<compile_context>
chip_gen: v6e
topology: v6e:2x2x1
jax: 0.10.0
libtpu: 0.0.40
codegen_flags: <defaults>
</compile_context>

<pallas_src>
import functools
import numpy as np
import jax
import jax.numpy as jnp
from jax import lax
from jax.experimental import pallas as pl
from jax.experimental.pallas import tpu as pltpu

_VMEM_LIMIT = 40 * 1024 * 1024


def _round_up(x, m):
    return (x + m - 1) // m * m


def _cparams(*sems):
    return pltpu.CompilerParams(dimension_semantics=tuple(sems),
                                vmem_limit_bytes=_VMEM_LIMIT)


# ----------------------------- Pallas kernels -----------------------------

def _gemm_multi_kernel(*refs, n_a, relu, has_res):
    """sum_i a_i @ w_i + bias [+ residual], optional ReLU; f32 accumulation."""
    a_refs = refs[:n_a]
    w_refs = refs[n_a:2 * n_a]
    b_ref = refs[2 * n_a]
    r_ref = refs[2 * n_a + 1] if has_res else None
    o_ref = refs[-1]
    acc = jnp.dot(a_refs[0][...], w_refs[0][...],
                  preferred_element_type=jnp.float32)
    for a_ref, w_ref in zip(a_refs[1:], w_refs[1:]):
        acc = acc + jnp.dot(a_ref[...], w_ref[...],
                            preferred_element_type=jnp.float32)
    acc = acc + b_ref[...]
    if has_res:
        acc = acc + r_ref[...].astype(jnp.float32)
    if relu:
        acc = jnp.maximum(acc, 0.0)
    o_ref[...] = acc.astype(o_ref.dtype)


def _gemm_multiout_kernel(*refs, n_out, relu):
    """One shared A operand, one lane-dense output per branch weight."""
    a_ref = refs[0]
    w_refs = refs[1:1 + n_out]
    b_refs = refs[1 + n_out:1 + 2 * n_out]
    o_refs = refs[1 + 2 * n_out:]
    a = a_ref[...]
    for w_ref, b_ref, o_ref in zip(w_refs, b_refs, o_refs):
        r = jnp.dot(a, w_ref[...], preferred_element_type=jnp.float32)
        r = r + b_ref[...]
        if relu:
            r = jnp.maximum(r, 0.0)
        o_ref[...] = r.astype(o_ref.dtype)


def _conv_same_kernel(x_ref, w_ref, b_ref, o_ref, *, h_img, w_img, kh, kw,
                      ph, pw, guard, tm, halo, relu):
    """Fused-im2col stride-1 'same' conv: kh*kw shifted GEMMs on a VMEM-
    resident flattened input.  x_ref is the whole (Mpad, Cin) padded input
    (guard zero rows before/after the real data); masking handles image-row
    and image boundaries."""
    m0 = pl.program_id(0) * tm
    win = x_ref[pl.ds(pl.multiple_of(m0, 16), tm + halo), :]
    mf = (lax.broadcasted_iota(jnp.int32, (tm, 1), 0) + m0).astype(jnp.float32)
    rowf = jnp.floor((mf + 0.5) * (1.0 / w_img))         # flat image-row index
    wcol = mf - rowf * float(w_img)                       # column within row
    imgf = jnp.floor((rowf + 0.5) * (1.0 / h_img))        # image index
    hrow = rowf - imgf * float(h_img)                     # row within image

    cout = o_ref.shape[1]
    acc = jnp.zeros((tm, cout), jnp.float32)
    for i in range(kh):
        dh = i - ph
        hok = (hrow + float(dh) >= 0.0) & (hrow + float(dh) <= float(h_img - 1))
        for j in range(kw):
            dw = j - pw
            off = guard + dh * w_img + dw            # static slice offset
            a = win[off:off + tm, :]
            if not (dh == 0 and dw == 0):             # centre tap never OOB
                ok = hok & (wcol + float(dw) >= 0.0) \
                         & (wcol + float(dw) <= float(w_img - 1))
                a = jnp.where(ok, a, 0.0)
            acc = acc + jnp.dot(a, w_ref[i * kw + j],
                                preferred_element_type=jnp.float32)
    acc = acc + b_ref[...]
    if relu:
        acc = jnp.maximum(acc, 0.0)
    o_ref[...] = acc.astype(o_ref.dtype)


def _max_reduce_kernel(x_ref, o_ref):
    o_ref[...] = jnp.max(x_ref[...], axis=0)


def _avg_div_kernel(v_ref, d_ref, o_ref):
    s = jnp.sum(v_ref[...], axis=0, dtype=jnp.float32)
    o_ref[...] = (s * d_ref[...]).astype(o_ref.dtype)


def _gap_kernel(x_ref, o_ref):
    o_ref[...] = jnp.mean(x_ref[...], axis=1, dtype=jnp.float32)


# --------------------------- GEMM / conv wrappers ---------------------------

def _gemm_impl(a_list, w_list, b, res, relu, out_dtype=jnp.bfloat16):
    """sum_i a_i @ w_i + b [+ res], activation.  Full-K blocks, boundary-
    handled M/N tiles, bf16 operands, f32 accumulation."""
    al, wl = [], []
    for a, w in zip(a_list, w_list):
        k = a.shape[1]
        if k % 16:
            kp = _round_up(k, 16) - k
            a = jnp.pad(a, ((0, 0), (0, kp)))
            w = jnp.pad(w, ((0, kp), (0, 0)))
        al.append(a.astype(jnp.bfloat16))
        wl.append(w.astype(jnp.bfloat16))
    M = al[0].shape[0]
    N = wl[0].shape[1]
    ks = [a.shape[1] for a in al]
    ktot = sum(ks)

    if M <= 4096:
        TM = _round_up(M, 16)
    else:
        TM = max(512, min(4096, (1 << 20) // ktot // 256 * 256))
    if ktot * N * 2 <= (4 << 20):
        TN = N                                    # full-N weight tile
    elif N % 512 == 0:
        TN = 512
    elif N % 256 == 0:
        TN = 256
    elif N % 128 == 0:
        TN = 128
    else:
        TN = N

    n_a = len(al)
    in_specs = [pl.BlockSpec((TM, k), lambda i, j: (i, 0)) for k in ks]
    in_specs += [pl.BlockSpec((k, TN), lambda i, j: (0, j)) for k in ks]
    in_specs.append(pl.BlockSpec((1, TN), lambda i, j: (0, j)))
    args = al + wl + [b.reshape(1, N).astype(jnp.float32)]
    if res is not None:
        in_specs.append(pl.BlockSpec((TM, TN), lambda i, j: (i, j)))
        args.append(res.astype(jnp.bfloat16))

    kern = functools.partial(_gemm_multi_kernel, n_a=n_a, relu=relu,
                             has_res=res is not None)
    return pl.pallas_call(
        kern,
        out_shape=jax.ShapeDtypeStruct((M, N), out_dtype),
        grid_spec=pltpu.PrefetchScalarGridSpec(
            num_scalar_prefetch=0,
            grid=(pl.cdiv(M, TM), pl.cdiv(N, TN)),
            in_specs=in_specs,
            out_specs=pl.BlockSpec((TM, TN), lambda i, j: (i, j))),
        compiler_params=_cparams("parallel", "parallel"),
    )(*args)


def _multiout_call(a, w_list, b_list, relu):
    M, K = a.shape
    TM = _round_up(M, 16) if M <= 4096 else 2048
    n_out = len(w_list)
    in_specs = [pl.BlockSpec((TM, K), lambda i: (i, 0))]
    in_specs += [pl.BlockSpec((K, w.shape[1]), lambda i: (0, 0)) for w in w_list]
    in_specs += [pl.BlockSpec((1, bb.shape[1]), lambda i: (0, 0)) for bb in b_list]
    out_shape = tuple(jax.ShapeDtypeStruct((M, w.shape[1]), jnp.bfloat16)
                      for w in w_list)
    out_specs = tuple(pl.BlockSpec((TM, w.shape[1]), lambda i: (i, 0))
                      for w in w_list)
    kern = functools.partial(_gemm_multiout_kernel, n_out=n_out, relu=relu)
    return pl.pallas_call(
        kern,
        out_shape=out_shape,
        grid_spec=pltpu.PrefetchScalarGridSpec(
            num_scalar_prefetch=0,
            grid=(pl.cdiv(M, TM),),
            in_specs=in_specs,
            out_specs=out_specs),
        compiler_params=_cparams("parallel"),
    )(a, *w_list, *b_list)


@functools.partial(jax.jit, static_argnames=("relu",))
def conv_same(x, w, b, relu=True):
    """Stride-1 'same' conv (any odd kh/kw incl. 1x7, 7x1, 1x3, 3x1, 5x5)."""
    n, h, wd, cin = x.shape
    kh, kw, _, cout = w.shape
    ph, pw = (kh - 1) // 2, (kw - 1) // 2
    M = n * h * wd
    guard = ph * wd + pw
    TM = _round_up(M, 16) if M <= 4096 else 2048
    Mg = _round_up(M, TM)
    halo = _round_up(2 * guard, 16)
    Mpad = Mg + halo + 16

    xf = x.astype(jnp.bfloat16).reshape(M, cin)
    xf = jnp.pad(xf, ((guard, Mpad - M - guard), (0, 0)))
    wf = w.astype(jnp.bfloat16).reshape(kh * kw, cin, cout)
    bf = b.reshape(1, cout).astype(jnp.float32)

    kern = functools.partial(_conv_same_kernel, h_img=h, w_img=wd, kh=kh,
                             kw=kw, ph=ph, pw=pw, guard=guard, tm=TM,
                             halo=halo, relu=relu)
    out = pl.pallas_call(
        kern,
        out_shape=jax.ShapeDtypeStruct((M, cout), jnp.bfloat16),
        grid_spec=pltpu.PrefetchScalarGridSpec(
            num_scalar_prefetch=0,
            grid=(Mg // TM,),
            in_specs=[pl.BlockSpec((Mpad, cin), lambda i: (0, 0)),
                      pl.BlockSpec((kh * kw, cin, cout), lambda i: (0, 0, 0)),
                      pl.BlockSpec((1, cout), lambda i: (0, 0))],
            out_specs=pl.BlockSpec((TM, cout), lambda i: (i, 0))),
        compiler_params=_cparams("parallel"),
    )(xf, wf, bf)
    return out.reshape(n, h, wd, cout)


def _im2col(x, kh, kw, stride, padding):
    n, h, w, c = x.shape
    ph, pw = padding
    sh, sw = stride
    xp = jnp.pad(x, ((0, 0), (ph, ph), (pw, pw), (0, 0)))
    ho = (h + 2 * ph - kh) // sh + 1
    wo = (w + 2 * pw - kw) // sw + 1
    cols = [xp[:, i:i + sh * ho:sh, j:j + sw * wo:sw, :]
            for i in range(kh) for j in range(kw)]
    patches = jnp.concatenate(cols, axis=-1)
    return patches.reshape(n * ho * wo, kh * kw * c), ho, wo


@functools.partial(jax.jit, static_argnames=("stride", "padding", "relu"))
def conv2d_im2col(x, w, b, *, stride, padding=(0, 0), relu=True):
    """Strided (stride-2) convs keep a small im2col GEMM."""
    n, h, wd, cin = x.shape
    kh, kw, _, cout = w.shape
    a, ho, wo = _im2col(x.astype(jnp.bfloat16), kh, kw, stride, padding)
    out = _gemm_impl([a], [w.astype(jnp.bfloat16).reshape(kh * kw * cin, cout)],
                     b, None, relu)
    return out.reshape(n, ho, wo, cout)


@functools.partial(jax.jit, static_argnames=("relu",))
def conv1x1(x, w, b, relu=True):
    n, h, wd, cin = x.shape
    cout = w.shape[-1]
    out = _gemm_impl([x.astype(jnp.bfloat16).reshape(n * h * wd, cin)],
                     [w.astype(jnp.bfloat16).reshape(cin, cout)], b, None, relu)
    return out.reshape(n, h, wd, cout)


@functools.partial(jax.jit, static_argnames=("relu",))
def conv1x1_multi(x, ws, bs, relu=True):
    """Several branch 1x1 convs over the same input -> one kernel, one
    lane-dense output per branch."""
    n, h, wd, cin = x.shape
    a = x.astype(jnp.bfloat16).reshape(n * h * wd, cin)
    w_list = [w.astype(jnp.bfloat16).reshape(cin, w.shape[-1]) for w in ws]
    b_list = [b.reshape(1, -1).astype(jnp.float32) for b in bs]
    outs = _multiout_call(a, w_list, b_list, relu)
    return tuple(o.reshape(n, h, wd, -1) for o in outs)


@functools.partial(jax.jit, static_argnames=("relu",))
def residual_up(branches, up_ws, up_b, res, relu=True):
    """Split-K up-projection: sum_i branch_i @ up_w_i + bias + residual,
    optional ReLU, one fused kernel (no channel concatenate)."""
    n, h, wd, cout = res.shape
    M = n * h * wd
    a_list = [br.astype(jnp.bfloat16).reshape(M, br.shape[-1]) for br in branches]
    w_list = [w.astype(jnp.bfloat16) for w in up_ws]
    out = _gemm_impl(a_list, w_list, up_b,
                     res.astype(jnp.bfloat16).reshape(M, cout), relu)
    return out.reshape(n, h, wd, cout)


# --------------------------------- pooling ---------------------------------

def _stack_windows(x, k, stride, padding):
    n, h, w, c = x.shape
    xp = jnp.pad(x, ((0, 0), (padding, padding), (padding, padding), (0, 0)))
    ho = (h + 2 * padding - k) // stride + 1
    wo = (w + 2 * padding - k) // stride + 1
    wins = [xp[:, i:i + stride * ho:stride, j:j + stride * wo:stride, :]
            for i in range(k) for j in range(k)]
    win = jnp.stack(wins, axis=0).reshape(k * k, n * ho * wo, c)
    return win, n, ho, wo, c


@jax.jit
def maxpool_3x3_s2(x):
    win, n, ho, wo, c = _stack_windows(x.astype(jnp.bfloat16), 3, 2, 0)
    kk, M, C = win.shape
    ptm = min(512, _round_up(M, 16))
    while ptm > 16 and kk * ptm * C * 2 > (4 << 20):
        ptm //= 2
    out = pl.pallas_call(
        _max_reduce_kernel,
        out_shape=jax.ShapeDtypeStruct((M, C), win.dtype),
        grid_spec=pltpu.PrefetchScalarGridSpec(
            num_scalar_prefetch=0,
            grid=(pl.cdiv(M, ptm),),
            in_specs=[pl.BlockSpec((kk, ptm, C), lambda i: (0, i, 0))],
            out_specs=pl.BlockSpec((ptm, C), lambda i: (i, 0))),
        compiler_params=_cparams("parallel"),
    )(win)
    return out.reshape(n, ho, wo, c)


@jax.jit
def avgpool_3x3_s1_p1(x):
    n, h, w, c = x.shape
    win, _, ho, wo, _ = _stack_windows(x.astype(jnp.bfloat16), 3, 1, 1)
    kk, M, C = win.shape
    # count_include_pad=False reciprocal divisor (values 1/4, 1/6, 1/9).
    ones = np.zeros((h + 2, w + 2), np.float32)
    ones[1:-1, 1:-1] = 1.0
    cnt = sum(ones[i:i + h, j:j + w] for i in range(3) for j in range(3))
    rdiv = jnp.asarray(
        np.broadcast_to((1.0 / cnt)[None], (n, h, w)).reshape(M, 1), jnp.float32)
    ptm = min(512, _round_up(M, 16))
    out = pl.pallas_call(
        _avg_div_kernel,
        out_shape=jax.ShapeDtypeStruct((M, C), win.dtype),
        grid_spec=pltpu.PrefetchScalarGridSpec(
            num_scalar_prefetch=0,
            grid=(pl.cdiv(M, ptm),),
            in_specs=[pl.BlockSpec((kk, ptm, C), lambda i: (0, i, 0)),
                      pl.BlockSpec((ptm, 1), lambda i: (i, 0))],
            out_specs=pl.BlockSpec((ptm, C), lambda i: (i, 0))),
        compiler_params=_cparams("parallel"),
    )(win, rdiv)
    return out.reshape(n, ho, wo, c)


@jax.jit
def global_avgpool(x):
    # AvgPool2d(8) on an 8x8 map == mean over all spatial positions.
    n, h, w, c = x.shape
    xr = x.astype(jnp.bfloat16).reshape(n, h * w, c)
    return pl.pallas_call(
        _gap_kernel,
        out_shape=jax.ShapeDtypeStruct((n, c), jnp.float32),
        grid_spec=pltpu.PrefetchScalarGridSpec(
            num_scalar_prefetch=0,
            grid=(1,),
            in_specs=[pl.BlockSpec((n, h * w, c), lambda i: (0, 0, 0))],
            out_specs=pl.BlockSpec((n, c), lambda i: (0, 0))),
        compiler_params=_cparams("arbitrary"),
    )(xr)


# -------------------------- InceptionResNetV2 body -------------------------

@jax.jit
def mixed_5b(x, p):
    y0, y1, y2 = conv1x1_multi(x, [p["b0"]["w"], p["b1_0"]["w"], p["b2_0"]["w"]],
                                  [p["b0"]["b"], p["b1_0"]["b"], p["b2_0"]["b"]])
    b1 = conv_same(y1, p["b1_1"]["w"], p["b1_1"]["b"])            # 5x5
    b2 = conv_same(y2, p["b2_1"]["w"], p["b2_1"]["b"])
    b2 = conv_same(b2, p["b2_2"]["w"], p["b2_2"]["b"])
    b3 = conv1x1(avgpool_3x3_s1_p1(x), p["b3"]["w"], p["b3"]["b"])
    return jnp.concatenate([y0, b1, b2, b3], axis=-1)             # 320 ch


@jax.jit
def block35(x, p):
    y0, y1, y2 = conv1x1_multi(x, [p["b0"]["w"], p["b1_0"]["w"], p["b2_0"]["w"]],
                                  [p["b0"]["b"], p["b1_0"]["b"], p["b2_0"]["b"]])
    b1 = conv_same(y1, p["b1_1"]["w"], p["b1_1"]["b"])
    b2 = conv_same(y2, p["b2_1"]["w"], p["b2_1"]["b"])
    b2 = conv_same(b2, p["b2_2"]["w"], p["b2_2"]["b"])
    return residual_up([y0, b1, b2], p["up_w"], p["up_b"], x, relu=True)


@jax.jit
def mixed_6a(x, p):
    b0 = conv2d_im2col(x, p["b0"]["w"], p["b0"]["b"], stride=(2, 2))
    b1 = conv1x1(x, p["b1_0"]["w"], p["b1_0"]["b"])
    b1 = conv_same(b1, p["b1_1"]["w"], p["b1_1"]["b"])
    b1 = conv2d_im2col(b1, p["b1_2"]["w"], p["b1_2"]["b"], stride=(2, 2))
    b2 = maxpool_3x3_s2(x)
    return jnp.concatenate([b0, b1, b2], axis=-1)                 # 1088 ch


@jax.jit
def block17(x, p):
    y0, y1 = conv1x1_multi(x, [p["b0"]["w"], p["b1_0"]["w"]],
                              [p["b0"]["b"], p["b1_0"]["b"]])
    b1 = conv_same(y1, p["b1_1"]["w"], p["b1_1"]["b"])            # (1,7)
    b1 = conv_same(b1, p["b1_2"]["w"], p["b1_2"]["b"])            # (7,1)
    return residual_up([y0, b1], p["up_w"], p["up_b"], x, relu=True)


@jax.jit
def mixed_7a(x, p):
    y0, y1, y2 = conv1x1_multi(
        x, [p["b0_0"]["w"], p["b1_0"]["w"], p["b2_0"]["w"]],
           [p["b0_0"]["b"], p["b1_0"]["b"], p["b2_0"]["b"]])
    b0 = conv2d_im2col(y0, p["b0_1"]["w"], p["b0_1"]["b"], stride=(2, 2))
    b1 = conv2d_im2col(y1, p["b1_1"]["w"], p["b1_1"]["b"], stride=(2, 2))
    b2 = conv_same(y2, p["b2_1"]["w"], p["b2_1"]["b"])
    b2 = conv2d_im2col(b2, p["b2_2"]["w"], p["b2_2"]["b"], stride=(2, 2))
    b3 = maxpool_3x3_s2(x)
    return jnp.concatenate([b0, b1, b2, b3], axis=-1)             # 2080 ch


@functools.partial(jax.jit, static_argnames=("relu",))
def block8(x, p, relu=True):
    y0, y1 = conv1x1_multi(x, [p["b0"]["w"], p["b1_0"]["w"]],
                              [p["b0"]["b"], p["b1_0"]["b"]])
    b1 = conv_same(y1, p["b1_1"]["w"], p["b1_1"]["b"])            # (1,3)
    b1 = conv_same(b1, p["b1_2"]["w"], p["b1_2"]["b"])            # (3,1)
    return residual_up([y0, b1], p["up_w"], p["up_b"], x, relu=relu)


def appearance_encoder_forward(images_nchw, P):
    """Matches AppearanceEncoder_inceptionresnetv2.forward -> (N, 1536)."""
    x = jnp.transpose(images_nchw, (0, 2, 3, 1)).astype(jnp.bfloat16)   # NHWC
    x = conv2d_im2col(x, P["conv2d_1a"]["w"], P["conv2d_1a"]["b"], stride=(2, 2))
    # valid 3x3 conv == same conv at input resolution + centre crop
    x = conv_same(x, P["conv2d_2a"]["w"], P["conv2d_2a"]["b"])[:, 1:-1, 1:-1, :]
    x = conv_same(x, P["conv2d_2b"]["w"], P["conv2d_2b"]["b"])
    x = maxpool_3x3_s2(x)
    x = conv1x1(x, P["conv2d_3b"]["w"], P["conv2d_3b"]["b"])
    x = conv_same(x, P["conv2d_4a"]["w"], P["conv2d_4a"]["b"])[:, 1:-1, 1:-1, :]
    x = maxpool_3x3_s2(x)
    x = mixed_5b(x, P["mixed_5b"])
    for bp in P["repeat"]:          # 10 x Block35(scale=0.17)
        x = block35(x, bp)
    x = mixed_6a(x, P["mixed_6a"])
    for bp in P["repeat_1"]:        # 20 x Block17(scale=0.10)
        x = block17(x, bp)
    x = mixed_7a(x, P["mixed_7a"])
    for bp in P["repeat_2"]:        # 9 x Block8(scale=0.20)
        x = block8(x, bp, relu=True)
    x = block8(x, P["block8"], relu=False)   # Block8(noReLU=True)
    x = conv1x1(x, P["conv2d_7b"]["w"], P["conv2d_7b"]["b"])
    return global_avgpool(x)        # == AvgPool2d(8) + reshape(N, -1)


# -------------------------- deterministic parameters -----------------------

def _fold_bn(rng, cin, cout, k):
    if isinstance(k, int):
        k = (k, k)
    kh, kw = k
    fan_in = kh * kw * cin
    w = rng.standard_normal((kh, kw, cin, cout), dtype=np.float32) \
        * np.float32(np.sqrt(1.0 / fan_in))
    gamma = (1.0 + 0.05 * rng.standard_normal(cout)).astype(np.float32)
    beta = (0.05 * rng.standard_normal(cout)).astype(np.float32)
    mean = (0.05 * rng.standard_normal(cout)).astype(np.float32)
    var = (0.75 + 0.5 * rng.random(cout)).astype(np.float32)
    s = gamma / np.sqrt(var + np.float32(1e-3))
    return {"w": jnp.asarray(w * s, jnp.bfloat16),
            "b": jnp.asarray(beta - mean * s, jnp.float32)}


def _up(rng, k_sizes, cout, scale):
    ktot = sum(k_sizes)
    ws = []
    for k in k_sizes:
        w = rng.standard_normal((k, cout), dtype=np.float32) \
            * np.float32(np.sqrt(1.0 / ktot))
        ws.append(jnp.asarray(w * np.float32(scale), jnp.bfloat16))
    b = (0.01 * rng.standard_normal(cout)).astype(np.float32) * np.float32(scale)
    return {"up_w": ws, "up_b": jnp.asarray(b, jnp.float32)}


def build_params(seed=0):
    rng = np.random.default_rng(seed)
    c = lambda cin, cout, k: _fold_bn(rng, cin, cout, k)
    P = {}
    P["conv2d_1a"] = c(3, 32, 3)
    P["conv2d_2a"] = c(32, 32, 3)
    P["conv2d_2b"] = c(32, 64, 3)
    P["conv2d_3b"] = c(64, 80, 1)
    P["conv2d_4a"] = c(80, 192, 3)

    P["mixed_5b"] = dict(b0=c(192, 96, 1), b1_0=c(192, 48, 1), b1_1=c(48, 64, 5),
                         b2_0=c(192, 64, 1), b2_1=c(64, 96, 3), b2_2=c(96, 96, 3),
                         b3=c(192, 64, 1))

    def p35():
        d = dict(b0=c(320, 32, 1), b1_0=c(320, 32, 1), b1_1=c(32, 32, 3),
                 b2_0=c(320, 32, 1), b2_1=c(32, 48, 3), b2_2=c(48, 64, 3))
        d.update(_up(rng, (32, 32, 64), 320, 0.17))
        return d

    P["repeat"] = [p35() for _ in range(10)]
    P["mixed_6a"] = dict(b0=c(320, 384, 3), b1_0=c(320, 256, 1),
                         b1_1=c(256, 256, 3), b1_2=c(256, 384, 3))

    def p17():
        d = dict(b0=c(1088, 192, 1), b1_0=c(1088, 128, 1),
                 b1_1=c(128, 160, (1, 7)), b1_2=c(160, 192, (7, 1)))
        d.update(_up(rng, (192, 192), 1088, 0.10))
        return d

    P["repeat_1"] = [p17() for _ in range(20)]
    P["mixed_7a"] = dict(b0_0=c(1088, 256, 1), b0_1=c(256, 384, 3),
                         b1_0=c(1088, 256, 1), b1_1=c(256, 288, 3),
                         b2_0=c(1088, 256, 1), b2_1=c(256, 288, 3),
                         b2_2=c(288, 320, 3))

    def p8(scale):
        d = dict(b0=c(2080, 192, 1), b1_0=c(2080, 192, 1),
                 b1_1=c(192, 224, (1, 3)), b1_2=c(224, 256, (3, 1)))
        d.update(_up(rng, (192, 256), 2080, scale))
        return d

    P["repeat_2"] = [p8(0.20) for _ in range(9)]
    P["block8"] = p8(1.0)                  # final Block8(noReLU=True)
    P["conv2d_7b"] = c(2080, 1536, 1)
    return P


# ----------------------------------- main -----------------------------------

if __name__ == "__main__":
    params = build_params(seed=0)
    key = jax.random.PRNGKey(0)
    # 299x299 is the smallest spatial size the architecture's AvgPool2d(8)
    # implies; batch of 2 images.
    images = jax.random.normal(key, (2, 3, 299, 299), dtype=jnp.float32)
    feats = appearance_encoder_forward(images, params)
    feats = jax.block_until_ready(feats)
    assert feats.shape == (2, 1536), feats.shape
    assert bool(jnp.all(jnp.isfinite(feats)))
    print("KERNEL_OK")
</pallas_src>

<mosaic_0001>
module attributes {stable_mosaic.version = 11 : i64} {
  func.func @_gemm_multi_kernel(%arg0: i32, %arg1: i32, %arg2: memref<4096x32xbf16, #tpu.memory_space<vmem>>, %arg3: memref<32x32xbf16, #tpu.memory_space<vmem>>, %arg4: memref<1x32xf32, #tpu.memory_space<vmem>>, %arg5: memref<4096x32xbf16, #tpu.memory_space<vmem>>) attributes {dimension_semantics = [#tpu.dimension_semantics<parallel>, #tpu.dimension_semantics<parallel>], iteration_bounds = array<i64: 11, 1>, scalar_prefetch = 0 : i64, scratch_operands = 0 : i64, tpu.core_type = #tpu.core_type<tc>, window_params = [{transform_indices = @transform_0, window_bounds = array<i64: 4096, 32>}, {transform_indices = @transform_1, window_bounds = array<i64: 32, 32>}, {transform_indices = @transform_2, window_bounds = array<i64: 1, 32>}, {transform_indices = @transform_3, window_bounds = array<i64: 4096, 32>}]} {
    %c0 = arith.constant 0 : index
    %c0_0 = arith.constant 0 : index
    %0 = vector.load %arg2[%c0, %c0_0] : memref<4096x32xbf16, #tpu.memory_space<vmem>>, vector<4096x32xbf16>
    %c0_1 = arith.constant 0 : index
    %c0_2 = arith.constant 0 : index
    %1 = vector.load %arg3[%c0_1, %c0_2] : memref<32x32xbf16, #tpu.memory_space<vmem>>, vector<32x32xbf16>
    %cst = arith.constant dense<0.000000e+00> : vector<4096x32xf32>
    %2 = tpu.matmul %0, %1, %cst {dimension_numbers = #tpu.dot_dimension_numbers<[1], [0], [0], [1], [0, 0, 1, 1], [], []>} : vector<4096x32xbf16>, vector<32x32xbf16>, vector<4096x32xf32> -> vector<4096x32xf32>
    %c0_3 = arith.constant 0 : index
    %c0_4 = arith.constant 0 : index
    %3 = vector.load %arg4[%c0_3, %c0_4] : memref<1x32xf32, #tpu.memory_space<vmem>>, vector<1x32xf32>
    %4 = vector.broadcast %3 : vector<1x32xf32> to vector<4096x32xf32>
    %5 = arith.addf %2, %4 : vector<4096x32xf32>
    %cst_5 = arith.constant 0.000000e+00 : f32
    %6 = vector.broadcast %cst_5 : f32 to vector<4096x32xf32>
    %7 = arith.maximumf %5, %6 : vector<4096x32xf32>
    %8 = arith.truncf %7 : vector<4096x32xf32> to vector<4096x32xbf16>
    %c0_6 = arith.constant 0 : index
    %c0_7 = arith.constant 0 : index
    %9 = vector.load %arg5[%c0_6, %c0_7] : memref<4096x32xbf16, #tpu.memory_space<vmem>>, vector<4096x32xbf16>
    tpu.vector_store %arg5[%c0_6, %c0_7], %8 {strides = array<i32>} : memref<4096x32xbf16, #tpu.memory_space<vmem>>, vector<4096x32xbf16>,
    return
  }
  func.func @transform_0(%arg0: i32, %arg1: i32) -> (i32, i32) {
    %c0_i32 = arith.constant 0 : i32
    %c0_i32_0 = arith.constant 0 : i32
    return %arg0, %c0_i32 : i32, i32
  }
  func.func @transform_1(%arg0: i32, %arg1: i32) -> (i32, i32) {
    %c0_i32 = arith.constant 0 : i32
    %c0_i32_0 = arith.constant 0 : i32
    return %c0_i32, %arg1 : i32, i32
  }
  func.func @transform_2(%arg0: i32, %arg1: i32) -> (i32, i32) {
    %c0_i32 = arith.constant 0 : i32
    %c0_i32_0 = arith.constant 0 : i32
    return %c0_i32, %arg1 : i32, i32
  }
  func.func @transform_3(%arg0: i32, %arg1: i32) -> (i32, i32) {
    %c0_i32 = arith.constant 0 : i32
    return %arg0, %arg1 : i32, i32
  }
}

</mosaic_0001>

<llo_original>
// kernel: conv2d_im2col.1
$region0: #{conv2d_im2col.1}
  #allocation0 [shape = 'u32[]', space=smem, size = 0x4, offset = 0x4, fixed_abs, tag = 'smem constant byte address 0x4 - core index']
  #allocation1 [shape = 'u32[144,128]{1,0:T(1,128)}', space=vmem, size = 0x12000, scoped, tag = 'internal scratch']
  %s0 = inlined_call_operand.vmem [shape: bf16[44402,32], index: 0, kind: input, shape index: {}]
  %s1 = inlined_call_operand.vmem [shape: bf16[32,32], index: 1, kind: input, shape index: {}]
  %s2 = inlined_call_operand.vmem [shape: f32[1,32], index: 2, kind: input, shape index: {}]
  %s3 = inlined_call_operand.vmem [shape: bf16[44402,32], index: 3, kind: output, shape index: {}]
  %s4 = sld [smem:[#allocation0]]
  $region89: #{conv2d_im2col.1} parent=0
    _
  %s6 = ssub.s32 1, %s4
  %s7 = scalar_select 0, %s6, %s4
  $region1: #{conv2d_im2col.1} parent=0
    #allocation2 [shape = 'u8[2097152]{0}', space=vmem, size = 0x200000, scoped, tag = 'output window, operand 0']
    loop: start=0, step=1, limit=13
    $region2: #{conv2d_im2col.1} parent=1 // loop_pre_header
      _
    $region3: #{conv2d_im2col.1} parent=1 // loop_header
      %s9 = sphi 0, %s13
      %p10 = scmp.ge.s32.totalorder %s9, 13
      %s16 = sphi 0, %s28
      %s17 = sphi 0, %s24
      %s18 = sphi 0, %s16
      %s19 = sphi 0, %s17
      %s20 = sphi 0, %s18
      %s21 = sphi 0, %s19
      %s31 = sphi 0, %s33
      %s34 = sphi 0, %s31
      %s35 = sphi 0, %s34
      %s51 = sphi 0, %s35
      %s57 = sphi 0, %s59
      %s60 = sphi 0, %s57
      %s61 = sphi 0, %s60
      %s77 = sphi 0, %s61
      %s83 = sphi 0, %s85
      %s86 = sphi 0, %s83
      %s87 = sphi 0, %s86
      %s103 = sphi 0, %s87
      %s111 = sphi 0, %s113
      %s114 = sphi 0, %s111
      %s115 = sphi 0, %s114
      %s131 = sphi 0, %s115
    $region4: #{conv2d_im2col.1} parent=1 // loop_header_branch
      %12 = sbr.rel (%p10) target = $region8
    $region5: #{conv2d_im2col.1} parent=1 // loop_body
      %s14 = ssub.s32 %s9, 1
      %s15 = ssub.s32 %s9, 2
      %s22 = sadd.s32 1, %s17
      %p23 = scmp.ge.s32.totalorder %s22, 1
      %s24 = scalar_select %p23, 0, %s22
      %s25 = sadd.s32 1, %s16
      %s26 = scalar_select %p23, %s25, %s16
      %p27 = scmp.ge.s32.totalorder %s26, 11
      %s28 = scalar_select %p27, 0, %s26
      %s29 = ssub.s32 %s16, %s28
      %p30 = scmp.eq.s32.totalorder %s29, 0
      %s32 = sadd.s32 %s31, 1
      %s33 = scalar_select %p30, %s31, %s32
      %p36 = pneg %p30
      %p37 = scmp.eq.s32.totalorder %s9, 10
      %p38 = por %p36, %p37
      %p39 = scmp.ne.s32.totalorder %s31, %s34
      %p40 = scmp.eq.s32.totalorder %s9, 0
      %p41 = por %p39, %p40
      %p42 = scmp.ne.s32.totalorder %s31, %s34
      %p43 = scmp.eq.s32.totalorder %s14, 10
      %p44 = por %p42, %p43
      %p45 = scmp.ne.s32.totalorder %s34, %s35
      %p46 = scmp.eq.s32.totalorder %s14, 0
      %p47 = por %p45, %p46
      %p48 = scmp.ne.s32.totalorder %s34, %s35
      %p49 = scmp.eq.s32.totalorder %s15, 10
      %p50 = por %p48, %p49
      %p52 = scmp.ne.s32.totalorder %s35, %s51
      %p53 = scmp.eq.s32.totalorder %s15, 0
      %p54 = por %p52, %p53
      %s55 = ssub.s32 %s17, %s24
      %p56 = scmp.eq.s32.totalorder %s55, 0
      %s58 = sadd.s32 %s57, 1
      %s59 = scalar_select %p56, %s57, %s58
      %p62 = pneg %p56
      %p63 = scmp.eq.s32.totalorder %s9, 10
      %p64 = por %p62, %p63
      %p65 = scmp.ne.s32.totalorder %s57, %s60
      %p66 = scmp.eq.s32.totalorder %s9, 0
      %p67 = por %p65, %p66
      %p68 = scmp.ne.s32.totalorder %s57, %s60
      %p69 = scmp.eq.s32.totalorder %s14, 10
      %p70 = por %p68, %p69
      %p71 = scmp.ne.s32.totalorder %s60, %s61
      %p72 = scmp.eq.s32.totalorder %s14, 0
      %p73 = por %p71, %p72
      %p74 = scmp.ne.s32.totalorder %s60, %s61
      %p75 = scmp.eq.s32.totalorder %s15, 10
      %p76 = por %p74, %p75
      %p78 = scmp.ne.s32.totalorder %s61, %s77
      %p79 = scmp.eq.s32.totalorder %s15, 0
      %p80 = por %p78, %p79
      %s81 = ssub.s32 %s17, %s24
      %p82 = scmp.eq.s32.totalorder %s81, 0
      %s84 = sadd.s32 %s83, 1
      %s85 = scalar_select %p82, %s83, %s84
      %p88 = pneg %p82
      %p89 = scmp.eq.s32.totalorder %s9, 10
      %p90 = por %p88, %p89
      %p91 = scmp.ne.s32.totalorder %s83, %s86
      %p92 = scmp.eq.s32.totalorder %s9, 0
      %p93 = por %p91, %p92
      %p94 = scmp.ne.s32.totalorder %s83, %s86
      %p95 = scmp.eq.s32.totalorder %s14, 10
      %p96 = por %p94, %p95
      %p97 = scmp.ne.s32.totalorder %s86, %s87
      %p98 = scmp.eq.s32.totalorder %s14, 0
      %p99 = por %p97, %p98
      %p100 = scmp.ne.s32.totalorder %s86, %s87
      %p101 = scmp.eq.s32.totalorder %s15, 10
      %p102 = por %p100, %p101
      %p104 = scmp.ne.s32.totalorder %s87, %s103
      %p105 = scmp.eq.s32.totalorder %s15, 0
      %p106 = por %p104, %p105
      %s107 = ssub.s32 %s16, %s28
      %s108 = ssub.s32 %s17, %s24
      %s109 = sor.u32 %s107, %s108
      %p110 = scmp.eq.s32.totalorder %s109, 0
      %s112 = sadd.s32 %s111, 1
      %s113 = scalar_select %p110, %s111, %s112
      %p116 = pneg %p110
      %p117 = scmp.eq.s32.totalorder %s9, 10
      %p118 = por %p116, %p117
      %p119 = scmp.ne.s32.totalorder %s111, %s114
      %p120 = scmp.eq.s32.totalorder %s9, 0
      %p121 = por %p119, %p120
      %p122 = scmp.ne.s32.totalorder %s111, %s114
      %p123 = scmp.eq.s32.totalorder %s14, 10
      %p124 = por %p122, %p123
      %p125 = scmp.ne.s32.totalorder %s114, %s115
      %p126 = scmp.eq.s32.totalorder %s14, 0
      %p127 = por %p125, %p126
      %p128 = scmp.ne.s32.totalorder %s114, %s115
      %p129 = scmp.eq.s32.totalorder %s15, 10
      %p130 = por %p128, %p129
      %p132 = scmp.ne.s32.totalorder %s115, %s131
      %p133 = scmp.eq.s32.totalorder %s15, 0
      %p134 = por %p132, %p133
      %p135 = scmp.le.s32.totalorder 1, %s9
      %p136 = scmp.lt.s32.totalorder %s9, 12
      %p137 = pnand %p135, %p136
      %p138 = pneg %p137
      // Predicated region
      $region9: #{conv2d_im2col.1} parent=5 // pred_check
        _
      $region10: #{conv2d_im2col.1} parent=5 // pred_check_branch
        %140 = sbr.rel (%p137) target = $region12
      $region11: #{conv2d_im2col.1} parent=5 // pred_region
        %s141 = ssub.s32 %s9, 1
        // Predicated region
        $region13: #{conv2d_im2col.1} parent=11 // pred_check
          %p142 = pneg %p73
        $region14: #{conv2d_im2col.1} parent=11 // pred_check_branch
          %144 = sbr.rel (%p142) target = $region16
        $region15: #{conv2d_im2col.1} parent=11 // pred_region
          %p145 = scmp.lt.s32.totalorder %s19, 0
          %s146 = scalar_select %p145, %s19, 0
          %s147 = smul.addr %s146, 4
          %s148 = scalar_lea.vmem %s1, %s147
        $region16: #{conv2d_im2col.1} parent=11 // pred_fallthru
          _
        // Predicated region
        $region17: #{conv2d_im2col.1} parent=11 // pred_check
          %p149 = pneg %p99
        $region18: #{conv2d_im2col.1} parent=11 // pred_check_branch
          %151 = sbr.rel (%p149) target = $region20
        $region19: #{conv2d_im2col.1} parent=11 // pred_region
          %p152 = scmp.lt.s32.totalorder %s19, 0
          %s153 = scalar_select %p152, %s19, 0
          %s154 = scalar_lea.vmem %s2, %s153
        $region20: #{conv2d_im2col.1} parent=11 // pred_fallthru
          _
      $region12: #{conv2d_im2col.1} parent=5 // pred_fallthru
        _
      %p155 = scmp.lt.s32.totalorder %s9, 11
      // Predicated region
      $region21: #{conv2d_im2col.1} parent=5 // pred_check
        %p156 = pneg %p155
      $region22: #{conv2d_im2col.1} parent=5 // pred_check_branch
        %158 = sbr.rel (%p156) target = $region24
      $region23: #{conv2d_im2col.1} parent=5 // pred_region
        // Predicated region
        $region25: #{conv2d_im2col.1} parent=23 // pred_check
          %p159 = pneg %p41
        $region26: #{conv2d_im2col.1} parent=23 // pred_check_branch
          %161 = sbr.rel (%p159) target = $region28
        $region27: #{conv2d_im2col.1} parent=23 // pred_region
          %s162 = smul.u32 512, %s16
          %s163 = ssub.s32 5551, %s162
          %p164 = scmp.lt.s32.totalorder %s163, 512
          %s165 = scalar_select %p164, %s163, 512
          %s166 = smul.u32 64, %s165
          %p167 = scmp.lt.s32.totalorder %s162, 5550
          %s168 = scalar_select %p167, %s162, 5550
          %s169 = smul.addr %s168, 4
          %s170 = scalar_lea.vmem %s0, %s169
          %s171 = smul.u32 512, %s16
          %s172 = ssub.s32 5551, %s171
          %p173 = scmp.lt.s32.totalorder %s172, 512
          %s174 = scalar_select %p173, %s172, 512
          %s175 = smul.u32 64, %s174
        $region28: #{conv2d_im2col.1} parent=23 // pred_fallthru
          _
      $region24: #{conv2d_im2col.1} parent=5 // pred_fallthru
        _
      %p176 = scmp.le.s32.totalorder 1, %s9
      %p177 = scmp.lt.s32.totalorder %s9, 12
      %p178 = pnand %p176, %p177
      %p179 = pneg %p178
      // Predicated region
      $region29: #{conv2d_im2col.1} parent=5 // pred_check
        _
      $region30: #{conv2d_im2col.1} parent=5 // pred_check_branch
        %181 = sbr.rel (%p178) target = $region32
      $region31: #{conv2d_im2col.1} parent=5 // pred_region
        %s182 = ssub.s32 %s9, 1
        %s183 = smul.u32 512, %s18
        %s184 = ssub.s32 5551, %s183
        %p185 = scmp.lt.s32.totalorder %s184, 512
        %s186 = scalar_select %p185, %s184, 512
        %s187 = smul.u32 64, %s186
        %p188 = scmp.lt.s32.totalorder %s183, 5550
        %s189 = scalar_select %p188, %s183, 5550
        %s190 = smul.addr %s189, 4
        %s191 = scalar_lea.vmem %s0, %s190
        %p192 = pneg %p47
        %p193 = pneg %p44
        %p194 = scmp.lt.s32.totalorder %s19, 0
        %s195 = scalar_select %p194, %s19, 0
        %s196 = smul.addr %s195, 4
        %s197 = scalar_lea.vmem %s1, %s196
        %p198 = pneg %p73
        %p199 = pneg %p70
        %p200 = scmp.lt.s32.totalorder %s19, 0
        %s201 = scalar_select %p200, %s19, 0
        %s202 = scalar_lea.vmem %s2, %s201
        %p203 = pneg %p99
        %p204 = pneg %p96
        %p205 = pneg %p127
        %p206 = pneg %p124
        %s207 = sand.u32 %s114, 1
        %s208 = sand.u32 %s114, 1
        %s209 = smul.addr %s208, 2048
        %s210 = scalar_lea.vmem [#allocation2], %s209
        %s211 = smul.u32 512, %s18
        %s212 = ssub.s32 5551, %s211
        %p213 = scmp.lt.s32.totalorder %s212, 512
        %s214 = scalar_select %p213, %s212, 512
        %s215 = smul.u32 64, %s214
        %p216 = scmp.lt.s32.totalorder %s211, 5550
        %s217 = scalar_select %p216, %s211, 5550
        %s218 = smul.addr %s217, 4
        %s219 = scalar_lea.vmem %s0, %s218
        %s220 = smul.u32 512, %s18
        %s221 = ssub.s32 5551, %s220
        %p222 = scmp.lt.s32.totalorder %s221, 512
        %s223 = scalar_select %p222, %s221, 512
        %s224 = smul.u32 64, %s223
        %p225 = scmp.lt.s32.totalorder %s19, 0
        %s226 = scalar_select %p225, %s19, 0
        %s227 = smul.addr %s226, 4
        %s228 = scalar_lea.vmem %s1, %s227
        %p229 = scmp.lt.s32.totalorder %s19, 0
        %s230 = scalar_select %p229, %s19, 0
        %s231 = scalar_lea.vmem %s2, %s230
        %s232 = smul.u32 512, %s18
        %s233 = ssub.s32 5551, %s232
        %p234 = scmp.lt.s32.totalorder %s233, 512
        %s235 = scalar_select %p234, %s233, 512
        %s236 = smul.u32 64, %s235
        %v238 = vld [vmem:[%s219] sm:$0xf]
        %v239 = vld [vmem:[%s219 + $0x4] sm:$0xf]
        %v240 = vld [vmem:[%s219 + $0x8] sm:$0xf]
        %v241 = vld [vmem:[%s219 + $0xc] sm:$0xf]
        %v242 = vld [vmem:[%s219 + $0x10] sm:$0xf]
        %v243 = vld [vmem:[%s219 + $0x14] sm:$0xf]
        %v244 = vld [vmem:[%s219 + $0x18] sm:$0xf]
        %v245 = vld [vmem:[%s219 + $0x1c] sm:$0xf]
        %v246 = vld [vmem:[%s219 + $0x20] sm:$0xf]
        %v247 = vld [vmem:[%s219 + $0x24] sm:$0xf]
        %v248 = vld [vmem:[%s219 + $0x28] sm:$0xf]
        %v249 = vld [vmem:[%s219 + $0x2c] sm:$0xf]
        %v250 = vld [vmem:[%s219 + $0x30] sm:$0xf]
        %v251 = vld [vmem:[%s219 + $0x34] sm:$0xf]
        %v252 = vld [vmem:[%s219 + $0x38] sm:$0xf]
        %v253 = vld [vmem:[%s219 + $0x3c] sm:$0xf]
        %v254 = vld [vmem:[%s219 + $0x40] sm:$0xf]
        %v255 = vld [vmem:[%s219 + $0x44] sm:$0xf]
        %v256 = vld [vmem:[%s219 + $0x48] sm:$0xf]
        %v257 = vld [vmem:[%s219 + $0x4c] sm:$0xf]
        %v258 = vld [vmem:[%s219 + $0x50] sm:$0xf]
        %v259 = vld [vmem:[%s219 + $0x54] sm:$0xf]
        %v260 = vld [vmem:[%s219 + $0x58] sm:$0xf]
        %v261 = vld [vmem:[%s219 + $0x5c] sm:$0xf]
        %v262 = vld [vmem:[%s219 + $0x60] sm:$0xf]
        %v263 = vld [vmem:[%s219 + $0x64] sm:$0xf]
        %v264 = vld [vmem:[%s219 + $0x68] sm:$0xf]
        %v265 = vld [vmem:[%s219 + $0x6c] sm:$0xf]
        %v266 = vld [vmem:[%s219 + $0x70] sm:$0xf]
        %v267 = vld [vmem:[%s219 + $0x74] sm:$0xf]
        %v268 = vld [vmem:[%s219 + $0x78] sm:$0xf]
        %v269 = vld [vmem:[%s219 + $0x7c] sm:$0xf]
        %v270 = vld [vmem:[%s219 + $0x80] sm:$0xf]
        %v271 = vld [vmem:[%s219 + $0x84] sm:$0xf]
        %v272 = vld [vmem:[%s219 + $0x88] sm:$0xf]
        %v273 = vld [vmem:[%s219 + $0x8c] sm:$0xf]
        %v274 = vld [vmem:[%s219 + $0x90] sm:$0xf]
        %v275 = vld [vmem:[%s219 + $0x94] sm:$0xf]
        %v276 = vld [vmem:[%s219 + $0x98] sm:$0xf]
        %v277 = vld [vmem:[%s219 + $0x9c] sm:$0xf]
        %v278 = vld [vmem:[%s219 + $0xa0] sm:$0xf]
        %v279 = vld [vmem:[%s219 + $0xa4] sm:$0xf]
        %v280 = vld [vmem:[%s219 + $0xa8] sm:$0xf]
        %v281 = vld [vmem:[%s219 + $0xac] sm:$0xf]
        %v282 = vld [vmem:[%s219 + $0xb0] sm:$0xf]
        %v283 = vld [vmem:[%s219 + $0xb4] sm:$0xf]
        %v284 = vld [vmem:[%s219 + $0xb8] sm:$0xf]
        %v285 = vld [vmem:[%s219 + $0xbc] sm:$0xf]
        %v286 = vld [vmem:[%s219 + $0xc0] sm:$0xf]
        %v287 = vld [vmem:[%s219 + $0xc4] sm:$0xf]
        %v288 = vld [vmem:[%s219 + $0xc8] sm:$0xf]
        %v289 = vld [vmem:[%s219 + $0xcc] sm:$0xf]
        %v290 = vld [vmem:[%s219 + $0xd0] sm:$0xf]
        %v291 = vld [vmem:[%s219 + $0xd4] sm:$0xf]
        %v292 = vld [vmem:[%s219 + $0xd8] sm:$0xf]
        %v293 = vld [vmem:[%s219 + $0xdc] sm:$0xf]
        %v294 = vld [vmem:[%s219 + $0xe0] sm:$0xf]
        %v295 = vld [vmem:[%s219 + $0xe4] sm:$0xf]
        %v296 = vld [vmem:[%s219 + $0xe8] sm:$0xf]
        %v297 = vld [vmem:[%s219 + $0xec] sm:$0xf]
        %v298 = vld [vmem:[%s219 + $0xf0] sm:$0xf]
        %v299 = vld [vmem:[%s219 + $0xf4] sm:$0xf]
        %v300 = vld [vmem:[%s219 + $0xf8] sm:$0xf]
        %v301 = vld [vmem:[%s219 + $0xfc] sm:$0xf]
        %v302 = vld [vmem:[%s219 + $0x100] sm:$0xf]
        %v303 = vld [vmem:[%s219 + $0x104] sm:$0xf]
        %v304 = vld [vmem:[%s219 + $0x108] sm:$0xf]
        %v305 = vld [vmem:[%s219 + $0x10c] sm:$0xf]
        %v306 = vld [vmem:[%s219 + $0x110] sm:$0xf]
        %v307 = vld [vmem:[%s219 + $0x114] sm:$0xf]
        %v308 = vld [vmem:[%s219 + $0x118] sm:$0xf]
        %v309 = vld [vmem:[%s219 + $0x11c] sm:$0xf]
        %v310 = vld [vmem:[%s219 + $0x120] sm:$0xf]
        %v311 = vld [vmem:[%s219 + $0x124] sm:$0xf]
        %v312 = vld [vmem:[%s219 + $0x128] sm:$0xf]
        %v313 = vld [vmem:[%s219 + $0x12c] sm:$0xf]
        %v314 = vld [vmem:[%s219 + $0x130] sm:$0xf]
        %v315 = vld [vmem:[%s219 + $0x134] sm:$0xf]
        %v316 = vld [vmem:[%s219 + $0x138] sm:$0xf]
        %v317 = vld [vmem:[%s219 + $0x13c] sm:$0xf]
        %v318 = vld [vmem:[%s219 + $0x140] sm:$0xf]
        %v319 = vld [vmem:[%s219 + $0x144] sm:$0xf]
        %v320 = vld [vmem:[%s219 + $0x148] sm:$0xf]
        %v321 = vld [vmem:[%s219 + $0x14c] sm:$0xf]
        %v322 = vld [vmem:[%s219 + $0x150] sm:$0xf]
        %v323 = vld [vmem:[%s219 + $0x154] sm:$0xf]
        %v324 = vld [vmem:[%s219 + $0x158] sm:$0xf]
        %v325 = vld [vmem:[%s219 + $0x15c] sm:$0xf]
        %v326 = vld [vmem:[%s219 + $0x160] sm:$0xf]
        %v327 = vld [vmem:[%s219 + $0x164] sm:$0xf]
        %v328 = vld [vmem:[%s219 + $0x168] sm:$0xf]
        %v329 = vld [vmem:[%s219 + $0x16c] sm:$0xf]
        %v330 = vld [vmem:[%s219 + $0x170] sm:$0xf]
        %v331 = vld [vmem:[%s219 + $0x174] sm:$0xf]
        %v332 = vld [vmem:[%s219 + $0x178] sm:$0xf]
        %v333 = vld [vmem:[%s219 + $0x17c] sm:$0xf]
        %v334 = vld [vmem:[%s219 + $0x180] sm:$0xf]
        %v335 = vld [vmem:[%s219 + $0x184] sm:$0xf]
        %v336 = vld [vmem:[%s219 + $0x188] sm:$0xf]
        %v337 = vld [vmem:[%s219 + $0x18c] sm:$0xf]
        %v338 = vld [vmem:[%s219 + $0x190] sm:$0xf]
        %v339 = vld [vmem:[%s219 + $0x194] sm:$0xf]
        %v340 = vld [vmem:[%s219 + $0x198] sm:$0xf]
        %v341 = vld [vmem:[%s219 + $0x19c] sm:$0xf]
        %v342 = vld [vmem:[%s219 + $0x1a0] sm:$0xf]
        %v343 = vld [vmem:[%s219 + $0x1a4] sm:$0xf]
        %v344 = vld [vmem:[%s219 + $0x1a8] sm:$0xf]
        %v345 = vld [vmem:[%s219 + $0x1ac] sm:$0xf]
        %v346 = vld [vmem:[%s219 + $0x1b0] sm:$0xf]
        %v347 = vld [vmem:[%s219 + $0x1b4] sm:$0xf]
        %v348 = vld [vmem:[%s219 + $0x1b8] sm:$0xf]
        %v349 = vld [vmem:[%s219 + $0x1bc] sm:$0xf]
        %v350 = vld [vmem:[%s219 + $0x1c0] sm:$0xf]
        %v351 = vld [vmem:[%s219 + $0x1c4] sm:$0xf]
        %v352 = vld [vmem:[%s219 + $0x1c8] sm:$0xf]
        %v353 = vld [vmem:[%s219 + $0x1cc] sm:$0xf]
        %v354 = vld [vmem:[%s219 + $0x1d0] sm:$0xf]
        %v355 = vld [vmem:[%s219 + $0x1d4] sm:$0xf]
        %v356 = vld [vmem:[%s219 + $0x1d8] sm:$0xf]
        %v357 = vld [vmem:[%s219 + $0x1dc] sm:$0xf]
        %v358 = vld [vmem:[%s219 + $0x1e0] sm:$0xf]
        %v359 = vld [vmem:[%s219 + $0x1e4] sm:$0xf]
        %v360 = vld [vmem:[%s219 + $0x1e8] sm:$0xf]
        %v361 = vld [vmem:[%s219 + $0x1ec] sm:$0xf]
        %v362 = vld [vmem:[%s219 + $0x1f0] sm:$0xf]
        %v363 = vld [vmem:[%s219 + $0x1f4] sm:$0xf]
        %v364 = vld [vmem:[%s219 + $0x1f8] sm:$0xf]
        %v365 = vld [vmem:[%s219 + $0x1fc] sm:$0xf]
        %v366 = vld [vmem:[%s219 + $0x200] sm:$0xf]
        %v367 = vld [vmem:[%s219 + $0x204] sm:$0xf]
        %v368 = vld [vmem:[%s219 + $0x208] sm:$0xf]
        %v369 = vld [vmem:[%s219 + $0x20c] sm:$0xf]
        %v370 = vld [vmem:[%s219 + $0x210] sm:$0xf]
        %v371 = vld [vmem:[%s219 + $0x214] sm:$0xf]
        %v372 = vld [vmem:[%s219 + $0x218] sm:$0xf]
        %v373 = vld [vmem:[%s219 + $0x21c] sm:$0xf]
        %v374 = vld [vmem:[%s219 + $0x220] sm:$0xf]
        %v375 = vld [vmem:[%s219 + $0x224] sm:$0xf]
        %v376 = vld [vmem:[%s219 + $0x228] sm:$0xf]
        %v377 = vld [vmem:[%s219 + $0x22c] sm:$0xf]
        %v378 = vld [vmem:[%s219 + $0x230] sm:$0xf]
        %v379 = vld [vmem:[%s219 + $0x234] sm:$0xf]
        %v380 = vld [vmem:[%s219 + $0x238] sm:$0xf]
        %v381 = vld [vmem:[%s219 + $0x23c] sm:$0xf]
        %v382 = vld [vmem:[%s219 + $0x240] sm:$0xf]
        %v383 = vld [vmem:[%s219 + $0x244] sm:$0xf]
        %v384 = vld [vmem:[%s219 + $0x248] sm:$0xf]
        %v385 = vld [vmem:[%s219 + $0x24c] sm:$0xf]
        %v386 = vld [vmem:[%s219 + $0x250] sm:$0xf]
        %v387 = vld [vmem:[%s219 + $0x254] sm:$0xf]
        %v388 = vld [vmem:[%s219 + $0x258] sm:$0xf]
        %v389 = vld [vmem:[%s219 + $0x25c] sm:$0xf]
        %v390 = vld [vmem:[%s219 + $0x260] sm:$0xf]
        %v391 = vld [vmem:[%s219 + $0x264] sm:$0xf]
        %v392 = vld [vmem:[%s219 + $0x268] sm:$0xf]
        %v393 = vld [vmem:[%s219 + $0x26c] sm:$0xf]
        %v394 = vld [vmem:[%s219 + $0x270] sm:$0xf]
        %v395 = vld [vmem:[%s219 + $0x274] sm:$0xf]
        %v396 = vld [vmem:[%s219 + $0x278] sm:$0xf]
        %v397 = vld [vmem:[%s219 + $0x27c] sm:$0xf]
        %v398 = vld [vmem:[%s219 + $0x280] sm:$0xf]
        %v399 = vld [vmem:[%s219 + $0x284] sm:$0xf]
        %v400 = vld [vmem:[%s219 + $0x288] sm:$0xf]
        %v401 = vld [vmem:[%s219 + $0x28c] sm:$0xf]
        %v402 = vld [vmem:[%s219 + $0x290] sm:$0xf]
        %v403 = vld [vmem:[%s219 + $0x294] sm:$0xf]
        %v404 = vld [vmem:[%s219 + $0x298] sm:$0xf]
        %v405 = vld [vmem:[%s219 + $0x29c] sm:$0xf]
        %v406 = vld [vmem:[%s219 + $0x2a0] sm:$0xf]
        %v407 = vld [vmem:[%s219 + $0x2a4] sm:$0xf]
        %v408 = vld [vmem:[%s219 + $0x2a8] sm:$0xf]
        %v409 = vld [vmem:[%s219 + $0x2ac] sm:$0xf]
        %v410 = vld [vmem:[%s219 + $0x2b0] sm:$0xf]
        %v411 = vld [vmem:[%s219 + $0x2b4] sm:$0xf]
        %v412 = vld [vmem:[%s219 + $0x2b8] sm:$0xf]
        %v413 = vld [vmem:[%s219 + $0x2bc] sm:$0xf]
        %v414 = vld [vmem:[%s219 + $0x2c0] sm:$0xf]
        %v415 = vld [vmem:[%s219 + $0x2c4] sm:$0xf]
        %v416 = vld [vmem:[%s219 + $0x2c8] sm:$0xf]
        %v417 = vld [vmem:[%s219 + $0x2cc] sm:$0xf]
        %v418 = vld [vmem:[%s219 + $0x2d0] sm:$0xf]
        %v419 = vld [vmem:[%s219 + $0x2d4] sm:$0xf]
        %v420 = vld [vmem:[%s219 + $0x2d8] sm:$0xf]
        %v421 = vld [vmem:[%s219 + $0x2dc] sm:$0xf]
        %v422 = vld [vmem:[%s219 + $0x2e0] sm:$0xf]
        %v423 = vld [vmem:[%s219 + $0x2e4] sm:$0xf]
        %v424 = vld [vmem:[%s219 + $0x2e8] sm:$0xf]
        %v425 = vld [vmem:[%s219 + $0x2ec] sm:$0xf]
        %v426 = vld [vmem:[%s219 + $0x2f0] sm:$0xf]
        %v427 = vld [vmem:[%s219 + $0x2f4] sm:$0xf]
        %v428 = vld [vmem:[%s219 + $0x2f8] sm:$0xf]
        %v429 = vld [vmem:[%s219 + $0x2fc] sm:$0xf]
        %v430 = vld [vmem:[%s219 + $0x300] sm:$0xf]
        %v431 = vld [vmem:[%s219 + $0x304] sm:$0xf]
        %v432 = vld [vmem:[%s219 + $0x308] sm:$0xf]
        %v433 = vld [vmem:[%s219 + $0x30c] sm:$0xf]
        %v434 = vld [vmem:[%s219 + $0x310] sm:$0xf]
        %v435 = vld [vmem:[%s219 + $0x314] sm:$0xf]
        %v436 = vld [vmem:[%s219 + $0x318] sm:$0xf]
        %v437 = vld [vmem:[%s219 + $0x31c] sm:$0xf]
        %v438 = vld [vmem:[%s219 + $0x320] sm:$0xf]
        %v439 = vld [vmem:[%s219 + $0x324] sm:$0xf]
        %v440 = vld [vmem:[%s219 + $0x328] sm:$0xf]
        %v441 = vld [vmem:[%s219 + $0x32c] sm:$0xf]
        %v442 = vld [vmem:[%s219 + $0x330] sm:$0xf]
        %v443 = vld [vmem:[%s219 + $0x334] sm:$0xf]
        %v444 = vld [vmem:[%s219 + $0x338] sm:$0xf]
        %v445 = vld [vmem:[%s219 + $0x33c] sm:$0xf]
        %v446 = vld [vmem:[%s219 + $0x340] sm:$0xf]
        %v447 = vld [vmem:[%s219 + $0x344] sm:$0xf]
        %v448 = vld [vmem:[%s219 + $0x348] sm:$0xf]
        %v449 = vld [vmem:[%s219 + $0x34c] sm:$0xf]
        %v450 = vld [vmem:[%s219 + $0x350] sm:$0xf]
        %v451 = vld [vmem:[%s219 + $0x354] sm:$0xf]
        %v452 = vld [vmem:[%s219 + $0x358] sm:$0xf]
        %v453 = vld [vmem:[%s219 + $0x35c] sm:$0xf]
        %v454 = vld [vmem:[%s219 + $0x360] sm:$0xf]
        %v455 = vld [vmem:[%s219 + $0x364] sm:$0xf]
        %v456 = vld [vmem:[%s219 + $0x368] sm:$0xf]
        %v457 = vld [vmem:[%s219 + $0x36c] sm:$0xf]
        %v458 = vld [vmem:[%s219 + $0x370] sm:$0xf]
        %v459 = vld [vmem:[%s219 + $0x374] sm:$0xf]
        %v460 = vld [vmem:[%s219 + $0x378] sm:$0xf]
        %v461 = vld [vmem:[%s219 + $0x37c] sm:$0xf]
        %v462 = vld [vmem:[%s219 + $0x380] sm:$0xf]
        %v463 = vld [vmem:[%s219 + $0x384] sm:$0xf]
        %v464 = vld [vmem:[%s219 + $0x388] sm:$0xf]
        %v465 = vld [vmem:[%s219 + $0x38c] sm:$0xf]
        %v466 = vld [vmem:[%s219 + $0x390] sm:$0xf]
        %v467 = vld [vmem:[%s219 + $0x394] sm:$0xf]
        %v468 = vld [vmem:[%s219 + $0x398] sm:$0xf]
        %v469 = vld [vmem:[%s219 + $0x39c] sm:$0xf]
        %v470 = vld [vmem:[%s219 + $0x3a0] sm:$0xf]
        %v471 = vld [vmem:[%s219 + $0x3a4] sm:$0xf]
        %v472 = vld [vmem:[%s219 + $0x3a8] sm:$0xf]
        %v473 = vld [vmem:[%s219 + $0x3ac] sm:$0xf]
        %v474 = vld [vmem:[%s219 + $0x3b0] sm:$0xf]
        %v475 = vld [vmem:[%s219 + $0x3b4] sm:$0xf]
        %v476 = vld [vmem:[%s219 + $0x3b8] sm:$0xf]
        %v477 = vld [vmem:[%s219 + $0x3bc] sm:$0xf]
        %v478 = vld [vmem:[%s219 + $0x3c0] sm:$0xf]
        %v479 = vld [vmem:[%s219 + $0x3c4] sm:$0xf]
        %v480 = vld [vmem:[%s219 + $0x3c8] sm:$0xf]
        %v481 = vld [vmem:[%s219 + $0x3cc] sm:$0xf]
        %v482 = vld [vmem:[%s219 + $0x3d0] sm:$0xf]
        %v483 = vld [vmem:[%s219 + $0x3d4] sm:$0xf]
        %v484 = vld [vmem:[%s219 + $0x3d8] sm:$0xf]
        %v485 = vld [vmem:[%s219 + $0x3dc] sm:$0xf]
        %v486 = vld [vmem:[%s219 + $0x3e0] sm:$0xf]
        %v487 = vld [vmem:[%s219 + $0x3e4] sm:$0xf]
        %v488 = vld [vmem:[%s219 + $0x3e8] sm:$0xf]
        %v489 = vld [vmem:[%s219 + $0x3ec] sm:$0xf]
        %v490 = vld [vmem:[%s219 + $0x3f0] sm:$0xf]
        %v491 = vld [vmem:[%s219 + $0x3f4] sm:$0xf]
        %v492 = vld [vmem:[%s219 + $0x3f8] sm:$0xf]
        %v493 = vld [vmem:[%s219 + $0x3fc] sm:$0xf]
        %v494 = vld [vmem:[%s219 + $0x400] sm:$0xf]
        %v495 = vld [vmem:[%s219 + $0x404] sm:$0xf]
        %v496 = vld [vmem:[%s219 + $0x408] sm:$0xf]
        %v497 = vld [vmem:[%s219 + $0x40c] sm:$0xf]
        %v498 = vld [vmem:[%s219 + $0x410] sm:$0xf]
        %v499 = vld [vmem:[%s219 + $0x414] sm:$0xf]
        %v500 = vld [vmem:[%s219 + $0x418] sm:$0xf]
        %v501 = vld [vmem:[%s219 + $0x41c] sm:$0xf]
        %v502 = vld [vmem:[%s219 + $0x420] sm:$0xf]
        %v503 = vld [vmem:[%s219 + $0x424] sm:$0xf]
        %v504 = vld [vmem:[%s219 + $0x428] sm:$0xf]
        %v505 = vld [vmem:[%s219 + $0x42c] sm:$0xf]
        %v506 = vld [vmem:[%s219 + $0x430] sm:$0xf]
        %v507 = vld [vmem:[%s219 + $0x434] sm:$0xf]
        %v508 = vld [vmem:[%s219 + $0x438] sm:$0xf]
        %v509 = vld [vmem:[%s219 + $0x43c] sm:$0xf]
        %v510 = vld [vmem:[%s219 + $0x440] sm:$0xf]
        %v511 = vld [vmem:[%s219 + $0x444] sm:$0xf]
        %v512 = vld [vmem:[%s219 + $0x448] sm:$0xf]
        %v513 = vld [vmem:[%s219 + $0x44c] sm:$0xf]
        %v514 = vld [vmem:[%s219 + $0x450] sm:$0xf]
        %v515 = vld [vmem:[%s219 + $0x454] sm:$0xf]
        %v516 = vld [vmem:[%s219 + $0x458] sm:$0xf]
        %v517 = vld [vmem:[%s219 + $0x45c] sm:$0xf]
        %v518 = vld [vmem:[%s219 + $0x460] sm:$0xf]
        %v519 = vld [vmem:[%s219 + $0x464] sm:$0xf]
        %v520 = vld [vmem:[%s219 + $0x468] sm:$0xf]
        %v521 = vld [vmem:[%s219 + $0x46c] sm:$0xf]
        %v522 = vld [vmem:[%s219 + $0x470] sm:$0xf]
        %v523 = vld [vmem:[%s219 + $0x474] sm:$0xf]
        %v524 = vld [vmem:[%s219 + $0x478] sm:$0xf]
        %v525 = vld [vmem:[%s219 + $0x47c] sm:$0xf]
        %v526 = vld [vmem:[%s219 + $0x480] sm:$0xf]
        %v527 = vld [vmem:[%s219 + $0x484] sm:$0xf]
        %v528 = vld [vmem:[%s219 + $0x488] sm:$0xf]
        %v529 = vld [vmem:[%s219 + $0x48c] sm:$0xf]
        %v530 = vld [vmem:[%s219 + $0x490] sm:$0xf]
        %v531 = vld [vmem:[%s219 + $0x494] sm:$0xf]
        %v532 = vld [vmem:[%s219 + $0x498] sm:$0xf]
        %v533 = vld [vmem:[%s219 + $0x49c] sm:$0xf]
        %v534 = vld [vmem:[%s219 + $0x4a0] sm:$0xf]
        %v535 = vld [vmem:[%s219 + $0x4a4] sm:$0xf]
        %v536 = vld [vmem:[%s219 + $0x4a8] sm:$0xf]
        %v537 = vld [vmem:[%s219 + $0x4ac] sm:$0xf]
        %v538 = vld [vmem:[%s219 + $0x4b0] sm:$0xf]
        %v539 = vld [vmem:[%s219 + $0x4b4] sm:$0xf]
        %v540 = vld [vmem:[%s219 + $0x4b8] sm:$0xf]
        %v541 = vld [vmem:[%s219 + $0x4bc] sm:$0xf]
        %v542 = vld [vmem:[%s219 + $0x4c0] sm:$0xf]
        %v543 = vld [vmem:[%s219 + $0x4c4] sm:$0xf]
        %v544 = vld [vmem:[%s219 + $0x4c8] sm:$0xf]
        %v545 = vld [vmem:[%s219 + $0x4cc] sm:$0xf]
        %v546 = vld [vmem:[%s219 + $0x4d0] sm:$0xf]
        %v547 = vld [vmem:[%s219 + $0x4d4] sm:$0xf]
        %v548 = vld [vmem:[%s219 + $0x4d8] sm:$0xf]
        %v549 = vld [vmem:[%s219 + $0x4dc] sm:$0xf]
        %v550 = vld [vmem:[%s219 + $0x4e0] sm:$0xf]
        %v551 = vld [vmem:[%s219 + $0x4e4] sm:$0xf]
        %v552 = vld [vmem:[%s219 + $0x4e8] sm:$0xf]
        %v553 = vld [vmem:[%s219 + $0x4ec] sm:$0xf]
        %v554 = vld [vmem:[%s219 + $0x4f0] sm:$0xf]
        %v555 = vld [vmem:[%s219 + $0x4f4] sm:$0xf]
        %v556 = vld [vmem:[%s219 + $0x4f8] sm:$0xf]
        %v557 = vld [vmem:[%s219 + $0x4fc] sm:$0xf]
        %v558 = vld [vmem:[%s219 + $0x500] sm:$0xf]
        %v559 = vld [vmem:[%s219 + $0x504] sm:$0xf]
        %v560 = vld [vmem:[%s219 + $0x508] sm:$0xf]
        %v561 = vld [vmem:[%s219 + $0x50c] sm:$0xf]
        %v562 = vld [vmem:[%s219 + $0x510] sm:$0xf]
        %v563 = vld [vmem:[%s219 + $0x514] sm:$0xf]
        %v564 = vld [vmem:[%s219 + $0x518] sm:$0xf]
        %v565 = vld [vmem:[%s219 + $0x51c] sm:$0xf]
        %v566 = vld [vmem:[%s219 + $0x520] sm:$0xf]
        %v567 = vld [vmem:[%s219 + $0x524] sm:$0xf]
        %v568 = vld [vmem:[%s219 + $0x528] sm:$0xf]
        %v569 = vld [vmem:[%s219 + $0x52c] sm:$0xf]
        %v570 = vld [vmem:[%s219 + $0x530] sm:$0xf]
        %v571 = vld [vmem:[%s219 + $0x534] sm:$0xf]
        %v572 = vld [vmem:[%s219 + $0x538] sm:$0xf]
        %v573 = vld [vmem:[%s219 + $0x53c] sm:$0xf]
        %v574 = vld [vmem:[%s219 + $0x540] sm:$0xf]
        %v575 = vld [vmem:[%s219 + $0x544] sm:$0xf]
        %v576 = vld [vmem:[%s219 + $0x548] sm:$0xf]
        %v577 = vld [vmem:[%s219 + $0x54c] sm:$0xf]
        %v578 = vld [vmem:[%s219 + $0x550] sm:$0xf]
        %v579 = vld [vmem:[%s219 + $0x554] sm:$0xf]
        %v580 = vld [vmem:[%s219 + $0x558] sm:$0xf]
        %v581 = vld [vmem:[%s219 + $0x55c] sm:$0xf]
        %v582 = vld [vmem:[%s219 + $0x560] sm:$0xf]
        %v583 = vld [vmem:[%s219 + $0x564] sm:$0xf]
        %v584 = vld [vmem:[%s219 + $0x568] sm:$0xf]
        %v585 = vld [vmem:[%s219 + $0x56c] sm:$0xf]
        %v586 = vld [vmem:[%s219 + $0x570] sm:$0xf]
        %v587 = vld [vmem:[%s219 + $0x574] sm:$0xf]
        %v588 = vld [vmem:[%s219 + $0x578] sm:$0xf]
        %v589 = vld [vmem:[%s219 + $0x57c] sm:$0xf]
        %v590 = vld [vmem:[%s219 + $0x580] sm:$0xf]
        %v591 = vld [vmem:[%s219 + $0x584] sm:$0xf]
        %v592 = vld [vmem:[%s219 + $0x588] sm:$0xf]
        %v593 = vld [vmem:[%s219 + $0x58c] sm:$0xf]
        %v594 = vld [vmem:[%s219 + $0x590] sm:$0xf]
        %v595 = vld [vmem:[%s219 + $0x594] sm:$0xf]
        %v596 = vld [vmem:[%s219 + $0x598] sm:$0xf]
        %v597 = vld [vmem:[%s219 + $0x59c] sm:$0xf]
        %v598 = vld [vmem:[%s219 + $0x5a0] sm:$0xf]
        %v599 = vld [vmem:[%s219 + $0x5a4] sm:$0xf]
        %v600 = vld [vmem:[%s219 + $0x5a8] sm:$0xf]
        %v601 = vld [vmem:[%s219 + $0x5ac] sm:$0xf]
        %v602 = vld [vmem:[%s219 + $0x5b0] sm:$0xf]
        %v603 = vld [vmem:[%s219 + $0x5b4] sm:$0xf]
        %v604 = vld [vmem:[%s219 + $0x5b8] sm:$0xf]
        %v605 = vld [vmem:[%s219 + $0x5bc] sm:$0xf]
        %v606 = vld [vmem:[%s219 + $0x5c0] sm:$0xf]
        %v607 = vld [vmem:[%s219 + $0x5c4] sm:$0xf]
        %v608 = vld [vmem:[%s219 + $0x5c8] sm:$0xf]
        %v609 = vld [vmem:[%s219 + $0x5cc] sm:$0xf]
        %v610 = vld [vmem:[%s219 + $0x5d0] sm:$0xf]
        %v611 = vld [vmem:[%s219 + $0x5d4] sm:$0xf]
        %v612 = vld [vmem:[%s219 + $0x5d8] sm:$0xf]
        %v613 = vld [vmem:[%s219 + $0x5dc] sm:$0xf]
        %v614 = vld [vmem:[%s219 + $0x5e0] sm:$0xf]
        %v615 = vld [vmem:[%s219 + $0x5e4] sm:$0xf]
        %v616 = vld [vmem:[%s219 + $0x5e8] sm:$0xf]
        %v617 = vld [vmem:[%s219 + $0x5ec] sm:$0xf]
        %v618 = vld [vmem:[%s219 + $0x5f0] sm:$0xf]
        %v619 = vld [vmem:[%s219 + $0x5f4] sm:$0xf]
        %v620 = vld [vmem:[%s219 + $0x5f8] sm:$0xf]
        %v621 = vld [vmem:[%s219 + $0x5fc] sm:$0xf]
        %v622 = vld [vmem:[%s219 + $0x600] sm:$0xf]
        %v623 = vld [vmem:[%s219 + $0x604] sm:$0xf]
        %v624 = vld [vmem:[%s219 + $0x608] sm:$0xf]
        %v625 = vld [vmem:[%s219 + $0x60c] sm:$0xf]
        %v626 = vld [vmem:[%s219 + $0x610] sm:$0xf]
        %v627 = vld [vmem:[%s219 + $0x614] sm:$0xf]
        %v628 = vld [vmem:[%s219 + $0x618] sm:$0xf]
        %v629 = vld [vmem:[%s219 + $0x61c] sm:$0xf]
        %v630 = vld [vmem:[%s219 + $0x620] sm:$0xf]
        %v631 = vld [vmem:[%s219 + $0x624] sm:$0xf]
        %v632 = vld [vmem:[%s219 + $0x628] sm:$0xf]
        %v633 = vld [vmem:[%s219 + $0x62c] sm:$0xf]
        %v634 = vld [vmem:[%s219 + $0x630] sm:$0xf]
        %v635 = vld [vmem:[%s219 + $0x634] sm:$0xf]
        %v636 = vld [vmem:[%s219 + $0x638] sm:$0xf]
        %v637 = vld [vmem:[%s219 + $0x63c] sm:$0xf]
        %v638 = vld [vmem:[%s219 + $0x640] sm:$0xf]
        %v639 = vld [vmem:[%s219 + $0x644] sm:$0xf]
        %v640 = vld [vmem:[%s219 + $0x648] sm:$0xf]
        %v641 = vld [vmem:[%s219 + $0x64c] sm:$0xf]
        %v642 = vld [vmem:[%s219 + $0x650] sm:$0xf]
        %v643 = vld [vmem:[%s219 + $0x654] sm:$0xf]
        %v644 = vld [vmem:[%s219 + $0x658] sm:$0xf]
        %v645 = vld [vmem:[%s219 + $0x65c] sm:$0xf]
        %v646 = vld [vmem:[%s219 + $0x660] sm:$0xf]
        %v647 = vld [vmem:[%s219 + $0x664] sm:$0xf]
        %v648 = vld [vmem:[%s219 + $0x668] sm:$0xf]
        %v649 = vld [vmem:[%s219 + $0x66c] sm:$0xf]
        %v650 = vld [vmem:[%s219 + $0x670] sm:$0xf]
        %v651 = vld [vmem:[%s219 + $0x674] sm:$0xf]
        %v652 = vld [vmem:[%s219 + $0x678] sm:$0xf]
        %v653 = vld [vmem:[%s219 + $0x67c] sm:$0xf]
        %v654 = vld [vmem:[%s219 + $0x680] sm:$0xf]
        %v655 = vld [vmem:[%s219 + $0x684] sm:$0xf]
        %v656 = vld [vmem:[%s219 + $0x688] sm:$0xf]
        %v657 = vld [vmem:[%s219 + $0x68c] sm:$0xf]
        %v658 = vld [vmem:[%s219 + $0x690] sm:$0xf]
        %v659 = vld [vmem:[%s219 + $0x694] sm:$0xf]
        %v660 = vld [vmem:[%s219 + $0x698] sm:$0xf]
        %v661 = vld [vmem:[%s219 + $0x69c] sm:$0xf]
        %v662 = vld [vmem:[%s219 + $0x6a0] sm:$0xf]
        %v663 = vld [vmem:[%s219 + $0x6a4] sm:$0xf]
        %v664 = vld [vmem:[%s219 + $0x6a8] sm:$0xf]
        %v665 = vld [vmem:[%s219 + $0x6ac] sm:$0xf]
        %v666 = vld [vmem:[%s219 + $0x6b0] sm:$0xf]
        %v667 = vld [vmem:[%s219 + $0x6b4] sm:$0xf]
        %v668 = vld [vmem:[%s219 + $0x6b8] sm:$0xf]
        %v669 = vld [vmem:[%s219 + $0x6bc] sm:$0xf]
        %v670 = vld [vmem:[%s219 + $0x6c0] sm:$0xf]
        %v671 = vld [vmem:[%s219 + $0x6c4] sm:$0xf]
        %v672 = vld [vmem:[%s219 + $0x6c8] sm:$0xf]
        %v673 = vld [vmem:[%s219 + $0x6cc] sm:$0xf]
        %v674 = vld [vmem:[%s219 + $0x6d0] sm:$0xf]
        %v675 = vld [vmem:[%s219 + $0x6d4] sm:$0xf]
        %v676 = vld [vmem:[%s219 + $0x6d8] sm:$0xf]
        %v677 = vld [vmem:[%s219 + $0x6dc] sm:$0xf]
        %v678 = vld [vmem:[%s219 + $0x6e0] sm:$0xf]
        %v679 = vld [vmem:[%s219 + $0x6e4] sm:$0xf]
        %v680 = vld [vmem:[%s219 + $0x6e8] sm:$0xf]
        %v681 = vld [vmem:[%s219 + $0x6ec] sm:$0xf]
        %v682 = vld [vmem:[%s219 + $0x6f0] sm:$0xf]
        %v683 = vld [vmem:[%s219 + $0x6f4] sm:$0xf]
        %v684 = vld [vmem:[%s219 + $0x6f8] sm:$0xf]
        %v685 = vld [vmem:[%s219 + $0x6fc] sm:$0xf]
        %v686 = vld [vmem:[%s219 + $0x700] sm:$0xf]
        %v687 = vld [vmem:[%s219 + $0x704] sm:$0xf]
        %v688 = vld [vmem:[%s219 + $0x708] sm:$0xf]
        %v689 = vld [vmem:[%s219 + $0x70c] sm:$0xf]
        %v690 = vld [vmem:[%s219 + $0x710] sm:$0xf]
        %v691 = vld [vmem:[%s219 + $0x714] sm:$0xf]
        %v692 = vld [vmem:[%s219 + $0x718] sm:$0xf]
        %v693 = vld [vmem:[%s219 + $0x71c] sm:$0xf]
        %v694 = vld [vmem:[%s219 + $0x720] sm:$0xf]
        %v695 = vld [vmem:[%s219 + $0x724] sm:$0xf]
        %v696 = vld [vmem:[%s219 + $0x728] sm:$0xf]
        %v697 = vld [vmem:[%s219 + $0x72c] sm:$0xf]
        %v698 = vld [vmem:[%s219 + $0x730] sm:$0xf]
        %v699 = vld [vmem:[%s219 + $0x734] sm:$0xf]
        %v700 = vld [vmem:[%s219 + $0x738] sm:$0xf]
        %v701 = vld [vmem:[%s219 + $0x73c] sm:$0xf]
        %v702 = vld [vmem:[%s219 + $0x740] sm:$0xf]
        %v703 = vld [vmem:[%s219 + $0x744] sm:$0xf]
        %v704 = vld [vmem:[%s219 + $0x748] sm:$0xf]
        %v705 = vld [vmem:[%s219 + $0x74c] sm:$0xf]
        %v706 = vld [vmem:[%s219 + $0x750] sm:$0xf]
        %v707 = vld [vmem:[%s219 + $0x754] sm:$0xf]
        %v708 = vld [vmem:[%s219 + $0x758] sm:$0xf]
        %v709 = vld [vmem:[%s219 + $0x75c] sm:$0xf]
        %v710 = vld [vmem:[%s219 + $0x760] sm:$0xf]
        %v711 = vld [vmem:[%s219 + $0x764] sm:$0xf]
        %v712 = vld [vmem:[%s219 + $0x768] sm:$0xf]
        %v713 = vld [vmem:[%s219 + $0x76c] sm:$0xf]
        %v714 = vld [vmem:[%s219 + $0x770] sm:$0xf]
        %v715 = vld [vmem:[%s219 + $0x774] sm:$0xf]
        %v716 = vld [vmem:[%s219 + $0x778] sm:$0xf]
        %v717 = vld [vmem:[%s219 + $0x77c] sm:$0xf]
        %v718 = vld [vmem:[%s219 + $0x780] sm:$0xf]
        %v719 = vld [vmem:[%s219 + $0x784] sm:$0xf]
        %v720 = vld [vmem:[%s219 + $0x788] sm:$0xf]
        %v721 = vld [vmem:[%s219 + $0x78c] sm:$0xf]
        %v722 = vld [vmem:[%s219 + $0x790] sm:$0xf]
        %v723 = vld [vmem:[%s219 + $0x794] sm:$0xf]
        %v724 = vld [vmem:[%s219 + $0x798] sm:$0xf]
        %v725 = vld [vmem:[%s219 + $0x79c] sm:$0xf]
        %v726 = vld [vmem:[%s219 + $0x7a0] sm:$0xf]
        %v727 = vld [vmem:[%s219 + $0x7a4] sm:$0xf]
        %v728 = vld [vmem:[%s219 + $0x7a8] sm:$0xf]
        %v729 = vld [vmem:[%s219 + $0x7ac] sm:$0xf]
        %v730 = vld [vmem:[%s219 + $0x7b0] sm:$0xf]
        %v731 = vld [vmem:[%s219 + $0x7b4] sm:$0xf]
        %v732 = vld [vmem:[%s219 + $0x7b8] sm:$0xf]
        %v733 = vld [vmem:[%s219 + $0x7bc] sm:$0xf]
        %v734 = vld [vmem:[%s219 + $0x7c0] sm:$0xf]
        %v735 = vld [vmem:[%s219 + $0x7c4] sm:$0xf]
        %v736 = vld [vmem:[%s219 + $0x7c8] sm:$0xf]
        %v737 = vld [vmem:[%s219 + $0x7cc] sm:$0xf]
        %v738 = vld [vmem:[%s219 + $0x7d0] sm:$0xf]
        %v739 = vld [vmem:[%s219 + $0x7d4] sm:$0xf]
        %v740 = vld [vmem:[%s219 + $0x7d8] sm:$0xf]
        %v741 = vld [vmem:[%s219 + $0x7dc] sm:$0xf]
        %v742 = vld [vmem:[%s219 + $0x7e0] sm:$0xf]
        %v743 = vld [vmem:[%s219 + $0x7e4] sm:$0xf]
        %v744 = vld [vmem:[%s219 + $0x7e8] sm:$0xf]
        %v745 = vld [vmem:[%s219 + $0x7ec] sm:$0xf]
        %v746 = vld [vmem:[%s219 + $0x7f0] sm:$0xf]
        %v747 = vld [vmem:[%s219 + $0x7f4] sm:$0xf]
        %v748 = vld [vmem:[%s219 + $0x7f8] sm:$0xf]
        %v749 = vld [vmem:[%s219 + $0x7fc] sm:$0xf]
        %v750 = vld [vmem:[%s228] sm:$0xf]
        %v751 = vld [vmem:[%s228 + $0x4] sm:$0xf]
        %v752 = vld [vmem:[%s228 + $0x8] sm:$0xf]
        %v753 = vld [vmem:[%s228 + $0xc] sm:$0xf]
        %v754 = vld [vmem:[%s231] sm:$0x1]
        %v756 = vlaneseq
        %v757 = vshrl.u32 %v756, 7
        %v758 = vsub.s32 0, %v757
        %v759 = vrot.slane %v754, %v758
        %v1273 = vunpack.c.l.b16 %v238
        %v1274 = vunpack.c.l.b16 %v239
        %v1275 = vunpack.c.l.b16 %v240
        %v1276 = vunpack.c.l.b16 %v241
        %v1277 = vunpack.c.l.b16 %v242
        %v1278 = vunpack.c.l.b16 %v243
        %v1279 = vunpack.c.l.b16 %v244
        %v1280 = vunpack.c.l.b16 %v245
        %v1281 = vunpack.c.l.b16 %v246
        %v1282 = vunpack.c.l.b16 %v247
        %v1283 = vunpack.c.l.b16 %v248
        %v1284 = vunpack.c.l.b16 %v249
        %v1285 = vunpack.c.l.b16 %v250
        %v1286 = vunpack.c.l.b16 %v251
        %v1287 = vunpack.c.l.b16 %v252
        %v1288 = vunpack.c.l.b16 %v253
        %v1289 = vunpack.c.l.b16 %v254
        %v1290 = vunpack.c.l.b16 %v255
        %v1291 = vunpack.c.l.b16 %v256
        %v1292 = vunpack.c.l.b16 %v257
        %v1293 = vunpack.c.l.b16 %v258
        %v1294 = vunpack.c.l.b16 %v259
        %v1295 = vunpack.c.l.b16 %v260
        %v1296 = vunpack.c.l.b16 %v261
        %v1297 = vunpack.c.l.b16 %v262
        %v1298 = vunpack.c.l.b16 %v263
        %v1299 = vunpack.c.l.b16 %v264
        %v1300 = vunpack.c.l.b16 %v265
        %v1301 = vunpack.c.l.b16 %v266
        %v1302 = vunpack.c.l.b16 %v267
        %v1303 = vunpack.c.l.b16 %v268
        %v1304 = vunpack.c.l.b16 %v269
        %v1305 = vunpack.c.l.b16 %v270
        %v1306 = vunpack.c.l.b16 %v271
        %v1307 = vunpack.c.l.b16 %v272
        %v1308 = vunpack.c.l.b16 %v273
        %v1309 = vunpack.c.l.b16 %v274
        %v1310 = vunpack.c.l.b16 %v275
        %v1311 = vunpack.c.l.b16 %v276
        %v1312 = vunpack.c.l.b16 %v277
        %v1313 = vunpack.c.l.b16 %v278
        %v1314 = vunpack.c.l.b16 %v279
        %v1315 = vunpack.c.l.b16 %v280
        %v1316 = vunpack.c.l.b16 %v281
        %v1317 = vunpack.c.l.b16 %v282
        %v1318 = vunpack.c.l.b16 %v283
        %v1319 = vunpack.c.l.b16 %v284
        %v1320 = vunpack.c.l.b16 %v285
        %v1321 = vunpack.c.l.b16 %v286
        %v1322 = vunpack.c.l.b16 %v287
        %v1323 = vunpack.c.l.b16 %v288
        %v1324 = vunpack.c.l.b16 %v289
        %v1325 = vunpack.c.l.b16 %v290
        %v1326 = vunpack.c.l.b16 %v291
        %v1327 = vunpack.c.l.b16 %v292
        %v1328 = vunpack.c.l.b16 %v293
        %v1329 = vunpack.c.l.b16 %v294
        %v1330 = vunpack.c.l.b16 %v295
        %v1331 = vunpack.c.l.b16 %v296
        %v1332 = vunpack.c.l.b16 %v297
        %v1333 = vunpack.c.l.b16 %v298
        %v1334 = vunpack.c.l.b16 %v299
        %v1335 = vunpack.c.l.b16 %v300
        %v1336 = vunpack.c.l.b16 %v301
        %v1337 = vunpack.c.l.b16 %v302
        %v1338 = vunpack.c.l.b16 %v303
        %v1339 = vunpack.c.l.b16 %v304
        %v1340 = vunpack.c.l.b16 %v305
        %v1341 = vunpack.c.l.b16 %v306
        %v1342 = vunpack.c.l.b16 %v307
        %v1343 = vunpack.c.l.b16 %v308
        %v1344 = vunpack.c.l.b16 %v309
        %v1345 = vunpack.c.l.b16 %v310
        %v1346 = vunpack.c.l.b16 %v311
        %v1347 = vunpack.c.l.b16 %v312
        %v1348 = vunpack.c.l.b16 %v313
        %v1349 = vunpack.c.l.b16 %v314
        %v1350 = vunpack.c.l.b16 %v315
        %v1351 = vunpack.c.l.b16 %v316
        %v1352 = vunpack.c.l.b16 %v317
        %v1353 = vunpack.c.l.b16 %v318
        %v1354 = vunpack.c.l.b16 %v319
        %v1355 = vunpack.c.l.b16 %v320
        %v1356 = vunpack.c.l.b16 %v321
        %v1357 = vunpack.c.l.b16 %v322
        %v1358 = vunpack.c.l.b16 %v323
        %v1359 = vunpack.c.l.b16 %v324
        %v1360 = vunpack.c.l.b16 %v325
        %v1361 = vunpack.c.l.b16 %v326
        %v1362 = vunpack.c.l.b16 %v327
        %v1363 = vunpack.c.l.b16 %v328
        %v1364 = vunpack.c.l.b16 %v329
        %v1365 = vunpack.c.l.b16 %v330
        %v1366 = vunpack.c.l.b16 %v331
        %v1367 = vunpack.c.l.b16 %v332
        %v1368 = vunpack.c.l.b16 %v333
        %v1369 = vunpack.c.l.b16 %v334
        %v1370 = vunpack.c.l.b16 %v335
        %v1371 = vunpack.c.l.b16 %v336
        %v1372 = vunpack.c.l.b16 %v337
        %v1373 = vunpack.c.l.b16 %v338
        %v1374 = vunpack.c.l.b16 %v339
        %v1375 = vunpack.c.l.b16 %v340
        %v1376 = vunpack.c.l.b16 %v341
        %v1377 = vunpack.c.l.b16 %v342
        %v1378 = vunpack.c.l.b16 %v343
        %v1379 = vunpack.c.l.b16 %v344
        %v1380 = vunpack.c.l.b16 %v345
        %v1381 = vunpack.c.l.b16 %v346
        %v1382 = vunpack.c.l.b16 %v347
        %v1383 = vunpack.c.l.b16 %v348
        %v1384 = vunpack.c.l.b16 %v349
        %v1385 = vunpack.c.l.b16 %v350
        %v1386 = vunpack.c.l.b16 %v351
        %v1387 = vunpack.c.l.b16 %v352
        %v1388 = vunpack.c.l.b16 %v353
        %v1389 = vunpack.c.l.b16 %v354
        %v1390 = vunpack.c.l.b16 %v355
        %v1391 = vunpack.c.l.b16 %v356
        %v1392 = vunpack.c.l.b16 %v357
        %v1393 = vunpack.c.l.b16 %v358
        %v1394 = vunpack.c.l.b16 %v359
        %v1395 = vunpack.c.l.b16 %v360
        %v1396 = vunpack.c.l.b16 %v361
        %v1397 = vunpack.c.l.b16 %v362
        %v1398 = vunpack.c.l.b16 %v363
        %v1399 = vunpack.c.l.b16 %v364
        %v1400 = vunpack.c.l.b16 %v365
        %v1401 = vunpack.c.l.b16 %v366
        %v1402 = vunpack.c.l.b16 %v367
        %v1403 = vunpack.c.l.b16 %v368
        %v1404 = vunpack.c.l.b16 %v369
        %v1405 = vunpack.c.l.b16 %v370
        %v1406 = vunpack.c.l.b16 %v371
        %v1407 = vunpack.c.l.b16 %v372
        %v1408 = vunpack.c.l.b16 %v373
        %v1409 = vunpack.c.l.b16 %v374
        %v1410 = vunpack.c.l.b16 %v375
        %v1411 = vunpack.c.l.b16 %v376
        %v1412 = vunpack.c.l.b16 %v377
        %v1413 = vunpack.c.l.b16 %v378
        %v1414 = vunpack.c.l.b16 %v379
        %v1415 = vunpack.c.l.b16 %v380
        %v1416 = vunpack.c.l.b16 %v381
        %v1417 = vunpack.c.l.b16 %v382
        %v1418 = vunpack.c.l.b16 %v383
        %v1419 = vunpack.c.l.b16 %v384
        %v1420 = vunpack.c.l.b16 %v385
        %v1421 = vunpack.c.l.b16 %v386
        %v1422 = vunpack.c.l.b16 %v387
        %v1423 = vunpack.c.l.b16 %v388
        %v1424 = vunpack.c.l.b16 %v389
        %v1425 = vunpack.c.l.b16 %v390
        %v1426 = vunpack.c.l.b16 %v391
        %v1427 = vunpack.c.l.b16 %v392
        %v1428 = vunpack.c.l.b16 %v393
        %v1429 = vunpack.c.l.b16 %v394
        %v1430 = vunpack.c.l.b16 %v395
        %v1431 = vunpack.c.l.b16 %v396
        %v1432 = vunpack.c.l.b16 %v397
        %v1433 = vunpack.c.l.b16 %v398
        %v1434 = vunpack.c.l.b16 %v399
        %v1435 = vunpack.c.l.b16 %v400
        %v1436 = vunpack.c.l.b16 %v401
        %v1437 = vunpack.c.l.b16 %v402
        %v1438 = vunpack.c.l.b16 %v403
        %v1439 = vunpack.c.l.b16 %v404
        %v1440 = vunpack.c.l.b16 %v405
        %v1441 = vunpack.c.l.b16 %v406
        %v1442 = vunpack.c.l.b16 %v407
        %v1443 = vunpack.c.l.b16 %v408
        %v1444 = vunpack.c.l.b16 %v409
        %v1445 = vunpack.c.l.b16 %v410
        %v1446 = vunpack.c.l.b16 %v411
        %v1447 = vunpack.c.l.b16 %v412
        %v1448 = vunpack.c.l.b16 %v413
        %v1449 = vunpack.c.l.b16 %v414
        %v1450 = vunpack.c.l.b16 %v415
        %v1451 = vunpack.c.l.b16 %v416
        %v1452 = vunpack.c.l.b16 %v417
        %v1453 = vunpack.c.l.b16 %v418
        %v1454 = vunpack.c.l.b16 %v419
        %v1455 = vunpack.c.l.b16 %v420
        %v1456 = vunpack.c.l.b16 %v421
        %v1457 = vunpack.c.l.b16 %v422
        %v1458 = vunpack.c.l.b16 %v423
        %v1459 = vunpack.c.l.b16 %v424
        %v1460 = vunpack.c.l.b16 %v425
        %v1461 = vunpack.c.l.b16 %v426
        %v1462 = vunpack.c.l.b16 %v427
        %v1463 = vunpack.c.l.b16 %v428
        %v1464 = vunpack.c.l.b16 %v429
        %v1465 = vunpack.c.l.b16 %v430
        %v1466 = vunpack.c.l.b16 %v431
        %v1467 = vunpack.c.l.b16 %v432
        %v1468 = vunpack.c.l.b16 %v433
        %v1469 = vunpack.c.l.b16 %v434
        %v1470 = vunpack.c.l.b16 %v435
        %v1471 = vunpack.c.l.b16 %v436
        %v1472 = vunpack.c.l.b16 %v437
        %v1473 = vunpack.c.l.b16 %v438
        %v1474 = vunpack.c.l.b16 %v439
        %v1475 = vunpack.c.l.b16 %v440
        %v1476 = vunpack.c.l.b16 %v441
        %v1477 = vunpack.c.l.b16 %v442
        %v1478 = vunpack.c.l.b16 %v443
        %v1479 = vunpack.c.l.b16 %v444
        %v1480 = vunpack.c.l.b16 %v445
        %v1481 = vunpack.c.l.b16 %v446
        %v1482 = vunpack.c.l.b16 %v447
        %v1483 = vunpack.c.l.b16 %v448
        %v1484 = vunpack.c.l.b16 %v449
        %v1485 = vunpack.c.l.b16 %v450
        %v1486 = vunpack.c.l.b16 %v451
        %v1487 = vunpack.c.l.b16 %v452
        %v1488 = vunpack.c.l.b16 %v453
        %v1489 = vunpack.c.l.b16 %v454
        %v1490 = vunpack.c.l.b16 %v455
        %v1491 = vunpack.c.l.b16 %v456
        %v1492 = vunpack.c.l.b16 %v457
        %v1493 = vunpack.c.l.b16 %v458
        %v1494 = vunpack.c.l.b16 %v459
        %v1495 = vunpack.c.l.b16 %v460
        %v1496 = vunpack.c.l.b16 %v461
        %v1497 = vunpack.c.l.b16 %v462
        %v1498 = vunpack.c.l.b16 %v463
        %v1499 = vunpack.c.l.b16 %v464
        %v1500 = vunpack.c.l.b16 %v465
        %v1501 = vunpack.c.l.b16 %v466
        %v1502 = vunpack.c.l.b16 %v467
        %v1503 = vunpack.c.l.b16 %v468
        %v1504 = vunpack.c.l.b16 %v469
        %v1505 = vunpack.c.l.b16 %v470
        %v1506 = vunpack.c.l.b16 %v471
        %v1507 = vunpack.c.l.b16 %v472
        %v1508 = vunpack.c.l.b16 %v473
        %v1509 = vunpack.c.l.b16 %v474
        %v1510 = vunpack.c.l.b16 %v475
        %v1511 = vunpack.c.l.b16 %v476
        %v1512 = vunpack.c.l.b16 %v477
        %v1513 = vunpack.c.l.b16 %v478
        %v1514 = vunpack.c.l.b16 %v479
        %v1515 = vunpack.c.l.b16 %v480
        %v1516 = vunpack.c.l.b16 %v481
        %v1517 = vunpack.c.l.b16 %v482
        %v1518 = vunpack.c.l.b16 %v483
        %v1519 = vunpack.c.l.b16 %v484
        %v1520 = vunpack.c.l.b16 %v485
        %v1521 = vunpack.c.l.b16 %v486
        %v1522 = vunpack.c.l.b16 %v487
        %v1523 = vunpack.c.l.b16 %v488
        %v1524 = vunpack.c.l.b16 %v489
        %v1525 = vunpack.c.l.b16 %v490
        %v1526 = vunpack.c.l.b16 %v491
        %v1527 = vunpack.c.l.b16 %v492
        %v1528 = vunpack.c.l.b16 %v493
        %v1529 = vunpack.c.l.b16 %v494
        %v1530 = vunpack.c.l.b16 %v495
        %v1531 = vunpack.c.l.b16 %v496
        %v1532 = vunpack.c.l.b16 %v497
        %v1533 = vunpack.c.l.b16 %v498
        %v1534 = vunpack.c.l.b16 %v499
        %v1535 = vunpack.c.l.b16 %v500
        %v1536 = vunpack.c.l.b16 %v501
        %v1537 = vunpack.c.l.b16 %v502
        %v1538 = vunpack.c.l.b16 %v503
        %v1539 = vunpack.c.l.b16 %v504
        %v1540 = vunpack.c.l.b16 %v505
        %v1541 = vunpack.c.l.b16 %v506
        %v1542 = vunpack.c.l.b16 %v507
        %v1543 = vunpack.c.l.b16 %v508
        %v1544 = vunpack.c.l.b16 %v509
        %v1545 = vunpack.c.l.b16 %v510
        %v1546 = vunpack.c.l.b16 %v511
        %v1547 = vunpack.c.l.b16 %v512
        %v1548 = vunpack.c.l.b16 %v513
        %v1549 = vunpack.c.l.b16 %v514
        %v1550 = vunpack.c.l.b16 %v515
        %v1551 = vunpack.c.l.b16 %v516
        %v1552 = vunpack.c.l.b16 %v517
        %v1553 = vunpack.c.l.b16 %v518
        %v1554 = vunpack.c.l.b16 %v519
        %v1555 = vunpack.c.l.b16 %v520
        %v1556 = vunpack.c.l.b16 %v521
        %v1557 = vunpack.c.l.b16 %v522
        %v1558 = vunpack.c.l.b16 %v523
        %v1559 = vunpack.c.l.b16 %v524
        %v1560 = vunpack.c.l.b16 %v525
        %v1561 = vunpack.c.l.b16 %v526
        %v1562 = vunpack.c.l.b16 %v527
        %v1563 = vunpack.c.l.b16 %v528
        %v1564 = vunpack.c.l.b16 %v529
        %v1565 = vunpack.c.l.b16 %v530
        %v1566 = vunpack.c.l.b16 %v531
        %v1567 = vunpack.c.l.b16 %v532
        %v1568 = vunpack.c.l.b16 %v533
        %v1569 = vunpack.c.l.b16 %v534
        %v1570 = vunpack.c.l.b16 %v535
        %v1571 = vunpack.c.l.b16 %v536
        %v1572 = vunpack.c.l.b16 %v537
        %v1573 = vunpack.c.l.b16 %v538
        %v1574 = vunpack.c.l.b16 %v539
        %v1575 = vunpack.c.l.b16 %v540
        %v1576 = vunpack.c.l.b16 %v541
        %v1577 = vunpack.c.l.b16 %v542
        %v1578 = vunpack.c.l.b16 %v543
        %v1579 = vunpack.c.l.b16 %v544
        %v1580 = vunpack.c.l.b16 %v545
        %v1581 = vunpack.c.l.b16 %v546
        %v1582 = vunpack.c.l.b16 %v547
        %v1583 = vunpack.c.l.b16 %v548
        %v1584 = vunpack.c.l.b16 %v549
        %v1585 = vunpack.c.l.b16 %v550
        %v1586 = vunpack.c.l.b16 %v551
        %v1587 = vunpack.c.l.b16 %v552
        %v1588 = vunpack.c.l.b16 %v553
        %v1589 = vunpack.c.l.b16 %v554
        %v1590 = vunpack.c.l.b16 %v555
        %v1591 = vunpack.c.l.b16 %v556
        %v1592 = vunpack.c.l.b16 %v557
        %v1593 = vunpack.c.l.b16 %v558
        %v1594 = vunpack.c.l.b16 %v559
        %v1595 = vunpack.c.l.b16 %v560
        %v1596 = vunpack.c.l.b16 %v561
        %v1597 = vunpack.c.l.b16 %v562
        %v1598 = vunpack.c.l.b16 %v563
        %v1599 = vunpack.c.l.b16 %v564
        %v1600 = vunpack.c.l.b16 %v565
        %v1601 = vunpack.c.l.b16 %v566
        %v1602 = vunpack.c.l.b16 %v567
        %v1603 = vunpack.c.l.b16 %v568
        %v1604 = vunpack.c.l.b16 %v569
        %v1605 = vunpack.c.l.b16 %v570
        %v1606 = vunpack.c.l.b16 %v571
        %v1607 = vunpack.c.l.b16 %v572
        %v1608 = vunpack.c.l.b16 %v573
        %v1609 = vunpack.c.l.b16 %v574
        %v1610 = vunpack.c.l.b16 %v575
        %v1611 = vunpack.c.l.b16 %v576
        %v1612 = vunpack.c.l.b16 %v577
        %v1613 = vunpack.c.l.b16 %v578
        %v1614 = vunpack.c.l.b16 %v579
        %v1615 = vunpack.c.l.b16 %v580
        %v1616 = vunpack.c.l.b16 %v581
        %v1617 = vunpack.c.l.b16 %v582
        %v1618 = vunpack.c.l.b16 %v583
        %v1619 = vunpack.c.l.b16 %v584
        %v1620 = vunpack.c.l.b16 %v585
        %v1621 = vunpack.c.l.b16 %v586
        %v1622 = vunpack.c.l.b16 %v587
        %v1623 = vunpack.c.l.b16 %v588
        %v1624 = vunpack.c.l.b16 %v589
        %v1625 = vunpack.c.l.b16 %v590
        %v1626 = vunpack.c.l.b16 %v591
        %v1627 = vunpack.c.l.b16 %v592
        %v1628 = vunpack.c.l.b16 %v593
        %v1629 = vunpack.c.l.b16 %v594
        %v1630 = vunpack.c.l.b16 %v595
        %v1631 = vunpack.c.l.b16 %v596
        %v1632 = vunpack.c.l.b16 %v597
        %v1633 = vunpack.c.l.b16 %v598
        %v1634 = vunpack.c.l.b16 %v599
        %v1635 = vunpack.c.l.b16 %v600
        %v1636 = vunpack.c.l.b16 %v601
        %v1637 = vunpack.c.l.b16 %v602
        %v1638 = vunpack.c.l.b16 %v603
        %v1639 = vunpack.c.l.b16 %v604
        %v1640 = vunpack.c.l.b16 %v605
        %v1641 = vunpack.c.l.b16 %v606
        %v1642 = vunpack.c.l.b16 %v607
        %v1643 = vunpack.c.l.b16 %v608
        %v1644 = vunpack.c.l.b16 %v609
        %v1645 = vunpack.c.l.b16 %v610
        %v1646 = vunpack.c.l.b16 %v611
        %v1647 = vunpack.c.l.b16 %v612
        %v1648 = vunpack.c.l.b16 %v613
        %v1649 = vunpack.c.l.b16 %v614
        %v1650 = vunpack.c.l.b16 %v615
        %v1651 = vunpack.c.l.b16 %v616
        %v1652 = vunpack.c.l.b16 %v617
        %v1653 = vunpack.c.l.b16 %v618
        %v1654 = vunpack.c.l.b16 %v619
        %v1655 = vunpack.c.l.b16 %v620
        %v1656 = vunpack.c.l.b16 %v621
        %v1657 = vunpack.c.l.b16 %v622
        %v1658 = vunpack.c.l.b16 %v623
        %v1659 = vunpack.c.l.b16 %v624
        %v1660 = vunpack.c.l.b16 %v625
        %v1661 = vunpack.c.l.b16 %v626
        %v1662 = vunpack.c.l.b16 %v627
        %v1663 = vunpack.c.l.b16 %v628
        %v1664 = vunpack.c.l.b16 %v629
        %v1665 = vunpack.c.l.b16 %v630
        %v1666 = vunpack.c.l.b16 %v631
        %v1667 = vunpack.c.l.b16 %v632
        %v1668 = vunpack.c.l.b16 %v633
        %v1669 = vunpack.c.l.b16 %v634
        %v1670 = vunpack.c.l.b16 %v635
        %v1671 = vunpack.c.l.b16 %v636
        %v1672 = vunpack.c.l.b16 %v637
        %v1673 = vunpack.c.l.b16 %v638
        %v1674 = vunpack.c.l.b16 %v639
        %v1675 = vunpack.c.l.b16 %v640
        %v1676 = vunpack.c.l.b16 %v641
        %v1677 = vunpack.c.l.b16 %v642
        %v1678 = vunpack.c.l.b16 %v643
        %v1679 = vunpack.c.l.b16 %v644
        %v1680 = vunpack.c.l.b16 %v645
        %v1681 = vunpack.c.l.b16 %v646
        %v1682 = vunpack.c.l.b16 %v647
        %v1683 = vunpack.c.l.b16 %v648
        %v1684 = vunpack.c.l.b16 %v649
        %v1685 = vunpack.c.l.b16 %v650
        %v1686 = vunpack.c.l.b16 %v651
        %v1687 = vunpack.c.l.b16 %v652
        %v1688 = vunpack.c.l.b16 %v653
        %v1689 = vunpack.c.l.b16 %v654
        %v1690 = vunpack.c.l.b16 %v655
        %v1691 = vunpack.c.l.b16 %v656
        %v1692 = vunpack.c.l.b16 %v657
        %v1693 = vunpack.c.l.b16 %v658
        %v1694 = vunpack.c.l.b16 %v659
        %v1695 = vunpack.c.l.b16 %v660
        %v1696 = vunpack.c.l.b16 %v661
        %v1697 = vunpack.c.l.b16 %v662
        %v1698 = vunpack.c.l.b16 %v663
        %v1699 = vunpack.c.l.b16 %v664
        %v1700 = vunpack.c.l.b16 %v665
        %v1701 = vunpack.c.l.b16 %v666
        %v1702 = vunpack.c.l.b16 %v667
        %v1703 = vunpack.c.l.b16 %v668
        %v1704 = vunpack.c.l.b16 %v669
        %v1705 = vunpack.c.l.b16 %v670
        %v1706 = vunpack.c.l.b16 %v671
        %v1707 = vunpack.c.l.b16 %v672
        %v1708 = vunpack.c.l.b16 %v673
        %v1709 = vunpack.c.l.b16 %v674
        %v1710 = vunpack.c.l.b16 %v675
        %v1711 = vunpack.c.l.b16 %v676
        %v1712 = vunpack.c.l.b16 %v677
        %v1713 = vunpack.c.l.b16 %v678
        %v1714 = vunpack.c.l.b16 %v679
        %v1715 = vunpack.c.l.b16 %v680
        %v1716 = vunpack.c.l.b16 %v681
        %v1717 = vunpack.c.l.b16 %v682
        %v1718 = vunpack.c.l.b16 %v683
        %v1719 = vunpack.c.l.b16 %v684
        %v1720 = vunpack.c.l.b16 %v685
        %v1721 = vunpack.c.l.b16 %v686
        %v1722 = vunpack.c.l.b16 %v687
        %v1723 = vunpack.c.l.b16 %v688
        %v1724 = vunpack.c.l.b16 %v689
        %v1725 = vunpack.c.l.b16 %v690
        %v1726 = vunpack.c.l.b16 %v691
        %v1727 = vunpack.c.l.b16 %v692
        %v1728 = vunpack.c.l.b16 %v693
        %v1729 = vunpack.c.l.b16 %v694
        %v1730 = vunpack.c.l.b16 %v695
        %v1731 = vunpack.c.l.b16 %v696
        %v1732 = vunpack.c.l.b16 %v697
        %v1733 = vunpack.c.l.b16 %v698
        %v1734 = vunpack.c.l.b16 %v699
        %v1735 = vunpack.c.l.b16 %v700
        %v1736 = vunpack.c.l.b16 %v701
        %v1737 = vunpack.c.l.b16 %v702
        %v1738 = vunpack.c.l.b16 %v703
        %v1739 = vunpack.c.l.b16 %v704
        %v1740 = vunpack.c.l.b16 %v705
        %v1741 = vunpack.c.l.b16 %v706
        %v1742 = vunpack.c.l.b16 %v707
        %v1743 = vunpack.c.l.b16 %v708
        %v1744 = vunpack.c.l.b16 %v709
        %v1745 = vunpack.c.l.b16 %v710
        %v1746 = vunpack.c.l.b16 %v711
        %v1747 = vunpack.c.l.b16 %v712
        %v1748 = vunpack.c.l.b16 %v713
        %v1749 = vunpack.c.l.b16 %v714
        %v1750 = vunpack.c.l.b16 %v715
        %v1751 = vunpack.c.l.b16 %v716
        %v1752 = vunpack.c.l.b16 %v717
        %v1753 = vunpack.c.l.b16 %v718
        %v1754 = vunpack.c.l.b16 %v719
        %v1755 = vunpack.c.l.b16 %v720
        %v1756 = vunpack.c.l.b16 %v721
        %v1757 = vunpack.c.l.b16 %v722
        %v1758 = vunpack.c.l.b16 %v723
        %v1759 = vunpack.c.l.b16 %v724
        %v1760 = vunpack.c.l.b16 %v725
        %v1761 = vunpack.c.l.b16 %v726
        %v1762 = vunpack.c.l.b16 %v727
        %v1763 = vunpack.c.l.b16 %v728
        %v1764 = vunpack.c.l.b16 %v729
        %v1765 = vunpack.c.l.b16 %v730
        %v1766 = vunpack.c.l.b16 %v731
        %v1767 = vunpack.c.l.b16 %v732
        %v1768 = vunpack.c.l.b16 %v733
        %v1769 = vunpack.c.l.b16 %v734
        %v1770 = vunpack.c.l.b16 %v735
        %v1771 = vunpack.c.l.b16 %v736
        %v1772 = vunpack.c.l.b16 %v737
        %v1773 = vunpack.c.l.b16 %v738
        %v1774 = vunpack.c.l.b16 %v739
        %v1775 = vunpack.c.l.b16 %v740
        %v1776 = vunpack.c.l.b16 %v741
        %v1777 = vunpack.c.l.b16 %v742
        %v1778 = vunpack.c.l.b16 %v743
        %v1779 = vunpack.c.l.b16 %v744
        %v1780 = vunpack.c.l.b16 %v745
        %v1781 = vunpack.c.l.b16 %v746
        %v1782 = vunpack.c.l.b16 %v747
        %v1783 = vunpack.c.l.b16 %v748
        %v1784 = vunpack.c.l.b16 %v749
        %v1785 = vpack.c.b16 %v1274, %v1273
        %v1786 = vpack.c.b16 %v1276, %v1275
        %v1787 = vpack.c.b16 %v1278, %v1277
        %v1788 = vpack.c.b16 %v1280, %v1279
        %v1789 = vpack.c.b16 %v1282, %v1281
        %v1790 = vpack.c.b16 %v1284, %v1283
        %v1791 = vpack.c.b16 %v1286, %v1285
        %v1792 = vpack.c.b16 %v1288, %v1287
        %v1793 = vpack.c.b16 %v1290, %v1289
        %v1794 = vpack.c.b16 %v1292, %v1291
        %v1795 = vpack.c.b16 %v1294, %v1293
        %v1796 = vpack.c.b16 %v1296, %v1295
        %v1797 = vpack.c.b16 %v1298, %v1297
        %v1798 = vpack.c.b16 %v1300, %v1299
        %v1799 = vpack.c.b16 %v1302, %v1301
        %v1800 = vpack.c.b16 %v1304, %v1303
        %v1801 = vpack.c.b16 %v1306, %v1305
        %v1802 = vpack.c.b16 %v1308, %v1307
        %v1803 = vpack.c.b16 %v1310, %v1309
        %v1804 = vpack.c.b16 %v1312, %v1311
        %v1805 = vpack.c.b16 %v1314, %v1313
        %v1806 = vpack.c.b16 %v1316, %v1315
        %v1807 = vpack.c.b16 %v1318, %v1317
        %v1808 = vpack.c.b16 %v1320, %v1319
        %v1809 = vpack.c.b16 %v1322, %v1321
        %v1810 = vpack.c.b16 %v1324, %v1323
        %v1811 = vpack.c.b16 %v1326, %v1325
        %v1812 = vpack.c.b16 %v1328, %v1327
        %v1813 = vpack.c.b16 %v1330, %v1329
        %v1814 = vpack.c.b16 %v1332, %v1331
        %v1815 = vpack.c.b16 %v1334, %v1333
        %v1816 = vpack.c.b16 %v1336, %v1335
        %v1817 = vpack.c.b16 %v1338, %v1337
        %v1818 = vpack.c.b16 %v1340, %v1339
        %v1819 = vpack.c.b16 %v1342, %v1341
        %v1820 = vpack.c.b16 %v1344, %v1343
        %v1821 = vpack.c.b16 %v1346, %v1345
        %v1822 = vpack.c.b16 %v1348, %v1347
        %v1823 = vpack.c.b16 %v1350, %v1349
        %v1824 = vpack.c.b16 %v1352, %v1351
        %v1825 = vpack.c.b16 %v1354, %v1353
        %v1826 = vpack.c.b16 %v1356, %v1355
        %v1827 = vpack.c.b16 %v1358, %v1357
        %v1828 = vpack.c.b16 %v1360, %v1359
        %v1829 = vpack.c.b16 %v1362, %v1361
        %v1830 = vpack.c.b16 %v1364, %v1363
        %v1831 = vpack.c.b16 %v1366, %v1365
        %v1832 = vpack.c.b16 %v1368, %v1367
        %v1833 = vpack.c.b16 %v1370, %v1369
        %v1834 = vpack.c.b16 %v1372, %v1371
        %v1835 = vpack.c.b16 %v1374, %v1373
        %v1836 = vpack.c.b16 %v1376, %v1375
        %v1837 = vpack.c.b16 %v1378, %v1377
        %v1838 = vpack.c.b16 %v1380, %v1379
        %v1839 = vpack.c.b16 %v1382, %v1381
        %v1840 = vpack.c.b16 %v1384, %v1383
        %v1841 = vpack.c.b16 %v1386, %v1385
        %v1842 = vpack.c.b16 %v1388, %v1387
        %v1843 = vpack.c.b16 %v1390, %v1389
        %v1844 = vpack.c.b16 %v1392, %v1391
        %v1845 = vpack.c.b16 %v1394, %v1393
        %v1846 = vpack.c.b16 %v1396, %v1395
        %v1847 = vpack.c.b16 %v1398, %v1397
        %v1848 = vpack.c.b16 %v1400, %v1399
        %v1849 = vpack.c.b16 %v1402, %v1401
        %v1850 = vpack.c.b16 %v1404, %v1403
        %v1851 = vpack.c.b16 %v1406, %v1405
        %v1852 = vpack.c.b16 %v1408, %v1407
        %v1853 = vpack.c.b16 %v1410, %v1409
        %v1854 = vpack.c.b16 %v1412, %v1411
        %v1855 = vpack.c.b16 %v1414, %v1413
        %v1856 = vpack.c.b16 %v1416, %v1415
        %v1857 = vpack.c.b16 %v1418, %v1417
        %v1858 = vpack.c.b16 %v1420, %v1419
        %v1859 = vpack.c.b16 %v1422, %v1421
        %v1860 = vpack.c.b16 %v1424, %v1423
        %v1861 = vpack.c.b16 %v1426, %v1425
        %v1862 = vpack.c.b16 %v1428, %v1427
        %v1863 = vpack.c.b16 %v1430, %v1429
        %v1864 = vpack.c.b16 %v1432, %v1431
        %v1865 = vpack.c.b16 %v1434, %v1433
        %v1866 = vpack.c.b16 %v1436, %v1435
        %v1867 = vpack.c.b16 %v1438, %v1437
        %v1868 = vpack.c.b16 %v1440, %v1439
        %v1869 = vpack.c.b16 %v1442, %v1441
        %v1870 = vpack.c.b16 %v1444, %v1443
        %v1871 = vpack.c.b16 %v1446, %v1445
        %v1872 = vpack.c.b16 %v1448, %v1447
        %v1873 = vpack.c.b16 %v1450, %v1449
        %v1874 = vpack.c.b16 %v1452, %v1451
        %v1875 = vpack.c.b16 %v1454, %v1453
        %v1876 = vpack.c.b16 %v1456, %v1455
        %v1877 = vpack.c.b16 %v1458, %v1457
        %v1878 = vpack.c.b16 %v1460, %v1459
        %v1879 = vpack.c.b16 %v1462, %v1461
        %v1880 = vpack.c.b16 %v1464, %v1463
        %v1881 = vpack.c.b16 %v1466, %v1465
        %v1882 = vpack.c.b16 %v1468, %v1467
        %v1883 = vpack.c.b16 %v1470, %v1469
        %v1884 = vpack.c.b16 %v1472, %v1471
        %v1885 = vpack.c.b16 %v1474, %v1473
        %v1886 = vpack.c.b16 %v1476, %v1475
        %v1887 = vpack.c.b16 %v1478, %v1477
        %v1888 = vpack.c.b16 %v1480, %v1479
        %v1889 = vpack.c.b16 %v1482, %v1481
        %v1890 = vpack.c.b16 %v1484, %v1483
        %v1891 = vpack.c.b16 %v1486, %v1485
        %v1892 = vpack.c.b16 %v1488, %v1487
        %v1893 = vpack.c.b16 %v1490, %v1489
        %v1894 = vpack.c.b16 %v1492, %v1491
        %v1895 = vpack.c.b16 %v1494, %v1493
        %v1896 = vpack.c.b16 %v1496, %v1495
        %v1897 = vpack.c.b16 %v1498, %v1497
        %v1898 = vpack.c.b16 %v1500, %v1499
        %v1899 = vpack.c.b16 %v1502, %v1501
        %v1900 = vpack.c.b16 %v1504, %v1503
        %v1901 = vpack.c.b16 %v1506, %v1505
        %v1902 = vpack.c.b16 %v1508, %v1507
        %v1903 = vpack.c.b16 %v1510, %v1509
        %v1904 = vpack.c.b16 %v1512, %v1511
        %v1905 = vpack.c.b16 %v1514, %v1513
        %v1906 = vpack.c.b16 %v1516, %v1515
        %v1907 = vpack.c.b16 %v1518, %v1517
        %v1908 = vpack.c.b16 %v1520, %v1519
        %v1909 = vpack.c.b16 %v1522, %v1521
        %v1910 = vpack.c.b16 %v1524, %v1523
        %v1911 = vpack.c.b16 %v1526, %v1525
        %v1912 = vpack.c.b16 %v1528, %v1527
        %v1913 = vpack.c.b16 %v1530, %v1529
        %v1914 = vpack.c.b16 %v1532, %v1531
        %v1915 = vpack.c.b16 %v1534, %v1533
        %v1916 = vpack.c.b16 %v1536, %v1535
        %v1917 = vpack.c.b16 %v1538, %v1537
        %v1918 = vpack.c.b16 %v1540, %v1539
        %v1919 = vpack.c.b16 %v1542, %v1541
        %v1920 = vpack.c.b16 %v1544, %v1543
        %v1921 = vpack.c.b16 %v1546, %v1545
        %v1922 = vpack.c.b16 %v1548, %v1547
        %v1923 = vpack.c.b16 %v1550, %v1549
        %v1924 = vpack.c.b16 %v1552, %v1551
        %v1925 = vpack.c.b16 %v1554, %v1553
        %v1926 = vpack.c.b16 %v1556, %v1555
        %v1927 = vpack.c.b16 %v1558, %v1557
        %v1928 = vpack.c.b16 %v1560, %v1559
        %v1929 = vpack.c.b16 %v1562, %v1561
        %v1930 = vpack.c.b16 %v1564, %v1563
        %v1931 = vpack.c.b16 %v1566, %v1565
        %v1932 = vpack.c.b16 %v1568, %v1567
        %v1933 = vpack.c.b16 %v1570, %v1569
        %v1934 = vpack.c.b16 %v1572, %v1571
        %v1935 = vpack.c.b16 %v1574, %v1573
        %v1936 = vpack.c.b16 %v1576, %v1575
        %v1937 = vpack.c.b16 %v1578, %v1577
        %v1938 = vpack.c.b16 %v1580, %v1579
        %v1939 = vpack.c.b16 %v1582, %v1581
        %v1940 = vpack.c.b16 %v1584, %v1583
        %v1941 = vpack.c.b16 %v1586, %v1585
        %v1942 = vpack.c.b16 %v1588, %v1587
        %v1943 = vpack.c.b16 %v1590, %v1589
        %v1944 = vpack.c.b16 %v1592, %v1591
        %v1945 = vpack.c.b16 %v1594, %v1593
        %v1946 = vpack.c.b16 %v1596, %v1595
        %v1947 = vpack.c.b16 %v1598, %v1597
        %v1948 = vpack.c.b16 %v1600, %v1599
        %v1949 = vpack.c.b16 %v1602, %v1601
        %v1950 = vpack.c.b16 %v1604, %v1603
        %v1951 = vpack.c.b16 %v1606, %v1605
        %v1952 = vpack.c.b16 %v1608, %v1607
        %v1953 = vpack.c.b16 %v1610, %v1609
        %v1954 = vpack.c.b16 %v1612, %v1611
        %v1955 = vpack.c.b16 %v1614, %v1613
        %v1956 = vpack.c.b16 %v1616, %v1615
        %v1957 = vpack.c.b16 %v1618, %v1617
        %v1958 = vpack.c.b16 %v1620, %v1619
        %v1959 = vpack.c.b16 %v1622, %v1621
        %v1960 = vpack.c.b16 %v1624, %v1623
        %v1961 = vpack.c.b16 %v1626, %v1625
        %v1962 = vpack.c.b16 %v1628, %v1627
        %v1963 = vpack.c.b16 %v1630, %v1629
        %v1964 = vpack.c.b16 %v1632, %v1631
        %v1965 = vpack.c.b16 %v1634, %v1633
        %v1966 = vpack.c.b16 %v1636, %v1635
        %v1967 = vpack.c.b16 %v1638, %v1637
        %v1968 = vpack.c.b16 %v1640, %v1639
        %v1969 = vpack.c.b16 %v1642, %v1641
        %v1970 = vpack.c.b16 %v1644, %v1643
        %v1971 = vpack.c.b16 %v1646, %v1645
        %v1972 = vpack.c.b16 %v1648, %v1647
        %v1973 = vpack.c.b16 %v1650, %v1649
        %v1974 = vpack.c.b16 %v1652, %v1651
        %v1975 = vpack.c.b16 %v1654, %v1653
        %v1976 = vpack.c.b16 %v1656, %v1655
        %v1977 = vpack.c.b16 %v1658, %v1657
        %v1978 = vpack.c.b16 %v1660, %v1659
        %v1979 = vpack.c.b16 %v1662, %v1661
        %v1980 = vpack.c.b16 %v1664, %v1663
        %v1981 = vpack.c.b16 %v1666, %v1665
        %v1982 = vpack.c.b16 %v1668, %v1667
        %v1983 = vpack.c.b16 %v1670, %v1669
        %v1984 = vpack.c.b16 %v1672, %v1671
        %v1985 = vpack.c.b16 %v1674, %v1673
        %v1986 = vpack.c.b16 %v1676, %v1675
        %v1987 = vpack.c.b16 %v1678, %v1677
        %v1988 = vpack.c.b16 %v1680, %v1679
        %v1989 = vpack.c.b16 %v1682, %v1681
        %v1990 = vpack.c.b16 %v1684, %v1683
        %v1991 = vpack.c.b16 %v1686, %v1685
        %v1992 = vpack.c.b16 %v1688, %v1687
        %v1993 = vpack.c.b16 %v1690, %v1689
        %v1994 = vpack.c.b16 %v1692, %v1691
        %v1995 = vpack.c.b16 %v1694, %v1693
        %v1996 = vpack.c.b16 %v1696, %v1695
        %v1997 = vpack.c.b16 %v1698, %v1697
        %v1998 = vpack.c.b16 %v1700, %v1699
        %v1999 = vpack.c.b16 %v1702, %v1701
        %v2000 = vpack.c.b16 %v1704, %v1703
        %v2001 = vpack.c.b16 %v1706, %v1705
        %v2002 = vpack.c.b16 %v1708, %v1707
        %v2003 = vpack.c.b16 %v1710, %v1709
        %v2004 = vpack.c.b16 %v1712, %v1711
        %v2005 = vpack.c.b16 %v1714, %v1713
        %v2006 = vpack.c.b16 %v1716, %v1715
        %v2007 = vpack.c.b16 %v1718, %v1717
        %v2008 = vpack.c.b16 %v1720, %v1719
        %v2009 = vpack.c.b16 %v1722, %v1721
        %v2010 = vpack.c.b16 %v1724, %v1723
        %v2011 = vpack.c.b16 %v1726, %v1725
        %v2012 = vpack.c.b16 %v1728, %v1727
        %v2013 = vpack.c.b16 %v1730, %v1729
        %v2014 = vpack.c.b16 %v1732, %v1731
        %v2015 = vpack.c.b16 %v1734, %v1733
        %v2016 = vpack.c.b16 %v1736, %v1735
        %v2017 = vpack.c.b16 %v1738, %v1737
        %v2018 = vpack.c.b16 %v1740, %v1739
        %v2019 = vpack.c.b16 %v1742, %v1741
        %v2020 = vpack.c.b16 %v1744, %v1743
        %v2021 = vpack.c.b16 %v1746, %v1745
        %v2022 = vpack.c.b16 %v1748, %v1747
        %v2023 = vpack.c.b16 %v1750, %v1749
        %v2024 = vpack.c.b16 %v1752, %v1751
        %v2025 = vpack.c.b16 %v1754, %v1753
        %v2026 = vpack.c.b16 %v1756, %v1755
        %v2027 = vpack.c.b16 %v1758, %v1757
        %v2028 = vpack.c.b16 %v1760, %v1759
        %v2029 = vpack.c.b16 %v1762, %v1761
        %v2030 = vpack.c.b16 %v1764, %v1763
        %v2031 = vpack.c.b16 %v1766, %v1765
        %v2032 = vpack.c.b16 %v1768, %v1767
        %v2033 = vpack.c.b16 %v1770, %v1769
        %v2034 = vpack.c.b16 %v1772, %v1771
        %v2035 = vpack.c.b16 %v1774, %v1773
        %v2036 = vpack.c.b16 %v1776, %v1775
        %v2037 = vpack.c.b16 %v1778, %v1777
        %v2038 = vpack.c.b16 %v1780, %v1779
        %v2039 = vpack.c.b16 %v1782, %v1781
        %v2040 = vpack.c.b16 %v1784, %v1783
        %v2045 = vunpack.c.l.b16 %v750
        %v2046 = vunpack.c.l.b16 %v751
        %v2047 = vunpack.c.l.b16 %v752
        %v2048 = vunpack.c.l.b16 %v753
        %v2049 = vpack.c.b16 %v2046, %v2045
        %v2050 = vpack.c.b16 %v2048, %v2047
        %vm2053 = vcmask 261120
        %v2055 = vsel %vm2053, %v1785, 0
        %v2058 = vsel %vm2053, %v1786, 0
        %v2061 = vsel %vm2053, %v1787, 0
        %v2064 = vsel %vm2053, %v1788, 0
        %v2067 = vsel %vm2053, %v1789, 0
        %v2070 = vsel %vm2053, %v1790, 0
        %v2073 = vsel %vm2053, %v1791, 0
        %v2076 = vsel %vm2053, %v1792, 0
        %v2079 = vsel %vm2053, %v1793, 0
        %v2082 = vsel %vm2053, %v1794, 0
        %v2085 = vsel %vm2053, %v1795, 0
        %v2088 = vsel %vm2053, %v1796, 0
        %v2091 = vsel %vm2053, %v1797, 0
        %v2094 = vsel %vm2053, %v1798, 0
        %v2097 = vsel %vm2053, %v1799, 0
        %v2100 = vsel %vm2053, %v1800, 0
        %v2103 = vsel %vm2053, %v1801, 0
        %v2106 = vsel %vm2053, %v1802, 0
        %v2109 = vsel %vm2053, %v1803, 0
        %v2112 = vsel %vm2053, %v1804, 0
        %v2115 = vsel %vm2053, %v1805, 0
        %v2118 = vsel %vm2053, %v1806, 0
        %v2121 = vsel %vm2053, %v1807, 0
        %v2124 = vsel %vm2053, %v1808, 0
        %v2127 = vsel %vm2053, %v1809, 0
        %v2130 = vsel %vm2053, %v1810, 0
        %v2133 = vsel %vm2053, %v1811, 0
        %v2136 = vsel %vm2053, %v1812, 0
        %v2139 = vsel %vm2053, %v1813, 0
        %v2142 = vsel %vm2053, %v1814, 0
        %v2145 = vsel %vm2053, %v1815, 0
        %v2148 = vsel %vm2053, %v1816, 0
        %v2151 = vsel %vm2053, %v1817, 0
        %v2154 = vsel %vm2053, %v1818, 0
        %v2157 = vsel %vm2053, %v1819, 0
        %v2160 = vsel %vm2053, %v1820, 0
        %v2163 = vsel %vm2053, %v1821, 0
        %v2166 = vsel %vm2053, %v1822, 0
        %v2169 = vsel %vm2053, %v1823, 0
        %v2172 = vsel %vm2053, %v1824, 0
        %v2175 = vsel %vm2053, %v1825, 0
        %v2178 = vsel %vm2053, %v1826, 0
        %v2181 = vsel %vm2053, %v1827, 0
        %v2184 = vsel %vm2053, %v1828, 0
        %v2187 = vsel %vm2053, %v1829, 0
        %v2190 = vsel %vm2053, %v1830, 0
        %v2193 = vsel %vm2053, %v1831, 0
        %v2196 = vsel %vm2053, %v1832, 0
        %v2199 = vsel %vm2053, %v1833, 0
        %v2202 = vsel %vm2053, %v1834, 0
        %v2205 = vsel %vm2053, %v1835, 0
        %v2208 = vsel %vm2053, %v1836, 0
        %v2211 = vsel %vm2053, %v1837, 0
        %v2214 = vsel %vm2053, %v1838, 0
        %v2217 = vsel %vm2053, %v1839, 0
        %v2220 = vsel %vm2053, %v1840, 0
        %v2223 = vsel %vm2053, %v1841, 0
        %v2226 = vsel %vm2053, %v1842, 0
        %v2229 = vsel %vm2053, %v1843, 0
        %v2232 = vsel %vm2053, %v1844, 0
        %v2235 = vsel %vm2053, %v1845, 0
        %v2238 = vsel %vm2053, %v1846, 0
        %v2241 = vsel %vm2053, %v1847, 0
        %v2244 = vsel %vm2053, %v1848, 0
        %v2247 = vsel %vm2053, %v1849, 0
        %v2250 = vsel %vm2053, %v1850, 0
        %v2253 = vsel %vm2053, %v1851, 0
        %v2256 = vsel %vm2053, %v1852, 0
        %v2259 = vsel %vm2053, %v1853, 0
        %v2262 = vsel %vm2053, %v1854, 0
        %v2265 = vsel %vm2053, %v1855, 0
        %v2268 = vsel %vm2053, %v1856, 0
        %v2271 = vsel %vm2053, %v1857, 0
        %v2274 = vsel %vm2053, %v1858, 0
        %v2277 = vsel %vm2053, %v1859, 0
        %v2280 = vsel %vm2053, %v1860, 0
        %v2283 = vsel %vm2053, %v1861, 0
        %v2286 = vsel %vm2053, %v1862, 0
        %v2289 = vsel %vm2053, %v1863, 0
        %v2292 = vsel %vm2053, %v1864, 0
        %v2295 = vsel %vm2053, %v1865, 0
        %v2298 = vsel %vm2053, %v1866, 0
        %v2301 = vsel %vm2053, %v1867, 0
        %v2304 = vsel %vm2053, %v1868, 0
        %v2307 = vsel %vm2053, %v1869, 0
        %v2310 = vsel %vm2053, %v1870, 0
        %v2313 = vsel %vm2053, %v1871, 0
        %v2316 = vsel %vm2053, %v1872, 0
        %v2319 = vsel %vm2053, %v1873, 0
        %v2322 = vsel %vm2053, %v1874, 0
        %v2325 = vsel %vm2053, %v1875, 0
        %v2328 = vsel %vm2053, %v1876, 0
        %v2331 = vsel %vm2053, %v1877, 0
        %v2334 = vsel %vm2053, %v1878, 0
        %v2337 = vsel %vm2053, %v1879, 0
        %v2340 = vsel %vm2053, %v1880, 0
        %v2343 = vsel %vm2053, %v1881, 0
        %v2346 = vsel %vm2053, %v1882, 0
        %v2349 = vsel %vm2053, %v1883, 0
        %v2352 = vsel %vm2053, %v1884, 0
        %v2355 = vsel %vm2053, %v1885, 0
        %v2358 = vsel %vm2053, %v1886, 0
        %v2361 = vsel %vm2053, %v1887, 0
        %v2364 = vsel %vm2053, %v1888, 0
        %v2367 = vsel %vm2053, %v1889, 0
        %v2370 = vsel %vm2053, %v1890, 0
        %v2373 = vsel %vm2053, %v1891, 0
        %v2376 = vsel %vm2053, %v1892, 0
        %v2379 = vsel %vm2053, %v1893, 0
        %v2382 = vsel %vm2053, %v1894, 0
        %v2385 = vsel %vm2053, %v1895, 0
        %v2388 = vsel %vm2053, %v1896, 0
        %v2391 = vsel %vm2053, %v1897, 0
        %v2394 = vsel %vm2053, %v1898, 0
        %v2397 = vsel %vm2053, %v1899, 0
        %v2400 = vsel %vm2053, %v1900, 0
        %v2403 = vsel %vm2053, %v1901, 0
        %v2406 = vsel %vm2053, %v1902, 0
        %v2409 = vsel %vm2053, %v1903, 0
        %v2412 = vsel %vm2053, %v1904, 0
        %v2415 = vsel %vm2053, %v1905, 0
        %v2418 = vsel %vm2053, %v1906, 0
        %v2421 = vsel %vm2053, %v1907, 0
        %v2424 = vsel %vm2053, %v1908, 0
        %v2427 = vsel %vm2053, %v1909, 0
        %v2430 = vsel %vm2053, %v1910, 0
        %v2433 = vsel %vm2053, %v1911, 0
        %v2436 = vsel %vm2053, %v1912, 0
        %v2439 = vsel %vm2053, %v1913, 0
        %v2442 = vsel %vm2053, %v1914, 0
        %v2445 = vsel %vm2053, %v1915, 0
        %v2448 = vsel %vm2053, %v1916, 0
        %v2451 = vsel %vm2053, %v1917, 0
        %v2454 = vsel %vm2053, %v1918, 0
        %v2457 = vsel %vm2053, %v1919, 0
        %v2460 = vsel %vm2053, %v1920, 0
        %v2463 = vsel %vm2053, %v1921, 0
        %v2466 = vsel %vm2053, %v1922, 0
        %v2469 = vsel %vm2053, %v1923, 0
        %v2472 = vsel %vm2053, %v1924, 0
        %v2475 = vsel %vm2053, %v1925, 0
        %v2478 = vsel %vm2053, %v1926, 0
        %v2481 = vsel %vm2053, %v1927, 0
        %v2484 = vsel %vm2053, %v1928, 0
        %v2487 = vsel %vm2053, %v1929, 0
        %v2490 = vsel %vm2053, %v1930, 0
        %v2493 = vsel %vm2053, %v1931, 0
        %v2496 = vsel %vm2053, %v1932, 0
        %v2499 = vsel %vm2053, %v1933, 0
        %v2502 = vsel %vm2053, %v1934, 0
        %v2505 = vsel %vm2053, %v1935, 0
        %v2508 = vsel %vm2053, %v1936, 0
        %v2511 = vsel %vm2053, %v1937, 0
        %v2514 = vsel %vm2053, %v1938, 0
        %v2517 = vsel %vm2053, %v1939, 0
        %v2520 = vsel %vm2053, %v1940, 0
        %v2523 = vsel %vm2053, %v1941, 0
        %v2526 = vsel %vm2053, %v1942, 0
        %v2529 = vsel %vm2053, %v1943, 0
        %v2532 = vsel %vm2053, %v1944, 0
        %v2535 = vsel %vm2053, %v1945, 0
        %v2538 = vsel %vm2053, %v1946, 0
        %v2541 = vsel %vm2053, %v1947, 0
        %v2544 = vsel %vm2053, %v1948, 0
        %v2547 = vsel %vm2053, %v1949, 0
        %v2550 = vsel %vm2053, %v1950, 0
        %v2553 = vsel %vm2053, %v1951, 0
        %v2556 = vsel %vm2053, %v1952, 0
        %v2559 = vsel %vm2053, %v1953, 0
        %v2562 = vsel %vm2053, %v1954, 0
        %v2565 = vsel %vm2053, %v1955, 0
        %v2568 = vsel %vm2053, %v1956, 0
        %v2571 = vsel %vm2053, %v1957, 0
        %v2574 = vsel %vm2053, %v1958, 0
        %v2577 = vsel %vm2053, %v1959, 0
        %v2580 = vsel %vm2053, %v1960, 0
        %v2583 = vsel %vm2053, %v1961, 0
        %v2586 = vsel %vm2053, %v1962, 0
        %v2589 = vsel %vm2053, %v1963, 0
        %v2592 = vsel %vm2053, %v1964, 0
        %v2595 = vsel %vm2053, %v1965, 0
        %v2598 = vsel %vm2053, %v1966, 0
        %v2601 = vsel %vm2053, %v1967, 0
        %v2604 = vsel %vm2053, %v1968, 0
        %v2607 = vsel %vm2053, %v1969, 0
        %v2610 = vsel %vm2053, %v1970, 0
        %v2613 = vsel %vm2053, %v1971, 0
        %v2616 = vsel %vm2053, %v1972, 0
        %v2619 = vsel %vm2053, %v1973, 0
        %v2622 = vsel %vm2053, %v1974, 0
        %v2625 = vsel %vm2053, %v1975, 0
        %v2628 = vsel %vm2053, %v1976, 0
        %v2631 = vsel %vm2053, %v1977, 0
        %v2634 = vsel %vm2053, %v1978, 0
        %v2637 = vsel %vm2053, %v1979, 0
        %v2640 = vsel %vm2053, %v1980, 0
        %v2643 = vsel %vm2053, %v1981, 0
        %v2646 = vsel %vm2053, %v1982, 0
        %v2649 = vsel %vm2053, %v1983, 0
        %v2652 = vsel %vm2053, %v1984, 0
        %v2655 = vsel %vm2053, %v1985, 0
        %v2658 = vsel %vm2053, %v1986, 0
        %v2661 = vsel %vm2053, %v1987, 0
        %v2664 = vsel %vm2053, %v1988, 0
        %v2667 = vsel %vm2053, %v1989, 0
        %v2670 = vsel %vm2053, %v1990, 0
        %v2673 = vsel %vm2053, %v1991, 0
        %v2676 = vsel %vm2053, %v1992, 0
        %v2679 = vsel %vm2053, %v1993, 0
        %v2682 = vsel %vm2053, %v1994, 0
        %v2685 = vsel %vm2053, %v1995, 0
        %v2688 = vsel %vm2053, %v1996, 0
        %v2691 = vsel %vm2053, %v1997, 0
        %v2694 = vsel %vm2053, %v1998, 0
        %v2697 = vsel %vm2053, %v1999, 0
        %v2700 = vsel %vm2053, %v2000, 0
        %v2703 = vsel %vm2053, %v2001, 0
        %v2706 = vsel %vm2053, %v2002, 0
        %v2709 = vsel %vm2053, %v2003, 0
        %v2712 = vsel %vm2053, %v2004, 0
        %v2715 = vsel %vm2053, %v2005, 0
        %v2718 = vsel %vm2053, %v2006, 0
        %v2721 = vsel %vm2053, %v2007, 0
        %v2724 = vsel %vm2053, %v2008, 0
        %v2727 = vsel %vm2053, %v2009, 0
        %v2730 = vsel %vm2053, %v2010, 0
        %v2733 = vsel %vm2053, %v2011, 0
        %v2736 = vsel %vm2053, %v2012, 0
        %v2739 = vsel %vm2053, %v2013, 0
        %v2742 = vsel %vm2053, %v2014, 0
        %v2745 = vsel %vm2053, %v2015, 0
        %v2748 = vsel %vm2053, %v2016, 0
        %v2751 = vsel %vm2053, %v2017, 0
        %v2754 = vsel %vm2053, %v2018, 0
        %v2757 = vsel %vm2053, %v2019, 0
        %v2760 = vsel %vm2053, %v2020, 0
        %v2763 = vsel %vm2053, %v2021, 0
        %v2766 = vsel %vm2053, %v2022, 0
        %v2769 = vsel %vm2053, %v2023, 0
        %v2772 = vsel %vm2053, %v2024, 0
        %v2775 = vsel %vm2053, %v2025, 0
        %v2778 = vsel %vm2053, %v2026, 0
        %v2781 = vsel %vm2053, %v2027, 0
        %v2784 = vsel %vm2053, %v2028, 0
        %v2787 = vsel %vm2053, %v2029, 0
        %v2790 = vsel %vm2053, %v2030, 0
        %v2793 = vsel %vm2053, %v2031, 0
        %v2796 = vsel %vm2053, %v2032, 0
        %v2799 = vsel %vm2053, %v2033, 0
        %v2802 = vsel %vm2053, %v2034, 0
        %v2805 = vsel %vm2053, %v2035, 0
        %v2808 = vsel %vm2053, %v2036, 0
        %v2811 = vsel %vm2053, %v2037, 0
        %v2814 = vsel %vm2053, %v2038, 0
        %v2817 = vsel %vm2053, %v2039, 0
        %v2820 = vsel %vm2053, %v2040, 0
        %2822 = vmatprep.subr.bf16.mxu0 0
        %2823 = vmatpush1.bf16.msra.mxu0 0
        %2824 = vmatprep.subr.bf16.mxu0 0
        %2825 = vmatpush1.bf16.msra.mxu0 0
        %2826 = vmatprep.subr.bf16.mxu0 0
        %2827 = vmatpush1.bf16.msra.mxu0 0
        %2828 = vmatprep.subr.bf16.mxu0 0
        %2829 = vmatpush1.bf16.msra.mxu0 0
        %2830 = vmatprep.subr.bf16.mxu0 0
        %2831 = vmatpush1.bf16.msra.mxu0 0
        %2832 = vmatprep.subr.bf16.mxu0 0
        %2833 = vmatpush1.bf16.msra.mxu0 0
        %2834 = vmatprep.subr.bf16.mxu0 0
        %2835 = vmatpush1.bf16.msra.mxu0 %v2050
        %2836 = vmatprep.subr.bf16.mxu0 0
        %2837 = vmatpush1.bf16.msra.mxu0 %v2049
        %2838 = vmatprep.subr.bf16.mxu0 0
        %2839 = vmatpush2.bf16.msra.mxu0 0
        %2840 = vmatprep.subr.bf16.mxu0 0
        %2841 = vmatpush2.bf16.msra.mxu0 0
        %2842 = vmatprep.subr.bf16.mxu0 0
        %2843 = vmatpush2.bf16.msra.mxu0 0
        %2844 = vmatprep.subr.bf16.mxu0 0
        %2845 = vmatpush2.bf16.msra.mxu0 0
        %2846 = vmatprep.subr.bf16.mxu0 0
        %2847 = vmatpush2.bf16.msra.mxu0 0
        %2848 = vmatprep.subr.bf16.mxu0 0
        %2849 = vmatpush2.bf16.msra.mxu0 0
        %2850 = vmatprep.subr.bf16.mxu0 0
        %2851 = vmatpush2.bf16.msra.mxu0 0
        %2852 = vmatprep.subr.bf16.mxu0 0
        %2853 = vmatpush2.bf16.msra.mxu0 0
        %2854 = vmatprep.mubr.bf16.mxu0 0
        %2855 = vmatmul.mubr.bf16.gmra.mxu0 %v2055
        %v2856 = vpop.f32.mrf.mxu0
        %v2857 = vadd.f32 %v759, %v2856
        %v2858 = vpop.f32.mrf.mxu0
        %v2859 = vpop.f32.mrf.mxu0
        %v2860 = vadd.f32 %v759, %v2859
        %v2861 = vpop.f32.mrf.mxu0
        %2862 = vmatprep.mubr.bf16.mxu0 0
        %2863 = vmatmul.mubr.bf16.gmra.mxu0 %v2058
        %v2864 = vpop.f32.mrf.mxu0
        %v2865 = vadd.f32 %v759, %v2864
        %v2866 = vpop.f32.mrf.mxu0
        %v2867 = vpop.f32.mrf.mxu0
        %v2868 = vadd.f32 %v759, %v2867
        %v2869 = vpop.f32.mrf.mxu0
        %2870 = vmatprep.mubr.bf16.mxu0 0
        %2871 = vmatmul.mubr.bf16.gmra.mxu0 %v2061
        %v2872 = vpop.f32.mrf.mxu0
        %v2873 = vadd.f32 %v759, %v2872
        %v2874 = vpop.f32.mrf.mxu0
        %v2875 = vpop.f32.mrf.mxu0
        %v2876 = vadd.f32 %v759, %v2875
        %v2877 = vpop.f32.mrf.mxu0
        %2878 = vmatprep.mubr.bf16.mxu0 0
        %2879 = vmatmul.mubr.bf16.gmra.mxu0 %v2064
        %v2880 = vpop.f32.mrf.mxu0
        %v2881 = vadd.f32 %v759, %v2880
        %v2882 = vpop.f32.mrf.mxu0
        %v2883 = vpop.f32.mrf.mxu0
        %v2884 = vadd.f32 %v759, %v2883
        %v2885 = vpop.f32.mrf.mxu0
        %2886 = vmatprep.mubr.bf16.mxu0 0
        %2887 = vmatmul.mubr.bf16.gmra.mxu0 %v2067
        %v2888 = vpop.f32.mrf.mxu0
        %v2889 = vadd.f32 %v759, %v2888
        %v2890 = vpop.f32.mrf.mxu0
        %v2891 = vpop.f32.mrf.mxu0
        %v2892 = vadd.f32 %v759, %v2891
        %v2893 = vpop.f32.mrf.mxu0
        %2894 = vmatprep.mubr.bf16.mxu0 0
        %2895 = vmatmul.mubr.bf16.gmra.mxu0 %v2070
        %v2896 = vpop.f32.mrf.mxu0
        %v2897 = vadd.f32 %v759, %v2896
        %v2898 = vpop.f32.mrf.mxu0
        %v2899 = vpop.f32.mrf.mxu0
        %v2900 = vadd.f32 %v759, %v2899
        %v2901 = vpop.f32.mrf.mxu0
        %2902 = vmatprep.mubr.bf16.mxu0 0
        %2903 = vmatmul.mubr.bf16.gmra.mxu0 %v2073
        %v2904 = vpop.f32.mrf.mxu0
        %v2905 = vadd.f32 %v759, %v2904
        %v2906 = vpop.f32.mrf.mxu0
        %v2907 = vpop.f32.mrf.mxu0
        %v2908 = vadd.f32 %v759, %v2907
        %v2909 = vpop.f32.mrf.mxu0
        %2910 = vmatprep.mubr.bf16.mxu0 0
        %2911 = vmatmul.mubr.bf16.gmra.mxu0 %v2076
        %v2912 = vpop.f32.mrf.mxu0
        %v2913 = vadd.f32 %v759, %v2912
        %v2914 = vpop.f32.mrf.mxu0
        %v2915 = vpop.f32.mrf.mxu0
        %v2916 = vadd.f32 %v759, %v2915
        %v2917 = vpop.f32.mrf.mxu0
        %2918 = vmatprep.mubr.bf16.mxu0 0
        %2919 = vmatmul.mubr.bf16.gmra.mxu0 %v2079
        %v2920 = vpop.f32.mrf.mxu0
        %v2921 = vadd.f32 %v759, %v2920
        %v2922 = vpop.f32.mrf.mxu0
        %v2923 = vpop.f32.mrf.mxu0
        %v2924 = vadd.f32 %v759, %v2923
        %v2925 = vpop.f32.mrf.mxu0
        %2926 = vmatprep.mubr.bf16.mxu0 0
        %2927 = vmatmul.mubr.bf16.gmra.mxu0 %v2082
        %v2928 = vpop.f32.mrf.mxu0
        %v2929 = vadd.f32 %v759, %v2928
        %v2930 = vpop.f32.mrf.mxu0
        %v2931 = vpop.f32.mrf.mxu0
        %v2932 = vadd.f32 %v759, %v2931
        %v2933 = vpop.f32.mrf.mxu0
        %2934 = vmatprep.mubr.bf16.mxu0 0
        %2935 = vmatmul.mubr.bf16.gmra.mxu0 %v2085
        %v2936 = vpop.f32.mrf.mxu0
        %v2937 = vadd.f32 %v759, %v2936
        %v2938 = vpop.f32.mrf.mxu0
        %v2939 = vpop.f32.mrf.mxu0
        %v2940 = vadd.f32 %v759, %v2939
        %v2941 = vpop.f32.mrf.mxu0
        %2942 = vmatprep.mubr.bf16.mxu0 0
        %2943 = vmatmul.mubr.bf16.gmra.mxu0 %v2088
        %v2944 = vpop.f32.mrf.mxu0
        %v2945 = vadd.f32 %v759, %v2944
        %v2946 = vpop.f32.mrf.mxu0
        %v2947 = vpop.f32.mrf.mxu0
        %v2948 = vadd.f32 %v759, %v2947
        %v2949 = vpop.f32.mrf.mxu0
        %2950 = vmatprep.mubr.bf16.mxu0 0
        %2951 = vmatmul.mubr.bf16.gmra.mxu0 %v2091
        %v2952 = vpop.f32.mrf.mxu0
        %v2953 = vadd.f32 %v759, %v2952
        %v2954 = vpop.f32.mrf.mxu0
        %v2955 = vpop.f32.mrf.mxu0
        %v2956 = vadd.f32 %v759, %v2955
        %v2957 = vpop.f32.mrf.mxu0
        %2958 = vmatprep.mubr.bf16.mxu0 0
        %2959 = vmatmul.mubr.bf16.gmra.mxu0 %v2094
        %v2960 = vpop.f32.mrf.mxu0
        %v2961 = vadd.f32 %v759, %v2960
        %v2962 = vpop.f32.mrf.mxu0
        %v2963 = vpop.f32.mrf.mxu0
        %v2964 = vadd.f32 %v759, %v2963
        %v2965 = vpop.f32.mrf.mxu0
        %2966 = vmatprep.mubr.bf16.mxu0 0
        %2967 = vmatmul.mubr.bf16.gmra.mxu0 %v2097
        %v2968 = vpop.f32.mrf.mxu0
        %v2969 = vadd.f32 %v759, %v2968
        %v2970 = vpop.f32.mrf.mxu0
        %v2971 = vpop.f32.mrf.mxu0
        %v2972 = vadd.f32 %v759, %v2971
        %v2973 = vpop.f32.mrf.mxu0
        %2974 = vmatprep.mubr.bf16.mxu0 0
        %2975 = vmatmul.mubr.bf16.gmra.mxu0 %v2100
        %v2976 = vpop.f32.mrf.mxu0
        %v2977 = vadd.f32 %v759, %v2976
        %v2978 = vpop.f32.mrf.mxu0
        %v2979 = vpop.f32.mrf.mxu0
        %v2980 = vadd.f32 %v759, %v2979
        %v2981 = vpop.f32.mrf.mxu0
        %2982 = vmatprep.mubr.bf16.mxu0 0
        %2983 = vmatmul.mubr.bf16.gmra.mxu0 %v2103
        %v2984 = vpop.f32.mrf.mxu0
        %v2985 = vadd.f32 %v759, %v2984
        %v2986 = vpop.f32.mrf.mxu0
        %v2987 = vpop.f32.mrf.mxu0
        %v2988 = vadd.f32 %v759, %v2987
        %v2989 = vpop.f32.mrf.mxu0
        %2990 = vmatprep.mubr.bf16.mxu0 0
        %2991 = vmatmul.mubr.bf16.gmra.mxu0 %v2106
        %v2992 = vpop.f32.mrf.mxu0
        %v2993 = vadd.f32 %v759, %v2992
        %v2994 = vpop.f32.mrf.mxu0
        %v2995 = vpop.f32.mrf.mxu0
        %v2996 = vadd.f32 %v759, %v2995
        %v2997 = vpop.f32.mrf.mxu0
        %2998 = vmatprep.mubr.bf16.mxu0 0
        %2999 = vmatmul.mubr.bf16.gmra.mxu0 %v2109
        %v3000 = vpop.f32.mrf.mxu0
        %v3001 = vadd.f32 %v759, %v3000
        %v3002 = vpop.f32.mrf.mxu0
        %v3003 = vpop.f32.mrf.mxu0
        %v3004 = vadd.f32 %v759, %v3003
        %v3005 = vpop.f32.mrf.mxu0
        %3006 = vmatprep.mubr.bf16.mxu0 0
        %3007 = vmatmul.mubr.bf16.gmra.mxu0 %v2112
        %v3008 = vpop.f32.mrf.mxu0
        %v3009 = vadd.f32 %v759, %v3008
        %v3010 = vpop.f32.mrf.mxu0
        %v3011 = vpop.f32.mrf.mxu0
        %v3012 = vadd.f32 %v759, %v3011
        %v3013 = vpop.f32.mrf.mxu0
        %3014 = vmatprep.mubr.bf16.mxu0 0
        %3015 = vmatmul.mubr.bf16.gmra.mxu0 %v2115
        %v3016 = vpop.f32.mrf.mxu0
        %v3017 = vadd.f32 %v759, %v3016
        %v3018 = vpop.f32.mrf.mxu0
        %v3019 = vpop.f32.mrf.mxu0
        %v3020 = vadd.f32 %v759, %v3019
        %v3021 = vpop.f32.mrf.mxu0
        %3022 = vmatprep.mubr.bf16.mxu0 0
        %3023 = vmatmul.mubr.bf16.gmra.mxu0 %v2118
        %v3024 = vpop.f32.mrf.mxu0
        %v3025 = vadd.f32 %v759, %v3024
        %v3026 = vpop.f32.mrf.mxu0
        %v3027 = vpop.f32.mrf.mxu0
        %v3028 = vadd.f32 %v759, %v3027
        %v3029 = vpop.f32.mrf.mxu0
        %3030 = vmatprep.mubr.bf16.mxu0 0
        %3031 = vmatmul.mubr.bf16.gmra.mxu0 %v2121
        %v3032 = vpop.f32.mrf.mxu0
        %v3033 = vadd.f32 %v759, %v3032
        %v3034 = vpop.f32.mrf.mxu0
        %v3035 = vpop.f32.mrf.mxu0
        %v3036 = vadd.f32 %v759, %v3035
        %v3037 = vpop.f32.mrf.mxu0
        %3038 = vmatprep.mubr.bf16.mxu0 0
        %3039 = vmatmul.mubr.bf16.gmra.mxu0 %v2124
        %v3040 = vpop.f32.mrf.mxu0
        %v3041 = vadd.f32 %v759, %v3040
        %v3042 = vpop.f32.mrf.mxu0
        %v3043 = vpop.f32.mrf.mxu0
        %v3044 = vadd.f32 %v759, %v3043
        %v3045 = vpop.f32.mrf.mxu0
        %3046 = vmatprep.mubr.bf16.mxu0 0
        %3047 = vmatmul.mubr.bf16.gmra.mxu0 %v2127
        %v3048 = vpop.f32.mrf.mxu0
        %v3049 = vadd.f32 %v759, %v3048
        %v3050 = vpop.f32.mrf.mxu0
        %v3051 = vpop.f32.mrf.mxu0
        %v3052 = vadd.f32 %v759, %v3051
        %v3053 = vpop.f32.mrf.mxu0
        %3054 = vmatprep.mubr.bf16.mxu0 0
        %3055 = vmatmul.mubr.bf16.gmra.mxu0 %v2130
        %v3056 = vpop.f32.mrf.mxu0
        %v3057 = vadd.f32 %v759, %v3056
        %v3058 = vpop.f32.mrf.mxu0
        %v3059 = vpop.f32.mrf.mxu0
        %v3060 = vadd.f32 %v759, %v3059
        %v3061 = vpop.f32.mrf.mxu0
        %3062 = vmatprep.mubr.bf16.mxu0 0
        %3063 = vmatmul.mubr.bf16.gmra.mxu0 %v2133
        %v3064 = vpop.f32.mrf.mxu0
        %v3065 = vadd.f32 %v759, %v3064
        %v3066 = vpop.f32.mrf.mxu0
        %v3067 = vpop.f32.mrf.mxu0
        %v3068 = vadd.f32 %v759, %v3067
        %v3069 = vpop.f32.mrf.mxu0
        %3070 = vmatprep.mubr.bf16.mxu0 0
        %3071 = vmatmul.mubr.bf16.gmra.mxu0 %v2136
        %v3072 = vpop.f32.mrf.mxu0
        %v3073 = vadd.f32 %v759, %v3072
        %v3074 = vpop.f32.mrf.mxu0
        %v3075 = vpop.f32.mrf.mxu0
        %v3076 = vadd.f32 %v759, %v3075
        %v3077 = vpop.f32.mrf.mxu0
        %3078 = vmatprep.mubr.bf16.mxu0 0
        %3079 = vmatmul.mubr.bf16.gmra.mxu0 %v2139
        %v3080 = vpop.f32.mrf.mxu0
        %v3081 = vadd.f32 %v759, %v3080
        %v3082 = vpop.f32.mrf.mxu0
        %v3083 = vpop.f32.mrf.mxu0
        %v3084 = vadd.f32 %v759, %v3083
        %v3085 = vpop.f32.mrf.mxu0
        %3086 = vmatprep.mubr.bf16.mxu0 0
        %3087 = vmatmul.mubr.bf16.gmra.mxu0 %v2142
        %v3088 = vpop.f32.mrf.mxu0
        %v3089 = vadd.f32 %v759, %v3088
        %v3090 = vpop.f32.mrf.mxu0
        %v3091 = vpop.f32.mrf.mxu0
        %v3092 = vadd.f32 %v759, %v3091
        %v3093 = vpop.f32.mrf.mxu0
        %3094 = vmatprep.mubr.bf16.mxu0 0
        %3095 = vmatmul.mubr.bf16.gmra.mxu0 %v2145
        %v3096 = vpop.f32.mrf.mxu0
        %v3097 = vadd.f32 %v759, %v3096
        %v3098 = vpop.f32.mrf.mxu0
        %v3099 = vpop.f32.mrf.mxu0
        %v3100 = vadd.f32 %v759, %v3099
        %v3101 = vpop.f32.mrf.mxu0
        %3102 = vmatprep.mubr.bf16.mxu0 0
        %3103 = vmatmul.mubr.bf16.gmra.mxu0 %v2148
        %v3104 = vpop.f32.mrf.mxu0
        %v3105 = vadd.f32 %v759, %v3104
        %v3106 = vpop.f32.mrf.mxu0
        %v3107 = vpop.f32.mrf.mxu0
        %v3108 = vadd.f32 %v759, %v3107
        %v3109 = vpop.f32.mrf.mxu0
        %3110 = vmatprep.mubr.bf16.mxu0 0
        %3111 = vmatmul.mubr.bf16.gmra.mxu0 %v2151
        %v3112 = vpop.f32.mrf.mxu0
        %v3113 = vadd.f32 %v759, %v3112
        %v3114 = vpop.f32.mrf.mxu0
        %v3115 = vpop.f32.mrf.mxu0
        %v3116 = vadd.f32 %v759, %v3115
        %v3117 = vpop.f32.mrf.mxu0
        %3118 = vmatprep.mubr.bf16.mxu0 0
        %3119 = vmatmul.mubr.bf16.gmra.mxu0 %v2154
        %v3120 = vpop.f32.mrf.mxu0
        %v3121 = vadd.f32 %v759, %v3120
        %v3122 = vpop.f32.mrf.mxu0
        %v3123 = vpop.f32.mrf.mxu0
        %v3124 = vadd.f32 %v759, %v3123
        %v3125 = vpop.f32.mrf.mxu0
        %3126 = vmatprep.mubr.bf16.mxu0 0
        %3127 = vmatmul.mubr.bf16.gmra.mxu0 %v2157
        %v3128 = vpop.f32.mrf.mxu0
        %v3129 = vadd.f32 %v759, %v3128
        %v3130 = vpop.f32.mrf.mxu0
        %v3131 = vpop.f32.mrf.mxu0
        %v3132 = vadd.f32 %v759, %v3131
        %v3133 = vpop.f32.mrf.mxu0
        %3134 = vmatprep.mubr.bf16.mxu0 0
        %3135 = vmatmul.mubr.bf16.gmra.mxu0 %v2160
        %v3136 = vpop.f32.mrf.mxu0
        %v3137 = vadd.f32 %v759, %v3136
        %v3138 = vpop.f32.mrf.mxu0
        %v3139 = vpop.f32.mrf.mxu0
        %v3140 = vadd.f32 %v759, %v3139
        %v3141 = vpop.f32.mrf.mxu0
        %3142 = vmatprep.mubr.bf16.mxu0 0
        %3143 = vmatmul.mubr.bf16.gmra.mxu0 %v2163
        %v3144 = vpop.f32.mrf.mxu0
        %v3145 = vadd.f32 %v759, %v3144
        %v3146 = vpop.f32.mrf.mxu0
        %v3147 = vpop.f32.mrf.mxu0
        %v3148 = vadd.f32 %v759, %v3147
        %v3149 = vpop.f32.mrf.mxu0
        %3150 = vmatprep.mubr.bf16.mxu0 0
        %3151 = vmatmul.mubr.bf16.gmra.mxu0 %v2166
        %v3152 = vpop.f32.mrf.mxu0
        %v3153 = vadd.f32 %v759, %v3152
        %v3154 = vpop.f32.mrf.mxu0
        %v3155 = vpop.f32.mrf.mxu0
        %v3156 = vadd.f32 %v759, %v3155
        %v3157 = vpop.f32.mrf.mxu0
        %3158 = vmatprep.mubr.bf16.mxu0 0
        %3159 = vmatmul.mubr.bf16.gmra.mxu0 %v2169
        %v3160 = vpop.f32.mrf.mxu0
        %v3161 = vadd.f32 %v759, %v3160
        %v3162 = vpop.f32.mrf.mxu0
        %v3163 = vpop.f32.mrf.mxu0
        %v3164 = vadd.f32 %v759, %v3163
        %v3165 = vpop.f32.mrf.mxu0
        %3166 = vmatprep.mubr.bf16.mxu0 0
        %3167 = vmatmul.mubr.bf16.gmra.mxu0 %v2172
        %v3168 = vpop.f32.mrf.mxu0
        %v3169 = vadd.f32 %v759, %v3168
        %v3170 = vpop.f32.mrf.mxu0
        %v3171 = vpop.f32.mrf.mxu0
        %v3172 = vadd.f32 %v759, %v3171
        %v3173 = vpop.f32.mrf.mxu0
        %3174 = vmatprep.mubr.bf16.mxu0 0
        %3175 = vmatmul.mubr.bf16.gmra.mxu0 %v2175
        %v3176 = vpop.f32.mrf.mxu0
        %v3177 = vadd.f32 %v759, %v3176
        %v3178 = vpop.f32.mrf.mxu0
        %v3179 = vpop.f32.mrf.mxu0
        %v3180 = vadd.f32 %v759, %v3179
        %v3181 = vpop.f32.mrf.mxu0
        %3182 = vmatprep.mubr.bf16.mxu0 0
        %3183 = vmatmul.mubr.bf16.gmra.mxu0 %v2178
        %v3184 = vpop.f32.mrf.mxu0
        %v3185 = vadd.f32 %v759, %v3184
        %v3186 = vpop.f32.mrf.mxu0
        %v3187 = vpop.f32.mrf.mxu0
        %v3188 = vadd.f32 %v759, %v3187
        %v3189 = vpop.f32.mrf.mxu0
        %3190 = vmatprep.mubr.bf16.mxu0 0
        %3191 = vmatmul.mubr.bf16.gmra.mxu0 %v2181
        %v3192 = vpop.f32.mrf.mxu0
        %v3193 = vadd.f32 %v759, %v3192
        %v3194 = vpop.f32.mrf.mxu0
        %v3195 = vpop.f32.mrf.mxu0
        %v3196 = vadd.f32 %v759, %v3195
        %v3197 = vpop.f32.mrf.mxu0
        %3198 = vmatprep.mubr.bf16.mxu0 0
        %3199 = vmatmul.mubr.bf16.gmra.mxu0 %v2184
        %v3200 = vpop.f32.mrf.mxu0
        %v3201 = vadd.f32 %v759, %v3200
        %v3202 = vpop.f32.mrf.mxu0
        %v3203 = vpop.f32.mrf.mxu0
        %v3204 = vadd.f32 %v759, %v3203
        %v3205 = vpop.f32.mrf.mxu0
        %3206 = vmatprep.mubr.bf16.mxu0 0
        %3207 = vmatmul.mubr.bf16.gmra.mxu0 %v2187
        %v3208 = vpop.f32.mrf.mxu0
        %v3209 = vadd.f32 %v759, %v3208
        %v3210 = vpop.f32.mrf.mxu0
        %v3211 = vpop.f32.mrf.mxu0
        %v3212 = vadd.f32 %v759, %v3211
        %v3213 = vpop.f32.mrf.mxu0
        %3214 = vmatprep.mubr.bf16.mxu0 0
        %3215 = vmatmul.mubr.bf16.gmra.mxu0 %v2190
        %v3216 = vpop.f32.mrf.mxu0
        %v3217 = vadd.f32 %v759, %v3216
        %v3218 = vpop.f32.mrf.mxu0
        %v3219 = vpop.f32.mrf.mxu0
        %v3220 = vadd.f32 %v759, %v3219
        %v3221 = vpop.f32.mrf.mxu0
        %3222 = vmatprep.mubr.bf16.mxu0 0
        %3223 = vmatmul.mubr.bf16.gmra.mxu0 %v2193
        %v3224 = vpop.f32.mrf.mxu0
        %v3225 = vadd.f32 %v759, %v3224
        %v3226 = vpop.f32.mrf.mxu0
        %v3227 = vpop.f32.mrf.mxu0
        %v3228 = vadd.f32 %v759, %v3227
        %v3229 = vpop.f32.mrf.mxu0
        %3230 = vmatprep.mubr.bf16.mxu0 0
        %3231 = vmatmul.mubr.bf16.gmra.mxu0 %v2196
        %v3232 = vpop.f32.mrf.mxu0
        %v3233 = vadd.f32 %v759, %v3232
        %v3234 = vpop.f32.mrf.mxu0
        %v3235 = vpop.f32.mrf.mxu0
        %v3236 = vadd.f32 %v759, %v3235
        %v3237 = vpop.f32.mrf.mxu0
        %3238 = vmatprep.mubr.bf16.mxu0 0
        %3239 = vmatmul.mubr.bf16.gmra.mxu0 %v2199
        %v3240 = vpop.f32.mrf.mxu0
        %v3241 = vadd.f32 %v759, %v3240
        %v3242 = vpop.f32.mrf.mxu0
        %v3243 = vpop.f32.mrf.mxu0
        %v3244 = vadd.f32 %v759, %v3243
        %v3245 = vpop.f32.mrf.mxu0
        %3246 = vmatprep.mubr.bf16.mxu0 0
        %3247 = vmatmul.mubr.bf16.gmra.mxu0 %v2202
        %v3248 = vpop.f32.mrf.mxu0
        %v3249 = vadd.f32 %v759, %v3248
        %v3250 = vpop.f32.mrf.mxu0
        %v3251 = vpop.f32.mrf.mxu0
        %v3252 = vadd.f32 %v759, %v3251
        %v3253 = vpop.f32.mrf.mxu0
        %3254 = vmatprep.mubr.bf16.mxu0 0
        %3255 = vmatmul.mubr.bf16.gmra.mxu0 %v2205
        %v3256 = vpop.f32.mrf.mxu0
        %v3257 = vadd.f32 %v759, %v3256
        %v3258 = vpop.f32.mrf.mxu0
        %v3259 = vpop.f32.mrf.mxu0
        %v3260 = vadd.f32 %v759, %v3259
        %v3261 = vpop.f32.mrf.mxu0
        %3262 = vmatprep.mubr.bf16.mxu0 0
        %3263 = vmatmul.mubr.bf16.gmra.mxu0 %v2208
        %v3264 = vpop.f32.mrf.mxu0
        %v3265 = vadd.f32 %v759, %v3264
        %v3266 = vpop.f32.mrf.mxu0
        %v3267 = vpop.f32.mrf.mxu0
        %v3268 = vadd.f32 %v759, %v3267
        %v3269 = vpop.f32.mrf.mxu0
        %3270 = vmatprep.mubr.bf16.mxu0 0
        %3271 = vmatmul.mubr.bf16.gmra.mxu0 %v2211
        %v3272 = vpop.f32.mrf.mxu0
        %v3273 = vadd.f32 %v759, %v3272
        %v3274 = vpop.f32.mrf.mxu0
        %v3275 = vpop.f32.mrf.mxu0
        %v3276 = vadd.f32 %v759, %v3275
        %v3277 = vpop.f32.mrf.mxu0
        %3278 = vmatprep.mubr.bf16.mxu0 0
        %3279 = vmatmul.mubr.bf16.gmra.mxu0 %v2214
        %v3280 = vpop.f32.mrf.mxu0
        %v3281 = vadd.f32 %v759, %v3280
        %v3282 = vpop.f32.mrf.mxu0
        %v3283 = vpop.f32.mrf.mxu0
        %v3284 = vadd.f32 %v759, %v3283
        %v3285 = vpop.f32.mrf.mxu0
        %3286 = vmatprep.mubr.bf16.mxu0 0
        %3287 = vmatmul.mubr.bf16.gmra.mxu0 %v2217
        %v3288 = vpop.f32.mrf.mxu0
        %v3289 = vadd.f32 %v759, %v3288
        %v3290 = vpop.f32.mrf.mxu0
        %v3291 = vpop.f32.mrf.mxu0
        %v3292 = vadd.f32 %v759, %v3291
        %v3293 = vpop.f32.mrf.mxu0
        %3294 = vmatprep.mubr.bf16.mxu0 0
        %3295 = vmatmul.mubr.bf16.gmra.mxu0 %v2220
        %v3296 = vpop.f32.mrf.mxu0
        %v3297 = vadd.f32 %v759, %v3296
        %v3298 = vpop.f32.mrf.mxu0
        %v3299 = vpop.f32.mrf.mxu0
        %v3300 = vadd.f32 %v759, %v3299
        %v3301 = vpop.f32.mrf.mxu0
        %3302 = vmatprep.mubr.bf16.mxu0 0
        %3303 = vmatmul.mubr.bf16.gmra.mxu0 %v2223
        %v3304 = vpop.f32.mrf.mxu0
        %v3305 = vadd.f32 %v759, %v3304
        %v3306 = vpop.f32.mrf.mxu0
        %v3307 = vpop.f32.mrf.mxu0
        %v3308 = vadd.f32 %v759, %v3307
        %v3309 = vpop.f32.mrf.mxu0
        %3310 = vmatprep.mubr.bf16.mxu0 0
        %3311 = vmatmul.mubr.bf16.gmra.mxu0 %v2226
        %v3312 = vpop.f32.mrf.mxu0
        %v3313 = vadd.f32 %v759, %v3312
        %v3314 = vpop.f32.mrf.mxu0
        %v3315 = vpop.f32.mrf.mxu0
        %v3316 = vadd.f32 %v759, %v3315
        %v3317 = vpop.f32.mrf.mxu0
        %3318 = vmatprep.mubr.bf16.mxu0 0
        %3319 = vmatmul.mubr.bf16.gmra.mxu0 %v2229
        %v3320 = vpop.f32.mrf.mxu0
        %v3321 = vadd.f32 %v759, %v3320
        %v3322 = vpop.f32.mrf.mxu0
        %v3323 = vpop.f32.mrf.mxu0
        %v3324 = vadd.f32 %v759, %v3323
        %v3325 = vpop.f32.mrf.mxu0
        %3326 = vmatprep.mubr.bf16.mxu0 0
        %3327 = vmatmul.mubr.bf16.gmra.mxu0 %v2232
        %v3328 = vpop.f32.mrf.mxu0
        %v3329 = vadd.f32 %v759, %v3328
        %v3330 = vpop.f32.mrf.mxu0
        %v3331 = vpop.f32.mrf.mxu0
        %v3332 = vadd.f32 %v759, %v3331
        %v3333 = vpop.f32.mrf.mxu0
        %3334 = vmatprep.mubr.bf16.mxu0 0
        %3335 = vmatmul.mubr.bf16.gmra.mxu0 %v2235
        %v3336 = vpop.f32.mrf.mxu0
        %v3337 = vadd.f32 %v759, %v3336
        %v3338 = vpop.f32.mrf.mxu0
        %v3339 = vpop.f32.mrf.mxu0
        %v3340 = vadd.f32 %v759, %v3339
        %v3341 = vpop.f32.mrf.mxu0
        %3342 = vmatprep.mubr.bf16.mxu0 0
        %3343 = vmatmul.mubr.bf16.gmra.mxu0 %v2238
        %v3344 = vpop.f32.mrf.mxu0
        %v3345 = vadd.f32 %v759, %v3344
        %v3346 = vpop.f32.mrf.mxu0
        %v3347 = vpop.f32.mrf.mxu0
        %v3348 = vadd.f32 %v759, %v3347
        %v3349 = vpop.f32.mrf.mxu0
        %3350 = vmatprep.mubr.bf16.mxu0 0
        %3351 = vmatmul.mubr.bf16.gmra.mxu0 %v2241
        %v3352 = vpop.f32.mrf.mxu0
        %v3353 = vadd.f32 %v759, %v3352
        %v3354 = vpop.f32.mrf.mxu0
        %v3355 = vpop.f32.mrf.mxu0
        %v3356 = vadd.f32 %v759, %v3355
        %v3357 = vpop.f32.mrf.mxu0
        %3358 = vmatprep.mubr.bf16.mxu0 0
        %3359 = vmatmul.mubr.bf16.gmra.mxu0 %v2244
        %v3360 = vpop.f32.mrf.mxu0
        %v3361 = vadd.f32 %v759, %v3360
        %v3362 = vpop.f32.mrf.mxu0
        %v3363 = vpop.f32.mrf.mxu0
        %v3364 = vadd.f32 %v759, %v3363
        %v3365 = vpop.f32.mrf.mxu0
        %3366 = vmatprep.mubr.bf16.mxu0 0
        %3367 = vmatmul.mubr.bf16.gmra.mxu0 %v2247
        %v3368 = vpop.f32.mrf.mxu0
        %v3369 = vadd.f32 %v759, %v3368
        %v3370 = vpop.f32.mrf.mxu0
        %v3371 = vpop.f32.mrf.mxu0
        %v3372 = vadd.f32 %v759, %v3371
        %v3373 = vpop.f32.mrf.mxu0
        %3374 = vmatprep.mubr.bf16.mxu0 0
        %3375 = vmatmul.mubr.bf16.gmra.mxu0 %v2250
        %v3376 = vpop.f32.mrf.mxu0
        %v3377 = vadd.f32 %v759, %v3376
        %v3378 = vpop.f32.mrf.mxu0
        %v3379 = vpop.f32.mrf.mxu0
        %v3380 = vadd.f32 %v759, %v3379
        %v3381 = vpop.f32.mrf.mxu0
        %3382 = vmatprep.mubr.bf16.mxu0 0
        %3383 = vmatmul.mubr.bf16.gmra.mxu0 %v2253
        %v3384 = vpop.f32.mrf.mxu0
        %v3385 = vadd.f32 %v759, %v3384
        %v3386 = vpop.f32.mrf.mxu0
        %v3387 = vpop.f32.mrf.mxu0
        %v3388 = vadd.f32 %v759, %v3387
        %v3389 = vpop.f32.mrf.mxu0
        %3390 = vmatprep.mubr.bf16.mxu0 0
        %3391 = vmatmul.mubr.bf16.gmra.mxu0 %v2256
        %v3392 = vpop.f32.mrf.mxu0
        %v3393 = vadd.f32 %v759, %v3392
        %v3394 = vpop.f32.mrf.mxu0
        %v3395 = vpop.f32.mrf.mxu0
        %v3396 = vadd.f32 %v759, %v3395
        %v3397 = vpop.f32.mrf.mxu0
        %3398 = vmatprep.mubr.bf16.mxu0 0
        %3399 = vmatmul.mubr.bf16.gmra.mxu0 %v2259
        %v3400 = vpop.f32.mrf.mxu0
        %v3401 = vadd.f32 %v759, %v3400
        %v3402 = vpop.f32.mrf.mxu0
        %v3403 = vpop.f32.mrf.mxu0
        %v3404 = vadd.f32 %v759, %v3403
        %v3405 = vpop.f32.mrf.mxu0
        %3406 = vmatprep.mubr.bf16.mxu0 0
        %3407 = vmatmul.mubr.bf16.gmra.mxu0 %v2262
        %v3408 = vpop.f32.mrf.mxu0
        %v3409 = vadd.f32 %v759, %v3408
        %v3410 = vpop.f32.mrf.mxu0
        %v3411 = vpop.f32.mrf.mxu0
        %v3412 = vadd.f32 %v759, %v3411
        %v3413 = vpop.f32.mrf.mxu0
        %3414 = vmatprep.mubr.bf16.mxu0 0
        %3415 = vmatmul.mubr.bf16.gmra.mxu0 %v2265
        %v3416 = vpop.f32.mrf.mxu0
        %v3417 = vadd.f32 %v759, %v3416
        %v3418 = vpop.f32.mrf.mxu0
        %v3419 = vpop.f32.mrf.mxu0
        %v3420 = vadd.f32 %v759, %v3419
        %v3421 = vpop.f32.mrf.mxu0
        %3422 = vmatprep.mubr.bf16.mxu0 0
        %3423 = vmatmul.mubr.bf16.gmra.mxu0 %v2268
        %v3424 = vpop.f32.mrf.mxu0
        %v3425 = vadd.f32 %v759, %v3424
        %v3426 = vpop.f32.mrf.mxu0
        %v3427 = vpop.f32.mrf.mxu0
        %v3428 = vadd.f32 %v759, %v3427
        %v3429 = vpop.f32.mrf.mxu0
        %3430 = vmatprep.mubr.bf16.mxu0 0
        %3431 = vmatmul.mubr.bf16.gmra.mxu0 %v2271
        %v3432 = vpop.f32.mrf.mxu0
        %v3433 = vadd.f32 %v759, %v3432
        %v3434 = vpop.f32.mrf.mxu0
        %v3435 = vpop.f32.mrf.mxu0
        %v3436 = vadd.f32 %v759, %v3435
        %v3437 = vpop.f32.mrf.mxu0
        %3438 = vmatprep.mubr.bf16.mxu0 0
        %3439 = vmatmul.mubr.bf16.gmra.mxu0 %v2274
        %v3440 = vpop.f32.mrf.mxu0
        %v3441 = vadd.f32 %v759, %v3440
        %v3442 = vpop.f32.mrf.mxu0
        %v3443 = vpop.f32.mrf.mxu0
        %v3444 = vadd.f32 %v759, %v3443
        %v3445 = vpop.f32.mrf.mxu0
        %3446 = vmatprep.mubr.bf16.mxu0 0
        %3447 = vmatmul.mubr.bf16.gmra.mxu0 %v2277
        %v3448 = vpop.f32.mrf.mxu0
        %v3449 = vadd.f32 %v759, %v3448
        %v3450 = vpop.f32.mrf.mxu0
        %v3451 = vpop.f32.mrf.mxu0
        %v3452 = vadd.f32 %v759, %v3451
        %v3453 = vpop.f32.mrf.mxu0
        %3454 = vmatprep.mubr.bf16.mxu0 0
        %3455 = vmatmul.mubr.bf16.gmra.mxu0 %v2280
        %v3456 = vpop.f32.mrf.mxu0
        %v3457 = vadd.f32 %v759, %v3456
        %v3458 = vpop.f32.mrf.mxu0
        %v3459 = vpop.f32.mrf.mxu0
        %v3460 = vadd.f32 %v759, %v3459
        %v3461 = vpop.f32.mrf.mxu0
        %3462 = vmatprep.mubr.bf16.mxu0 0
        %3463 = vmatmul.mubr.bf16.gmra.mxu0 %v2283
        %v3464 = vpop.f32.mrf.mxu0
        %v3465 = vadd.f32 %v759, %v3464
        %v3466 = vpop.f32.mrf.mxu0
        %v3467 = vpop.f32.mrf.mxu0
        %v3468 = vadd.f32 %v759, %v3467
        %v3469 = vpop.f32.mrf.mxu0
        %3470 = vmatprep.mubr.bf16.mxu0 0
        %3471 = vmatmul.mubr.bf16.gmra.mxu0 %v2286
        %v3472 = vpop.f32.mrf.mxu0
        %v3473 = vadd.f32 %v759, %v3472
        %v3474 = vpop.f32.mrf.mxu0
        %v3475 = vpop.f32.mrf.mxu0
        %v3476 = vadd.f32 %v759, %v3475
        %v3477 = vpop.f32.mrf.mxu0
        %3478 = vmatprep.mubr.bf16.mxu0 0
        %3479 = vmatmul.mubr.bf16.gmra.mxu0 %v2289
        %v3480 = vpop.f32.mrf.mxu0
        %v3481 = vadd.f32 %v759, %v3480
        %v3482 = vpop.f32.mrf.mxu0
        %v3483 = vpop.f32.mrf.mxu0
        %v3484 = vadd.f32 %v759, %v3483
        %v3485 = vpop.f32.mrf.mxu0
        %3486 = vmatprep.mubr.bf16.mxu0 0
        %3487 = vmatmul.mubr.bf16.gmra.mxu0 %v2292
        %v3488 = vpop.f32.mrf.mxu0
        %v3489 = vadd.f32 %v759, %v3488
        %v3490 = vpop.f32.mrf.mxu0
        %v3491 = vpop.f32.mrf.mxu0
        %v3492 = vadd.f32 %v759, %v3491
        %v3493 = vpop.f32.mrf.mxu0
        %3494 = vmatprep.mubr.bf16.mxu0 0
        %3495 = vmatmul.mubr.bf16.gmra.mxu0 %v2295
        %v3496 = vpop.f32.mrf.mxu0
        %v3497 = vadd.f32 %v759, %v3496
        %v3498 = vpop.f32.mrf.mxu0
        %v3499 = vpop.f32.mrf.mxu0
        %v3500 = vadd.f32 %v759, %v3499
        %v3501 = vpop.f32.mrf.mxu0
        %3502 = vmatprep.mubr.bf16.mxu0 0
        %3503 = vmatmul.mubr.bf16.gmra.mxu0 %v2298
        %v3504 = vpop.f32.mrf.mxu0
        %v3505 = vadd.f32 %v759, %v3504
        %v3506 = vpop.f32.mrf.mxu0
        %v3507 = vpop.f32.mrf.mxu0
        %v3508 = vadd.f32 %v759, %v3507
        %v3509 = vpop.f32.mrf.mxu0
        %3510 = vmatprep.mubr.bf16.mxu0 0
        %3511 = vmatmul.mubr.bf16.gmra.mxu0 %v2301
        %v3512 = vpop.f32.mrf.mxu0
        %v3513 = vadd.f32 %v759, %v3512
        %v3514 = vpop.f32.mrf.mxu0
        %v3515 = vpop.f32.mrf.mxu0
        %v3516 = vadd.f32 %v759, %v3515
        %v3517 = vpop.f32.mrf.mxu0
        %3518 = vmatprep.mubr.bf16.mxu0 0
        %3519 = vmatmul.mubr.bf16.gmra.mxu0 %v2304
        %v3520 = vpop.f32.mrf.mxu0
        %v3521 = vadd.f32 %v759, %v3520
        %v3522 = vpop.f32.mrf.mxu0
        %v3523 = vpop.f32.mrf.mxu0
        %v3524 = vadd.f32 %v759, %v3523
        %v3525 = vpop.f32.mrf.mxu0
        %3526 = vmatprep.mubr.bf16.mxu0 0
        %3527 = vmatmul.mubr.bf16.gmra.mxu0 %v2307
        %v3528 = vpop.f32.mrf.mxu0
        %v3529 = vadd.f32 %v759, %v3528
        %v3530 = vpop.f32.mrf.mxu0
        %v3531 = vpop.f32.mrf.mxu0
        %v3532 = vadd.f32 %v759, %v3531
        %v3533 = vpop.f32.mrf.mxu0
        %3534 = vmatprep.mubr.bf16.mxu0 0
        %3535 = vmatmul.mubr.bf16.gmra.mxu0 %v2310
        %v3536 = vpop.f32.mrf.mxu0
        %v3537 = vadd.f32 %v759, %v3536
        %v3538 = vpop.f32.mrf.mxu0
        %v3539 = vpop.f32.mrf.mxu0
        %v3540 = vadd.f32 %v759, %v3539
        %v3541 = vpop.f32.mrf.mxu0
        %3542 = vmatprep.mubr.bf16.mxu0 0
        %3543 = vmatmul.mubr.bf16.gmra.mxu0 %v2313
        %v3544 = vpop.f32.mrf.mxu0
        %v3545 = vadd.f32 %v759, %v3544
        %v3546 = vpop.f32.mrf.mxu0
        %v3547 = vpop.f32.mrf.mxu0
        %v3548 = vadd.f32 %v759, %v3547
        %v3549 = vpop.f32.mrf.mxu0
        %3550 = vmatprep.mubr.bf16.mxu0 0
        %3551 = vmatmul.mubr.bf16.gmra.mxu0 %v2316
        %v3552 = vpop.f32.mrf.mxu0
        %v3553 = vadd.f32 %v759, %v3552
        %v3554 = vpop.f32.mrf.mxu0
        %v3555 = vpop.f32.mrf.mxu0
        %v3556 = vadd.f32 %v759, %v3555
        %v3557 = vpop.f32.mrf.mxu0
        %3558 = vmatprep.mubr.bf16.mxu0 0
        %3559 = vmatmul.mubr.bf16.gmra.mxu0 %v2319
        %v3560 = vpop.f32.mrf.mxu0
        %v3561 = vadd.f32 %v759, %v3560
        %v3562 = vpop.f32.mrf.mxu0
        %v3563 = vpop.f32.mrf.mxu0
        %v3564 = vadd.f32 %v759, %v3563
        %v3565 = vpop.f32.mrf.mxu0
        %3566 = vmatprep.mubr.bf16.mxu0 0
        %3567 = vmatmul.mubr.bf16.gmra.mxu0 %v2322
        %v3568 = vpop.f32.mrf.mxu0
        %v3569 = vadd.f32 %v759, %v3568
        %v3570 = vpop.f32.mrf.mxu0
        %v3571 = vpop.f32.mrf.mxu0
        %v3572 = vadd.f32 %v759, %v3571
        %v3573 = vpop.f32.mrf.mxu0
        %3574 = vmatprep.mubr.bf16.mxu0 0
        %3575 = vmatmul.mubr.bf16.gmra.mxu0 %v2325
        %v3576 = vpop.f32.mrf.mxu0
        %v3577 = vadd.f32 %v759, %v3576
        %v3578 = vpop.f32.mrf.mxu0
        %v3579 = vpop.f32.mrf.mxu0
        %v3580 = vadd.f32 %v759, %v3579
        %v3581 = vpop.f32.mrf.mxu0
        %3582 = vmatprep.mubr.bf16.mxu0 0
        %3583 = vmatmul.mubr.bf16.gmra.mxu0 %v2328
        %v3584 = vpop.f32.mrf.mxu0
        %v3585 = vadd.f32 %v759, %v3584
        %v3586 = vpop.f32.mrf.mxu0
        %v3587 = vpop.f32.mrf.mxu0
        %v3588 = vadd.f32 %v759, %v3587
        %v3589 = vpop.f32.mrf.mxu0
        %3590 = vmatprep.mubr.bf16.mxu0 0
        %3591 = vmatmul.mubr.bf16.gmra.mxu0 %v2331
        %v3592 = vpop.f32.mrf.mxu0
        %v3593 = vadd.f32 %v759, %v3592
        %v3594 = vpop.f32.mrf.mxu0
        %v3595 = vpop.f32.mrf.mxu0
        %v3596 = vadd.f32 %v759, %v3595
        %v3597 = vpop.f32.mrf.mxu0
        %3598 = vmatprep.mubr.bf16.mxu0 0
        %3599 = vmatmul.mubr.bf16.gmra.mxu0 %v2334
        %v3600 = vpop.f32.mrf.mxu0
        %v3601 = vadd.f32 %v759, %v3600
        %v3602 = vpop.f32.mrf.mxu0
        %v3603 = vpop.f32.mrf.mxu0
        %v3604 = vadd.f32 %v759, %v3603
        %v3605 = vpop.f32.mrf.mxu0
        %3606 = vmatprep.mubr.bf16.mxu0 0
        %3607 = vmatmul.mubr.bf16.gmra.mxu0 %v2337
        %v3608 = vpop.f32.mrf.mxu0
        %v3609 = vadd.f32 %v759, %v3608
        %v3610 = vpop.f32.mrf.mxu0
        %v3611 = vpop.f32.mrf.mxu0
        %v3612 = vadd.f32 %v759, %v3611
        %v3613 = vpop.f32.mrf.mxu0
        %3614 = vmatprep.mubr.bf16.mxu0 0
        %3615 = vmatmul.mubr.bf16.gmra.mxu0 %v2340
        %v3616 = vpop.f32.mrf.mxu0
        %v3617 = vadd.f32 %v759, %v3616
        %v3618 = vpop.f32.mrf.mxu0
        %v3619 = vpop.f32.mrf.mxu0
        %v3620 = vadd.f32 %v759, %v3619
        %v3621 = vpop.f32.mrf.mxu0
        %3622 = vmatprep.mubr.bf16.mxu0 0
        %3623 = vmatmul.mubr.bf16.gmra.mxu0 %v2343
        %v3624 = vpop.f32.mrf.mxu0
        %v3625 = vadd.f32 %v759, %v3624
        %v3626 = vpop.f32.mrf.mxu0
        %v3627 = vpop.f32.mrf.mxu0
        %v3628 = vadd.f32 %v759, %v3627
        %v3629 = vpop.f32.mrf.mxu0
        %3630 = vmatprep.mubr.bf16.mxu0 0
        %3631 = vmatmul.mubr.bf16.gmra.mxu0 %v2346
        %v3632 = vpop.f32.mrf.mxu0
        %v3633 = vadd.f32 %v759, %v3632
        %v3634 = vpop.f32.mrf.mxu0
        %v3635 = vpop.f32.mrf.mxu0
        %v3636 = vadd.f32 %v759, %v3635
        %v3637 = vpop.f32.mrf.mxu0
        %3638 = vmatprep.mubr.bf16.mxu0 0
        %3639 = vmatmul.mubr.bf16.gmra.mxu0 %v2349
        %v3640 = vpop.f32.mrf.mxu0
        %v3641 = vadd.f32 %v759, %v3640
        %v3642 = vpop.f32.mrf.mxu0
        %v3643 = vpop.f32.mrf.mxu0
        %v3644 = vadd.f32 %v759, %v3643
        %v3645 = vpop.f32.mrf.mxu0
        %3646 = vmatprep.mubr.bf16.mxu0 0
        %3647 = vmatmul.mubr.bf16.gmra.mxu0 %v2352
        %v3648 = vpop.f32.mrf.mxu0
        %v3649 = vadd.f32 %v759, %v3648
        %v3650 = vpop.f32.mrf.mxu0
        %v3651 = vpop.f32.mrf.mxu0
        %v3652 = vadd.f32 %v759, %v3651
        %v3653 = vpop.f32.mrf.mxu0
        %3654 = vmatprep.mubr.bf16.mxu0 0
        %3655 = vmatmul.mubr.bf16.gmra.mxu0 %v2355
        %v3656 = vpop.f32.mrf.mxu0
        %v3657 = vadd.f32 %v759, %v3656
        %v3658 = vpop.f32.mrf.mxu0
        %v3659 = vpop.f32.mrf.mxu0
        %v3660 = vadd.f32 %v759, %v3659
        %v3661 = vpop.f32.mrf.mxu0
        %3662 = vmatprep.mubr.bf16.mxu0 0
        %3663 = vmatmul.mubr.bf16.gmra.mxu0 %v2358
        %v3664 = vpop.f32.mrf.mxu0
        %v3665 = vadd.f32 %v759, %v3664
        %v3666 = vpop.f32.mrf.mxu0
        %v3667 = vpop.f32.mrf.mxu0
        %v3668 = vadd.f32 %v759, %v3667
        %v3669 = vpop.f32.mrf.mxu0
        %3670 = vmatprep.mubr.bf16.mxu0 0
        %3671 = vmatmul.mubr.bf16.gmra.mxu0 %v2361
        %v3672 = vpop.f32.mrf.mxu0
        %v3673 = vadd.f32 %v759, %v3672
        %v3674 = vpop.f32.mrf.mxu0
        %v3675 = vpop.f32.mrf.mxu0
        %v3676 = vadd.f32 %v759, %v3675
        %v3677 = vpop.f32.mrf.mxu0
        %3678 = vmatprep.mubr.bf16.mxu0 0
        %3679 = vmatmul.mubr.bf16.gmra.mxu0 %v2364
        %v3680 = vpop.f32.mrf.mxu0
        %v3681 = vadd.f32 %v759, %v3680
        %v3682 = vpop.f32.mrf.mxu0
        %v3683 = vpop.f32.mrf.mxu0
        %v3684 = vadd.f32 %v759, %v3683
        %v3685 = vpop.f32.mrf.mxu0
        %3686 = vmatprep.mubr.bf16.mxu0 0
        %3687 = vmatmul.mubr.bf16.gmra.mxu0 %v2367
        %v3688 = vpop.f32.mrf.mxu0
        %v3689 = vadd.f32 %v759, %v3688
        %v3690 = vpop.f32.mrf.mxu0
        %v3691 = vpop.f32.mrf.mxu0
        %v3692 = vadd.f32 %v759, %v3691
        %v3693 = vpop.f32.mrf.mxu0
        %3694 = vmatprep.mubr.bf16.mxu0 0
        %3695 = vmatmul.mubr.bf16.gmra.mxu0 %v2370
        %v3696 = vpop.f32.mrf.mxu0
        %v3697 = vadd.f32 %v759, %v3696
        %v3698 = vpop.f32.mrf.mxu0
        %v3699 = vpop.f32.mrf.mxu0
        %v3700 = vadd.f32 %v759, %v3699
        %v3701 = vpop.f32.mrf.mxu0
        %3702 = vmatprep.mubr.bf16.mxu0 0
        %3703 = vmatmul.mubr.bf16.gmra.mxu0 %v2373
        %v3704 = vpop.f32.mrf.mxu0
        %v3705 = vadd.f32 %v759, %v3704
        %v3706 = vpop.f32.mrf.mxu0
        %v3707 = vpop.f32.mrf.mxu0
        %v3708 = vadd.f32 %v759, %v3707
        %v3709 = vpop.f32.mrf.mxu0
        %3710 = vmatprep.mubr.bf16.mxu0 0
        %3711 = vmatmul.mubr.bf16.gmra.mxu0 %v2376
        %v3712 = vpop.f32.mrf.mxu0
        %v3713 = vadd.f32 %v759, %v3712
        %v3714 = vpop.f32.mrf.mxu0
        %v3715 = vpop.f32.mrf.mxu0
        %v3716 = vadd.f32 %v759, %v3715
        %v3717 = vpop.f32.mrf.mxu0
        %3718 = vmatprep.mubr.bf16.mxu0 0
        %3719 = vmatmul.mubr.bf16.gmra.mxu0 %v2379
        %v3720 = vpop.f32.mrf.mxu0
        %v3721 = vadd.f32 %v759, %v3720
        %v3722 = vpop.f32.mrf.mxu0
        %v3723 = vpop.f32.mrf.mxu0
        %v3724 = vadd.f32 %v759, %v3723
        %v3725 = vpop.f32.mrf.mxu0
        %3726 = vmatprep.mubr.bf16.mxu0 0
        %3727 = vmatmul.mubr.bf16.gmra.mxu0 %v2382
        %v3728 = vpop.f32.mrf.mxu0
        %v3729 = vadd.f32 %v759, %v3728
        %v3730 = vpop.f32.mrf.mxu0
        %v3731 = vpop.f32.mrf.mxu0
        %v3732 = vadd.f32 %v759, %v3731
        %v3733 = vpop.f32.mrf.mxu0
        %3734 = vmatprep.mubr.bf16.mxu0 0
        %3735 = vmatmul.mubr.bf16.gmra.mxu0 %v2385
        %v3736 = vpop.f32.mrf.mxu0
        %v3737 = vadd.f32 %v759, %v3736
        %v3738 = vpop.f32.mrf.mxu0
        %v3739 = vpop.f32.mrf.mxu0
        %v3740 = vadd.f32 %v759, %v3739
        %v3741 = vpop.f32.mrf.mxu0
        %3742 = vmatprep.mubr.bf16.mxu0 0
        %3743 = vmatmul.mubr.bf16.gmra.mxu0 %v2388
        %v3744 = vpop.f32.mrf.mxu0
        %v3745 = vadd.f32 %v759, %v3744
        %v3746 = vpop.f32.mrf.mxu0
        %v3747 = vpop.f32.mrf.mxu0
        %v3748 = vadd.f32 %v759, %v3747
        %v3749 = vpop.f32.mrf.mxu0
        %3750 = vmatprep.mubr.bf16.mxu0 0
        %3751 = vmatmul.mubr.bf16.gmra.mxu0 %v2391
        %v3752 = vpop.f32.mrf.mxu0
        %v3753 = vadd.f32 %v759, %v3752
        %v3754 = vpop.f32.mrf.mxu0
        %v3755 = vpop.f32.mrf.mxu0
        %v3756 = vadd.f32 %v759, %v3755
        %v3757 = vpop.f32.mrf.mxu0
        %3758 = vmatprep.mubr.bf16.mxu0 0
        %3759 = vmatmul.mubr.bf16.gmra.mxu0 %v2394
        %v3760 = vpop.f32.mrf.mxu0
        %v3761 = vadd.f32 %v759, %v3760
        %v3762 = vpop.f32.mrf.mxu0
        %v3763 = vpop.f32.mrf.mxu0
        %v3764 = vadd.f32 %v759, %v3763
        %v3765 = vpop.f32.mrf.mxu0
        %3766 = vmatprep.mubr.bf16.mxu0 0
        %3767 = vmatmul.mubr.bf16.gmra.mxu0 %v2397
        %v3768 = vpop.f32.mrf.mxu0
        %v3769 = vadd.f32 %v759, %v3768
        %v3770 = vpop.f32.mrf.mxu0
        %v3771 = vpop.f32.mrf.mxu0
        %v3772 = vadd.f32 %v759, %v3771
        %v3773 = vpop.f32.mrf.mxu0
        %3774 = vmatprep.mubr.bf16.mxu0 0
        %3775 = vmatmul.mubr.bf16.gmra.mxu0 %v2400
        %v3776 = vpop.f32.mrf.mxu0
        %v3777 = vadd.f32 %v759, %v3776
        %v3778 = vpop.f32.mrf.mxu0
        %v3779 = vpop.f32.mrf.mxu0
        %v3780 = vadd.f32 %v759, %v3779
        %v3781 = vpop.f32.mrf.mxu0
        %3782 = vmatprep.mubr.bf16.mxu0 0
        %3783 = vmatmul.mubr.bf16.gmra.mxu0 %v2403
        %v3784 = vpop.f32.mrf.mxu0
        %v3785 = vadd.f32 %v759, %v3784
        %v3786 = vpop.f32.mrf.mxu0
        %v3787 = vpop.f32.mrf.mxu0
        %v3788 = vadd.f32 %v759, %v3787
        %v3789 = vpop.f32.mrf.mxu0
        %3790 = vmatprep.mubr.bf16.mxu0 0
        %3791 = vmatmul.mubr.bf16.gmra.mxu0 %v2406
        %v3792 = vpop.f32.mrf.mxu0
        %v3793 = vadd.f32 %v759, %v3792
        %v3794 = vpop.f32.mrf.mxu0
        %v3795 = vpop.f32.mrf.mxu0
        %v3796 = vadd.f32 %v759, %v3795
        %v3797 = vpop.f32.mrf.mxu0
        %3798 = vmatprep.mubr.bf16.mxu0 0
        %3799 = vmatmul.mubr.bf16.gmra.mxu0 %v2409
        %v3800 = vpop.f32.mrf.mxu0
        %v3801 = vadd.f32 %v759, %v3800
        %v3802 = vpop.f32.mrf.mxu0
        %v3803 = vpop.f32.mrf.mxu0
        %v3804 = vadd.f32 %v759, %v3803
        %v3805 = vpop.f32.mrf.mxu0
        %3806 = vmatprep.mubr.bf16.mxu0 0
        %3807 = vmatmul.mubr.bf16.gmra.mxu0 %v2412
        %v3808 = vpop.f32.mrf.mxu0
        %v3809 = vadd.f32 %v759, %v3808
        %v3810 = vpop.f32.mrf.mxu0
        %v3811 = vpop.f32.mrf.mxu0
        %v3812 = vadd.f32 %v759, %v3811
        %v3813 = vpop.f32.mrf.mxu0
        %3814 = vmatprep.mubr.bf16.mxu0 0
        %3815 = vmatmul.mubr.bf16.gmra.mxu0 %v2415
        %v3816 = vpop.f32.mrf.mxu0
        %v3817 = vadd.f32 %v759, %v3816
        %v3818 = vpop.f32.mrf.mxu0
        %v3819 = vpop.f32.mrf.mxu0
        %v3820 = vadd.f32 %v759, %v3819
        %v3821 = vpop.f32.mrf.mxu0
        %3822 = vmatprep.mubr.bf16.mxu0 0
        %3823 = vmatmul.mubr.bf16.gmra.mxu0 %v2418
        %v3824 = vpop.f32.mrf.mxu0
        %v3825 = vadd.f32 %v759, %v3824
        %v3826 = vpop.f32.mrf.mxu0
        %v3827 = vpop.f32.mrf.mxu0
        %v3828 = vadd.f32 %v759, %v3827
        %v3829 = vpop.f32.mrf.mxu0
        %3830 = vmatprep.mubr.bf16.mxu0 0
        %3831 = vmatmul.mubr.bf16.gmra.mxu0 %v2421
        %v3832 = vpop.f32.mrf.mxu0
        %v3833 = vadd.f32 %v759, %v3832
        %v3834 = vpop.f32.mrf.mxu0
        %v3835 = vpop.f32.mrf.mxu0
        %v3836 = vadd.f32 %v759, %v3835
        %v3837 = vpop.f32.mrf.mxu0
        %3838 = vmatprep.mubr.bf16.mxu0 0
        %3839 = vmatmul.mubr.bf16.gmra.mxu0 %v2424
        %v3840 = vpop.f32.mrf.mxu0
        %v3841 = vadd.f32 %v759, %v3840
        %v3842 = vpop.f32.mrf.mxu0
        %v3843 = vpop.f32.mrf.mxu0
        %v3844 = vadd.f32 %v759, %v3843
        %v3845 = vpop.f32.mrf.mxu0
        %3846 = vmatprep.mubr.bf16.mxu0 0
        %3847 = vmatmul.mubr.bf16.gmra.mxu0 %v2427
        %v3848 = vpop.f32.mrf.mxu0
        %v3849 = vadd.f32 %v759, %v3848
        %v3850 = vpop.f32.mrf.mxu0
        %v3851 = vpop.f32.mrf.mxu0
        %v3852 = vadd.f32 %v759, %v3851
        %v3853 = vpop.f32.mrf.mxu0
        %3854 = vmatprep.mubr.bf16.mxu0 0
        %3855 = vmatmul.mubr.bf16.gmra.mxu0 %v2430
        %v3856 = vpop.f32.mrf.mxu0
        %v3857 = vadd.f32 %v759, %v3856
        %v3858 = vpop.f32.mrf.mxu0
        %v3859 = vpop.f32.mrf.mxu0
        %v3860 = vadd.f32 %v759, %v3859
        %v3861 = vpop.f32.mrf.mxu0
        %3862 = vmatprep.mubr.bf16.mxu0 0
        %3863 = vmatmul.mubr.bf16.gmra.mxu0 %v2433
        %v3864 = vpop.f32.mrf.mxu0
        %v3865 = vadd.f32 %v759, %v3864
        %v3866 = vpop.f32.mrf.mxu0
        %v3867 = vpop.f32.mrf.mxu0
        %v3868 = vadd.f32 %v759, %v3867
        %v3869 = vpop.f32.mrf.mxu0
        %3870 = vmatprep.mubr.bf16.mxu0 0
        %3871 = vmatmul.mubr.bf16.gmra.mxu0 %v2436
        %v3872 = vpop.f32.mrf.mxu0
        %v3873 = vadd.f32 %v759, %v3872
        %v3874 = vpop.f32.mrf.mxu0
        %v3875 = vpop.f32.mrf.mxu0
        %v3876 = vadd.f32 %v759, %v3875
        %v3877 = vpop.f32.mrf.mxu0
        %3878 = vmatprep.mubr.bf16.mxu0 0
        %3879 = vmatmul.mubr.bf16.gmra.mxu0 %v2439
        %v3880 = vpop.f32.mrf.mxu0
        %v3881 = vadd.f32 %v759, %v3880
        %v3882 = vpop.f32.mrf.mxu0
        %v3883 = vpop.f32.mrf.mxu0
        %v3884 = vadd.f32 %v759, %v3883
        %v3885 = vpop.f32.mrf.mxu0
        %3886 = vmatprep.mubr.bf16.mxu0 0
        %3887 = vmatmul.mubr.bf16.gmra.mxu0 %v2442
        %v3888 = vpop.f32.mrf.mxu0
        %v3889 = vadd.f32 %v759, %v3888
        %v3890 = vpop.f32.mrf.mxu0
        %v3891 = vpop.f32.mrf.mxu0
        %v3892 = vadd.f32 %v759, %v3891
        %v3893 = vpop.f32.mrf.mxu0
        %3894 = vmatprep.mubr.bf16.mxu0 0
        %3895 = vmatmul.mubr.bf16.gmra.mxu0 %v2445
        %v3896 = vpop.f32.mrf.mxu0
        %v3897 = vadd.f32 %v759, %v3896
        %v3898 = vpop.f32.mrf.mxu0
        %v3899 = vpop.f32.mrf.mxu0
        %v3900 = vadd.f32 %v759, %v3899
        %v3901 = vpop.f32.mrf.mxu0
        %3902 = vmatprep.mubr.bf16.mxu0 0
        %3903 = vmatmul.mubr.bf16.gmra.mxu0 %v2448
        %v3904 = vpop.f32.mrf.mxu0
        %v3905 = vadd.f32 %v759, %v3904
        %v3906 = vpop.f32.mrf.mxu0
        %v3907 = vpop.f32.mrf.mxu0
        %v3908 = vadd.f32 %v759, %v3907
        %v3909 = vpop.f32.mrf.mxu0
        %3910 = vmatprep.mubr.bf16.mxu0 0
        %3911 = vmatmul.mubr.bf16.gmra.mxu0 %v2451
        %v3912 = vpop.f32.mrf.mxu0
        %v3913 = vadd.f32 %v759, %v3912
        %v3914 = vpop.f32.mrf.mxu0
        %v3915 = vpop.f32.mrf.mxu0
        %v3916 = vadd.f32 %v759, %v3915
        %v3917 = vpop.f32.mrf.mxu0
        %3918 = vmatprep.mubr.bf16.mxu0 0
        %3919 = vmatmul.mubr.bf16.gmra.mxu0 %v2454
        %v3920 = vpop.f32.mrf.mxu0
        %v3921 = vadd.f32 %v759, %v3920
        %v3922 = vpop.f32.mrf.mxu0
        %v3923 = vpop.f32.mrf.mxu0
        %v3924 = vadd.f32 %v759, %v3923
        %v3925 = vpop.f32.mrf.mxu0
        %3926 = vmatprep.mubr.bf16.mxu0 0
        %3927 = vmatmul.mubr.bf16.gmra.mxu0 %v2457
        %v3928 = vpop.f32.mrf.mxu0
        %v3929 = vadd.f32 %v759, %v3928
        %v3930 = vpop.f32.mrf.mxu0
        %v3931 = vpop.f32.mrf.mxu0
        %v3932 = vadd.f32 %v759, %v3931
        %v3933 = vpop.f32.mrf.mxu0
        %3934 = vmatprep.mubr.bf16.mxu0 0
        %3935 = vmatmul.mubr.bf16.gmra.mxu0 %v2460
        %v3936 = vpop.f32.mrf.mxu0
        %v3937 = vadd.f32 %v759, %v3936
        %v3938 = vpop.f32.mrf.mxu0
        %v3939 = vpop.f32.mrf.mxu0
        %v3940 = vadd.f32 %v759, %v3939
        %v3941 = vpop.f32.mrf.mxu0
        %3942 = vmatprep.mubr.bf16.mxu0 0
        %3943 = vmatmul.mubr.bf16.gmra.mxu0 %v2463
        %v3944 = vpop.f32.mrf.mxu0
        %v3945 = vadd.f32 %v759, %v3944
        %v3946 = vpop.f32.mrf.mxu0
        %v3947 = vpop.f32.mrf.mxu0
        %v3948 = vadd.f32 %v759, %v3947
        %v3949 = vpop.f32.mrf.mxu0
        %3950 = vmatprep.mubr.bf16.mxu0 0
        %3951 = vmatmul.mubr.bf16.gmra.mxu0 %v2466
        %v3952 = vpop.f32.mrf.mxu0
        %v3953 = vadd.f32 %v759, %v3952
        %v3954 = vpop.f32.mrf.mxu0
        %v3955 = vpop.f32.mrf.mxu0
        %v3956 = vadd.f32 %v759, %v3955
        %v3957 = vpop.f32.mrf.mxu0
        %3958 = vmatprep.mubr.bf16.mxu0 0
        %3959 = vmatmul.mubr.bf16.gmra.mxu0 %v2469
        %v3960 = vpop.f32.mrf.mxu0
        %v3961 = vadd.f32 %v759, %v3960
        %v3962 = vpop.f32.mrf.mxu0
        %v3963 = vpop.f32.mrf.mxu0
        %v3964 = vadd.f32 %v759, %v3963
        %v3965 = vpop.f32.mrf.mxu0
        %3966 = vmatprep.mubr.bf16.mxu0 0
        %3967 = vmatmul.mubr.bf16.gmra.mxu0 %v2472
        %v3968 = vpop.f32.mrf.mxu0
        %v3969 = vadd.f32 %v759, %v3968
        %v3970 = vpop.f32.mrf.mxu0
        %v3971 = vpop.f32.mrf.mxu0
        %v3972 = vadd.f32 %v759, %v3971
        %v3973 = vpop.f32.mrf.mxu0
        %3974 = vmatprep.mubr.bf16.mxu0 0
        %3975 = vmatmul.mubr.bf16.gmra.mxu0 %v2475
        %v3976 = vpop.f32.mrf.mxu0
        %v3977 = vadd.f32 %v759, %v3976
        %v3978 = vpop.f32.mrf.mxu0
        %v3979 = vpop.f32.mrf.mxu0
        %v3980 = vadd.f32 %v759, %v3979
        %v3981 = vpop.f32.mrf.mxu0
        %3982 = vmatprep.mubr.bf16.mxu0 0
        %3983 = vmatmul.mubr.bf16.gmra.mxu0 %v2478
        %v3984 = vpop.f32.mrf.mxu0
        %v3985 = vadd.f32 %v759, %v3984
        %v3986 = vpop.f32.mrf.mxu0
        %v3987 = vpop.f32.mrf.mxu0
        %v3988 = vadd.f32 %v759, %v3987
        %v3989 = vpop.f32.mrf.mxu0
        %3990 = vmatprep.mubr.bf16.mxu0 0
        %3991 = vmatmul.mubr.bf16.gmra.mxu0 %v2481
        %v3992 = vpop.f32.mrf.mxu0
        %v3993 = vadd.f32 %v759, %v3992
        %v3994 = vpop.f32.mrf.mxu0
        %v3995 = vpop.f32.mrf.mxu0
        %v3996 = vadd.f32 %v759, %v3995
        %v3997 = vpop.f32.mrf.mxu0
        %3998 = vmatprep.mubr.bf16.mxu0 0
        %3999 = vmatmul.mubr.bf16.gmra.mxu0 %v2484
        %v4000 = vpop.f32.mrf.mxu0
        %v4001 = vadd.f32 %v759, %v4000
        %v4002 = vpop.f32.mrf.mxu0
        %v4003 = vpop.f32.mrf.mxu0
        %v4004 = vadd.f32 %v759, %v4003
        %v4005 = vpop.f32.mrf.mxu0
        %4006 = vmatprep.mubr.bf16.mxu0 0
        %4007 = vmatmul.mubr.bf16.gmra.mxu0 %v2487
        %v4008 = vpop.f32.mrf.mxu0
        %v4009 = vadd.f32 %v759, %v4008
        %v4010 = vpop.f32.mrf.mxu0
        %v4011 = vpop.f32.mrf.mxu0
        %v4012 = vadd.f32 %v759, %v4011
        %v4013 = vpop.f32.mrf.mxu0
        %4014 = vmatprep.mubr.bf16.mxu0 0
        %4015 = vmatmul.mubr.bf16.gmra.mxu0 %v2490
        %v4016 = vpop.f32.mrf.mxu0
        %v4017 = vadd.f32 %v759, %v4016
        %v4018 = vpop.f32.mrf.mxu0
        %v4019 = vpop.f32.mrf.mxu0
        %v4020 = vadd.f32 %v759, %v4019
        %v4021 = vpop.f32.mrf.mxu0
        %4022 = vmatprep.mubr.bf16.mxu0 0
        %4023 = vmatmul.mubr.bf16.gmra.mxu0 %v2493
        %v4024 = vpop.f32.mrf.mxu0
        %v4025 = vadd.f32 %v759, %v4024
        %v4026 = vpop.f32.mrf.mxu0
        %v4027 = vpop.f32.mrf.mxu0
        %v4028 = vadd.f32 %v759, %v4027
        %v4029 = vpop.f32.mrf.mxu0
        %4030 = vmatprep.mubr.bf16.mxu0 0
        %4031 = vmatmul.mubr.bf16.gmra.mxu0 %v2496
        %v4032 = vpop.f32.mrf.mxu0
        %v4033 = vadd.f32 %v759, %v4032
        %v4034 = vpop.f32.mrf.mxu0
        %v4035 = vpop.f32.mrf.mxu0
        %v4036 = vadd.f32 %v759, %v4035
        %v4037 = vpop.f32.mrf.mxu0
        %4038 = vmatprep.mubr.bf16.mxu0 0
        %4039 = vmatmul.mubr.bf16.gmra.mxu0 %v2499
        %v4040 = vpop.f32.mrf.mxu0
        %v4041 = vadd.f32 %v759, %v4040
        %v4042 = vpop.f32.mrf.mxu0
        %v4043 = vpop.f32.mrf.mxu0
        %v4044 = vadd.f32 %v759, %v4043
        %v4045 = vpop.f32.mrf.mxu0
        %4046 = vmatprep.mubr.bf16.mxu0 0
        %4047 = vmatmul.mubr.bf16.gmra.mxu0 %v2502
        %v4048 = vpop.f32.mrf.mxu0
        %v4049 = vadd.f32 %v759, %v4048
        %v4050 = vpop.f32.mrf.mxu0
        %v4051 = vpop.f32.mrf.mxu0
        %v4052 = vadd.f32 %v759, %v4051
        %v4053 = vpop.f32.mrf.mxu0
        %4054 = vmatprep.mubr.bf16.mxu0 0
        %4055 = vmatmul.mubr.bf16.gmra.mxu0 %v2505
        %v4056 = vpop.f32.mrf.mxu0
        %v4057 = vadd.f32 %v759, %v4056
        %v4058 = vpop.f32.mrf.mxu0
        %v4059 = vpop.f32.mrf.mxu0
        %v4060 = vadd.f32 %v759, %v4059
        %v4061 = vpop.f32.mrf.mxu0
        %4062 = vmatprep.mubr.bf16.mxu0 0
        %4063 = vmatmul.mubr.bf16.gmra.mxu0 %v2508
        %v4064 = vpop.f32.mrf.mxu0
        %v4065 = vadd.f32 %v759, %v4064
        %v4066 = vpop.f32.mrf.mxu0
        %v4067 = vpop.f32.mrf.mxu0
        %v4068 = vadd.f32 %v759, %v4067
        %v4069 = vpop.f32.mrf.mxu0
        %4070 = vmatprep.mubr.bf16.mxu0 0
        %4071 = vmatmul.mubr.bf16.gmra.mxu0 %v2511
        %v4072 = vpop.f32.mrf.mxu0
        %v4073 = vadd.f32 %v759, %v4072
        %v4074 = vpop.f32.mrf.mxu0
        %v4075 = vpop.f32.mrf.mxu0
        %v4076 = vadd.f32 %v759, %v4075
        %v4077 = vpop.f32.mrf.mxu0
        %4078 = vmatprep.mubr.bf16.mxu0 0
        %4079 = vmatmul.mubr.bf16.gmra.mxu0 %v2514
        %v4080 = vpop.f32.mrf.mxu0
        %v4081 = vadd.f32 %v759, %v4080
        %v4082 = vpop.f32.mrf.mxu0
        %v4083 = vpop.f32.mrf.mxu0
        %v4084 = vadd.f32 %v759, %v4083
        %v4085 = vpop.f32.mrf.mxu0
        %4086 = vmatprep.mubr.bf16.mxu0 0
        %4087 = vmatmul.mubr.bf16.gmra.mxu0 %v2517
        %v4088 = vpop.f32.mrf.mxu0
        %v4089 = vadd.f32 %v759, %v4088
        %v4090 = vpop.f32.mrf.mxu0
        %v4091 = vpop.f32.mrf.mxu0
        %v4092 = vadd.f32 %v759, %v4091
        %v4093 = vpop.f32.mrf.mxu0
        %4094 = vmatprep.mubr.bf16.mxu0 0
        %4095 = vmatmul.mubr.bf16.gmra.mxu0 %v2520
        %v4096 = vpop.f32.mrf.mxu0
        %v4097 = vadd.f32 %v759, %v4096
        %v4098 = vpop.f32.mrf.mxu0
        %v4099 = vpop.f32.mrf.mxu0
        %v4100 = vadd.f32 %v759, %v4099
        %v4101 = vpop.f32.mrf.mxu0
        %4102 = vmatprep.mubr.bf16.mxu0 0
        %4103 = vmatmul.mubr.bf16.gmra.mxu0 %v2523
        %v4104 = vpop.f32.mrf.mxu0
        %v4105 = vadd.f32 %v759, %v4104
        %v4106 = vpop.f32.mrf.mxu0
        %v4107 = vpop.f32.mrf.mxu0
        %v4108 = vadd.f32 %v759, %v4107
        %v4109 = vpop.f32.mrf.mxu0
        %4110 = vmatprep.mubr.bf16.mxu0 0
        %4111 = vmatmul.mubr.bf16.gmra.mxu0 %v2526
        %v4112 = vpop.f32.mrf.mxu0
        %v4113 = vadd.f32 %v759, %v4112
        %v4114 = vpop.f32.mrf.mxu0
        %v4115 = vpop.f32.mrf.mxu0
        %v4116 = vadd.f32 %v759, %v4115
        %v4117 = vpop.f32.mrf.mxu0
        %4118 = vmatprep.mubr.bf16.mxu0 0
        %4119 = vmatmul.mubr.bf16.gmra.mxu0 %v2529
        %v4120 = vpop.f32.mrf.mxu0
        %v4121 = vadd.f32 %v759, %v4120
        %v4122 = vpop.f32.mrf.mxu0
        %v4123 = vpop.f32.mrf.mxu0
        %v4124 = vadd.f32 %v759, %v4123
        %v4125 = vpop.f32.mrf.mxu0
        %4126 = vmatprep.mubr.bf16.mxu0 0
        %4127 = vmatmul.mubr.bf16.gmra.mxu0 %v2532
        %v4128 = vpop.f32.mrf.mxu0
        %v4129 = vadd.f32 %v759, %v4128
        %v4130 = vpop.f32.mrf.mxu0
        %v4131 = vpop.f32.mrf.mxu0
        %v4132 = vadd.f32 %v759, %v4131
        %v4133 = vpop.f32.mrf.mxu0
        %4134 = vmatprep.mubr.bf16.mxu0 0
        %4135 = vmatmul.mubr.bf16.gmra.mxu0 %v2535
        %v4136 = vpop.f32.mrf.mxu0
        %v4137 = vadd.f32 %v759, %v4136
        %v4138 = vpop.f32.mrf.mxu0
        %v4139 = vpop.f32.mrf.mxu0
        %v4140 = vadd.f32 %v759, %v4139
        %v4141 = vpop.f32.mrf.mxu0
        %4142 = vmatprep.mubr.bf16.mxu0 0
        %4143 = vmatmul.mubr.bf16.gmra.mxu0 %v2538
        %v4144 = vpop.f32.mrf.mxu0
        %v4145 = vadd.f32 %v759, %v4144
        %v4146 = vpop.f32.mrf.mxu0
        %v4147 = vpop.f32.mrf.mxu0
        %v4148 = vadd.f32 %v759, %v4147
        %v4149 = vpop.f32.mrf.mxu0
        %4150 = vmatprep.mubr.bf16.mxu0 0
        %4151 = vmatmul.mubr.bf16.gmra.mxu0 %v2541
        %v4152 = vpop.f32.mrf.mxu0
        %v4153 = vadd.f32 %v759, %v4152
        %v4154 = vpop.f32.mrf.mxu0
        %v4155 = vpop.f32.mrf.mxu0
        %v4156 = vadd.f32 %v759, %v4155
        %v4157 = vpop.f32.mrf.mxu0
        %4158 = vmatprep.mubr.bf16.mxu0 0
        %4159 = vmatmul.mubr.bf16.gmra.mxu0 %v2544
        %v4160 = vpop.f32.mrf.mxu0
        %v4161 = vadd.f32 %v759, %v4160
        %v4162 = vpop.f32.mrf.mxu0
        %v4163 = vpop.f32.mrf.mxu0
        %v4164 = vadd.f32 %v759, %v4163
        %v4165 = vpop.f32.mrf.mxu0
        %4166 = vmatprep.mubr.bf16.mxu0 0
        %4167 = vmatmul.mubr.bf16.gmra.mxu0 %v2547
        %v4168 = vpop.f32.mrf.mxu0
        %v4169 = vadd.f32 %v759, %v4168
        %v4170 = vpop.f32.mrf.mxu0
        %v4171 = vpop.f32.mrf.mxu0
        %v4172 = vadd.f32 %v759, %v4171
        %v4173 = vpop.f32.mrf.mxu0
        %4174 = vmatprep.mubr.bf16.mxu0 0
        %4175 = vmatmul.mubr.bf16.gmra.mxu0 %v2550
        %v4176 = vpop.f32.mrf.mxu0
        %v4177 = vadd.f32 %v759, %v4176
        %v4178 = vpop.f32.mrf.mxu0
        %v4179 = vpop.f32.mrf.mxu0
        %v4180 = vadd.f32 %v759, %v4179
        %v4181 = vpop.f32.mrf.mxu0
        %4182 = vmatprep.mubr.bf16.mxu0 0
        %4183 = vmatmul.mubr.bf16.gmra.mxu0 %v2553
        %v4184 = vpop.f32.mrf.mxu0
        %v4185 = vadd.f32 %v759, %v4184
        %v4186 = vpop.f32.mrf.mxu0
        %v4187 = vpop.f32.mrf.mxu0
        %v4188 = vadd.f32 %v759, %v4187
        %v4189 = vpop.f32.mrf.mxu0
        %4190 = vmatprep.mubr.bf16.mxu0 0
        %4191 = vmatmul.mubr.bf16.gmra.mxu0 %v2556
        %v4192 = vpop.f32.mrf.mxu0
        %v4193 = vadd.f32 %v759, %v4192
        %v4194 = vpop.f32.mrf.mxu0
        %v4195 = vpop.f32.mrf.mxu0
        %v4196 = vadd.f32 %v759, %v4195
        %v4197 = vpop.f32.mrf.mxu0
        %4198 = vmatprep.mubr.bf16.mxu0 0
        %4199 = vmatmul.mubr.bf16.gmra.mxu0 %v2559
        %v4200 = vpop.f32.mrf.mxu0
        %v4201 = vadd.f32 %v759, %v4200
        %v4202 = vpop.f32.mrf.mxu0
        %v4203 = vpop.f32.mrf.mxu0
        %v4204 = vadd.f32 %v759, %v4203
        %v4205 = vpop.f32.mrf.mxu0
        %4206 = vmatprep.mubr.bf16.mxu0 0
        %4207 = vmatmul.mubr.bf16.gmra.mxu0 %v2562
        %v4208 = vpop.f32.mrf.mxu0
        %v4209 = vadd.f32 %v759, %v4208
        %v4210 = vpop.f32.mrf.mxu0
        %v4211 = vpop.f32.mrf.mxu0
        %v4212 = vadd.f32 %v759, %v4211
        %v4213 = vpop.f32.mrf.mxu0
        %4214 = vmatprep.mubr.bf16.mxu0 0
        %4215 = vmatmul.mubr.bf16.gmra.mxu0 %v2565
        %v4216 = vpop.f32.mrf.mxu0
        %v4217 = vadd.f32 %v759, %v4216
        %v4218 = vpop.f32.mrf.mxu0
        %v4219 = vpop.f32.mrf.mxu0
        %v4220 = vadd.f32 %v759, %v4219
        %v4221 = vpop.f32.mrf.mxu0
        %4222 = vmatprep.mubr.bf16.mxu0 0
        %4223 = vmatmul.mubr.bf16.gmra.mxu0 %v2568
        %v4224 = vpop.f32.mrf.mxu0
        %v4225 = vadd.f32 %v759, %v4224
        %v4226 = vpop.f32.mrf.mxu0
        %v4227 = vpop.f32.mrf.mxu0
        %v4228 = vadd.f32 %v759, %v4227
        %v4229 = vpop.f32.mrf.mxu0
        %4230 = vmatprep.mubr.bf16.mxu0 0
        %4231 = vmatmul.mubr.bf16.gmra.mxu0 %v2571
        %v4232 = vpop.f32.mrf.mxu0
        %v4233 = vadd.f32 %v759, %v4232
        %v4234 = vpop.f32.mrf.mxu0
        %v4235 = vpop.f32.mrf.mxu0
        %v4236 = vadd.f32 %v759, %v4235
        %v4237 = vpop.f32.mrf.mxu0
        %4238 = vmatprep.mubr.bf16.mxu0 0
        %4239 = vmatmul.mubr.bf16.gmra.mxu0 %v2574
        %v4240 = vpop.f32.mrf.mxu0
        %v4241 = vadd.f32 %v759, %v4240
        %v4242 = vpop.f32.mrf.mxu0
        %v4243 = vpop.f32.mrf.mxu0
        %v4244 = vadd.f32 %v759, %v4243
        %v4245 = vpop.f32.mrf.mxu0
        %4246 = vmatprep.mubr.bf16.mxu0 0
        %4247 = vmatmul.mubr.bf16.gmra.mxu0 %v2577
        %v4248 = vpop.f32.mrf.mxu0
        %v4249 = vadd.f32 %v759, %v4248
        %v4250 = vpop.f32.mrf.mxu0
        %v4251 = vpop.f32.mrf.mxu0
        %v4252 = vadd.f32 %v759, %v4251
        %v4253 = vpop.f32.mrf.mxu0
        %4254 = vmatprep.mubr.bf16.mxu0 0
        %4255 = vmatmul.mubr.bf16.gmra.mxu0 %v2580
        %v4256 = vpop.f32.mrf.mxu0
        %v4257 = vadd.f32 %v759, %v4256
        %v4258 = vpop.f32.mrf.mxu0
        %v4259 = vpop.f32.mrf.mxu0
        %v4260 = vadd.f32 %v759, %v4259
        %v4261 = vpop.f32.mrf.mxu0
        %4262 = vmatprep.mubr.bf16.mxu0 0
        %4263 = vmatmul.mubr.bf16.gmra.mxu0 %v2583
        %v4264 = vpop.f32.mrf.mxu0
        %v4265 = vadd.f32 %v759, %v4264
        %v4266 = vpop.f32.mrf.mxu0
        %v4267 = vpop.f32.mrf.mxu0
        %v4268 = vadd.f32 %v759, %v4267
        %v4269 = vpop.f32.mrf.mxu0
        %4270 = vmatprep.mubr.bf16.mxu0 0
        %4271 = vmatmul.mubr.bf16.gmra.mxu0 %v2586
        %v4272 = vpop.f32.mrf.mxu0
        %v4273 = vadd.f32 %v759, %v4272
        %v4274 = vpop.f32.mrf.mxu0
        %v4275 = vpop.f32.mrf.mxu0
        %v4276 = vadd.f32 %v759, %v4275
        %v4277 = vpop.f32.mrf.mxu0
        %4278 = vmatprep.mubr.bf16.mxu0 0
        %4279 = vmatmul.mubr.bf16.gmra.mxu0 %v2589
        %v4280 = vpop.f32.mrf.mxu0
        %v4281 = vadd.f32 %v759, %v4280
        %v4282 = vpop.f32.mrf.mxu0
        %v4283 = vpop.f32.mrf.mxu0
        %v4284 = vadd.f32 %v759, %v4283
        %v4285 = vpop.f32.mrf.mxu0
        %4286 = vmatprep.mubr.bf16.mxu0 0
        %4287 = vmatmul.mubr.bf16.gmra.mxu0 %v2592
        %v4288 = vpop.f32.mrf.mxu0
        %v4289 = vadd.f32 %v759, %v4288
        %v4290 = vpop.f32.mrf.mxu0
        %v4291 = vpop.f32.mrf.mxu0
        %v4292 = vadd.f32 %v759, %v4291
        %v4293 = vpop.f32.mrf.mxu0
        %4294 = vmatprep.mubr.bf16.mxu0 0
        %4295 = vmatmul.mubr.bf16.gmra.mxu0 %v2595
        %v4296 = vpop.f32.mrf.mxu0
        %v4297 = vadd.f32 %v759, %v4296
        %v4298 = vpop.f32.mrf.mxu0
        %v4299 = vpop.f32.mrf.mxu0
        %v4300 = vadd.f32 %v759, %v4299
        %v4301 = vpop.f32.mrf.mxu0
        %4302 = vmatprep.mubr.bf16.mxu0 0
        %4303 = vmatmul.mubr.bf16.gmra.mxu0 %v2598
        %v4304 = vpop.f32.mrf.mxu0
        %v4305 = vadd.f32 %v759, %v4304
        %v4306 = vpop.f32.mrf.mxu0
        %v4307 = vpop.f32.mrf.mxu0
        %v4308 = vadd.f32 %v759, %v4307
        %v4309 = vpop.f32.mrf.mxu0
        %4310 = vmatprep.mubr.bf16.mxu0 0
        %4311 = vmatmul.mubr.bf16.gmra.mxu0 %v2601
        %v4312 = vpop.f32.mrf.mxu0
        %v4313 = vadd.f32 %v759, %v4312
        %v4314 = vpop.f32.mrf.mxu0
        %v4315 = vpop.f32.mrf.mxu0
        %v4316 = vadd.f32 %v759, %v4315
        %v4317 = vpop.f32.mrf.mxu0
        %4318 = vmatprep.mubr.bf16.mxu0 0
        %4319 = vmatmul.mubr.bf16.gmra.mxu0 %v2604
        %v4320 = vpop.f32.mrf.mxu0
        %v4321 = vadd.f32 %v759, %v4320
        %v4322 = vpop.f32.mrf.mxu0
        %v4323 = vpop.f32.mrf.mxu0
        %v4324 = vadd.f32 %v759, %v4323
        %v4325 = vpop.f32.mrf.mxu0
        %4326 = vmatprep.mubr.bf16.mxu0 0
        %4327 = vmatmul.mubr.bf16.gmra.mxu0 %v2607
        %v4328 = vpop.f32.mrf.mxu0
        %v4329 = vadd.f32 %v759, %v4328
        %v4330 = vpop.f32.mrf.mxu0
        %v4331 = vpop.f32.mrf.mxu0
        %v4332 = vadd.f32 %v759, %v4331
        %v4333 = vpop.f32.mrf.mxu0
        %4334 = vmatprep.mubr.bf16.mxu0 0
        %4335 = vmatmul.mubr.bf16.gmra.mxu0 %v2610
        %v4336 = vpop.f32.mrf.mxu0
        %v4337 = vadd.f32 %v759, %v4336
        %v4338 = vpop.f32.mrf.mxu0
        %v4339 = vpop.f32.mrf.mxu0
        %v4340 = vadd.f32 %v759, %v4339
        %v4341 = vpop.f32.mrf.mxu0
        %4342 = vmatprep.mubr.bf16.mxu0 0
        %4343 = vmatmul.mubr.bf16.gmra.mxu0 %v2613
        %v4344 = vpop.f32.mrf.mxu0
        %v4345 = vadd.f32 %v759, %v4344
        %v4346 = vpop.f32.mrf.mxu0
        %v4347 = vpop.f32.mrf.mxu0
        %v4348 = vadd.f32 %v759, %v4347
        %v4349 = vpop.f32.mrf.mxu0
        %4350 = vmatprep.mubr.bf16.mxu0 0
        %4351 = vmatmul.mubr.bf16.gmra.mxu0 %v2616
        %v4352 = vpop.f32.mrf.mxu0
        %v4353 = vadd.f32 %v759, %v4352
        %v4354 = vpop.f32.mrf.mxu0
        %v4355 = vpop.f32.mrf.mxu0
        %v4356 = vadd.f32 %v759, %v4355
        %v4357 = vpop.f32.mrf.mxu0
        %4358 = vmatprep.mubr.bf16.mxu0 0
        %4359 = vmatmul.mubr.bf16.gmra.mxu0 %v2619
        %v4360 = vpop.f32.mrf.mxu0
        %v4361 = vadd.f32 %v759, %v4360
        %v4362 = vpop.f32.mrf.mxu0
        %v4363 = vpop.f32.mrf.mxu0
        %v4364 = vadd.f32 %v759, %v4363
        %v4365 = vpop.f32.mrf.mxu0
        %4366 = vmatprep.mubr.bf16.mxu0 0
        %4367 = vmatmul.mubr.bf16.gmra.mxu0 %v2622
        %v4368 = vpop.f32.mrf.mxu0
        %v4369 = vadd.f32 %v759, %v4368
        %v4370 = vpop.f32.mrf.mxu0
        %v4371 = vpop.f32.mrf.mxu0
        %v4372 = vadd.f32 %v759, %v4371
        %v4373 = vpop.f32.mrf.mxu0
        %4374 = vmatprep.mubr.bf16.mxu0 0
        %4375 = vmatmul.mubr.bf16.gmra.mxu0 %v2625
        %v4376 = vpop.f32.mrf.mxu0
        %v4377 = vadd.f32 %v759, %v4376
        %v4378 = vpop.f32.mrf.mxu0
        %v4379 = vpop.f32.mrf.mxu0
        %v4380 = vadd.f32 %v759, %v4379
        %v4381 = vpop.f32.mrf.mxu0
        %4382 = vmatprep.mubr.bf16.mxu0 0
        %4383 = vmatmul.mubr.bf16.gmra.mxu0 %v2628
        %v4384 = vpop.f32.mrf.mxu0
        %v4385 = vadd.f32 %v759, %v4384
        %v4386 = vpop.f32.mrf.mxu0
        %v4387 = vpop.f32.mrf.mxu0
        %v4388 = vadd.f32 %v759, %v4387
        %v4389 = vpop.f32.mrf.mxu0
        %4390 = vmatprep.mubr.bf16.mxu0 0
        %4391 = vmatmul.mubr.bf16.gmra.mxu0 %v2631
        %v4392 = vpop.f32.mrf.mxu0
        %v4393 = vadd.f32 %v759, %v4392
        %v4394 = vpop.f32.mrf.mxu0
        %v4395 = vpop.f32.mrf.mxu0
        %v4396 = vadd.f32 %v759, %v4395
        %v4397 = vpop.f32.mrf.mxu0
        %4398 = vmatprep.mubr.bf16.mxu0 0
        %4399 = vmatmul.mubr.bf16.gmra.mxu0 %v2634
        %v4400 = vpop.f32.mrf.mxu0
        %v4401 = vadd.f32 %v759, %v4400
        %v4402 = vpop.f32.mrf.mxu0
        %v4403 = vpop.f32.mrf.mxu0
        %v4404 = vadd.f32 %v759, %v4403
        %v4405 = vpop.f32.mrf.mxu0
        %4406 = vmatprep.mubr.bf16.mxu0 0
        %4407 = vmatmul.mubr.bf16.gmra.mxu0 %v2637
        %v4408 = vpop.f32.mrf.mxu0
        %v4409 = vadd.f32 %v759, %v4408
        %v4410 = vpop.f32.mrf.mxu0
        %v4411 = vpop.f32.mrf.mxu0
        %v4412 = vadd.f32 %v759, %v4411
        %v4413 = vpop.f32.mrf.mxu0
        %4414 = vmatprep.mubr.bf16.mxu0 0
        %4415 = vmatmul.mubr.bf16.gmra.mxu0 %v2640
        %v4416 = vpop.f32.mrf.mxu0
        %v4417 = vadd.f32 %v759, %v4416
        %v4418 = vpop.f32.mrf.mxu0
        %v4419 = vpop.f32.mrf.mxu0
        %v4420 = vadd.f32 %v759, %v4419
        %v4421 = vpop.f32.mrf.mxu0
        %4422 = vmatprep.mubr.bf16.mxu0 0
        %4423 = vmatmul.mubr.bf16.gmra.mxu0 %v2643
        %v4424 = vpop.f32.mrf.mxu0
        %v4425 = vadd.f32 %v759, %v4424
        %v4426 = vpop.f32.mrf.mxu0
        %v4427 = vpop.f32.mrf.mxu0
        %v4428 = vadd.f32 %v759, %v4427
        %v4429 = vpop.f32.mrf.mxu0
        %4430 = vmatprep.mubr.bf16.mxu0 0
        %4431 = vmatmul.mubr.bf16.gmra.mxu0 %v2646
        %v4432 = vpop.f32.mrf.mxu0
        %v4433 = vadd.f32 %v759, %v4432
        %v4434 = vpop.f32.mrf.mxu0
        %v4435 = vpop.f32.mrf.mxu0
        %v4436 = vadd.f32 %v759, %v4435
        %v4437 = vpop.f32.mrf.mxu0
        %4438 = vmatprep.mubr.bf16.mxu0 0
        %4439 = vmatmul.mubr.bf16.gmra.mxu0 %v2649
        %v4440 = vpop.f32.mrf.mxu0
        %v4441 = vadd.f32 %v759, %v4440
        %v4442 = vpop.f32.mrf.mxu0
        %v4443 = vpop.f32.mrf.mxu0
        %v4444 = vadd.f32 %v759, %v4443
        %v4445 = vpop.f32.mrf.mxu0
        %4446 = vmatprep.mubr.bf16.mxu0 0
        %4447 = vmatmul.mubr.bf16.gmra.mxu0 %v2652
        %v4448 = vpop.f32.mrf.mxu0
        %v4449 = vadd.f32 %v759, %v4448
        %v4450 = vpop.f32.mrf.mxu0
        %v4451 = vpop.f32.mrf.mxu0
        %v4452 = vadd.f32 %v759, %v4451
        %v4453 = vpop.f32.mrf.mxu0
        %4454 = vmatprep.mubr.bf16.mxu0 0
        %4455 = vmatmul.mubr.bf16.gmra.mxu0 %v2655
        %v4456 = vpop.f32.mrf.mxu0
        %v4457 = vadd.f32 %v759, %v4456
        %v4458 = vpop.f32.mrf.mxu0
        %v4459 = vpop.f32.mrf.mxu0
        %v4460 = vadd.f32 %v759, %v4459
        %v4461 = vpop.f32.mrf.mxu0
        %4462 = vmatprep.mubr.bf16.mxu0 0
        %4463 = vmatmul.mubr.bf16.gmra.mxu0 %v2658
        %v4464 = vpop.f32.mrf.mxu0
        %v4465 = vadd.f32 %v759, %v4464
        %v4466 = vpop.f32.mrf.mxu0
        %v4467 = vpop.f32.mrf.mxu0
        %v4468 = vadd.f32 %v759, %v4467
        %v4469 = vpop.f32.mrf.mxu0
        %4470 = vmatprep.mubr.bf16.mxu0 0
        %4471 = vmatmul.mubr.bf16.gmra.mxu0 %v2661
        %v4472 = vpop.f32.mrf.mxu0
        %v4473 = vadd.f32 %v759, %v4472
        %v4474 = vpop.f32.mrf.mxu0
        %v4475 = vpop.f32.mrf.mxu0
        %v4476 = vadd.f32 %v759, %v4475
        %v4477 = vpop.f32.mrf.mxu0
        %4478 = vmatprep.mubr.bf16.mxu0 0
        %4479 = vmatmul.mubr.bf16.gmra.mxu0 %v2664
        %v4480 = vpop.f32.mrf.mxu0
        %v4481 = vadd.f32 %v759, %v4480
        %v4482 = vpop.f32.mrf.mxu0
        %v4483 = vpop.f32.mrf.mxu0
        %v4484 = vadd.f32 %v759, %v4483
        %v4485 = vpop.f32.mrf.mxu0
        %4486 = vmatprep.mubr.bf16.mxu0 0
        %4487 = vmatmul.mubr.bf16.gmra.mxu0 %v2667
        %v4488 = vpop.f32.mrf.mxu0
        %v4489 = vadd.f32 %v759, %v4488
        %v4490 = vpop.f32.mrf.mxu0
        %v4491 = vpop.f32.mrf.mxu0
        %v4492 = vadd.f32 %v759, %v4491
        %v4493 = vpop.f32.mrf.mxu0
        %4494 = vmatprep.mubr.bf16.mxu0 0
        %4495 = vmatmul.mubr.bf16.gmra.mxu0 %v2670
        %v4496 = vpop.f32.mrf.mxu0
        %v4497 = vadd.f32 %v759, %v4496
        %v4498 = vpop.f32.mrf.mxu0
        %v4499 = vpop.f32.mrf.mxu0
        %v4500 = vadd.f32 %v759, %v4499
        %v4501 = vpop.f32.mrf.mxu0
        %4502 = vmatprep.mubr.bf16.mxu0 0
        %4503 = vmatmul.mubr.bf16.gmra.mxu0 %v2673
        %v4504 = vpop.f32.mrf.mxu0
        %v4505 = vadd.f32 %v759, %v4504
        %v4506 = vpop.f32.mrf.mxu0
        %v4507 = vpop.f32.mrf.mxu0
        %v4508 = vadd.f32 %v759, %v4507
        %v4509 = vpop.f32.mrf.mxu0
        %4510 = vmatprep.mubr.bf16.mxu0 0
        %4511 = vmatmul.mubr.bf16.gmra.mxu0 %v2676
        %v4512 = vpop.f32.mrf.mxu0
        %v4513 = vadd.f32 %v759, %v4512
        %v4514 = vpop.f32.mrf.mxu0
        %v4515 = vpop.f32.mrf.mxu0
        %v4516 = vadd.f32 %v759, %v4515
        %v4517 = vpop.f32.mrf.mxu0
        %4518 = vmatprep.mubr.bf16.mxu0 0
        %4519 = vmatmul.mubr.bf16.gmra.mxu0 %v2679
        %v4520 = vpop.f32.mrf.mxu0
        %v4521 = vadd.f32 %v759, %v4520
        %v4522 = vpop.f32.mrf.mxu0
        %v4523 = vpop.f32.mrf.mxu0
        %v4524 = vadd.f32 %v759, %v4523
        %v4525 = vpop.f32.mrf.mxu0
        %4526 = vmatprep.mubr.bf16.mxu0 0
        %4527 = vmatmul.mubr.bf16.gmra.mxu0 %v2682
        %v4528 = vpop.f32.mrf.mxu0
        %v4529 = vadd.f32 %v759, %v4528
        %v4530 = vpop.f32.mrf.mxu0
        %v4531 = vpop.f32.mrf.mxu0
        %v4532 = vadd.f32 %v759, %v4531
        %v4533 = vpop.f32.mrf.mxu0
        %4534 = vmatprep.mubr.bf16.mxu0 0
        %4535 = vmatmul.mubr.bf16.gmra.mxu0 %v2685
        %v4536 = vpop.f32.mrf.mxu0
        %v4537 = vadd.f32 %v759, %v4536
        %v4538 = vpop.f32.mrf.mxu0
        %v4539 = vpop.f32.mrf.mxu0
        %v4540 = vadd.f32 %v759, %v4539
        %v4541 = vpop.f32.mrf.mxu0
        %4542 = vmatprep.mubr.bf16.mxu0 0
        %4543 = vmatmul.mubr.bf16.gmra.mxu0 %v2688
        %v4544 = vpop.f32.mrf.mxu0
        %v4545 = vadd.f32 %v759, %v4544
        %v4546 = vpop.f32.mrf.mxu0
        %v4547 = vpop.f32.mrf.mxu0
        %v4548 = vadd.f32 %v759, %v4547
        %v4549 = vpop.f32.mrf.mxu0
        %4550 = vmatprep.mubr.bf16.mxu0 0
        %4551 = vmatmul.mubr.bf16.gmra.mxu0 %v2691
        %v4552 = vpop.f32.mrf.mxu0
        %v4553 = vadd.f32 %v759, %v4552
        %v4554 = vpop.f32.mrf.mxu0
        %v4555 = vpop.f32.mrf.mxu0
        %v4556 = vadd.f32 %v759, %v4555
        %v4557 = vpop.f32.mrf.mxu0
        %4558 = vmatprep.mubr.bf16.mxu0 0
        %4559 = vmatmul.mubr.bf16.gmra.mxu0 %v2694
        %v4560 = vpop.f32.mrf.mxu0
        %v4561 = vadd.f32 %v759, %v4560
        %v4562 = vpop.f32.mrf.mxu0
        %v4563 = vpop.f32.mrf.mxu0
        %v4564 = vadd.f32 %v759, %v4563
        %v4565 = vpop.f32.mrf.mxu0
        %4566 = vmatprep.mubr.bf16.mxu0 0
        %4567 = vmatmul.mubr.bf16.gmra.mxu0 %v2697
        %v4568 = vpop.f32.mrf.mxu0
        %v4569 = vadd.f32 %v759, %v4568
        %v4570 = vpop.f32.mrf.mxu0
        %v4571 = vpop.f32.mrf.mxu0
        %v4572 = vadd.f32 %v759, %v4571
        %v4573 = vpop.f32.mrf.mxu0
        %4574 = vmatprep.mubr.bf16.mxu0 0
        %4575 = vmatmul.mubr.bf16.gmra.mxu0 %v2700
        %v4576 = vpop.f32.mrf.mxu0
        %v4577 = vadd.f32 %v759, %v4576
        %v4578 = vpop.f32.mrf.mxu0
        %v4579 = vpop.f32.mrf.mxu0
        %v4580 = vadd.f32 %v759, %v4579
        %v4581 = vpop.f32.mrf.mxu0
        %4582 = vmatprep.mubr.bf16.mxu0 0
        %4583 = vmatmul.mubr.bf16.gmra.mxu0 %v2703
        %v4584 = vpop.f32.mrf.mxu0
        %v4585 = vadd.f32 %v759, %v4584
        %v4586 = vpop.f32.mrf.mxu0
        %v4587 = vpop.f32.mrf.mxu0
        %v4588 = vadd.f32 %v759, %v4587
        %v4589 = vpop.f32.mrf.mxu0
        %4590 = vmatprep.mubr.bf16.mxu0 0
        %4591 = vmatmul.mubr.bf16.gmra.mxu0 %v2706
        %v4592 = vpop.f32.mrf.mxu0
        %v4593 = vadd.f32 %v759, %v4592
        %v4594 = vpop.f32.mrf.mxu0
        %v4595 = vpop.f32.mrf.mxu0
        %v4596 = vadd.f32 %v759, %v4595
        %v4597 = vpop.f32.mrf.mxu0
        %4598 = vmatprep.mubr.bf16.mxu0 0
        %4599 = vmatmul.mubr.bf16.gmra.mxu0 %v2709
        %v4600 = vpop.f32.mrf.mxu0
        %v4601 = vadd.f32 %v759, %v4600
        %v4602 = vpop.f32.mrf.mxu0
        %v4603 = vpop.f32.mrf.mxu0
        %v4604 = vadd.f32 %v759, %v4603
        %v4605 = vpop.f32.mrf.mxu0
        %4606 = vmatprep.mubr.bf16.mxu0 0
        %4607 = vmatmul.mubr.bf16.gmra.mxu0 %v2712
        %v4608 = vpop.f32.mrf.mxu0
        %v4609 = vadd.f32 %v759, %v4608
        %v4610 = vpop.f32.mrf.mxu0
        %v4611 = vpop.f32.mrf.mxu0
        %v4612 = vadd.f32 %v759, %v4611
        %v4613 = vpop.f32.mrf.mxu0
        %4614 = vmatprep.mubr.bf16.mxu0 0
        %4615 = vmatmul.mubr.bf16.gmra.mxu0 %v2715
        %v4616 = vpop.f32.mrf.mxu0
        %v4617 = vadd.f32 %v759, %v4616
        %v4618 = vpop.f32.mrf.mxu0
        %v4619 = vpop.f32.mrf.mxu0
        %v4620 = vadd.f32 %v759, %v4619
        %v4621 = vpop.f32.mrf.mxu0
        %4622 = vmatprep.mubr.bf16.mxu0 0
        %4623 = vmatmul.mubr.bf16.gmra.mxu0 %v2718
        %v4624 = vpop.f32.mrf.mxu0
        %v4625 = vadd.f32 %v759, %v4624
        %v4626 = vpop.f32.mrf.mxu0
        %v4627 = vpop.f32.mrf.mxu0
        %v4628 = vadd.f32 %v759, %v4627
        %v4629 = vpop.f32.mrf.mxu0
        %4630 = vmatprep.mubr.bf16.mxu0 0
        %4631 = vmatmul.mubr.bf16.gmra.mxu0 %v2721
        %v4632 = vpop.f32.mrf.mxu0
        %v4633 = vadd.f32 %v759, %v4632
        %v4634 = vpop.f32.mrf.mxu0
        %v4635 = vpop.f32.mrf.mxu0
        %v4636 = vadd.f32 %v759, %v4635
        %v4637 = vpop.f32.mrf.mxu0
        %4638 = vmatprep.mubr.bf16.mxu0 0
        %4639 = vmatmul.mubr.bf16.gmra.mxu0 %v2724
        %v4640 = vpop.f32.mrf.mxu0
        %v4641 = vadd.f32 %v759, %v4640
        %v4642 = vpop.f32.mrf.mxu0
        %v4643 = vpop.f32.mrf.mxu0
        %v4644 = vadd.f32 %v759, %v4643
        %v4645 = vpop.f32.mrf.mxu0
        %4646 = vmatprep.mubr.bf16.mxu0 0
        %4647 = vmatmul.mubr.bf16.gmra.mxu0 %v2727
        %v4648 = vpop.f32.mrf.mxu0
        %v4649 = vadd.f32 %v759, %v4648
        %v4650 = vpop.f32.mrf.mxu0
        %v4651 = vpop.f32.mrf.mxu0
        %v4652 = vadd.f32 %v759, %v4651
        %v4653 = vpop.f32.mrf.mxu0
        %4654 = vmatprep.mubr.bf16.mxu0 0
        %4655 = vmatmul.mubr.bf16.gmra.mxu0 %v2730
        %v4656 = vpop.f32.mrf.mxu0
        %v4657 = vadd.f32 %v759, %v4656
        %v4658 = vpop.f32.mrf.mxu0
        %v4659 = vpop.f32.mrf.mxu0
        %v4660 = vadd.f32 %v759, %v4659
        %v4661 = vpop.f32.mrf.mxu0
        %4662 = vmatprep.mubr.bf16.mxu0 0
        %4663 = vmatmul.mubr.bf16.gmra.mxu0 %v2733
        %v4664 = vpop.f32.mrf.mxu0
        %v4665 = vadd.f32 %v759, %v4664
        %v4666 = vpop.f32.mrf.mxu0
        %v4667 = vpop.f32.mrf.mxu0
        %v4668 = vadd.f32 %v759, %v4667
        %v4669 = vpop.f32.mrf.mxu0
        %4670 = vmatprep.mubr.bf16.mxu0 0
        %4671 = vmatmul.mubr.bf16.gmra.mxu0 %v2736
        %v4672 = vpop.f32.mrf.mxu0
        %v4673 = vadd.f32 %v759, %v4672
        %v4674 = vpop.f32.mrf.mxu0
        %v4675 = vpop.f32.mrf.mxu0
        %v4676 = vadd.f32 %v759, %v4675
        %v4677 = vpop.f32.mrf.mxu0
        %4678 = vmatprep.mubr.bf16.mxu0 0
        %4679 = vmatmul.mubr.bf16.gmra.mxu0 %v2739
        %v4680 = vpop.f32.mrf.mxu0
        %v4681 = vadd.f32 %v759, %v4680
        %v4682 = vpop.f32.mrf.mxu0
        %v4683 = vpop.f32.mrf.mxu0
        %v4684 = vadd.f32 %v759, %v4683
        %v4685 = vpop.f32.mrf.mxu0
        %4686 = vmatprep.mubr.bf16.mxu0 0
        %4687 = vmatmul.mubr.bf16.gmra.mxu0 %v2742
        %v4688 = vpop.f32.mrf.mxu0
        %v4689 = vadd.f32 %v759, %v4688
        %v4690 = vpop.f32.mrf.mxu0
        %v4691 = vpop.f32.mrf.mxu0
        %v4692 = vadd.f32 %v759, %v4691
        %v4693 = vpop.f32.mrf.mxu0
        %4694 = vmatprep.mubr.bf16.mxu0 0
        %4695 = vmatmul.mubr.bf16.gmra.mxu0 %v2745
        %v4696 = vpop.f32.mrf.mxu0
        %v4697 = vadd.f32 %v759, %v4696
        %v4698 = vpop.f32.mrf.mxu0
        %v4699 = vpop.f32.mrf.mxu0
        %v4700 = vadd.f32 %v759, %v4699
        %v4701 = vpop.f32.mrf.mxu0
        %4702 = vmatprep.mubr.bf16.mxu0 0
        %4703 = vmatmul.mubr.bf16.gmra.mxu0 %v2748
        %v4704 = vpop.f32.mrf.mxu0
        %v4705 = vadd.f32 %v759, %v4704
        %v4706 = vpop.f32.mrf.mxu0
        %v4707 = vpop.f32.mrf.mxu0
        %v4708 = vadd.f32 %v759, %v4707
        %v4709 = vpop.f32.mrf.mxu0
        %4710 = vmatprep.mubr.bf16.mxu0 0
        %4711 = vmatmul.mubr.bf16.gmra.mxu0 %v2751
        %v4712 = vpop.f32.mrf.mxu0
        %v4713 = vadd.f32 %v759, %v4712
        %v4714 = vpop.f32.mrf.mxu0
        %v4715 = vpop.f32.mrf.mxu0
        %v4716 = vadd.f32 %v759, %v4715
        %v4717 = vpop.f32.mrf.mxu0
        %4718 = vmatprep.mubr.bf16.mxu0 0
        %4719 = vmatmul.mubr.bf16.gmra.mxu0 %v2754
        %v4720 = vpop.f32.mrf.mxu0
        %v4721 = vadd.f32 %v759, %v4720
        %v4722 = vpop.f32.mrf.mxu0
        %v4723 = vpop.f32.mrf.mxu0
        %v4724 = vadd.f32 %v759, %v4723
        %v4725 = vpop.f32.mrf.mxu0
        %4726 = vmatprep.mubr.bf16.mxu0 0
        %4727 = vmatmul.mubr.bf16.gmra.mxu0 %v2757
        %v4728 = vpop.f32.mrf.mxu0
        %v4729 = vadd.f32 %v759, %v4728
        %v4730 = vpop.f32.mrf.mxu0
        %v4731 = vpop.f32.mrf.mxu0
        %v4732 = vadd.f32 %v759, %v4731
        %v4733 = vpop.f32.mrf.mxu0
        %4734 = vmatprep.mubr.bf16.mxu0 0
        %4735 = vmatmul.mubr.bf16.gmra.mxu0 %v2760
        %v4736 = vpop.f32.mrf.mxu0
        %v4737 = vadd.f32 %v759, %v4736
        %v4738 = vpop.f32.mrf.mxu0
        %v4739 = vpop.f32.mrf.mxu0
        %v4740 = vadd.f32 %v759, %v4739
        %v4741 = vpop.f32.mrf.mxu0
        %4742 = vmatprep.mubr.bf16.mxu0 0
        %4743 = vmatmul.mubr.bf16.gmra.mxu0 %v2763
        %v4744 = vpop.f32.mrf.mxu0
        %v4745 = vadd.f32 %v759, %v4744
        %v4746 = vpop.f32.mrf.mxu0
        %v4747 = vpop.f32.mrf.mxu0
        %v4748 = vadd.f32 %v759, %v4747
        %v4749 = vpop.f32.mrf.mxu0
        %4750 = vmatprep.mubr.bf16.mxu0 0
        %4751 = vmatmul.mubr.bf16.gmra.mxu0 %v2766
        %v4752 = vpop.f32.mrf.mxu0
        %v4753 = vadd.f32 %v759, %v4752
        %v4754 = vpop.f32.mrf.mxu0
        %v4755 = vpop.f32.mrf.mxu0
        %v4756 = vadd.f32 %v759, %v4755
        %v4757 = vpop.f32.mrf.mxu0
        %4758 = vmatprep.mubr.bf16.mxu0 0
        %4759 = vmatmul.mubr.bf16.gmra.mxu0 %v2769
        %v4760 = vpop.f32.mrf.mxu0
        %v4761 = vadd.f32 %v759, %v4760
        %v4762 = vpop.f32.mrf.mxu0
        %v4763 = vpop.f32.mrf.mxu0
        %v4764 = vadd.f32 %v759, %v4763
        %v4765 = vpop.f32.mrf.mxu0
        %4766 = vmatprep.mubr.bf16.mxu0 0
        %4767 = vmatmul.mubr.bf16.gmra.mxu0 %v2772
        %v4768 = vpop.f32.mrf.mxu0
        %v4769 = vadd.f32 %v759, %v4768
        %v4770 = vpop.f32.mrf.mxu0
        %v4771 = vpop.f32.mrf.mxu0
        %v4772 = vadd.f32 %v759, %v4771
        %v4773 = vpop.f32.mrf.mxu0
        %4774 = vmatprep.mubr.bf16.mxu0 0
        %4775 = vmatmul.mubr.bf16.gmra.mxu0 %v2775
        %v4776 = vpop.f32.mrf.mxu0
        %v4777 = vadd.f32 %v759, %v4776
        %v4778 = vpop.f32.mrf.mxu0
        %v4779 = vpop.f32.mrf.mxu0
        %v4780 = vadd.f32 %v759, %v4779
        %v4781 = vpop.f32.mrf.mxu0
        %4782 = vmatprep.mubr.bf16.mxu0 0
        %4783 = vmatmul.mubr.bf16.gmra.mxu0 %v2778
        %v4784 = vpop.f32.mrf.mxu0
        %v4785 = vadd.f32 %v759, %v4784
        %v4786 = vpop.f32.mrf.mxu0
        %v4787 = vpop.f32.mrf.mxu0
        %v4788 = vadd.f32 %v759, %v4787
        %v4789 = vpop.f32.mrf.mxu0
        %4790 = vmatprep.mubr.bf16.mxu0 0
        %4791 = vmatmul.mubr.bf16.gmra.mxu0 %v2781
        %v4792 = vpop.f32.mrf.mxu0
        %v4793 = vadd.f32 %v759, %v4792
        %v4794 = vpop.f32.mrf.mxu0
        %v4795 = vpop.f32.mrf.mxu0
        %v4796 = vadd.f32 %v759, %v4795
        %v4797 = vpop.f32.mrf.mxu0
        %4798 = vmatprep.mubr.bf16.mxu0 0
        %4799 = vmatmul.mubr.bf16.gmra.mxu0 %v2784
        %v4800 = vpop.f32.mrf.mxu0
        %v4801 = vadd.f32 %v759, %v4800
        %v4802 = vpop.f32.mrf.mxu0
        %v4803 = vpop.f32.mrf.mxu0
        %v4804 = vadd.f32 %v759, %v4803
        %v4805 = vpop.f32.mrf.mxu0
        %4806 = vmatprep.mubr.bf16.mxu0 0
        %4807 = vmatmul.mubr.bf16.gmra.mxu0 %v2787
        %v4808 = vpop.f32.mrf.mxu0
        %v4809 = vadd.f32 %v759, %v4808
        %v4810 = vpop.f32.mrf.mxu0
        %v4811 = vpop.f32.mrf.mxu0
        %v4812 = vadd.f32 %v759, %v4811
        %v4813 = vpop.f32.mrf.mxu0
        %4814 = vmatprep.mubr.bf16.mxu0 0
        %4815 = vmatmul.mubr.bf16.gmra.mxu0 %v2790
        %v4816 = vpop.f32.mrf.mxu0
        %v4817 = vadd.f32 %v759, %v4816
        %v4818 = vpop.f32.mrf.mxu0
        %v4819 = vpop.f32.mrf.mxu0
        %v4820 = vadd.f32 %v759, %v4819
        %v4821 = vpop.f32.mrf.mxu0
        %4822 = vmatprep.mubr.bf16.mxu0 0
        %4823 = vmatmul.mubr.bf16.gmra.mxu0 %v2793
        %v4824 = vpop.f32.mrf.mxu0
        %v4825 = vadd.f32 %v759, %v4824
        %v4826 = vpop.f32.mrf.mxu0
        %v4827 = vpop.f32.mrf.mxu0
        %v4828 = vadd.f32 %v759, %v4827
        %v4829 = vpop.f32.mrf.mxu0
        %4830 = vmatprep.mubr.bf16.mxu0 0
        %4831 = vmatmul.mubr.bf16.gmra.mxu0 %v2796
        %v4832 = vpop.f32.mrf.mxu0
        %v4833 = vadd.f32 %v759, %v4832
        %v4834 = vpop.f32.mrf.mxu0
        %v4835 = vpop.f32.mrf.mxu0
        %v4836 = vadd.f32 %v759, %v4835
        %v4837 = vpop.f32.mrf.mxu0
        %4838 = vmatprep.mubr.bf16.mxu0 0
        %4839 = vmatmul.mubr.bf16.gmra.mxu0 %v2799
        %v4840 = vpop.f32.mrf.mxu0
        %v4841 = vadd.f32 %v759, %v4840
        %v4842 = vpop.f32.mrf.mxu0
        %v4843 = vpop.f32.mrf.mxu0
        %v4844 = vadd.f32 %v759, %v4843
        %v4845 = vpop.f32.mrf.mxu0
        %4846 = vmatprep.mubr.bf16.mxu0 0
        %4847 = vmatmul.mubr.bf16.gmra.mxu0 %v2802
        %v4848 = vpop.f32.mrf.mxu0
        %v4849 = vadd.f32 %v759, %v4848
        %v4850 = vpop.f32.mrf.mxu0
        %v4851 = vpop.f32.mrf.mxu0
        %v4852 = vadd.f32 %v759, %v4851
        %v4853 = vpop.f32.mrf.mxu0
        %4854 = vmatprep.mubr.bf16.mxu0 0
        %4855 = vmatmul.mubr.bf16.gmra.mxu0 %v2805
        %v4856 = vpop.f32.mrf.mxu0
        %v4857 = vadd.f32 %v759, %v4856
        %v4858 = vpop.f32.mrf.mxu0
        %v4859 = vpop.f32.mrf.mxu0
        %v4860 = vadd.f32 %v759, %v4859
        %v4861 = vpop.f32.mrf.mxu0
        %4862 = vmatprep.mubr.bf16.mxu0 0
        %4863 = vmatmul.mubr.bf16.gmra.mxu0 %v2808
        %v4864 = vpop.f32.mrf.mxu0
        %v4865 = vadd.f32 %v759, %v4864
        %v4866 = vpop.f32.mrf.mxu0
        %v4867 = vpop.f32.mrf.mxu0
        %v4868 = vadd.f32 %v759, %v4867
        %v4869 = vpop.f32.mrf.mxu0
        %4870 = vmatprep.mubr.bf16.mxu0 0
        %4871 = vmatmul.mubr.bf16.gmra.mxu0 %v2811
        %v4872 = vpop.f32.mrf.mxu0
        %v4873 = vadd.f32 %v759, %v4872
        %v4874 = vpop.f32.mrf.mxu0
        %v4875 = vpop.f32.mrf.mxu0
        %v4876 = vadd.f32 %v759, %v4875
        %v4877 = vpop.f32.mrf.mxu0
        %4878 = vmatprep.mubr.bf16.mxu0 0
        %4879 = vmatmul.mubr.bf16.gmra.mxu0 %v2814
        %v4880 = vpop.f32.mrf.mxu0
        %v4881 = vadd.f32 %v759, %v4880
        %v4882 = vpop.f32.mrf.mxu0
        %v4883 = vpop.f32.mrf.mxu0
        %v4884 = vadd.f32 %v759, %v4883
        %v4885 = vpop.f32.mrf.mxu0
        %4886 = vmatprep.mubr.bf16.mxu0 0
        %4887 = vmatmul.mubr.bf16.gmra.mxu0 %v2817
        %v4888 = vpop.f32.mrf.mxu0
        %v4889 = vadd.f32 %v759, %v4888
        %v4890 = vpop.f32.mrf.mxu0
        %v4891 = vpop.f32.mrf.mxu0
        %v4892 = vadd.f32 %v759, %v4891
        %v4893 = vpop.f32.mrf.mxu0
        %4894 = vmatprep.mubr.bf16.mxu0 0
        %4895 = vmatmul.mubr.bf16.gmra.mxu0 %v2820
        %v4896 = vpop.f32.mrf.mxu0
        %v4897 = vadd.f32 %v759, %v4896
        %v4898 = vpop.f32.mrf.mxu0
        %v4899 = vpop.f32.mrf.mxu0
        %v4900 = vadd.f32 %v759, %v4899
        %v4901 = vpop.f32.mrf.mxu0
        %4902 = vdwg.mxu0
        %v4903 = vmax.f32 %v2857, 0.0
        %v4904 = vmax.f32 %v2860, 0.0
        %v4905 = vmax.f32 %v2865, 0.0
        %v4906 = vmax.f32 %v2868, 0.0
        %v4907 = vmax.f32 %v2873, 0.0
        %v4908 = vmax.f32 %v2876, 0.0
        %v4909 = vmax.f32 %v2881, 0.0
        %v4910 = vmax.f32 %v2884, 0.0
        %v4911 = vmax.f32 %v2889, 0.0
        %v4912 = vmax.f32 %v2892, 0.0
        %v4913 = vmax.f32 %v2897, 0.0
        %v4914 = vmax.f32 %v2900, 0.0
        %v4915 = vmax.f32 %v2905, 0.0
        %v4916 = vmax.f32 %v2908, 0.0
        %v4917 = vmax.f32 %v2913, 0.0
        %v4918 = vmax.f32 %v2916, 0.0
        %v4919 = vmax.f32 %v2921, 0.0
        %v4920 = vmax.f32 %v2924, 0.0
        %v4921 = vmax.f32 %v2929, 0.0
        %v4922 = vmax.f32 %v2932, 0.0
        %v4923 = vmax.f32 %v2937, 0.0
        %v4924 = vmax.f32 %v2940, 0.0
        %v4925 = vmax.f32 %v2945, 0.0
        %v4926 = vmax.f32 %v2948, 0.0
        %v4927 = vmax.f32 %v2953, 0.0
        %v4928 = vmax.f32 %v2956, 0.0
        %v4929 = vmax.f32 %v2961, 0.0
        %v4930 = vmax.f32 %v2964, 0.0
        %v4931 = vmax.f32 %v2969, 0.0
        %v4932 = vmax.f32 %v2972, 0.0
        %v4933 = vmax.f32 %v2977, 0.0
        %v4934 = vmax.f32 %v2980, 0.0
        %v4935 = vmax.f32 %v2985, 0.0
        %v4936 = vmax.f32 %v2988, 0.0
        %v4937 = vmax.f32 %v2993, 0.0
        %v4938 = vmax.f32 %v2996, 0.0
        %v4939 = vmax.f32 %v3001, 0.0
        %v4940 = vmax.f32 %v3004, 0.0
        %v4941 = vmax.f32 %v3009, 0.0
        %v4942 = vmax.f32 %v3012, 0.0
        %v4943 = vmax.f32 %v3017, 0.0
        %v4944 = vmax.f32 %v3020, 0.0
        %v4945 = vmax.f32 %v3025, 0.0
        %v4946 = vmax.f32 %v3028, 0.0
        %v4947 = vmax.f32 %v3033, 0.0
        %v4948 = vmax.f32 %v3036, 0.0
        %v4949 = vmax.f32 %v3041, 0.0
        %v4950 = vmax.f32 %v3044, 0.0
        %v4951 = vmax.f32 %v3049, 0.0
        %v4952 = vmax.f32 %v3052, 0.0
        %v4953 = vmax.f32 %v3057, 0.0
        %v4954 = vmax.f32 %v3060, 0.0
        %v4955 = vmax.f32 %v3065, 0.0
        %v4956 = vmax.f32 %v3068, 0.0
        %v4957 = vmax.f32 %v3073, 0.0
        %v4958 = vmax.f32 %v3076, 0.0
        %v4959 = vmax.f32 %v3081, 0.0
        %v4960 = vmax.f32 %v3084, 0.0
        %v4961 = vmax.f32 %v3089, 0.0
        %v4962 = vmax.f32 %v3092, 0.0
        %v4963 = vmax.f32 %v3097, 0.0
        %v4964 = vmax.f32 %v3100, 0.0
        %v4965 = vmax.f32 %v3105, 0.0
        %v4966 = vmax.f32 %v3108, 0.0
        %v4967 = vmax.f32 %v3113, 0.0
        %v4968 = vmax.f32 %v3116, 0.0
        %v4969 = vmax.f32 %v3121, 0.0
        %v4970 = vmax.f32 %v3124, 0.0
        %v4971 = vmax.f32 %v3129, 0.0
        %v4972 = vmax.f32 %v3132, 0.0
        %v4973 = vmax.f32 %v3137, 0.0
        %v4974 = vmax.f32 %v3140, 0.0
        %v4975 = vmax.f32 %v3145, 0.0
        %v4976 = vmax.f32 %v3148, 0.0
        %v4977 = vmax.f32 %v3153, 0.0
        %v4978 = vmax.f32 %v3156, 0.0
        %v4979 = vmax.f32 %v3161, 0.0
        %v4980 = vmax.f32 %v3164, 0.0
        %v4981 = vmax.f32 %v3169, 0.0
        %v4982 = vmax.f32 %v3172, 0.0
        %v4983 = vmax.f32 %v3177, 0.0
        %v4984 = vmax.f32 %v3180, 0.0
        %v4985 = vmax.f32 %v3185, 0.0
        %v4986 = vmax.f32 %v3188, 0.0
        %v4987 = vmax.f32 %v3193, 0.0
        %v4988 = vmax.f32 %v3196, 0.0
        %v4989 = vmax.f32 %v3201, 0.0
        %v4990 = vmax.f32 %v3204, 0.0
        %v4991 = vmax.f32 %v3209, 0.0
        %v4992 = vmax.f32 %v3212, 0.0
        %v4993 = vmax.f32 %v3217, 0.0
        %v4994 = vmax.f32 %v3220, 0.0
        %v4995 = vmax.f32 %v3225, 0.0
        %v4996 = vmax.f32 %v3228, 0.0
        %v4997 = vmax.f32 %v3233, 0.0
        %v4998 = vmax.f32 %v3236, 0.0
        %v4999 = vmax.f32 %v3241, 0.0
        %v5000 = vmax.f32 %v3244, 0.0
        %v5001 = vmax.f32 %v3249, 0.0
        %v5002 = vmax.f32 %v3252, 0.0
        %v5003 = vmax.f32 %v3257, 0.0
        %v5004 = vmax.f32 %v3260, 0.0
        %v5005 = vmax.f32 %v3265, 0.0
        %v5006 = vmax.f32 %v3268, 0.0
        %v5007 = vmax.f32 %v3273, 0.0
        %v5008 = vmax.f32 %v3276, 0.0
        %v5009 = vmax.f32 %v3281, 0.0
        %v5010 = vmax.f32 %v3284, 0.0
        %v5011 = vmax.f32 %v3289, 0.0
        %v5012 = vmax.f32 %v3292, 0.0
        %v5013 = vmax.f32 %v3297, 0.0
        %v5014 = vmax.f32 %v3300, 0.0
        %v5015 = vmax.f32 %v3305, 0.0
        %v5016 = vmax.f32 %v3308, 0.0
        %v5017 = vmax.f32 %v3313, 0.0
        %v5018 = vmax.f32 %v3316, 0.0
        %v5019 = vmax.f32 %v3321, 0.0
        %v5020 = vmax.f32 %v3324, 0.0
        %v5021 = vmax.f32 %v3329, 0.0
        %v5022 = vmax.f32 %v3332, 0.0
        %v5023 = vmax.f32 %v3337, 0.0
        %v5024 = vmax.f32 %v3340, 0.0
        %v5025 = vmax.f32 %v3345, 0.0
        %v5026 = vmax.f32 %v3348, 0.0
        %v5027 = vmax.f32 %v3353, 0.0
        %v5028 = vmax.f32 %v3356, 0.0
        %v5029 = vmax.f32 %v3361, 0.0
        %v5030 = vmax.f32 %v3364, 0.0
        %v5031 = vmax.f32 %v3369, 0.0
        %v5032 = vmax.f32 %v3372, 0.0
        %v5033 = vmax.f32 %v3377, 0.0
        %v5034 = vmax.f32 %v3380, 0.0
        %v5035 = vmax.f32 %v3385, 0.0
        %v5036 = vmax.f32 %v3388, 0.0
        %v5037 = vmax.f32 %v3393, 0.0
        %v5038 = vmax.f32 %v3396, 0.0
        %v5039 = vmax.f32 %v3401, 0.0
        %v5040 = vmax.f32 %v3404, 0.0
        %v5041 = vmax.f32 %v3409, 0.0
        %v5042 = vmax.f32 %v3412, 0.0
        %v5043 = vmax.f32 %v3417, 0.0
        %v5044 = vmax.f32 %v3420, 0.0
        %v5045 = vmax.f32 %v3425, 0.0
        %v5046 = vmax.f32 %v3428, 0.0
        %v5047 = vmax.f32 %v3433, 0.0
        %v5048 = vmax.f32 %v3436, 0.0
        %v5049 = vmax.f32 %v3441, 0.0
        %v5050 = vmax.f32 %v3444, 0.0
        %v5051 = vmax.f32 %v3449, 0.0
        %v5052 = vmax.f32 %v3452, 0.0
        %v5053 = vmax.f32 %v3457, 0.0
        %v5054 = vmax.f32 %v3460, 0.0
        %v5055 = vmax.f32 %v3465, 0.0
        %v5056 = vmax.f32 %v3468, 0.0
        %v5057 = vmax.f32 %v3473, 0.0
        %v5058 = vmax.f32 %v3476, 0.0
        %v5059 = vmax.f32 %v3481, 0.0
        %v5060 = vmax.f32 %v3484, 0.0
        %v5061 = vmax.f32 %v3489, 0.0
        %v5062 = vmax.f32 %v3492, 0.0
        %v5063 = vmax.f32 %v3497, 0.0
        %v5064 = vmax.f32 %v3500, 0.0
        %v5065 = vmax.f32 %v3505, 0.0
        %v5066 = vmax.f32 %v3508, 0.0
        %v5067 = vmax.f32 %v3513, 0.0
        %v5068 = vmax.f32 %v3516, 0.0
        %v5069 = vmax.f32 %v3521, 0.0
        %v5070 = vmax.f32 %v3524, 0.0
        %v5071 = vmax.f32 %v3529, 0.0
        %v5072 = vmax.f32 %v3532, 0.0
        %v5073 = vmax.f32 %v3537, 0.0
        %v5074 = vmax.f32 %v3540, 0.0
        %v5075 = vmax.f32 %v3545, 0.0
        %v5076 = vmax.f32 %v3548, 0.0
        %v5077 = vmax.f32 %v3553, 0.0
        %v5078 = vmax.f32 %v3556, 0.0
        %v5079 = vmax.f32 %v3561, 0.0
        %v5080 = vmax.f32 %v3564, 0.0
        %v5081 = vmax.f32 %v3569, 0.0
        %v5082 = vmax.f32 %v3572, 0.0
        %v5083 = vmax.f32 %v3577, 0.0
        %v5084 = vmax.f32 %v3580, 0.0
        %v5085 = vmax.f32 %v3585, 0.0
        %v5086 = vmax.f32 %v3588, 0.0
        %v5087 = vmax.f32 %v3593, 0.0
        %v5088 = vmax.f32 %v3596, 0.0
        %v5089 = vmax.f32 %v3601, 0.0
        %v5090 = vmax.f32 %v3604, 0.0
        %v5091 = vmax.f32 %v3609, 0.0
        %v5092 = vmax.f32 %v3612, 0.0
        %v5093 = vmax.f32 %v3617, 0.0
        %v5094 = vmax.f32 %v3620, 0.0
        %v5095 = vmax.f32 %v3625, 0.0
        %v5096 = vmax.f32 %v3628, 0.0
        %v5097 = vmax.f32 %v3633, 0.0
        %v5098 = vmax.f32 %v3636, 0.0
        %v5099 = vmax.f32 %v3641, 0.0
        %v5100 = vmax.f32 %v3644, 0.0
        %v5101 = vmax.f32 %v3649, 0.0
        %v5102 = vmax.f32 %v3652, 0.0
        %v5103 = vmax.f32 %v3657, 0.0
        %v5104 = vmax.f32 %v3660, 0.0
        %v5105 = vmax.f32 %v3665, 0.0
        %v5106 = vmax.f32 %v3668, 0.0
        %v5107 = vmax.f32 %v3673, 0.0
        %v5108 = vmax.f32 %v3676, 0.0
        %v5109 = vmax.f32 %v3681, 0.0
        %v5110 = vmax.f32 %v3684, 0.0
        %v5111 = vmax.f32 %v3689, 0.0
        %v5112 = vmax.f32 %v3692, 0.0
        %v5113 = vmax.f32 %v3697, 0.0
        %v5114 = vmax.f32 %v3700, 0.0
        %v5115 = vmax.f32 %v3705, 0.0
        %v5116 = vmax.f32 %v3708, 0.0
        %v5117 = vmax.f32 %v3713, 0.0
        %v5118 = vmax.f32 %v3716, 0.0
        %v5119 = vmax.f32 %v3721, 0.0
        %v5120 = vmax.f32 %v3724, 0.0
        %v5121 = vmax.f32 %v3729, 0.0
        %v5122 = vmax.f32 %v3732, 0.0
        %v5123 = vmax.f32 %v3737, 0.0
        %v5124 = vmax.f32 %v3740, 0.0
        %v5125 = vmax.f32 %v3745, 0.0
        %v5126 = vmax.f32 %v3748, 0.0
        %v5127 = vmax.f32 %v3753, 0.0
        %v5128 = vmax.f32 %v3756, 0.0
        %v5129 = vmax.f32 %v3761, 0.0
        %v5130 = vmax.f32 %v3764, 0.0
        %v5131 = vmax.f32 %v3769, 0.0
        %v5132 = vmax.f32 %v3772, 0.0
        %v5133 = vmax.f32 %v3777, 0.0
        %v5134 = vmax.f32 %v3780, 0.0
        %v5135 = vmax.f32 %v3785, 0.0
        %v5136 = vmax.f32 %v3788, 0.0
        %v5137 = vmax.f32 %v3793, 0.0
        %v5138 = vmax.f32 %v3796, 0.0
        %v5139 = vmax.f32 %v3801, 0.0
        %v5140 = vmax.f32 %v3804, 0.0
        %v5141 = vmax.f32 %v3809, 0.0
        %v5142 = vmax.f32 %v3812, 0.0
        %v5143 = vmax.f32 %v3817, 0.0
        %v5144 = vmax.f32 %v3820, 0.0
        %v5145 = vmax.f32 %v3825, 0.0
        %v5146 = vmax.f32 %v3828, 0.0
        %v5147 = vmax.f32 %v3833, 0.0
        %v5148 = vmax.f32 %v3836, 0.0
        %v5149 = vmax.f32 %v3841, 0.0
        %v5150 = vmax.f32 %v3844, 0.0
        %v5151 = vmax.f32 %v3849, 0.0
        %v5152 = vmax.f32 %v3852, 0.0
        %v5153 = vmax.f32 %v3857, 0.0
        %v5154 = vmax.f32 %v3860, 0.0
        %v5155 = vmax.f32 %v3865, 0.0
        %v5156 = vmax.f32 %v3868, 0.0
        %v5157 = vmax.f32 %v3873, 0.0
        %v5158 = vmax.f32 %v3876, 0.0
        %v5159 = vmax.f32 %v3881, 0.0
        %v5160 = vmax.f32 %v3884, 0.0
        %v5161 = vmax.f32 %v3889, 0.0
        %v5162 = vmax.f32 %v3892, 0.0
        %v5163 = vmax.f32 %v3897, 0.0
        %v5164 = vmax.f32 %v3900, 0.0
        %v5165 = vmax.f32 %v3905, 0.0
        %v5166 = vmax.f32 %v3908, 0.0
        %v5167 = vmax.f32 %v3913, 0.0
        %v5168 = vmax.f32 %v3916, 0.0
        %v5169 = vmax.f32 %v3921, 0.0
        %v5170 = vmax.f32 %v3924, 0.0
        %v5171 = vmax.f32 %v3929, 0.0
        %v5172 = vmax.f32 %v3932, 0.0
        %v5173 = vmax.f32 %v3937, 0.0
        %v5174 = vmax.f32 %v3940, 0.0
        %v5175 = vmax.f32 %v3945, 0.0
        %v5176 = vmax.f32 %v3948, 0.0
        %v5177 = vmax.f32 %v3953, 0.0
        %v5178 = vmax.f32 %v3956, 0.0
        %v5179 = vmax.f32 %v3961, 0.0
        %v5180 = vmax.f32 %v3964, 0.0
        %v5181 = vmax.f32 %v3969, 0.0
        %v5182 = vmax.f32 %v3972, 0.0
        %v5183 = vmax.f32 %v3977, 0.0
        %v5184 = vmax.f32 %v3980, 0.0
        %v5185 = vmax.f32 %v3985, 0.0
        %v5186 = vmax.f32 %v3988, 0.0
        %v5187 = vmax.f32 %v3993, 0.0
        %v5188 = vmax.f32 %v3996, 0.0
        %v5189 = vmax.f32 %v4001, 0.0
        %v5190 = vmax.f32 %v4004, 0.0
        %v5191 = vmax.f32 %v4009, 0.0
        %v5192 = vmax.f32 %v4012, 0.0
        %v5193 = vmax.f32 %v4017, 0.0
        %v5194 = vmax.f32 %v4020, 0.0
        %v5195 = vmax.f32 %v4025, 0.0
        %v5196 = vmax.f32 %v4028, 0.0
        %v5197 = vmax.f32 %v4033, 0.0
        %v5198 = vmax.f32 %v4036, 0.0
        %v5199 = vmax.f32 %v4041, 0.0
        %v5200 = vmax.f32 %v4044, 0.0
        %v5201 = vmax.f32 %v4049, 0.0
        %v5202 = vmax.f32 %v4052, 0.0
        %v5203 = vmax.f32 %v4057, 0.0
        %v5204 = vmax.f32 %v4060, 0.0
        %v5205 = vmax.f32 %v4065, 0.0
        %v5206 = vmax.f32 %v4068, 0.0
        %v5207 = vmax.f32 %v4073, 0.0
        %v5208 = vmax.f32 %v4076, 0.0
        %v5209 = vmax.f32 %v4081, 0.0
        %v5210 = vmax.f32 %v4084, 0.0
        %v5211 = vmax.f32 %v4089, 0.0
        %v5212 = vmax.f32 %v4092, 0.0
        %v5213 = vmax.f32 %v4097, 0.0
        %v5214 = vmax.f32 %v4100, 0.0
        %v5215 = vmax.f32 %v4105, 0.0
        %v5216 = vmax.f32 %v4108, 0.0
        %v5217 = vmax.f32 %v4113, 0.0
        %v5218 = vmax.f32 %v4116, 0.0
        %v5219 = vmax.f32 %v4121, 0.0
        %v5220 = vmax.f32 %v4124, 0.0
        %v5221 = vmax.f32 %v4129, 0.0
        %v5222 = vmax.f32 %v4132, 0.0
        %v5223 = vmax.f32 %v4137, 0.0
        %v5224 = vmax.f32 %v4140, 0.0
        %v5225 = vmax.f32 %v4145, 0.0
        %v5226 = vmax.f32 %v4148, 0.0
        %v5227 = vmax.f32 %v4153, 0.0
        %v5228 = vmax.f32 %v4156, 0.0
        %v5229 = vmax.f32 %v4161, 0.0
        %v5230 = vmax.f32 %v4164, 0.0
        %v5231 = vmax.f32 %v4169, 0.0
        %v5232 = vmax.f32 %v4172, 0.0
        %v5233 = vmax.f32 %v4177, 0.0
        %v5234 = vmax.f32 %v4180, 0.0
        %v5235 = vmax.f32 %v4185, 0.0
        %v5236 = vmax.f32 %v4188, 0.0
        %v5237 = vmax.f32 %v4193, 0.0
        %v5238 = vmax.f32 %v4196, 0.0
        %v5239 = vmax.f32 %v4201, 0.0
        %v5240 = vmax.f32 %v4204, 0.0
        %v5241 = vmax.f32 %v4209, 0.0
        %v5242 = vmax.f32 %v4212, 0.0
        %v5243 = vmax.f32 %v4217, 0.0
        %v5244 = vmax.f32 %v4220, 0.0
        %v5245 = vmax.f32 %v4225, 0.0
        %v5246 = vmax.f32 %v4228, 0.0
        %v5247 = vmax.f32 %v4233, 0.0
        %v5248 = vmax.f32 %v4236, 0.0
        %v5249 = vmax.f32 %v4241, 0.0
        %v5250 = vmax.f32 %v4244, 0.0
        %v5251 = vmax.f32 %v4249, 0.0
        %v5252 = vmax.f32 %v4252, 0.0
        %v5253 = vmax.f32 %v4257, 0.0
        %v5254 = vmax.f32 %v4260, 0.0
        %v5255 = vmax.f32 %v4265, 0.0
        %v5256 = vmax.f32 %v4268, 0.0
        %v5257 = vmax.f32 %v4273, 0.0
        %v5258 = vmax.f32 %v4276, 0.0
        %v5259 = vmax.f32 %v4281, 0.0
        %v5260 = vmax.f32 %v4284, 0.0
        %v5261 = vmax.f32 %v4289, 0.0
        %v5262 = vmax.f32 %v4292, 0.0
        %v5263 = vmax.f32 %v4297, 0.0
        %v5264 = vmax.f32 %v4300, 0.0
        %v5265 = vmax.f32 %v4305, 0.0
        %v5266 = vmax.f32 %v4308, 0.0
        %v5267 = vmax.f32 %v4313, 0.0
        %v5268 = vmax.f32 %v4316, 0.0
        %v5269 = vmax.f32 %v4321, 0.0
        %v5270 = vmax.f32 %v4324, 0.0
        %v5271 = vmax.f32 %v4329, 0.0
        %v5272 = vmax.f32 %v4332, 0.0
        %v5273 = vmax.f32 %v4337, 0.0
        %v5274 = vmax.f32 %v4340, 0.0
        %v5275 = vmax.f32 %v4345, 0.0
        %v5276 = vmax.f32 %v4348, 0.0
        %v5277 = vmax.f32 %v4353, 0.0
        %v5278 = vmax.f32 %v4356, 0.0
        %v5279 = vmax.f32 %v4361, 0.0
        %v5280 = vmax.f32 %v4364, 0.0
        %v5281 = vmax.f32 %v4369, 0.0
        %v5282 = vmax.f32 %v4372, 0.0
        %v5283 = vmax.f32 %v4377, 0.0
        %v5284 = vmax.f32 %v4380, 0.0
        %v5285 = vmax.f32 %v4385, 0.0
        %v5286 = vmax.f32 %v4388, 0.0
        %v5287 = vmax.f32 %v4393, 0.0
        %v5288 = vmax.f32 %v4396, 0.0
        %v5289 = vmax.f32 %v4401, 0.0
        %v5290 = vmax.f32 %v4404, 0.0
        %v5291 = vmax.f32 %v4409, 0.0
        %v5292 = vmax.f32 %v4412, 0.0
        %v5293 = vmax.f32 %v4417, 0.0
        %v5294 = vmax.f32 %v4420, 0.0
        %v5295 = vmax.f32 %v4425, 0.0
        %v5296 = vmax.f32 %v4428, 0.0
        %v5297 = vmax.f32 %v4433, 0.0
        %v5298 = vmax.f32 %v4436, 0.0
        %v5299 = vmax.f32 %v4441, 0.0
        %v5300 = vmax.f32 %v4444, 0.0
        %v5301 = vmax.f32 %v4449, 0.0
        %v5302 = vmax.f32 %v4452, 0.0
        %v5303 = vmax.f32 %v4457, 0.0
        %v5304 = vmax.f32 %v4460, 0.0
        %v5305 = vmax.f32 %v4465, 0.0
        %v5306 = vmax.f32 %v4468, 0.0
        %v5307 = vmax.f32 %v4473, 0.0
        %v5308 = vmax.f32 %v4476, 0.0
        %v5309 = vmax.f32 %v4481, 0.0
        %v5310 = vmax.f32 %v4484, 0.0
        %v5311 = vmax.f32 %v4489, 0.0
        %v5312 = vmax.f32 %v4492, 0.0
        %v5313 = vmax.f32 %v4497, 0.0
        %v5314 = vmax.f32 %v4500, 0.0
        %v5315 = vmax.f32 %v4505, 0.0
        %v5316 = vmax.f32 %v4508, 0.0
        %v5317 = vmax.f32 %v4513, 0.0
        %v5318 = vmax.f32 %v4516, 0.0
        %v5319 = vmax.f32 %v4521, 0.0
        %v5320 = vmax.f32 %v4524, 0.0
        %v5321 = vmax.f32 %v4529, 0.0
        %v5322 = vmax.f32 %v4532, 0.0
        %v5323 = vmax.f32 %v4537, 0.0
        %v5324 = vmax.f32 %v4540, 0.0
        %v5325 = vmax.f32 %v4545, 0.0
        %v5326 = vmax.f32 %v4548, 0.0
        %v5327 = vmax.f32 %v4553, 0.0
        %v5328 = vmax.f32 %v4556, 0.0
        %v5329 = vmax.f32 %v4561, 0.0
        %v5330 = vmax.f32 %v4564, 0.0
        %v5331 = vmax.f32 %v4569, 0.0
        %v5332 = vmax.f32 %v4572, 0.0
        %v5333 = vmax.f32 %v4577, 0.0
        %v5334 = vmax.f32 %v4580, 0.0
        %v5335 = vmax.f32 %v4585, 0.0
        %v5336 = vmax.f32 %v4588, 0.0
        %v5337 = vmax.f32 %v4593, 0.0
        %v5338 = vmax.f32 %v4596, 0.0
        %v5339 = vmax.f32 %v4601, 0.0
        %v5340 = vmax.f32 %v4604, 0.0
        %v5341 = vmax.f32 %v4609, 0.0
        %v5342 = vmax.f32 %v4612, 0.0
        %v5343 = vmax.f32 %v4617, 0.0
        %v5344 = vmax.f32 %v4620, 0.0
        %v5345 = vmax.f32 %v4625, 0.0
        %v5346 = vmax.f32 %v4628, 0.0
        %v5347 = vmax.f32 %v4633, 0.0
        %v5348 = vmax.f32 %v4636, 0.0
        %v5349 = vmax.f32 %v4641, 0.0
        %v5350 = vmax.f32 %v4644, 0.0
        %v5351 = vmax.f32 %v4649, 0.0
        %v5352 = vmax.f32 %v4652, 0.0
        %v5353 = vmax.f32 %v4657, 0.0
        %v5354 = vmax.f32 %v4660, 0.0
        %v5355 = vmax.f32 %v4665, 0.0
        %v5356 = vmax.f32 %v4668, 0.0
        %v5357 = vmax.f32 %v4673, 0.0
        %v5358 = vmax.f32 %v4676, 0.0
        %v5359 = vmax.f32 %v4681, 0.0
        %v5360 = vmax.f32 %v4684, 0.0
        %v5361 = vmax.f32 %v4689, 0.0
        %v5362 = vmax.f32 %v4692, 0.0
        %v5363 = vmax.f32 %v4697, 0.0
        %v5364 = vmax.f32 %v4700, 0.0
        %v5365 = vmax.f32 %v4705, 0.0
        %v5366 = vmax.f32 %v4708, 0.0
        %v5367 = vmax.f32 %v4713, 0.0
        %v5368 = vmax.f32 %v4716, 0.0
        %v5369 = vmax.f32 %v4721, 0.0
        %v5370 = vmax.f32 %v4724, 0.0
        %v5371 = vmax.f32 %v4729, 0.0
        %v5372 = vmax.f32 %v4732, 0.0
        %v5373 = vmax.f32 %v4737, 0.0
        %v5374 = vmax.f32 %v4740, 0.0
        %v5375 = vmax.f32 %v4745, 0.0
        %v5376 = vmax.f32 %v4748, 0.0
        %v5377 = vmax.f32 %v4753, 0.0
        %v5378 = vmax.f32 %v4756, 0.0
        %v5379 = vmax.f32 %v4761, 0.0
        %v5380 = vmax.f32 %v4764, 0.0
        %v5381 = vmax.f32 %v4769, 0.0
        %v5382 = vmax.f32 %v4772, 0.0
        %v5383 = vmax.f32 %v4777, 0.0
        %v5384 = vmax.f32 %v4780, 0.0
        %v5385 = vmax.f32 %v4785, 0.0
        %v5386 = vmax.f32 %v4788, 0.0
        %v5387 = vmax.f32 %v4793, 0.0
        %v5388 = vmax.f32 %v4796, 0.0
        %v5389 = vmax.f32 %v4801, 0.0
        %v5390 = vmax.f32 %v4804, 0.0
        %v5391 = vmax.f32 %v4809, 0.0
        %v5392 = vmax.f32 %v4812, 0.0
        %v5393 = vmax.f32 %v4817, 0.0
        %v5394 = vmax.f32 %v4820, 0.0
        %v5395 = vmax.f32 %v4825, 0.0
        %v5396 = vmax.f32 %v4828, 0.0
        %v5397 = vmax.f32 %v4833, 0.0
        %v5398 = vmax.f32 %v4836, 0.0
        %v5399 = vmax.f32 %v4841, 0.0
        %v5400 = vmax.f32 %v4844, 0.0
        %v5401 = vmax.f32 %v4849, 0.0
        %v5402 = vmax.f32 %v4852, 0.0
        %v5403 = vmax.f32 %v4857, 0.0
        %v5404 = vmax.f32 %v4860, 0.0
        %v5405 = vmax.f32 %v4865, 0.0
        %v5406 = vmax.f32 %v4868, 0.0
        %v5407 = vmax.f32 %v4873, 0.0
        %v5408 = vmax.f32 %v4876, 0.0
        %v5409 = vmax.f32 %v4881, 0.0
        %v5410 = vmax.f32 %v4884, 0.0
        %v5411 = vmax.f32 %v4889, 0.0
        %v5412 = vmax.f32 %v4892, 0.0
        %v5413 = vmax.f32 %v4897, 0.0
        %v5414 = vmax.f32 %v4900, 0.0
        %v5415 = vpack.c.bf16 %v4904, %v4903
        %v5416 = vpack.c.bf16 %v4906, %v4905
        %v5417 = vpack.c.bf16 %v4908, %v4907
        %v5418 = vpack.c.bf16 %v4910, %v4909
        %v5419 = vpack.c.bf16 %v4912, %v4911
        %v5420 = vpack.c.bf16 %v4914, %v4913
        %v5421 = vpack.c.bf16 %v4916, %v4915
        %v5422 = vpack.c.bf16 %v4918, %v4917
        %v5423 = vpack.c.bf16 %v4920, %v4919
        %v5424 = vpack.c.bf16 %v4922, %v4921
        %v5425 = vpack.c.bf16 %v4924, %v4923
        %v5426 = vpack.c.bf16 %v4926, %v4925
        %v5427 = vpack.c.bf16 %v4928, %v4927
        %v5428 = vpack.c.bf16 %v4930, %v4929
        %v5429 = vpack.c.bf16 %v4932, %v4931
        %v5430 = vpack.c.bf16 %v4934, %v4933
        %v5431 = vpack.c.bf16 %v4936, %v4935
        %v5432 = vpack.c.bf16 %v4938, %v4937
        %v5433 = vpack.c.bf16 %v4940, %v4939
        %v5434 = vpack.c.bf16 %v4942, %v4941
        %v5435 = vpack.c.bf16 %v4944, %v4943
        %v5436 = vpack.c.bf16 %v4946, %v4945
        %v5437 = vpack.c.bf16 %v4948, %v4947
        %v5438 = vpack.c.bf16 %v4950, %v4949
        %v5439 = vpack.c.bf16 %v4952, %v4951
        %v5440 = vpack.c.bf16 %v4954, %v4953
        %v5441 = vpack.c.bf16 %v4956, %v4955
        %v5442 = vpack.c.bf16 %v4958, %v4957
        %v5443 = vpack.c.bf16 %v4960, %v4959
        %v5444 = vpack.c.bf16 %v4962, %v4961
        %v5445 = vpack.c.bf16 %v4964, %v4963
        %v5446 = vpack.c.bf16 %v4966, %v4965
        %v5447 = vpack.c.bf16 %v4968, %v4967
        %v5448 = vpack.c.bf16 %v4970, %v4969
        %v5449 = vpack.c.bf16 %v4972, %v4971
        %v5450 = vpack.c.bf16 %v4974, %v4973
        %v5451 = vpack.c.bf16 %v4976, %v4975
        %v5452 = vpack.c.bf16 %v4978, %v4977
        %v5453 = vpack.c.bf16 %v4980, %v4979
        %v5454 = vpack.c.bf16 %v4982, %v4981
        %v5455 = vpack.c.bf16 %v4984, %v4983
        %v5456 = vpack.c.bf16 %v4986, %v4985
        %v5457 = vpack.c.bf16 %v4988, %v4987
        %v5458 = vpack.c.bf16 %v4990, %v4989
        %v5459 = vpack.c.bf16 %v4992, %v4991
        %v5460 = vpack.c.bf16 %v4994, %v4993
        %v5461 = vpack.c.bf16 %v4996, %v4995
        %v5462 = vpack.c.bf16 %v4998, %v4997
        %v5463 = vpack.c.bf16 %v5000, %v4999
        %v5464 = vpack.c.bf16 %v5002, %v5001
        %v5465 = vpack.c.bf16 %v5004, %v5003
        %v5466 = vpack.c.bf16 %v5006, %v5005
        %v5467 = vpack.c.bf16 %v5008, %v5007
        %v5468 = vpack.c.bf16 %v5010, %v5009
        %v5469 = vpack.c.bf16 %v5012, %v5011
        %v5470 = vpack.c.bf16 %v5014, %v5013
        %v5471 = vpack.c.bf16 %v5016, %v5015
        %v5472 = vpack.c.bf16 %v5018, %v5017
        %v5473 = vpack.c.bf16 %v5020, %v5019
        %v5474 = vpack.c.bf16 %v5022, %v5021
        %v5475 = vpack.c.bf16 %v5024, %v5023
        %v5476 = vpack.c.bf16 %v5026, %v5025
        %v5477 = vpack.c.bf16 %v5028, %v5027
        %v5478 = vpack.c.bf16 %v5030, %v5029
        %v5479 = vpack.c.bf16 %v5032, %v5031
        %v5480 = vpack.c.bf16 %v5034, %v5033
        %v5481 = vpack.c.bf16 %v5036, %v5035
        %v5482 = vpack.c.bf16 %v5038, %v5037
        %v5483 = vpack.c.bf16 %v5040, %v5039
        %v5484 = vpack.c.bf16 %v5042, %v5041
        %v5485 = vpack.c.bf16 %v5044, %v5043
        %v5486 = vpack.c.bf16 %v5046, %v5045
        %v5487 = vpack.c.bf16 %v5048, %v5047
        %v5488 = vpack.c.bf16 %v5050, %v5049
        %v5489 = vpack.c.bf16 %v5052, %v5051
        %v5490 = vpack.c.bf16 %v5054, %v5053
        %v5491 = vpack.c.bf16 %v5056, %v5055
        %v5492 = vpack.c.bf16 %v5058, %v5057
        %v5493 = vpack.c.bf16 %v5060, %v5059
        %v5494 = vpack.c.bf16 %v5062, %v5061
        %v5495 = vpack.c.bf16 %v5064, %v5063
        %v5496 = vpack.c.bf16 %v5066, %v5065
        %v5497 = vpack.c.bf16 %v5068, %v5067
        %v5498 = vpack.c.bf16 %v5070, %v5069
        %v5499 = vpack.c.bf16 %v5072, %v5071
        %v5500 = vpack.c.bf16 %v5074, %v5073
        %v5501 = vpack.c.bf16 %v5076, %v5075
        %v5502 = vpack.c.bf16 %v5078, %v5077
        %v5503 = vpack.c.bf16 %v5080, %v5079
        %v5504 = vpack.c.bf16 %v5082, %v5081
        %v5505 = vpack.c.bf16 %v5084, %v5083
        %v5506 = vpack.c.bf16 %v5086, %v5085
        %v5507 = vpack.c.bf16 %v5088, %v5087
        %v5508 = vpack.c.bf16 %v5090, %v5089
        %v5509 = vpack.c.bf16 %v5092, %v5091
        %v5510 = vpack.c.bf16 %v5094, %v5093
        %v5511 = vpack.c.bf16 %v5096, %v5095
        %v5512 = vpack.c.bf16 %v5098, %v5097
        %v5513 = vpack.c.bf16 %v5100, %v5099
        %v5514 = vpack.c.bf16 %v5102, %v5101
        %v5515 = vpack.c.bf16 %v5104, %v5103
        %v5516 = vpack.c.bf16 %v5106, %v5105
        %v5517 = vpack.c.bf16 %v5108, %v5107
        %v5518 = vpack.c.bf16 %v5110, %v5109
        %v5519 = vpack.c.bf16 %v5112, %v5111
        %v5520 = vpack.c.bf16 %v5114, %v5113
        %v5521 = vpack.c.bf16 %v5116, %v5115
        %v5522 = vpack.c.bf16 %v5118, %v5117
        %v5523 = vpack.c.bf16 %v5120, %v5119
        %v5524 = vpack.c.bf16 %v5122, %v5121
        %v5525 = vpack.c.bf16 %v5124, %v5123
        %v5526 = vpack.c.bf16 %v5126, %v5125
        %v5527 = vpack.c.bf16 %v5128, %v5127
        %v5528 = vpack.c.bf16 %v5130, %v5129
        %v5529 = vpack.c.bf16 %v5132, %v5131
        %v5530 = vpack.c.bf16 %v5134, %v5133
        %v5531 = vpack.c.bf16 %v5136, %v5135
        %v5532 = vpack.c.bf16 %v5138, %v5137
        %v5533 = vpack.c.bf16 %v5140, %v5139
        %v5534 = vpack.c.bf16 %v5142, %v5141
        %v5535 = vpack.c.bf16 %v5144, %v5143
        %v5536 = vpack.c.bf16 %v5146, %v5145
        %v5537 = vpack.c.bf16 %v5148, %v5147
        %v5538 = vpack.c.bf16 %v5150, %v5149
        %v5539 = vpack.c.bf16 %v5152, %v5151
        %v5540 = vpack.c.bf16 %v5154, %v5153
        %v5541 = vpack.c.bf16 %v5156, %v5155
        %v5542 = vpack.c.bf16 %v5158, %v5157
        %v5543 = vpack.c.bf16 %v5160, %v5159
        %v5544 = vpack.c.bf16 %v5162, %v5161
        %v5545 = vpack.c.bf16 %v5164, %v5163
        %v5546 = vpack.c.bf16 %v5166, %v5165
        %v5547 = vpack.c.bf16 %v5168, %v5167
        %v5548 = vpack.c.bf16 %v5170, %v5169
        %v5549 = vpack.c.bf16 %v5172, %v5171
        %v5550 = vpack.c.bf16 %v5174, %v5173
        %v5551 = vpack.c.bf16 %v5176, %v5175
        %v5552 = vpack.c.bf16 %v5178, %v5177
        %v5553 = vpack.c.bf16 %v5180, %v5179
        %v5554 = vpack.c.bf16 %v5182, %v5181
        %v5555 = vpack.c.bf16 %v5184, %v5183
        %v5556 = vpack.c.bf16 %v5186, %v5185
        %v5557 = vpack.c.bf16 %v5188, %v5187
        %v5558 = vpack.c.bf16 %v5190, %v5189
        %v5559 = vpack.c.bf16 %v5192, %v5191
        %v5560 = vpack.c.bf16 %v5194, %v5193
        %v5561 = vpack.c.bf16 %v5196, %v5195
        %v5562 = vpack.c.bf16 %v5198, %v5197
        %v5563 = vpack.c.bf16 %v5200, %v5199
        %v5564 = vpack.c.bf16 %v5202, %v5201
        %v5565 = vpack.c.bf16 %v5204, %v5203
        %v5566 = vpack.c.bf16 %v5206, %v5205
        %v5567 = vpack.c.bf16 %v5208, %v5207
        %v5568 = vpack.c.bf16 %v5210, %v5209
        %v5569 = vpack.c.bf16 %v5212, %v5211
        %v5570 = vpack.c.bf16 %v5214, %v5213
        %v5571 = vpack.c.bf16 %v5216, %v5215
        %v5572 = vpack.c.bf16 %v5218, %v5217
        %v5573 = vpack.c.bf16 %v5220, %v5219
        %v5574 = vpack.c.bf16 %v5222, %v5221
        %v5575 = vpack.c.bf16 %v5224, %v5223
        %v5576 = vpack.c.bf16 %v5226, %v5225
        %v5577 = vpack.c.bf16 %v5228, %v5227
        %v5578 = vpack.c.bf16 %v5230, %v5229
        %v5579 = vpack.c.bf16 %v5232, %v5231
        %v5580 = vpack.c.bf16 %v5234, %v5233
        %v5581 = vpack.c.bf16 %v5236, %v5235
        %v5582 = vpack.c.bf16 %v5238, %v5237
        %v5583 = vpack.c.bf16 %v5240, %v5239
        %v5584 = vpack.c.bf16 %v5242, %v5241
        %v5585 = vpack.c.bf16 %v5244, %v5243
        %v5586 = vpack.c.bf16 %v5246, %v5245
        %v5587 = vpack.c.bf16 %v5248, %v5247
        %v5588 = vpack.c.bf16 %v5250, %v5249
        %v5589 = vpack.c.bf16 %v5252, %v5251
        %v5590 = vpack.c.bf16 %v5254, %v5253
        %v5591 = vpack.c.bf16 %v5256, %v5255
        %v5592 = vpack.c.bf16 %v5258, %v5257
        %v5593 = vpack.c.bf16 %v5260, %v5259
        %v5594 = vpack.c.bf16 %v5262, %v5261
        %v5595 = vpack.c.bf16 %v5264, %v5263
        %v5596 = vpack.c.bf16 %v5266, %v5265
        %v5597 = vpack.c.bf16 %v5268, %v5267
        %v5598 = vpack.c.bf16 %v5270, %v5269
        %v5599 = vpack.c.bf16 %v5272, %v5271
        %v5600 = vpack.c.bf16 %v5274, %v5273
        %v5601 = vpack.c.bf16 %v5276, %v5275
        %v5602 = vpack.c.bf16 %v5278, %v5277
        %v5603 = vpack.c.bf16 %v5280, %v5279
        %v5604 = vpack.c.bf16 %v5282, %v5281
        %v5605 = vpack.c.bf16 %v5284, %v5283
        %v5606 = vpack.c.bf16 %v5286, %v5285
        %v5607 = vpack.c.bf16 %v5288, %v5287
        %v5608 = vpack.c.bf16 %v5290, %v5289
        %v5609 = vpack.c.bf16 %v5292, %v5291
        %v5610 = vpack.c.bf16 %v5294, %v5293
        %v5611 = vpack.c.bf16 %v5296, %v5295
        %v5612 = vpack.c.bf16 %v5298, %v5297
        %v5613 = vpack.c.bf16 %v5300, %v5299
        %v5614 = vpack.c.bf16 %v5302, %v5301
        %v5615 = vpack.c.bf16 %v5304, %v5303
        %v5616 = vpack.c.bf16 %v5306, %v5305
        %v5617 = vpack.c.bf16 %v5308, %v5307
        %v5618 = vpack.c.bf16 %v5310, %v5309
        %v5619 = vpack.c.bf16 %v5312, %v5311
        %v5620 = vpack.c.bf16 %v5314, %v5313
        %v5621 = vpack.c.bf16 %v5316, %v5315
        %v5622 = vpack.c.bf16 %v5318, %v5317
        %v5623 = vpack.c.bf16 %v5320, %v5319
        %v5624 = vpack.c.bf16 %v5322, %v5321
        %v5625 = vpack.c.bf16 %v5324, %v5323
        %v5626 = vpack.c.bf16 %v5326, %v5325
        %v5627 = vpack.c.bf16 %v5328, %v5327
        %v5628 = vpack.c.bf16 %v5330, %v5329
        %v5629 = vpack.c.bf16 %v5332, %v5331
        %v5630 = vpack.c.bf16 %v5334, %v5333
        %v5631 = vpack.c.bf16 %v5336, %v5335
        %v5632 = vpack.c.bf16 %v5338, %v5337
        %v5633 = vpack.c.bf16 %v5340, %v5339
        %v5634 = vpack.c.bf16 %v5342, %v5341
        %v5635 = vpack.c.bf16 %v5344, %v5343
        %v5636 = vpack.c.bf16 %v5346, %v5345
        %v5637 = vpack.c.bf16 %v5348, %v5347
        %v5638 = vpack.c.bf16 %v5350, %v5349
        %v5639 = vpack.c.bf16 %v5352, %v5351
        %v5640 = vpack.c.bf16 %v5354, %v5353
        %v5641 = vpack.c.bf16 %v5356, %v5355
        %v5642 = vpack.c.bf16 %v5358, %v5357
        %v5643 = vpack.c.bf16 %v5360, %v5359
        %v5644 = vpack.c.bf16 %v5362, %v5361
        %v5645 = vpack.c.bf16 %v5364, %v5363
        %v5646 = vpack.c.bf16 %v5366, %v5365
        %v5647 = vpack.c.bf16 %v5368, %v5367
        %v5648 = vpack.c.bf16 %v5370, %v5369
        %v5649 = vpack.c.bf16 %v5372, %v5371
        %v5650 = vpack.c.bf16 %v5374, %v5373
        %v5651 = vpack.c.bf16 %v5376, %v5375
        %v5652 = vpack.c.bf16 %v5378, %v5377
        %v5653 = vpack.c.bf16 %v5380, %v5379
        %v5654 = vpack.c.bf16 %v5382, %v5381
        %v5655 = vpack.c.bf16 %v5384, %v5383
        %v5656 = vpack.c.bf16 %v5386, %v5385
        %v5657 = vpack.c.bf16 %v5388, %v5387
        %v5658 = vpack.c.bf16 %v5390, %v5389
        %v5659 = vpack.c.bf16 %v5392, %v5391
        %v5660 = vpack.c.bf16 %v5394, %v5393
        %v5661 = vpack.c.bf16 %v5396, %v5395
        %v5662 = vpack.c.bf16 %v5398, %v5397
        %v5663 = vpack.c.bf16 %v5400, %v5399
        %v5664 = vpack.c.bf16 %v5402, %v5401
        %v5665 = vpack.c.bf16 %v5404, %v5403
        %v5666 = vpack.c.bf16 %v5406, %v5405
        %v5667 = vpack.c.bf16 %v5408, %v5407
        %v5668 = vpack.c.bf16 %v5410, %v5409
        %v5669 = vpack.c.bf16 %v5412, %v5411
        %v5670 = vpack.c.bf16 %v5414, %v5413
        %v5927 = vunpack.c.l.b16 %v5415
        %v5928 = vunpack.c.h.b16 %v5415
        %v5929 = vunpack.c.l.b16 %v5416
        %v5930 = vunpack.c.h.b16 %v5416
        %v5931 = vunpack.c.l.b16 %v5417
        %v5932 = vunpack.c.h.b16 %v5417
        %v5933 = vunpack.c.l.b16 %v5418
        %v5934 = vunpack.c.h.b16 %v5418
        %v5935 = vunpack.c.l.b16 %v5419
        %v5936 = vunpack.c.h.b16 %v5419
        %v5937 = vunpack.c.l.b16 %v5420
        %v5938 = vunpack.c.h.b16 %v5420
        %v5939 = vunpack.c.l.b16 %v5421
        %v5940 = vunpack.c.h.b16 %v5421
        %v5941 = vunpack.c.l.b16 %v5422
        %v5942 = vunpack.c.h.b16 %v5422
        %v5943 = vunpack.c.l.b16 %v5423
        %v5944 = vunpack.c.h.b16 %v5423
        %v5945 = vunpack.c.l.b16 %v5424
        %v5946 = vunpack.c.h.b16 %v5424
        %v5947 = vunpack.c.l.b16 %v5425
        %v5948 = vunpack.c.h.b16 %v5425
        %v5949 = vunpack.c.l.b16 %v5426
        %v5950 = vunpack.c.h.b16 %v5426
        %v5951 = vunpack.c.l.b16 %v5427
        %v5952 = vunpack.c.h.b16 %v5427
        %v5953 = vunpack.c.l.b16 %v5428
        %v5954 = vunpack.c.h.b16 %v5428
        %v5955 = vunpack.c.l.b16 %v5429
        %v5956 = vunpack.c.h.b16 %v5429
        %v5957 = vunpack.c.l.b16 %v5430
        %v5958 = vunpack.c.h.b16 %v5430
        %v5959 = vunpack.c.l.b16 %v5431
        %v5960 = vunpack.c.h.b16 %v5431
        %v5961 = vunpack.c.l.b16 %v5432
        %v5962 = vunpack.c.h.b16 %v5432
        %v5963 = vunpack.c.l.b16 %v5433
        %v5964 = vunpack.c.h.b16 %v5433
        %v5965 = vunpack.c.l.b16 %v5434
        %v5966 = vunpack.c.h.b16 %v5434
        %v5967 = vunpack.c.l.b16 %v5435
        %v5968 = vunpack.c.h.b16 %v5435
        %v5969 = vunpack.c.l.b16 %v5436
        %v5970 = vunpack.c.h.b16 %v5436
        %v5971 = vunpack.c.l.b16 %v5437
        %v5972 = vunpack.c.h.b16 %v5437
        %v5973 = vunpack.c.l.b16 %v5438
        %v5974 = vunpack.c.h.b16 %v5438
        %v5975 = vunpack.c.l.b16 %v5439
        %v5976 = vunpack.c.h.b16 %v5439
        %v5977 = vunpack.c.l.b16 %v5440
        %v5978 = vunpack.c.h.b16 %v5440
        %v5979 = vunpack.c.l.b16 %v5441
        %v5980 = vunpack.c.h.b16 %v5441
        %v5981 = vunpack.c.l.b16 %v5442
        %v5982 = vunpack.c.h.b16 %v5442
        %v5983 = vunpack.c.l.b16 %v5443
        %v5984 = vunpack.c.h.b16 %v5443
        %v5985 = vunpack.c.l.b16 %v5444
        %v5986 = vunpack.c.h.b16 %v5444
        %v5987 = vunpack.c.l.b16 %v5445
        %v5988 = vunpack.c.h.b16 %v5445
        %v5989 = vunpack.c.l.b16 %v5446
        %v5990 = vunpack.c.h.b16 %v5446
        %v5991 = vunpack.c.l.b16 %v5447
        %v5992 = vunpack.c.h.b16 %v5447
        %v5993 = vunpack.c.l.b16 %v5448
        %v5994 = vunpack.c.h.b16 %v5448
        %v5995 = vunpack.c.l.b16 %v5449
        %v5996 = vunpack.c.h.b16 %v5449
        %v5997 = vunpack.c.l.b16 %v5450
        %v5998 = vunpack.c.h.b16 %v5450
        %v5999 = vunpack.c.l.b16 %v5451
        %v6000 = vunpack.c.h.b16 %v5451
        %v6001 = vunpack.c.l.b16 %v5452
        %v6002 = vunpack.c.h.b16 %v5452
        %v6003 = vunpack.c.l.b16 %v5453
        %v6004 = vunpack.c.h.b16 %v5453
        %v6005 = vunpack.c.l.b16 %v5454
        %v6006 = vunpack.c.h.b16 %v5454
        %v6007 = vunpack.c.l.b16 %v5455
        %v6008 = vunpack.c.h.b16 %v5455
        %v6009 = vunpack.c.l.b16 %v5456
        %v6010 = vunpack.c.h.b16 %v5456
        %v6011 = vunpack.c.l.b16 %v5457
        %v6012 = vunpack.c.h.b16 %v5457
        %v6013 = vunpack.c.l.b16 %v5458
        %v6014 = vunpack.c.h.b16 %v5458
        %v6015 = vunpack.c.l.b16 %v5459
        %v6016 = vunpack.c.h.b16 %v5459
        %v6017 = vunpack.c.l.b16 %v5460
        %v6018 = vunpack.c.h.b16 %v5460
        %v6019 = vunpack.c.l.b16 %v5461
        %v6020 = vunpack.c.h.b16 %v5461
        %v6021 = vunpack.c.l.b16 %v5462
        %v6022 = vunpack.c.h.b16 %v5462
        %v6023 = vunpack.c.l.b16 %v5463
        %v6024 = vunpack.c.h.b16 %v5463
        %v6025 = vunpack.c.l.b16 %v5464
        %v6026 = vunpack.c.h.b16 %v5464
        %v6027 = vunpack.c.l.b16 %v5465
        %v6028 = vunpack.c.h.b16 %v5465
        %v6029 = vunpack.c.l.b16 %v5466
        %v6030 = vunpack.c.h.b16 %v5466
        %v6031 = vunpack.c.l.b16 %v5467
        %v6032 = vunpack.c.h.b16 %v5467
        %v6033 = vunpack.c.l.b16 %v5468
        %v6034 = vunpack.c.h.b16 %v5468
        %v6035 = vunpack.c.l.b16 %v5469
        %v6036 = vunpack.c.h.b16 %v5469
        %v6037 = vunpack.c.l.b16 %v5470
        %v6038 = vunpack.c.h.b16 %v5470
        %v6039 = vunpack.c.l.b16 %v5471
        %v6040 = vunpack.c.h.b16 %v5471
        %v6041 = vunpack.c.l.b16 %v5472
        %v6042 = vunpack.c.h.b16 %v5472
        %v6043 = vunpack.c.l.b16 %v5473
        %v6044 = vunpack.c.h.b16 %v5473
        %v6045 = vunpack.c.l.b16 %v5474
        %v6046 = vunpack.c.h.b16 %v5474
        %v6047 = vunpack.c.l.b16 %v5475
        %v6048 = vunpack.c.h.b16 %v5475
        %v6049 = vunpack.c.l.b16 %v5476
        %v6050 = vunpack.c.h.b16 %v5476
        %v6051 = vunpack.c.l.b16 %v5477
        %v6052 = vunpack.c.h.b16 %v5477
        %v6053 = vunpack.c.l.b16 %v5478
        %v6054 = vunpack.c.h.b16 %v5478
        %v6055 = vunpack.c.l.b16 %v5479
        %v6056 = vunpack.c.h.b16 %v5479
        %v6057 = vunpack.c.l.b16 %v5480
        %v6058 = vunpack.c.h.b16 %v5480
        %v6059 = vunpack.c.l.b16 %v5481
        %v6060 = vunpack.c.h.b16 %v5481
        %v6061 = vunpack.c.l.b16 %v5482
        %v6062 = vunpack.c.h.b16 %v5482
        %v6063 = vunpack.c.l.b16 %v5483
        %v6064 = vunpack.c.h.b16 %v5483
        %v6065 = vunpack.c.l.b16 %v5484
        %v6066 = vunpack.c.h.b16 %v5484
        %v6067 = vunpack.c.l.b16 %v5485
        %v6068 = vunpack.c.h.b16 %v5485
        %v6069 = vunpack.c.l.b16 %v5486
        %v6070 = vunpack.c.h.b16 %v5486
        %v6071 = vunpack.c.l.b16 %v5487
        %v6072 = vunpack.c.h.b16 %v5487
        %v6073 = vunpack.c.l.b16 %v5488
        %v6074 = vunpack.c.h.b16 %v5488
        %v6075 = vunpack.c.l.b16 %v5489
        %v6076 = vunpack.c.h.b16 %v5489
        %v6077 = vunpack.c.l.b16 %v5490
        %v6078 = vunpack.c.h.b16 %v5490
        %v6079 = vunpack.c.l.b16 %v5491
        %v6080 = vunpack.c.h.b16 %v5491
        %v6081 = vunpack.c.l.b16 %v5492
        %v6082 = vunpack.c.h.b16 %v5492
        %v6083 = vunpack.c.l.b16 %v5493
        %v6084 = vunpack.c.h.b16 %v5493
        %v6085 = vunpack.c.l.b16 %v5494
        %v6086 = vunpack.c.h.b16 %v5494
        %v6087 = vunpack.c.l.b16 %v5495
        %v6088 = vunpack.c.h.b16 %v5495
        %v6089 = vunpack.c.l.b16 %v5496
        %v6090 = vunpack.c.h.b16 %v5496
        %v6091 = vunpack.c.l.b16 %v5497
        %v6092 = vunpack.c.h.b16 %v5497
        %v6093 = vunpack.c.l.b16 %v5498
        %v6094 = vunpack.c.h.b16 %v5498
        %v6095 = vunpack.c.l.b16 %v5499
        %v6096 = vunpack.c.h.b16 %v5499
        %v6097 = vunpack.c.l.b16 %v5500
        %v6098 = vunpack.c.h.b16 %v5500
        %v6099 = vunpack.c.l.b16 %v5501
        %v6100 = vunpack.c.h.b16 %v5501
        %v6101 = vunpack.c.l.b16 %v5502
        %v6102 = vunpack.c.h.b16 %v5502
        %v6103 = vunpack.c.l.b16 %v5503
        %v6104 = vunpack.c.h.b16 %v5503
        %v6105 = vunpack.c.l.b16 %v5504
        %v6106 = vunpack.c.h.b16 %v5504
        %v6107 = vunpack.c.l.b16 %v5505
        %v6108 = vunpack.c.h.b16 %v5505
        %v6109 = vunpack.c.l.b16 %v5506
        %v6110 = vunpack.c.h.b16 %v5506
        %v6111 = vunpack.c.l.b16 %v5507
        %v6112 = vunpack.c.h.b16 %v5507
        %v6113 = vunpack.c.l.b16 %v5508
        %v6114 = vunpack.c.h.b16 %v5508
        %v6115 = vunpack.c.l.b16 %v5509
        %v6116 = vunpack.c.h.b16 %v5509
        %v6117 = vunpack.c.l.b16 %v5510
        %v6118 = vunpack.c.h.b16 %v5510
        %v6119 = vunpack.c.l.b16 %v5511
        %v6120 = vunpack.c.h.b16 %v5511
        %v6121 = vunpack.c.l.b16 %v5512
        %v6122 = vunpack.c.h.b16 %v5512
        %v6123 = vunpack.c.l.b16 %v5513
        %v6124 = vunpack.c.h.b16 %v5513
        %v6125 = vunpack.c.l.b16 %v5514
        %v6126 = vunpack.c.h.b16 %v5514
        %v6127 = vunpack.c.l.b16 %v5515
        %v6128 = vunpack.c.h.b16 %v5515
        %v6129 = vunpack.c.l.b16 %v5516
        %v6130 = vunpack.c.h.b16 %v5516
        %v6131 = vunpack.c.l.b16 %v5517
        %v6132 = vunpack.c.h.b16 %v5517
        %v6133 = vunpack.c.l.b16 %v5518
        %v6134 = vunpack.c.h.b16 %v5518
        %v6135 = vunpack.c.l.b16 %v5519
        %v6136 = vunpack.c.h.b16 %v5519
        %v6137 = vunpack.c.l.b16 %v5520
        %v6138 = vunpack.c.h.b16 %v5520
        %v6139 = vunpack.c.l.b16 %v5521
        %v6140 = vunpack.c.h.b16 %v5521
        %v6141 = vunpack.c.l.b16 %v5522
        %v6142 = vunpack.c.h.b16 %v5522
        %v6143 = vunpack.c.l.b16 %v5523
        %v6144 = vunpack.c.h.b16 %v5523
        %v6145 = vunpack.c.l.b16 %v5524
        %v6146 = vunpack.c.h.b16 %v5524
        %v6147 = vunpack.c.l.b16 %v5525
        %v6148 = vunpack.c.h.b16 %v5525
        %v6149 = vunpack.c.l.b16 %v5526
        %v6150 = vunpack.c.h.b16 %v5526
        %v6151 = vunpack.c.l.b16 %v5527
        %v6152 = vunpack.c.h.b16 %v5527
        %v6153 = vunpack.c.l.b16 %v5528
        %v6154 = vunpack.c.h.b16 %v5528
        %v6155 = vunpack.c.l.b16 %v5529
        %v6156 = vunpack.c.h.b16 %v5529
        %v6157 = vunpack.c.l.b16 %v5530
        %v6158 = vunpack.c.h.b16 %v5530
        %v6159 = vunpack.c.l.b16 %v5531
        %v6160 = vunpack.c.h.b16 %v5531
        %v6161 = vunpack.c.l.b16 %v5532
        %v6162 = vunpack.c.h.b16 %v5532
        %v6163 = vunpack.c.l.b16 %v5533
        %v6164 = vunpack.c.h.b16 %v5533
        %v6165 = vunpack.c.l.b16 %v5534
        %v6166 = vunpack.c.h.b16 %v5534
        %v6167 = vunpack.c.l.b16 %v5535
        %v6168 = vunpack.c.h.b16 %v5535
        %v6169 = vunpack.c.l.b16 %v5536
        %v6170 = vunpack.c.h.b16 %v5536
        %v6171 = vunpack.c.l.b16 %v5537
        %v6172 = vunpack.c.h.b16 %v5537
        %v6173 = vunpack.c.l.b16 %v5538
        %v6174 = vunpack.c.h.b16 %v5538
        %v6175 = vunpack.c.l.b16 %v5539
        %v6176 = vunpack.c.h.b16 %v5539
        %v6177 = vunpack.c.l.b16 %v5540
        %v6178 = vunpack.c.h.b16 %v5540
        %v6179 = vunpack.c.l.b16 %v5541
        %v6180 = vunpack.c.h.b16 %v5541
        %v6181 = vunpack.c.l.b16 %v5542
        %v6182 = vunpack.c.h.b16 %v5542
        %v6183 = vunpack.c.l.b16 %v5543
        %v6184 = vunpack.c.h.b16 %v5543
        %v6185 = vunpack.c.l.b16 %v5544
        %v6186 = vunpack.c.h.b16 %v5544
        %v6187 = vunpack.c.l.b16 %v5545
        %v6188 = vunpack.c.h.b16 %v5545
        %v6189 = vunpack.c.l.b16 %v5546
        %v6190 = vunpack.c.h.b16 %v5546
        %v6191 = vunpack.c.l.b16 %v5547
        %v6192 = vunpack.c.h.b16 %v5547
        %v6193 = vunpack.c.l.b16 %v5548
        %v6194 = vunpack.c.h.b16 %v5548
        %v6195 = vunpack.c.l.b16 %v5549
        %v6196 = vunpack.c.h.b16 %v5549
        %v6197 = vunpack.c.l.b16 %v5550
        %v6198 = vunpack.c.h.b16 %v5550
        %v6199 = vunpack.c.l.b16 %v5551
        %v6200 = vunpack.c.h.b16 %v5551
        %v6201 = vunpack.c.l.b16 %v5552
        %v6202 = vunpack.c.h.b16 %v5552
        %v6203 = vunpack.c.l.b16 %v5553
        %v6204 = vunpack.c.h.b16 %v5553
        %v6205 = vunpack.c.l.b16 %v5554
        %v6206 = vunpack.c.h.b16 %v5554
        %v6207 = vunpack.c.l.b16 %v5555
        %v6208 = vunpack.c.h.b16 %v5555
        %v6209 = vunpack.c.l.b16 %v5556
        %v6210 = vunpack.c.h.b16 %v5556
        %v6211 = vunpack.c.l.b16 %v5557
        %v6212 = vunpack.c.h.b16 %v5557
        %v6213 = vunpack.c.l.b16 %v5558
        %v6214 = vunpack.c.h.b16 %v5558
        %v6215 = vunpack.c.l.b16 %v5559
        %v6216 = vunpack.c.h.b16 %v5559
        %v6217 = vunpack.c.l.b16 %v5560
        %v6218 = vunpack.c.h.b16 %v5560
        %v6219 = vunpack.c.l.b16 %v5561
        %v6220 = vunpack.c.h.b16 %v5561
        %v6221 = vunpack.c.l.b16 %v5562
        %v6222 = vunpack.c.h.b16 %v5562
        %v6223 = vunpack.c.l.b16 %v5563
        %v6224 = vunpack.c.h.b16 %v5563
        %v6225 = vunpack.c.l.b16 %v5564
        %v6226 = vunpack.c.h.b16 %v5564
        %v6227 = vunpack.c.l.b16 %v5565
        %v6228 = vunpack.c.h.b16 %v5565
        %v6229 = vunpack.c.l.b16 %v5566
        %v6230 = vunpack.c.h.b16 %v5566
        %v6231 = vunpack.c.l.b16 %v5567
        %v6232 = vunpack.c.h.b16 %v5567
        %v6233 = vunpack.c.l.b16 %v5568
        %v6234 = vunpack.c.h.b16 %v5568
        %v6235 = vunpack.c.l.b16 %v5569
        %v6236 = vunpack.c.h.b16 %v5569
        %v6237 = vunpack.c.l.b16 %v5570
        %v6238 = vunpack.c.h.b16 %v5570
        %v6239 = vunpack.c.l.b16 %v5571
        %v6240 = vunpack.c.h.b16 %v5571
        %v6241 = vunpack.c.l.b16 %v5572
        %v6242 = vunpack.c.h.b16 %v5572
        %v6243 = vunpack.c.l.b16 %v5573
        %v6244 = vunpack.c.h.b16 %v5573
        %v6245 = vunpack.c.l.b16 %v5574
        %v6246 = vunpack.c.h.b16 %v5574
        %v6247 = vunpack.c.l.b16 %v5575
        %v6248 = vunpack.c.h.b16 %v5575
        %v6249 = vunpack.c.l.b16 %v5576
        %v6250 = vunpack.c.h.b16 %v5576
        %v6251 = vunpack.c.l.b16 %v5577
        %v6252 = vunpack.c.h.b16 %v5577
        %v6253 = vunpack.c.l.b16 %v5578
        %v6254 = vunpack.c.h.b16 %v5578
        %v6255 = vunpack.c.l.b16 %v5579
        %v6256 = vunpack.c.h.b16 %v5579
        %v6257 = vunpack.c.l.b16 %v5580
        %v6258 = vunpack.c.h.b16 %v5580
        %v6259 = vunpack.c.l.b16 %v5581
        %v6260 = vunpack.c.h.b16 %v5581
        %v6261 = vunpack.c.l.b16 %v5582
        %v6262 = vunpack.c.h.b16 %v5582
        %v6263 = vunpack.c.l.b16 %v5583
        %v6264 = vunpack.c.h.b16 %v5583
        %v6265 = vunpack.c.l.b16 %v5584
        %v6266 = vunpack.c.h.b16 %v5584
        %v6267 = vunpack.c.l.b16 %v5585
        %v6268 = vunpack.c.h.b16 %v5585
        %v6269 = vunpack.c.l.b16 %v5586
        %v6270 = vunpack.c.h.b16 %v5586
        %v6271 = vunpack.c.l.b16 %v5587
        %v6272 = vunpack.c.h.b16 %v5587
        %v6273 = vunpack.c.l.b16 %v5588
        %v6274 = vunpack.c.h.b16 %v5588
        %v6275 = vunpack.c.l.b16 %v5589
        %v6276 = vunpack.c.h.b16 %v5589
        %v6277 = vunpack.c.l.b16 %v5590
        %v6278 = vunpack.c.h.b16 %v5590
        %v6279 = vunpack.c.l.b16 %v5591
        %v6280 = vunpack.c.h.b16 %v5591
        %v6281 = vunpack.c.l.b16 %v5592
        %v6282 = vunpack.c.h.b16 %v5592
        %v6283 = vunpack.c.l.b16 %v5593
        %v6284 = vunpack.c.h.b16 %v5593
        %v6285 = vunpack.c.l.b16 %v5594
        %v6286 = vunpack.c.h.b16 %v5594
        %v6287 = vunpack.c.l.b16 %v5595
        %v6288 = vunpack.c.h.b16 %v5595
        %v6289 = vunpack.c.l.b16 %v5596
        %v6290 = vunpack.c.h.b16 %v5596
        %v6291 = vunpack.c.l.b16 %v5597
        %v6292 = vunpack.c.h.b16 %v5597
        %v6293 = vunpack.c.l.b16 %v5598
        %v6294 = vunpack.c.h.b16 %v5598
        %v6295 = vunpack.c.l.b16 %v5599
        %v6296 = vunpack.c.h.b16 %v5599
        %v6297 = vunpack.c.l.b16 %v5600
        %v6298 = vunpack.c.h.b16 %v5600
        %v6299 = vunpack.c.l.b16 %v5601
        %v6300 = vunpack.c.h.b16 %v5601
        %v6301 = vunpack.c.l.b16 %v5602
        %v6302 = vunpack.c.h.b16 %v5602
        %v6303 = vunpack.c.l.b16 %v5603
        %v6304 = vunpack.c.h.b16 %v5603
        %v6305 = vunpack.c.l.b16 %v5604
        %v6306 = vunpack.c.h.b16 %v5604
        %v6307 = vunpack.c.l.b16 %v5605
        %v6308 = vunpack.c.h.b16 %v5605
        %v6309 = vunpack.c.l.b16 %v5606
        %v6310 = vunpack.c.h.b16 %v5606
        %v6311 = vunpack.c.l.b16 %v5607
        %v6312 = vunpack.c.h.b16 %v5607
        %v6313 = vunpack.c.l.b16 %v5608
        %v6314 = vunpack.c.h.b16 %v5608
        %v6315 = vunpack.c.l.b16 %v5609
        %v6316 = vunpack.c.h.b16 %v5609
        %v6317 = vunpack.c.l.b16 %v5610
        %v6318 = vunpack.c.h.b16 %v5610
        %v6319 = vunpack.c.l.b16 %v5611
        %v6320 = vunpack.c.h.b16 %v5611
        %v6321 = vunpack.c.l.b16 %v5612
        %v6322 = vunpack.c.h.b16 %v5612
        %v6323 = vunpack.c.l.b16 %v5613
        %v6324 = vunpack.c.h.b16 %v5613
        %v6325 = vunpack.c.l.b16 %v5614
        %v6326 = vunpack.c.h.b16 %v5614
        %v6327 = vunpack.c.l.b16 %v5615
        %v6328 = vunpack.c.h.b16 %v5615
        %v6329 = vunpack.c.l.b16 %v5616
        %v6330 = vunpack.c.h.b16 %v5616
        %v6331 = vunpack.c.l.b16 %v5617
        %v6332 = vunpack.c.h.b16 %v5617
        %v6333 = vunpack.c.l.b16 %v5618
        %v6334 = vunpack.c.h.b16 %v5618
        %v6335 = vunpack.c.l.b16 %v5619
        %v6336 = vunpack.c.h.b16 %v5619
        %v6337 = vunpack.c.l.b16 %v5620
        %v6338 = vunpack.c.h.b16 %v5620
        %v6339 = vunpack.c.l.b16 %v5621
        %v6340 = vunpack.c.h.b16 %v5621
        %v6341 = vunpack.c.l.b16 %v5622
        %v6342 = vunpack.c.h.b16 %v5622
        %v6343 = vunpack.c.l.b16 %v5623
        %v6344 = vunpack.c.h.b16 %v5623
        %v6345 = vunpack.c.l.b16 %v5624
        %v6346 = vunpack.c.h.b16 %v5624
        %v6347 = vunpack.c.l.b16 %v5625
        %v6348 = vunpack.c.h.b16 %v5625
        %v6349 = vunpack.c.l.b16 %v5626
        %v6350 = vunpack.c.h.b16 %v5626
        %v6351 = vunpack.c.l.b16 %v5627
        %v6352 = vunpack.c.h.b16 %v5627
        %v6353 = vunpack.c.l.b16 %v5628
        %v6354 = vunpack.c.h.b16 %v5628
        %v6355 = vunpack.c.l.b16 %v5629
        %v6356 = vunpack.c.h.b16 %v5629
        %v6357 = vunpack.c.l.b16 %v5630
        %v6358 = vunpack.c.h.b16 %v5630
        %v6359 = vunpack.c.l.b16 %v5631
        %v6360 = vunpack.c.h.b16 %v5631
        %v6361 = vunpack.c.l.b16 %v5632
        %v6362 = vunpack.c.h.b16 %v5632
        %v6363 = vunpack.c.l.b16 %v5633
        %v6364 = vunpack.c.h.b16 %v5633
        %v6365 = vunpack.c.l.b16 %v5634
        %v6366 = vunpack.c.h.b16 %v5634
        %v6367 = vunpack.c.l.b16 %v5635
        %v6368 = vunpack.c.h.b16 %v5635
        %v6369 = vunpack.c.l.b16 %v5636
        %v6370 = vunpack.c.h.b16 %v5636
        %v6371 = vunpack.c.l.b16 %v5637
        %v6372 = vunpack.c.h.b16 %v5637
        %v6373 = vunpack.c.l.b16 %v5638
        %v6374 = vunpack.c.h.b16 %v5638
        %v6375 = vunpack.c.l.b16 %v5639
        %v6376 = vunpack.c.h.b16 %v5639
        %v6377 = vunpack.c.l.b16 %v5640
        %v6378 = vunpack.c.h.b16 %v5640
        %v6379 = vunpack.c.l.b16 %v5641
        %v6380 = vunpack.c.h.b16 %v5641
        %v6381 = vunpack.c.l.b16 %v5642
        %v6382 = vunpack.c.h.b16 %v5642
        %v6383 = vunpack.c.l.b16 %v5643
        %v6384 = vunpack.c.h.b16 %v5643
        %v6385 = vunpack.c.l.b16 %v5644
        %v6386 = vunpack.c.h.b16 %v5644
        %v6387 = vunpack.c.l.b16 %v5645
        %v6388 = vunpack.c.h.b16 %v5645
        %v6389 = vunpack.c.l.b16 %v5646
        %v6390 = vunpack.c.h.b16 %v5646
        %v6391 = vunpack.c.l.b16 %v5647
        %v6392 = vunpack.c.h.b16 %v5647
        %v6393 = vunpack.c.l.b16 %v5648
        %v6394 = vunpack.c.h.b16 %v5648
        %v6395 = vunpack.c.l.b16 %v5649
        %v6396 = vunpack.c.h.b16 %v5649
        %v6397 = vunpack.c.l.b16 %v5650
        %v6398 = vunpack.c.h.b16 %v5650
        %v6399 = vunpack.c.l.b16 %v5651
        %v6400 = vunpack.c.h.b16 %v5651
        %v6401 = vunpack.c.l.b16 %v5652
        %v6402 = vunpack.c.h.b16 %v5652
        %v6403 = vunpack.c.l.b16 %v5653
        %v6404 = vunpack.c.h.b16 %v5653
        %v6405 = vunpack.c.l.b16 %v5654
        %v6406 = vunpack.c.h.b16 %v5654
        %v6407 = vunpack.c.l.b16 %v5655
        %v6408 = vunpack.c.h.b16 %v5655
        %v6409 = vunpack.c.l.b16 %v5656
        %v6410 = vunpack.c.h.b16 %v5656
        %v6411 = vunpack.c.l.b16 %v5657
        %v6412 = vunpack.c.h.b16 %v5657
        %v6413 = vunpack.c.l.b16 %v5658
        %v6414 = vunpack.c.h.b16 %v5658
        %v6415 = vunpack.c.l.b16 %v5659
        %v6416 = vunpack.c.h.b16 %v5659
        %v6417 = vunpack.c.l.b16 %v5660
        %v6418 = vunpack.c.h.b16 %v5660
        %v6419 = vunpack.c.l.b16 %v5661
        %v6420 = vunpack.c.h.b16 %v5661
        %v6421 = vunpack.c.l.b16 %v5662
        %v6422 = vunpack.c.h.b16 %v5662
        %v6423 = vunpack.c.l.b16 %v5663
        %v6424 = vunpack.c.h.b16 %v5663
        %v6425 = vunpack.c.l.b16 %v5664
        %v6426 = vunpack.c.h.b16 %v5664
        %v6427 = vunpack.c.l.b16 %v5665
        %v6428 = vunpack.c.h.b16 %v5665
        %v6429 = vunpack.c.l.b16 %v5666
        %v6430 = vunpack.c.h.b16 %v5666
        %v6431 = vunpack.c.l.b16 %v5667
        %v6432 = vunpack.c.h.b16 %v5667
        %v6433 = vunpack.c.l.b16 %v5668
        %v6434 = vunpack.c.h.b16 %v5668
        %v6435 = vunpack.c.l.b16 %v5669
        %v6436 = vunpack.c.h.b16 %v5669
        %v6437 = vunpack.c.l.b16 %v5670
        %v6438 = vunpack.c.h.b16 %v5670
        %v6439 = vpack.c.b16 %v5927, %v5927
        %v6440 = vpack.c.b16 %v5928, %v5928
        %v6441 = vpack.c.b16 %v5929, %v5929
        %v6442 = vpack.c.b16 %v5930, %v5930
        %v6443 = vpack.c.b16 %v5931, %v5931
        %v6444 = vpack.c.b16 %v5932, %v5932
        %v6445 = vpack.c.b16 %v5933, %v5933
        %v6446 = vpack.c.b16 %v5934, %v5934
        %v6447 = vpack.c.b16 %v5935, %v5935
        %v6448 = vpack.c.b16 %v5936, %v5936
        %v6449 = vpack.c.b16 %v5937, %v5937
        %v6450 = vpack.c.b16 %v5938, %v5938
        %v6451 = vpack.c.b16 %v5939, %v5939
        %v6452 = vpack.c.b16 %v5940, %v5940
        %v6453 = vpack.c.b16 %v5941, %v5941
        %v6454 = vpack.c.b16 %v5942, %v5942
        %v6455 = vpack.c.b16 %v5943, %v5943
        %v6456 = vpack.c.b16 %v5944, %v5944
        %v6457 = vpack.c.b16 %v5945, %v5945
        %v6458 = vpack.c.b16 %v5946, %v5946
        %v6459 = vpack.c.b16 %v5947, %v5947
        %v6460 = vpack.c.b16 %v5948, %v5948
        %v6461 = vpack.c.b16 %v5949, %v5949
        %v6462 = vpack.c.b16 %v5950, %v5950
        %v6463 = vpack.c.b16 %v5951, %v5951
        %v6464 = vpack.c.b16 %v5952, %v5952
        %v6465 = vpack.c.b16 %v5953, %v5953
        %v6466 = vpack.c.b16 %v5954, %v5954
        %v6467 = vpack.c.b16 %v5955, %v5955
        %v6468 = vpack.c.b16 %v5956, %v5956
        %v6469 = vpack.c.b16 %v5957, %v5957
        %v6470 = vpack.c.b16 %v5958, %v5958
        %v6471 = vpack.c.b16 %v5959, %v5959
        %v6472 = vpack.c.b16 %v5960, %v5960
        %v6473 = vpack.c.b16 %v5961, %v5961
        %v6474 = vpack.c.b16 %v5962, %v5962
        %v6475 = vpack.c.b16 %v5963, %v5963
        %v6476 = vpack.c.b16 %v5964, %v5964
        %v6477 = vpack.c.b16 %v5965, %v5965
        %v6478 = vpack.c.b16 %v5966, %v5966
        %v6479 = vpack.c.b16 %v5967, %v5967
        %v6480 = vpack.c.b16 %v5968, %v5968
        %v6481 = vpack.c.b16 %v5969, %v5969
        %v6482 = vpack.c.b16 %v5970, %v5970
        %v6483 = vpack.c.b16 %v5971, %v5971
        %v6484 = vpack.c.b16 %v5972, %v5972
        %v6485 = vpack.c.b16 %v5973, %v5973
        %v6486 = vpack.c.b16 %v5974, %v5974
        %v6487 = vpack.c.b16 %v5975, %v5975
        %v6488 = vpack.c.b16 %v5976, %v5976
        %v6489 = vpack.c.b16 %v5977, %v5977
        %v6490 = vpack.c.b16 %v5978, %v5978
        %v6491 = vpack.c.b16 %v5979, %v5979
        %v6492 = vpack.c.b16 %v5980, %v5980
        %v6493 = vpack.c.b16 %v5981, %v5981
        %v6494 = vpack.c.b16 %v5982, %v5982
        %v6495 = vpack.c.b16 %v5983, %v5983
        %v6496 = vpack.c.b16 %v5984, %v5984
        %v6497 = vpack.c.b16 %v5985, %v5985
        %v6498 = vpack.c.b16 %v5986, %v5986
        %v6499 = vpack.c.b16 %v5987, %v5987
        %v6500 = vpack.c.b16 %v5988, %v5988
        %v6501 = vpack.c.b16 %v5989, %v5989
        %v6502 = vpack.c.b16 %v5990, %v5990
        %v6503 = vpack.c.b16 %v5991, %v5991
        %v6504 = vpack.c.b16 %v5992, %v5992
        %v6505 = vpack.c.b16 %v5993, %v5993
        %v6506 = vpack.c.b16 %v5994, %v5994
        %v6507 = vpack.c.b16 %v5995, %v5995
        %v6508 = vpack.c.b16 %v5996, %v5996
        %v6509 = vpack.c.b16 %v5997, %v5997
        %v6510 = vpack.c.b16 %v5998, %v5998
        %v6511 = vpack.c.b16 %v5999, %v5999
        %v6512 = vpack.c.b16 %v6000, %v6000
        %v6513 = vpack.c.b16 %v6001, %v6001
        %v6514 = vpack.c.b16 %v6002, %v6002
        %v6515 = vpack.c.b16 %v6003, %v6003
        %v6516 = vpack.c.b16 %v6004, %v6004
        %v6517 = vpack.c.b16 %v6005, %v6005
        %v6518 = vpack.c.b16 %v6006, %v6006
        %v6519 = vpack.c.b16 %v6007, %v6007
        %v6520 = vpack.c.b16 %v6008, %v6008
        %v6521 = vpack.c.b16 %v6009, %v6009
        %v6522 = vpack.c.b16 %v6010, %v6010
        %v6523 = vpack.c.b16 %v6011, %v6011
        %v6524 = vpack.c.b16 %v6012, %v6012
        %v6525 = vpack.c.b16 %v6013, %v6013
        %v6526 = vpack.c.b16 %v6014, %v6014
        %v6527 = vpack.c.b16 %v6015, %v6015
        %v6528 = vpack.c.b16 %v6016, %v6016
        %v6529 = vpack.c.b16 %v6017, %v6017
        %v6530 = vpack.c.b16 %v6018, %v6018
        %v6531 = vpack.c.b16 %v6019, %v6019
        %v6532 = vpack.c.b16 %v6020, %v6020
        %v6533 = vpack.c.b16 %v6021, %v6021
        %v6534 = vpack.c.b16 %v6022, %v6022
        %v6535 = vpack.c.b16 %v6023, %v6023
        %v6536 = vpack.c.b16 %v6024, %v6024
        %v6537 = vpack.c.b16 %v6025, %v6025
        %v6538 = vpack.c.b16 %v6026, %v6026
        %v6539 = vpack.c.b16 %v6027, %v6027
        %v6540 = vpack.c.b16 %v6028, %v6028
        %v6541 = vpack.c.b16 %v6029, %v6029
        %v6542 = vpack.c.b16 %v6030, %v6030
        %v6543 = vpack.c.b16 %v6031, %v6031
        %v6544 = vpack.c.b16 %v6032, %v6032
        %v6545 = vpack.c.b16 %v6033, %v6033
        %v6546 = vpack.c.b16 %v6034, %v6034
        %v6547 = vpack.c.b16 %v6035, %v6035
        %v6548 = vpack.c.b16 %v6036, %v6036
        %v6549 = vpack.c.b16 %v6037, %v6037
        %v6550 = vpack.c.b16 %v6038, %v6038
        %v6551 = vpack.c.b16 %v6039, %v6039
        %v6552 = vpack.c.b16 %v6040, %v6040
        %v6553 = vpack.c.b16 %v6041, %v6041
        %v6554 = vpack.c.b16 %v6042, %v6042
        %v6555 = vpack.c.b16 %v6043, %v6043
        %v6556 = vpack.c.b16 %v6044, %v6044
        %v6557 = vpack.c.b16 %v6045, %v6045
        %v6558 = vpack.c.b16 %v6046, %v6046
        %v6559 = vpack.c.b16 %v6047, %v6047
        %v6560 = vpack.c.b16 %v6048, %v6048
        %v6561 = vpack.c.b16 %v6049, %v6049
        %v6562 = vpack.c.b16 %v6050, %v6050
        %v6563 = vpack.c.b16 %v6051, %v6051
        %v6564 = vpack.c.b16 %v6052, %v6052
        %v6565 = vpack.c.b16 %v6053, %v6053
        %v6566 = vpack.c.b16 %v6054, %v6054
        %v6567 = vpack.c.b16 %v6055, %v6055
        %v6568 = vpack.c.b16 %v6056, %v6056
        %v6569 = vpack.c.b16 %v6057, %v6057
        %v6570 = vpack.c.b16 %v6058, %v6058
        %v6571 = vpack.c.b16 %v6059, %v6059
        %v6572 = vpack.c.b16 %v6060, %v6060
        %v6573 = vpack.c.b16 %v6061, %v6061
        %v6574 = vpack.c.b16 %v6062, %v6062
        %v6575 = vpack.c.b16 %v6063, %v6063
        %v6576 = vpack.c.b16 %v6064, %v6064
        %v6577 = vpack.c.b16 %v6065, %v6065
        %v6578 = vpack.c.b16 %v6066, %v6066
        %v6579 = vpack.c.b16 %v6067, %v6067
        %v6580 = vpack.c.b16 %v6068, %v6068
        %v6581 = vpack.c.b16 %v6069, %v6069
        %v6582 = vpack.c.b16 %v6070, %v6070
        %v6583 = vpack.c.b16 %v6071, %v6071
        %v6584 = vpack.c.b16 %v6072, %v6072
        %v6585 = vpack.c.b16 %v6073, %v6073
        %v6586 = vpack.c.b16 %v6074, %v6074
        %v6587 = vpack.c.b16 %v6075, %v6075
        %v6588 = vpack.c.b16 %v6076, %v6076
        %v6589 = vpack.c.b16 %v6077, %v6077
        %v6590 = vpack.c.b16 %v6078, %v6078
        %v6591 = vpack.c.b16 %v6079, %v6079
        %v6592 = vpack.c.b16 %v6080, %v6080
        %v6593 = vpack.c.b16 %v6081, %v6081
        %v6594 = vpack.c.b16 %v6082, %v6082
        %v6595 = vpack.c.b16 %v6083, %v6083
        %v6596 = vpack.c.b16 %v6084, %v6084
        %v6597 = vpack.c.b16 %v6085, %v6085
        %v6598 = vpack.c.b16 %v6086, %v6086
        %v6599 = vpack.c.b16 %v6087, %v6087
        %v6600 = vpack.c.b16 %v6088, %v6088
        %v6601 = vpack.c.b16 %v6089, %v6089
        %v6602 = vpack.c.b16 %v6090, %v6090
        %v6603 = vpack.c.b16 %v6091, %v6091
        %v6604 = vpack.c.b16 %v6092, %v6092
        %v6605 = vpack.c.b16 %v6093, %v6093
        %v6606 = vpack.c.b16 %v6094, %v6094
        %v6607 = vpack.c.b16 %v6095, %v6095
        %v6608 = vpack.c.b16 %v6096, %v6096
        %v6609 = vpack.c.b16 %v6097, %v6097
        %v6610 = vpack.c.b16 %v6098, %v6098
        %v6611 = vpack.c.b16 %v6099, %v6099
        %v6612 = vpack.c.b16 %v6100, %v6100
        %v6613 = vpack.c.b16 %v6101, %v6101
        %v6614 = vpack.c.b16 %v6102, %v6102
        %v6615 = vpack.c.b16 %v6103, %v6103
        %v6616 = vpack.c.b16 %v6104, %v6104
        %v6617 = vpack.c.b16 %v6105, %v6105
        %v6618 = vpack.c.b16 %v6106, %v6106
        %v6619 = vpack.c.b16 %v6107, %v6107
        %v6620 = vpack.c.b16 %v6108, %v6108
        %v6621 = vpack.c.b16 %v6109, %v6109
        %v6622 = vpack.c.b16 %v6110, %v6110
        %v6623 = vpack.c.b16 %v6111, %v6111
        %v6624 = vpack.c.b16 %v6112, %v6112
        %v6625 = vpack.c.b16 %v6113, %v6113
        %v6626 = vpack.c.b16 %v6114, %v6114
        %v6627 = vpack.c.b16 %v6115, %v6115
        %v6628 = vpack.c.b16 %v6116, %v6116
        %v6629 = vpack.c.b16 %v6117, %v6117
        %v6630 = vpack.c.b16 %v6118, %v6118
        %v6631 = vpack.c.b16 %v6119, %v6119
        %v6632 = vpack.c.b16 %v6120, %v6120
        %v6633 = vpack.c.b16 %v6121, %v6121
        %v6634 = vpack.c.b16 %v6122, %v6122
        %v6635 = vpack.c.b16 %v6123, %v6123
        %v6636 = vpack.c.b16 %v6124, %v6124
        %v6637 = vpack.c.b16 %v6125, %v6125
        %v6638 = vpack.c.b16 %v6126, %v6126
        %v6639 = vpack.c.b16 %v6127, %v6127
        %v6640 = vpack.c.b16 %v6128, %v6128
        %v6641 = vpack.c.b16 %v6129, %v6129
        %v6642 = vpack.c.b16 %v6130, %v6130
        %v6643 = vpack.c.b16 %v6131, %v6131
        %v6644 = vpack.c.b16 %v6132, %v6132
        %v6645 = vpack.c.b16 %v6133, %v6133
        %v6646 = vpack.c.b16 %v6134, %v6134
        %v6647 = vpack.c.b16 %v6135, %v6135
        %v6648 = vpack.c.b16 %v6136, %v6136
        %v6649 = vpack.c.b16 %v6137, %v6137
        %v6650 = vpack.c.b16 %v6138, %v6138
        %v6651 = vpack.c.b16 %v6139, %v6139
        %v6652 = vpack.c.b16 %v6140, %v6140
        %v6653 = vpack.c.b16 %v6141, %v6141
        %v6654 = vpack.c.b16 %v6142, %v6142
        %v6655 = vpack.c.b16 %v6143, %v6143
        %v6656 = vpack.c.b16 %v6144, %v6144
        %v6657 = vpack.c.b16 %v6145, %v6145
        %v6658 = vpack.c.b16 %v6146, %v6146
        %v6659 = vpack.c.b16 %v6147, %v6147
        %v6660 = vpack.c.b16 %v6148, %v6148
        %v6661 = vpack.c.b16 %v6149, %v6149
        %v6662 = vpack.c.b16 %v6150, %v6150
        %v6663 = vpack.c.b16 %v6151, %v6151
        %v6664 = vpack.c.b16 %v6152, %v6152
        %v6665 = vpack.c.b16 %v6153, %v6153
        %v6666 = vpack.c.b16 %v6154, %v6154
        %v6667 = vpack.c.b16 %v6155, %v6155
        %v6668 = vpack.c.b16 %v6156, %v6156
        %v6669 = vpack.c.b16 %v6157, %v6157
        %v6670 = vpack.c.b16 %v6158, %v6158
        %v6671 = vpack.c.b16 %v6159, %v6159
        %v6672 = vpack.c.b16 %v6160, %v6160
        %v6673 = vpack.c.b16 %v6161, %v6161
        %v6674 = vpack.c.b16 %v6162, %v6162
        %v6675 = vpack.c.b16 %v6163, %v6163
        %v6676 = vpack.c.b16 %v6164, %v6164
        %v6677 = vpack.c.b16 %v6165, %v6165
        %v6678 = vpack.c.b16 %v6166, %v6166
        %v6679 = vpack.c.b16 %v6167, %v6167
        %v6680 = vpack.c.b16 %v6168, %v6168
        %v6681 = vpack.c.b16 %v6169, %v6169
        %v6682 = vpack.c.b16 %v6170, %v6170
        %v6683 = vpack.c.b16 %v6171, %v6171
        %v6684 = vpack.c.b16 %v6172, %v6172
        %v6685 = vpack.c.b16 %v6173, %v6173
        %v6686 = vpack.c.b16 %v6174, %v6174
        %v6687 = vpack.c.b16 %v6175, %v6175
        %v6688 = vpack.c.b16 %v6176, %v6176
        %v6689 = vpack.c.b16 %v6177, %v6177
        %v6690 = vpack.c.b16 %v6178, %v6178
        %v6691 = vpack.c.b16 %v6179, %v6179
        %v6692 = vpack.c.b16 %v6180, %v6180
        %v6693 = vpack.c.b16 %v6181, %v6181
        %v6694 = vpack.c.b16 %v6182, %v6182
        %v6695 = vpack.c.b16 %v6183, %v6183
        %v6696 = vpack.c.b16 %v6184, %v6184
        %v6697 = vpack.c.b16 %v6185, %v6185
        %v6698 = vpack.c.b16 %v6186, %v6186
        %v6699 = vpack.c.b16 %v6187, %v6187
        %v6700 = vpack.c.b16 %v6188, %v6188
        %v6701 = vpack.c.b16 %v6189, %v6189
        %v6702 = vpack.c.b16 %v6190, %v6190
        %v6703 = vpack.c.b16 %v6191, %v6191
        %v6704 = vpack.c.b16 %v6192, %v6192
        %v6705 = vpack.c.b16 %v6193, %v6193
        %v6706 = vpack.c.b16 %v6194, %v6194
        %v6707 = vpack.c.b16 %v6195, %v6195
        %v6708 = vpack.c.b16 %v6196, %v6196
        %v6709 = vpack.c.b16 %v6197, %v6197
        %v6710 = vpack.c.b16 %v6198, %v6198
        %v6711 = vpack.c.b16 %v6199, %v6199
        %v6712 = vpack.c.b16 %v6200, %v6200
        %v6713 = vpack.c.b16 %v6201, %v6201
        %v6714 = vpack.c.b16 %v6202, %v6202
        %v6715 = vpack.c.b16 %v6203, %v6203
        %v6716 = vpack.c.b16 %v6204, %v6204
        %v6717 = vpack.c.b16 %v6205, %v6205
        %v6718 = vpack.c.b16 %v6206, %v6206
        %v6719 = vpack.c.b16 %v6207, %v6207
        %v6720 = vpack.c.b16 %v6208, %v6208
        %v6721 = vpack.c.b16 %v6209, %v6209
        %v6722 = vpack.c.b16 %v6210, %v6210
        %v6723 = vpack.c.b16 %v6211, %v6211
        %v6724 = vpack.c.b16 %v6212, %v6212
        %v6725 = vpack.c.b16 %v6213, %v6213
        %v6726 = vpack.c.b16 %v6214, %v6214
        %v6727 = vpack.c.b16 %v6215, %v6215
        %v6728 = vpack.c.b16 %v6216, %v6216
        %v6729 = vpack.c.b16 %v6217, %v6217
        %v6730 = vpack.c.b16 %v6218, %v6218
        %v6731 = vpack.c.b16 %v6219, %v6219
        %v6732 = vpack.c.b16 %v6220, %v6220
        %v6733 = vpack.c.b16 %v6221, %v6221
        %v6734 = vpack.c.b16 %v6222, %v6222
        %v6735 = vpack.c.b16 %v6223, %v6223
        %v6736 = vpack.c.b16 %v6224, %v6224
        %v6737 = vpack.c.b16 %v6225, %v6225
        %v6738 = vpack.c.b16 %v6226, %v6226
        %v6739 = vpack.c.b16 %v6227, %v6227
        %v6740 = vpack.c.b16 %v6228, %v6228
        %v6741 = vpack.c.b16 %v6229, %v6229
        %v6742 = vpack.c.b16 %v6230, %v6230
        %v6743 = vpack.c.b16 %v6231, %v6231
        %v6744 = vpack.c.b16 %v6232, %v6232
        %v6745 = vpack.c.b16 %v6233, %v6233
        %v6746 = vpack.c.b16 %v6234, %v6234
        %v6747 = vpack.c.b16 %v6235, %v6235
        %v6748 = vpack.c.b16 %v6236, %v6236
        %v6749 = vpack.c.b16 %v6237, %v6237
        %v6750 = vpack.c.b16 %v6238, %v6238
        %v6751 = vpack.c.b16 %v6239, %v6239
        %v6752 = vpack.c.b16 %v6240, %v6240
        %v6753 = vpack.c.b16 %v6241, %v6241
        %v6754 = vpack.c.b16 %v6242, %v6242
        %v6755 = vpack.c.b16 %v6243, %v6243
        %v6756 = vpack.c.b16 %v6244, %v6244
        %v6757 = vpack.c.b16 %v6245, %v6245
        %v6758 = vpack.c.b16 %v6246, %v6246
        %v6759 = vpack.c.b16 %v6247, %v6247
        %v6760 = vpack.c.b16 %v6248, %v6248
        %v6761 = vpack.c.b16 %v6249, %v6249
        %v6762 = vpack.c.b16 %v6250, %v6250
        %v6763 = vpack.c.b16 %v6251, %v6251
        %v6764 = vpack.c.b16 %v6252, %v6252
        %v6765 = vpack.c.b16 %v6253, %v6253
        %v6766 = vpack.c.b16 %v6254, %v6254
        %v6767 = vpack.c.b16 %v6255, %v6255
        %v6768 = vpack.c.b16 %v6256, %v6256
        %v6769 = vpack.c.b16 %v6257, %v6257
        %v6770 = vpack.c.b16 %v6258, %v6258
        %v6771 = vpack.c.b16 %v6259, %v6259
        %v6772 = vpack.c.b16 %v6260, %v6260
        %v6773 = vpack.c.b16 %v6261, %v6261
        %v6774 = vpack.c.b16 %v6262, %v6262
        %v6775 = vpack.c.b16 %v6263, %v6263
        %v6776 = vpack.c.b16 %v6264, %v6264
        %v6777 = vpack.c.b16 %v6265, %v6265
        %v6778 = vpack.c.b16 %v6266, %v6266
        %v6779 = vpack.c.b16 %v6267, %v6267
        %v6780 = vpack.c.b16 %v6268, %v6268
        %v6781 = vpack.c.b16 %v6269, %v6269
        %v6782 = vpack.c.b16 %v6270, %v6270
        %v6783 = vpack.c.b16 %v6271, %v6271
        %v6784 = vpack.c.b16 %v6272, %v6272
        %v6785 = vpack.c.b16 %v6273, %v6273
        %v6786 = vpack.c.b16 %v6274, %v6274
        %v6787 = vpack.c.b16 %v6275, %v6275
        %v6788 = vpack.c.b16 %v6276, %v6276
        %v6789 = vpack.c.b16 %v6277, %v6277
        %v6790 = vpack.c.b16 %v6278, %v6278
        %v6791 = vpack.c.b16 %v6279, %v6279
        %v6792 = vpack.c.b16 %v6280, %v6280
        %v6793 = vpack.c.b16 %v6281, %v6281
        %v6794 = vpack.c.b16 %v6282, %v6282
        %v6795 = vpack.c.b16 %v6283, %v6283
        %v6796 = vpack.c.b16 %v6284, %v6284
        %v6797 = vpack.c.b16 %v6285, %v6285
        %v6798 = vpack.c.b16 %v6286, %v6286
        %v6799 = vpack.c.b16 %v6287, %v6287
        %v6800 = vpack.c.b16 %v6288, %v6288
        %v6801 = vpack.c.b16 %v6289, %v6289
        %v6802 = vpack.c.b16 %v6290, %v6290
        %v6803 = vpack.c.b16 %v6291, %v6291
        %v6804 = vpack.c.b16 %v6292, %v6292
        %v6805 = vpack.c.b16 %v6293, %v6293
        %v6806 = vpack.c.b16 %v6294, %v6294
        %v6807 = vpack.c.b16 %v6295, %v6295
        %v6808 = vpack.c.b16 %v6296, %v6296
        %v6809 = vpack.c.b16 %v6297, %v6297
        %v6810 = vpack.c.b16 %v6298, %v6298
        %v6811 = vpack.c.b16 %v6299, %v6299
        %v6812 = vpack.c.b16 %v6300, %v6300
        %v6813 = vpack.c.b16 %v6301, %v6301
        %v6814 = vpack.c.b16 %v6302, %v6302
        %v6815 = vpack.c.b16 %v6303, %v6303
        %v6816 = vpack.c.b16 %v6304, %v6304
        %v6817 = vpack.c.b16 %v6305, %v6305
        %v6818 = vpack.c.b16 %v6306, %v6306
        %v6819 = vpack.c.b16 %v6307, %v6307
        %v6820 = vpack.c.b16 %v6308, %v6308
        %v6821 = vpack.c.b16 %v6309, %v6309
        %v6822 = vpack.c.b16 %v6310, %v6310
        %v6823 = vpack.c.b16 %v6311, %v6311
        %v6824 = vpack.c.b16 %v6312, %v6312
        %v6825 = vpack.c.b16 %v6313, %v6313
        %v6826 = vpack.c.b16 %v6314, %v6314
        %v6827 = vpack.c.b16 %v6315, %v6315
        %v6828 = vpack.c.b16 %v6316, %v6316
        %v6829 = vpack.c.b16 %v6317, %v6317
        %v6830 = vpack.c.b16 %v6318, %v6318
        %v6831 = vpack.c.b16 %v6319, %v6319
        %v6832 = vpack.c.b16 %v6320, %v6320
        %v6833 = vpack.c.b16 %v6321, %v6321
        %v6834 = vpack.c.b16 %v6322, %v6322
        %v6835 = vpack.c.b16 %v6323, %v6323
        %v6836 = vpack.c.b16 %v6324, %v6324
        %v6837 = vpack.c.b16 %v6325, %v6325
        %v6838 = vpack.c.b16 %v6326, %v6326
        %v6839 = vpack.c.b16 %v6327, %v6327
        %v6840 = vpack.c.b16 %v6328, %v6328
        %v6841 = vpack.c.b16 %v6329, %v6329
        %v6842 = vpack.c.b16 %v6330, %v6330
        %v6843 = vpack.c.b16 %v6331, %v6331
        %v6844 = vpack.c.b16 %v6332, %v6332
        %v6845 = vpack.c.b16 %v6333, %v6333
        %v6846 = vpack.c.b16 %v6334, %v6334
        %v6847 = vpack.c.b16 %v6335, %v6335
        %v6848 = vpack.c.b16 %v6336, %v6336
        %v6849 = vpack.c.b16 %v6337, %v6337
        %v6850 = vpack.c.b16 %v6338, %v6338
        %v6851 = vpack.c.b16 %v6339, %v6339
        %v6852 = vpack.c.b16 %v6340, %v6340
        %v6853 = vpack.c.b16 %v6341, %v6341
        %v6854 = vpack.c.b16 %v6342, %v6342
        %v6855 = vpack.c.b16 %v6343, %v6343
        %v6856 = vpack.c.b16 %v6344, %v6344
        %v6857 = vpack.c.b16 %v6345, %v6345
        %v6858 = vpack.c.b16 %v6346, %v6346
        %v6859 = vpack.c.b16 %v6347, %v6347
        %v6860 = vpack.c.b16 %v6348, %v6348
        %v6861 = vpack.c.b16 %v6349, %v6349
        %v6862 = vpack.c.b16 %v6350, %v6350
        %v6863 = vpack.c.b16 %v6351, %v6351
        %v6864 = vpack.c.b16 %v6352, %v6352
        %v6865 = vpack.c.b16 %v6353, %v6353
        %v6866 = vpack.c.b16 %v6354, %v6354
        %v6867 = vpack.c.b16 %v6355, %v6355
        %v6868 = vpack.c.b16 %v6356, %v6356
        %v6869 = vpack.c.b16 %v6357, %v6357
        %v6870 = vpack.c.b16 %v6358, %v6358
        %v6871 = vpack.c.b16 %v6359, %v6359
        %v6872 = vpack.c.b16 %v6360, %v6360
        %v6873 = vpack.c.b16 %v6361, %v6361
        %v6874 = vpack.c.b16 %v6362, %v6362
        %v6875 = vpack.c.b16 %v6363, %v6363
        %v6876 = vpack.c.b16 %v6364, %v6364
        %v6877 = vpack.c.b16 %v6365, %v6365
        %v6878 = vpack.c.b16 %v6366, %v6366
        %v6879 = vpack.c.b16 %v6367, %v6367
        %v6880 = vpack.c.b16 %v6368, %v6368
        %v6881 = vpack.c.b16 %v6369, %v6369
        %v6882 = vpack.c.b16 %v6370, %v6370
        %v6883 = vpack.c.b16 %v6371, %v6371
        %v6884 = vpack.c.b16 %v6372, %v6372
        %v6885 = vpack.c.b16 %v6373, %v6373
        %v6886 = vpack.c.b16 %v6374, %v6374
        %v6887 = vpack.c.b16 %v6375, %v6375
        %v6888 = vpack.c.b16 %v6376, %v6376
        %v6889 = vpack.c.b16 %v6377, %v6377
        %v6890 = vpack.c.b16 %v6378, %v6378
        %v6891 = vpack.c.b16 %v6379, %v6379
        %v6892 = vpack.c.b16 %v6380, %v6380
        %v6893 = vpack.c.b16 %v6381, %v6381
        %v6894 = vpack.c.b16 %v6382, %v6382
        %v6895 = vpack.c.b16 %v6383, %v6383
        %v6896 = vpack.c.b16 %v6384, %v6384
        %v6897 = vpack.c.b16 %v6385, %v6385
        %v6898 = vpack.c.b16 %v6386, %v6386
        %v6899 = vpack.c.b16 %v6387, %v6387
        %v6900 = vpack.c.b16 %v6388, %v6388
        %v6901 = vpack.c.b16 %v6389, %v6389
        %v6902 = vpack.c.b16 %v6390, %v6390
        %v6903 = vpack.c.b16 %v6391, %v6391
        %v6904 = vpack.c.b16 %v6392, %v6392
        %v6905 = vpack.c.b16 %v6393, %v6393
        %v6906 = vpack.c.b16 %v6394, %v6394
        %v6907 = vpack.c.b16 %v6395, %v6395
        %v6908 = vpack.c.b16 %v6396, %v6396
        %v6909 = vpack.c.b16 %v6397, %v6397
        %v6910 = vpack.c.b16 %v6398, %v6398
        %v6911 = vpack.c.b16 %v6399, %v6399
        %v6912 = vpack.c.b16 %v6400, %v6400
        %v6913 = vpack.c.b16 %v6401, %v6401
        %v6914 = vpack.c.b16 %v6402, %v6402
        %v6915 = vpack.c.b16 %v6403, %v6403
        %v6916 = vpack.c.b16 %v6404, %v6404
        %v6917 = vpack.c.b16 %v6405, %v6405
        %v6918 = vpack.c.b16 %v6406, %v6406
        %v6919 = vpack.c.b16 %v6407, %v6407
        %v6920 = vpack.c.b16 %v6408, %v6408
        %v6921 = vpack.c.b16 %v6409, %v6409
        %v6922 = vpack.c.b16 %v6410, %v6410
        %v6923 = vpack.c.b16 %v6411, %v6411
        %v6924 = vpack.c.b16 %v6412, %v6412
        %v6925 = vpack.c.b16 %v6413, %v6413
        %v6926 = vpack.c.b16 %v6414, %v6414
        %v6927 = vpack.c.b16 %v6415, %v6415
        %v6928 = vpack.c.b16 %v6416, %v6416
        %v6929 = vpack.c.b16 %v6417, %v6417
        %v6930 = vpack.c.b16 %v6418, %v6418
        %v6931 = vpack.c.b16 %v6419, %v6419
        %v6932 = vpack.c.b16 %v6420, %v6420
        %v6933 = vpack.c.b16 %v6421, %v6421
        %v6934 = vpack.c.b16 %v6422, %v6422
        %v6935 = vpack.c.b16 %v6423, %v6423
        %v6936 = vpack.c.b16 %v6424, %v6424
        %v6937 = vpack.c.b16 %v6425, %v6425
        %v6938 = vpack.c.b16 %v6426, %v6426
        %v6939 = vpack.c.b16 %v6427, %v6427
        %v6940 = vpack.c.b16 %v6428, %v6428
        %v6941 = vpack.c.b16 %v6429, %v6429
        %v6942 = vpack.c.b16 %v6430, %v6430
        %v6943 = vpack.c.b16 %v6431, %v6431
        %v6944 = vpack.c.b16 %v6432, %v6432
        %v6945 = vpack.c.b16 %v6433, %v6433
        %v6946 = vpack.c.b16 %v6434, %v6434
        %v6947 = vpack.c.b16 %v6435, %v6435
        %v6948 = vpack.c.b16 %v6436, %v6436
        %v6949 = vpack.c.b16 %v6437, %v6437
        %v6950 = vpack.c.b16 %v6438, %v6438
        %vm7463 = vcmask 257024
        %7464 = vst.msk [vmem:[%s210] sm:$0xf] %vm7463, %v6439
        %7465 = vst.msk [vmem:[%s210 + $0x4] sm:$0xf] %vm7463, %v6440
        %7466 = vst.msk [vmem:[%s210 + $0x8] sm:$0xf] %vm7463, %v6441
        %7467 = vst.msk [vmem:[%s210 + $0xc] sm:$0xf] %vm7463, %v6442
        %7468 = vst.msk [vmem:[%s210 + $0x10] sm:$0xf] %vm7463, %v6443
        %7469 = vst.msk [vmem:[%s210 + $0x14] sm:$0xf] %vm7463, %v6444
        %7470 = vst.msk [vmem:[%s210 + $0x18] sm:$0xf] %vm7463, %v6445
        %7471 = vst.msk [vmem:[%s210 + $0x1c] sm:$0xf] %vm7463, %v6446
        %7472 = vst.msk [vmem:[%s210 + $0x20] sm:$0xf] %vm7463, %v6447
        %7473 = vst.msk [vmem:[%s210 + $0x24] sm:$0xf] %vm7463, %v6448
        %7474 = vst.msk [vmem:[%s210 + $0x28] sm:$0xf] %vm7463, %v6449
        %7475 = vst.msk [vmem:[%s210 + $0x2c] sm:$0xf] %vm7463, %v6450
        %7476 = vst.msk [vmem:[%s210 + $0x30] sm:$0xf] %vm7463, %v6451
        %7477 = vst.msk [vmem:[%s210 + $0x34] sm:$0xf] %vm7463, %v6452
        %7478 = vst.msk [vmem:[%s210 + $0x38] sm:$0xf] %vm7463, %v6453
        %7479 = vst.msk [vmem:[%s210 + $0x3c] sm:$0xf] %vm7463, %v6454
        %7480 = vst.msk [vmem:[%s210 + $0x40] sm:$0xf] %vm7463, %v6455
        %7481 = vst.msk [vmem:[%s210 + $0x44] sm:$0xf] %vm7463, %v6456
        %7482 = vst.msk [vmem:[%s210 + $0x48] sm:$0xf] %vm7463, %v6457
        %7483 = vst.msk [vmem:[%s210 + $0x4c] sm:$0xf] %vm7463, %v6458
        %7484 = vst.msk [vmem:[%s210 + $0x50] sm:$0xf] %vm7463, %v6459
        %7485 = vst.msk [vmem:[%s210 + $0x54] sm:$0xf] %vm7463, %v6460
        %7486 = vst.msk [vmem:[%s210 + $0x58] sm:$0xf] %vm7463, %v6461
        %7487 = vst.msk [vmem:[%s210 + $0x5c] sm:$0xf] %vm7463, %v6462
        %7488 = vst.msk [vmem:[%s210 + $0x60] sm:$0xf] %vm7463, %v6463
        %7489 = vst.msk [vmem:[%s210 + $0x64] sm:$0xf] %vm7463, %v6464
        %7490 = vst.msk [vmem:[%s210 + $0x68] sm:$0xf] %vm7463, %v6465
        %7491 = vst.msk [vmem:[%s210 + $0x6c] sm:$0xf] %vm7463, %v6466
        %7492 = vst.msk [vmem:[%s210 + $0x70] sm:$0xf] %vm7463, %v6467
        %7493 = vst.msk [vmem:[%s210 + $0x74] sm:$0xf] %vm7463, %v6468
        %7494 = vst.msk [vmem:[%s210 + $0x78] sm:$0xf] %vm7463, %v6469
        %7495 = vst.msk [vmem:[%s210 + $0x7c] sm:$0xf] %vm7463, %v6470
        %7496 = vst.msk [vmem:[%s210 + $0x80] sm:$0xf] %vm7463, %v6471
        %7497 = vst.msk [vmem:[%s210 + $0x84] sm:$0xf] %vm7463, %v6472
        %7498 = vst.msk [vmem:[%s210 + $0x88] sm:$0xf] %vm7463, %v6473
        %7499 = vst.msk [vmem:[%s210 + $0x8c] sm:$0xf] %vm7463, %v6474
        %7500 = vst.msk [vmem:[%s210 + $0x90] sm:$0xf] %vm7463, %v6475
        %7501 = vst.msk [vmem:[%s210 + $0x94] sm:$0xf] %vm7463, %v6476
        %7502 = vst.msk [vmem:[%s210 + $0x98] sm:$0xf] %vm7463, %v6477
        %7503 = vst.msk [vmem:[%s210 + $0x9c] sm:$0xf] %vm7463, %v6478
        %7504 = vst.msk [vmem:[%s210 + $0xa0] sm:$0xf] %vm7463, %v6479
        %7505 = vst.msk [vmem:[%s210 + $0xa4] sm:$0xf] %vm7463, %v6480
        %7506 = vst.msk [vmem:[%s210 + $0xa8] sm:$0xf] %vm7463, %v6481
        %7507 = vst.msk [vmem:[%s210 + $0xac] sm:$0xf] %vm7463, %v6482
        %7508 = vst.msk [vmem:[%s210 + $0xb0] sm:$0xf] %vm7463, %v6483
        %7509 = vst.msk [vmem:[%s210 + $0xb4] sm:$0xf] %vm7463, %v6484
        %7510 = vst.msk [vmem:[%s210 + $0xb8] sm:$0xf] %vm7463, %v6485
        %7511 = vst.msk [vmem:[%s210 + $0xbc] sm:$0xf] %vm7463, %v6486
        %7512 = vst.msk [vmem:[%s210 + $0xc0] sm:$0xf] %vm7463, %v6487
        %7513 = vst.msk [vmem:[%s210 + $0xc4] sm:$0xf] %vm7463, %v6488
        %7514 = vst.msk [vmem:[%s210 + $0xc8] sm:$0xf] %vm7463, %v6489
        %7515 = vst.msk [vmem:[%s210 + $0xcc] sm:$0xf] %vm7463, %v6490
        %7516 = vst.msk [vmem:[%s210 + $0xd0] sm:$0xf] %vm7463, %v6491
        %7517 = vst.msk [vmem:[%s210 + $0xd4] sm:$0xf] %vm7463, %v6492
        %7518 = vst.msk [vmem:[%s210 + $0xd8] sm:$0xf] %vm7463, %v6493
        %7519 = vst.msk [vmem:[%s210 + $0xdc] sm:$0xf] %vm7463, %v6494
        %7520 = vst.msk [vmem:[%s210 + $0xe0] sm:$0xf] %vm7463, %v6495
        %7521 = vst.msk [vmem:[%s210 + $0xe4] sm:$0xf] %vm7463, %v6496
        %7522 = vst.msk [vmem:[%s210 + $0xe8] sm:$0xf] %vm7463, %v6497
        %7523 = vst.msk [vmem:[%s210 + $0xec] sm:$0xf] %vm7463, %v6498
        %7524 = vst.msk [vmem:[%s210 + $0xf0] sm:$0xf] %vm7463, %v6499
        %7525 = vst.msk [vmem:[%s210 + $0xf4] sm:$0xf] %vm7463, %v6500
        %7526 = vst.msk [vmem:[%s210 + $0xf8] sm:$0xf] %vm7463, %v6501
        %7527 = vst.msk [vmem:[%s210 + $0xfc] sm:$0xf] %vm7463, %v6502
        %7528 = vst.msk [vmem:[%s210 + $0x100] sm:$0xf] %vm7463, %v6503
        %7529 = vst.msk [vmem:[%s210 + $0x104] sm:$0xf] %vm7463, %v6504
        %7530 = vst.msk [vmem:[%s210 + $0x108] sm:$0xf] %vm7463, %v6505
        %7531 = vst.msk [vmem:[%s210 + $0x10c] sm:$0xf] %vm7463, %v6506
        %7532 = vst.msk [vmem:[%s210 + $0x110] sm:$0xf] %vm7463, %v6507
        %7533 = vst.msk [vmem:[%s210 + $0x114] sm:$0xf] %vm7463, %v6508
        %7534 = vst.msk [vmem:[%s210 + $0x118] sm:$0xf] %vm7463, %v6509
        %7535 = vst.msk [vmem:[%s210 + $0x11c] sm:$0xf] %vm7463, %v6510
        %7536 = vst.msk [vmem:[%s210 + $0x120] sm:$0xf] %vm7463, %v6511
        %7537 = vst.msk [vmem:[%s210 + $0x124] sm:$0xf] %vm7463, %v6512
        %7538 = vst.msk [vmem:[%s210 + $0x128] sm:$0xf] %vm7463, %v6513
        %7539 = vst.msk [vmem:[%s210 + $0x12c] sm:$0xf] %vm7463, %v6514
        %7540 = vst.msk [vmem:[%s210 + $0x130] sm:$0xf] %vm7463, %v6515
        %7541 = vst.msk [vmem:[%s210 + $0x134] sm:$0xf] %vm7463, %v6516
        %7542 = vst.msk [vmem:[%s210 + $0x138] sm:$0xf] %vm7463, %v6517
        %7543 = vst.msk [vmem:[%s210 + $0x13c] sm:$0xf] %vm7463, %v6518
        %7544 = vst.msk [vmem:[%s210 + $0x140] sm:$0xf] %vm7463, %v6519
        %7545 = vst.msk [vmem:[%s210 + $0x144] sm:$0xf] %vm7463, %v6520
        %7546 = vst.msk [vmem:[%s210 + $0x148] sm:$0xf] %vm7463, %v6521
        %7547 = vst.msk [vmem:[%s210 + $0x14c] sm:$0xf] %vm7463, %v6522
        %7548 = vst.msk [vmem:[%s210 + $0x150] sm:$0xf] %vm7463, %v6523
        %7549 = vst.msk [vmem:[%s210 + $0x154] sm:$0xf] %vm7463, %v6524
        %7550 = vst.msk [vmem:[%s210 + $0x158] sm:$0xf] %vm7463, %v6525
        %7551 = vst.msk [vmem:[%s210 + $0x15c] sm:$0xf] %vm7463, %v6526
        %7552 = vst.msk [vmem:[%s210 + $0x160] sm:$0xf] %vm7463, %v6527
        %7553 = vst.msk [vmem:[%s210 + $0x164] sm:$0xf] %vm7463, %v6528
        %7554 = vst.msk [vmem:[%s210 + $0x168] sm:$0xf] %vm7463, %v6529
        %7555 = vst.msk [vmem:[%s210 + $0x16c] sm:$0xf] %vm7463, %v6530
        %7556 = vst.msk [vmem:[%s210 + $0x170] sm:$0xf] %vm7463, %v6531
        %7557 = vst.msk [vmem:[%s210 + $0x174] sm:$0xf] %vm7463, %v6532
        %7558 = vst.msk [vmem:[%s210 + $0x178] sm:$0xf] %vm7463, %v6533
        %7559 = vst.msk [vmem:[%s210 + $0x17c] sm:$0xf] %vm7463, %v6534
        %7560 = vst.msk [vmem:[%s210 + $0x180] sm:$0xf] %vm7463, %v6535
        %7561 = vst.msk [vmem:[%s210 + $0x184] sm:$0xf] %vm7463, %v6536
        %7562 = vst.msk [vmem:[%s210 + $0x188] sm:$0xf] %vm7463, %v6537
        %7563 = vst.msk [vmem:[%s210 + $0x18c] sm:$0xf] %vm7463, %v6538
        %7564 = vst.msk [vmem:[%s210 + $0x190] sm:$0xf] %vm7463, %v6539
        %7565 = vst.msk [vmem:[%s210 + $0x194] sm:$0xf] %vm7463, %v6540
        %7566 = vst.msk [vmem:[%s210 + $0x198] sm:$0xf] %vm7463, %v6541
        %7567 = vst.msk [vmem:[%s210 + $0x19c] sm:$0xf] %vm7463, %v6542
        %7568 = vst.msk [vmem:[%s210 + $0x1a0] sm:$0xf] %vm7463, %v6543
        %7569 = vst.msk [vmem:[%s210 + $0x1a4] sm:$0xf] %vm7463, %v6544
        %7570 = vst.msk [vmem:[%s210 + $0x1a8] sm:$0xf] %vm7463, %v6545
        %7571 = vst.msk [vmem:[%s210 + $0x1ac] sm:$0xf] %vm7463, %v6546
        %7572 = vst.msk [vmem:[%s210 + $0x1b0] sm:$0xf] %vm7463, %v6547
        %7573 = vst.msk [vmem:[%s210 + $0x1b4] sm:$0xf] %vm7463, %v6548
        %7574 = vst.msk [vmem:[%s210 + $0x1b8] sm:$0xf] %vm7463, %v6549
        %7575 = vst.msk [vmem:[%s210 + $0x1bc] sm:$0xf] %vm7463, %v6550
        %7576 = vst.msk [vmem:[%s210 + $0x1c0] sm:$0xf] %vm7463, %v6551
        %7577 = vst.msk [vmem:[%s210 + $0x1c4] sm:$0xf] %vm7463, %v6552
        %7578 = vst.msk [vmem:[%s210 + $0x1c8] sm:$0xf] %vm7463, %v6553
        %7579 = vst.msk [vmem:[%s210 + $0x1cc] sm:$0xf] %vm7463, %v6554
        %7580 = vst.msk [vmem:[%s210 + $0x1d0] sm:$0xf] %vm7463, %v6555
        %7581 = vst.msk [vmem:[%s210 + $0x1d4] sm:$0xf] %vm7463, %v6556
        %7582 = vst.msk [vmem:[%s210 + $0x1d8] sm:$0xf] %vm7463, %v6557
        %7583 = vst.msk [vmem:[%s210 + $0x1dc] sm:$0xf] %vm7463, %v6558
        %7584 = vst.msk [vmem:[%s210 + $0x1e0] sm:$0xf] %vm7463, %v6559
        %7585 = vst.msk [vmem:[%s210 + $0x1e4] sm:$0xf] %vm7463, %v6560
        %7586 = vst.msk [vmem:[%s210 + $0x1e8] sm:$0xf] %vm7463, %v6561
        %7587 = vst.msk [vmem:[%s210 + $0x1ec] sm:$0xf] %vm7463, %v6562
        %7588 = vst.msk [vmem:[%s210 + $0x1f0] sm:$0xf] %vm7463, %v6563
        %7589 = vst.msk [vmem:[%s210 + $0x1f4] sm:$0xf] %vm7463, %v6564
        %7590 = vst.msk [vmem:[%s210 + $0x1f8] sm:$0xf] %vm7463, %v6565
        %7591 = vst.msk [vmem:[%s210 + $0x1fc] sm:$0xf] %vm7463, %v6566
        %7592 = vst.msk [vmem:[%s210 + $0x200] sm:$0xf] %vm7463, %v6567
        %7593 = vst.msk [vmem:[%s210 + $0x204] sm:$0xf] %vm7463, %v6568
        %7594 = vst.msk [vmem:[%s210 + $0x208] sm:$0xf] %vm7463, %v6569
        %7595 = vst.msk [vmem:[%s210 + $0x20c] sm:$0xf] %vm7463, %v6570
        %7596 = vst.msk [vmem:[%s210 + $0x210] sm:$0xf] %vm7463, %v6571
        %7597 = vst.msk [vmem:[%s210 + $0x214] sm:$0xf] %vm7463, %v6572
        %7598 = vst.msk [vmem:[%s210 + $0x218] sm:$0xf] %vm7463, %v6573
        %7599 = vst.msk [vmem:[%s210 + $0x21c] sm:$0xf] %vm7463, %v6574
        %7600 = vst.msk [vmem:[%s210 + $0x220] sm:$0xf] %vm7463, %v6575
        %7601 = vst.msk [vmem:[%s210 + $0x224] sm:$0xf] %vm7463, %v6576
        %7602 = vst.msk [vmem:[%s210 + $0x228] sm:$0xf] %vm7463, %v6577
        %7603 = vst.msk [vmem:[%s210 + $0x22c] sm:$0xf] %vm7463, %v6578
        %7604 = vst.msk [vmem:[%s210 + $0x230] sm:$0xf] %vm7463, %v6579
        %7605 = vst.msk [vmem:[%s210 + $0x234] sm:$0xf] %vm7463, %v6580
        %7606 = vst.msk [vmem:[%s210 + $0x238] sm:$0xf] %vm7463, %v6581
        %7607 = vst.msk [vmem:[%s210 + $0x23c] sm:$0xf] %vm7463, %v6582
        %7608 = vst.msk [vmem:[%s210 + $0x240] sm:$0xf] %vm7463, %v6583
        %7609 = vst.msk [vmem:[%s210 + $0x244] sm:$0xf] %vm7463, %v6584
        %7610 = vst.msk [vmem:[%s210 + $0x248] sm:$0xf] %vm7463, %v6585
        %7611 = vst.msk [vmem:[%s210 + $0x24c] sm:$0xf] %vm7463, %v6586
        %7612 = vst.msk [vmem:[%s210 + $0x250] sm:$0xf] %vm7463, %v6587
        %7613 = vst.msk [vmem:[%s210 + $0x254] sm:$0xf] %vm7463, %v6588
        %7614 = vst.msk [vmem:[%s210 + $0x258] sm:$0xf] %vm7463, %v6589
        %7615 = vst.msk [vmem:[%s210 + $0x25c] sm:$0xf] %vm7463, %v6590
        %7616 = vst.msk [vmem:[%s210 + $0x260] sm:$0xf] %vm7463, %v6591
        %7617 = vst.msk [vmem:[%s210 + $0x264] sm:$0xf] %vm7463, %v6592
        %7618 = vst.msk [vmem:[%s210 + $0x268] sm:$0xf] %vm7463, %v6593
        %7619 = vst.msk [vmem:[%s210 + $0x26c] sm:$0xf] %vm7463, %v6594
        %7620 = vst.msk [vmem:[%s210 + $0x270] sm:$0xf] %vm7463, %v6595
        %7621 = vst.msk [vmem:[%s210 + $0x274] sm:$0xf] %vm7463, %v6596
        %7622 = vst.msk [vmem:[%s210 + $0x278] sm:$0xf] %vm7463, %v6597
        %7623 = vst.msk [vmem:[%s210 + $0x27c] sm:$0xf] %vm7463, %v6598
        %7624 = vst.msk [vmem:[%s210 + $0x280] sm:$0xf] %vm7463, %v6599
        %7625 = vst.msk [vmem:[%s210 + $0x284] sm:$0xf] %vm7463, %v6600
        %7626 = vst.msk [vmem:[%s210 + $0x288] sm:$0xf] %vm7463, %v6601
        %7627 = vst.msk [vmem:[%s210 + $0x28c] sm:$0xf] %vm7463, %v6602
        %7628 = vst.msk [vmem:[%s210 + $0x290] sm:$0xf] %vm7463, %v6603
        %7629 = vst.msk [vmem:[%s210 + $0x294] sm:$0xf] %vm7463, %v6604
        %7630 = vst.msk [vmem:[%s210 + $0x298] sm:$0xf] %vm7463, %v6605
        %7631 = vst.msk [vmem:[%s210 + $0x29c] sm:$0xf] %vm7463, %v6606
        %7632 = vst.msk [vmem:[%s210 + $0x2a0] sm:$0xf] %vm7463, %v6607
        %7633 = vst.msk [vmem:[%s210 + $0x2a4] sm:$0xf] %vm7463, %v6608
        %7634 = vst.msk [vmem:[%s210 + $0x2a8] sm:$0xf] %vm7463, %v6609
        %7635 = vst.msk [vmem:[%s210 + $0x2ac] sm:$0xf] %vm7463, %v6610
        %7636 = vst.msk [vmem:[%s210 + $0x2b0] sm:$0xf] %vm7463, %v6611
        %7637 = vst.msk [vmem:[%s210 + $0x2b4] sm:$0xf] %vm7463, %v6612
        %7638 = vst.msk [vmem:[%s210 + $0x2b8] sm:$0xf] %vm7463, %v6613
        %7639 = vst.msk [vmem:[%s210 + $0x2bc] sm:$0xf] %vm7463, %v6614
        %7640 = vst.msk [vmem:[%s210 + $0x2c0] sm:$0xf] %vm7463, %v6615
        %7641 = vst.msk [vmem:[%s210 + $0x2c4] sm:$0xf] %vm7463, %v6616
        %7642 = vst.msk [vmem:[%s210 + $0x2c8] sm:$0xf] %vm7463, %v6617
        %7643 = vst.msk [vmem:[%s210 + $0x2cc] sm:$0xf] %vm7463, %v6618
        %7644 = vst.msk [vmem:[%s210 + $0x2d0] sm:$0xf] %vm7463, %v6619
        %7645 = vst.msk [vmem:[%s210 + $0x2d4] sm:$0xf] %vm7463, %v6620
        %7646 = vst.msk [vmem:[%s210 + $0x2d8] sm:$0xf] %vm7463, %v6621
        %7647 = vst.msk [vmem:[%s210 + $0x2dc] sm:$0xf] %vm7463, %v6622
        %7648 = vst.msk [vmem:[%s210 + $0x2e0] sm:$0xf] %vm7463, %v6623
        %7649 = vst.msk [vmem:[%s210 + $0x2e4] sm:$0xf] %vm7463, %v6624
        %7650 = vst.msk [vmem:[%s210 + $0x2e8] sm:$0xf] %vm7463, %v6625
        %7651 = vst.msk [vmem:[%s210 + $0x2ec] sm:$0xf] %vm7463, %v6626
        %7652 = vst.msk [vmem:[%s210 + $0x2f0] sm:$0xf] %vm7463, %v6627
        %7653 = vst.msk [vmem:[%s210 + $0x2f4] sm:$0xf] %vm7463, %v6628
        %7654 = vst.msk [vmem:[%s210 + $0x2f8] sm:$0xf] %vm7463, %v6629
        %7655 = vst.msk [vmem:[%s210 + $0x2fc] sm:$0xf] %vm7463, %v6630
        %7656 = vst.msk [vmem:[%s210 + $0x300] sm:$0xf] %vm7463, %v6631
        %7657 = vst.msk [vmem:[%s210 + $0x304] sm:$0xf] %vm7463, %v6632
        %7658 = vst.msk [vmem:[%s210 + $0x308] sm:$0xf] %vm7463, %v6633
        %7659 = vst.msk [vmem:[%s210 + $0x30c] sm:$0xf] %vm7463, %v6634
        %7660 = vst.msk [vmem:[%s210 + $0x310] sm:$0xf] %vm7463, %v6635
        %7661 = vst.msk [vmem:[%s210 + $0x314] sm:$0xf] %vm7463, %v6636
        %7662 = vst.msk [vmem:[%s210 + $0x318] sm:$0xf] %vm7463, %v6637
        %7663 = vst.msk [vmem:[%s210 + $0x31c] sm:$0xf] %vm7463, %v6638
        %7664 = vst.msk [vmem:[%s210 + $0x320] sm:$0xf] %vm7463, %v6639
        %7665 = vst.msk [vmem:[%s210 + $0x324] sm:$0xf] %vm7463, %v6640
        %7666 = vst.msk [vmem:[%s210 + $0x328] sm:$0xf] %vm7463, %v6641
        %7667 = vst.msk [vmem:[%s210 + $0x32c] sm:$0xf] %vm7463, %v6642
        %7668 = vst.msk [vmem:[%s210 + $0x330] sm:$0xf] %vm7463, %v6643
        %7669 = vst.msk [vmem:[%s210 + $0x334] sm:$0xf] %vm7463, %v6644
        %7670 = vst.msk [vmem:[%s210 + $0x338] sm:$0xf] %vm7463, %v6645
        %7671 = vst.msk [vmem:[%s210 + $0x33c] sm:$0xf] %vm7463, %v6646
        %7672 = vst.msk [vmem:[%s210 + $0x340] sm:$0xf] %vm7463, %v6647
        %7673 = vst.msk [vmem:[%s210 + $0x344] sm:$0xf] %vm7463, %v6648
        %7674 = vst.msk [vmem:[%s210 + $0x348] sm:$0xf] %vm7463, %v6649
        %7675 = vst.msk [vmem:[%s210 + $0x34c] sm:$0xf] %vm7463, %v6650
        %7676 = vst.msk [vmem:[%s210 + $0x350] sm:$0xf] %vm7463, %v6651
        %7677 = vst.msk [vmem:[%s210 + $0x354] sm:$0xf] %vm7463, %v6652
        %7678 = vst.msk [vmem:[%s210 + $0x358] sm:$0xf] %vm7463, %v6653
        %7679 = vst.msk [vmem:[%s210 + $0x35c] sm:$0xf] %vm7463, %v6654
        %7680 = vst.msk [vmem:[%s210 + $0x360] sm:$0xf] %vm7463, %v6655
        %7681 = vst.msk [vmem:[%s210 + $0x364] sm:$0xf] %vm7463, %v6656
        %7682 = vst.msk [vmem:[%s210 + $0x368] sm:$0xf] %vm7463, %v6657
        %7683 = vst.msk [vmem:[%s210 + $0x36c] sm:$0xf] %vm7463, %v6658
        %7684 = vst.msk [vmem:[%s210 + $0x370] sm:$0xf] %vm7463, %v6659
        %7685 = vst.msk [vmem:[%s210 + $0x374] sm:$0xf] %vm7463, %v6660
        %7686 = vst.msk [vmem:[%s210 + $0x378] sm:$0xf] %vm7463, %v6661
        %7687 = vst.msk [vmem:[%s210 + $0x37c] sm:$0xf] %vm7463, %v6662
        %7688 = vst.msk [vmem:[%s210 + $0x380] sm:$0xf] %vm7463, %v6663
        %7689 = vst.msk [vmem:[%s210 + $0x384] sm:$0xf] %vm7463, %v6664
        %7690 = vst.msk [vmem:[%s210 + $0x388] sm:$0xf] %vm7463, %v6665
        %7691 = vst.msk [vmem:[%s210 + $0x38c] sm:$0xf] %vm7463, %v6666
        %7692 = vst.msk [vmem:[%s210 + $0x390] sm:$0xf] %vm7463, %v6667
        %7693 = vst.msk [vmem:[%s210 + $0x394] sm:$0xf] %vm7463, %v6668
        %7694 = vst.msk [vmem:[%s210 + $0x398] sm:$0xf] %vm7463, %v6669
        %7695 = vst.msk [vmem:[%s210 + $0x39c] sm:$0xf] %vm7463, %v6670
        %7696 = vst.msk [vmem:[%s210 + $0x3a0] sm:$0xf] %vm7463, %v6671
        %7697 = vst.msk [vmem:[%s210 + $0x3a4] sm:$0xf] %vm7463, %v6672
        %7698 = vst.msk [vmem:[%s210 + $0x3a8] sm:$0xf] %vm7463, %v6673
        %7699 = vst.msk [vmem:[%s210 + $0x3ac] sm:$0xf] %vm7463, %v6674
        %7700 = vst.msk [vmem:[%s210 + $0x3b0] sm:$0xf] %vm7463, %v6675
        %7701 = vst.msk [vmem:[%s210 + $0x3b4] sm:$0xf] %vm7463, %v6676
        %7702 = vst.msk [vmem:[%s210 + $0x3b8] sm:$0xf] %vm7463, %v6677
        %7703 = vst.msk [vmem:[%s210 + $0x3bc] sm:$0xf] %vm7463, %v6678
        %7704 = vst.msk [vmem:[%s210 + $0x3c0] sm:$0xf] %vm7463, %v6679
        %7705 = vst.msk [vmem:[%s210 + $0x3c4] sm:$0xf] %vm7463, %v6680
        %7706 = vst.msk [vmem:[%s210 + $0x3c8] sm:$0xf] %vm7463, %v6681
        %7707 = vst.msk [vmem:[%s210 + $0x3cc] sm:$0xf] %vm7463, %v6682
        %7708 = vst.msk [vmem:[%s210 + $0x3d0] sm:$0xf] %vm7463, %v6683
        %7709 = vst.msk [vmem:[%s210 + $0x3d4] sm:$0xf] %vm7463, %v6684
        %7710 = vst.msk [vmem:[%s210 + $0x3d8] sm:$0xf] %vm7463, %v6685
        %7711 = vst.msk [vmem:[%s210 + $0x3dc] sm:$0xf] %vm7463, %v6686
        %7712 = vst.msk [vmem:[%s210 + $0x3e0] sm:$0xf] %vm7463, %v6687
        %7713 = vst.msk [vmem:[%s210 + $0x3e4] sm:$0xf] %vm7463, %v6688
        %7714 = vst.msk [vmem:[%s210 + $0x3e8] sm:$0xf] %vm7463, %v6689
        %7715 = vst.msk [vmem:[%s210 + $0x3ec] sm:$0xf] %vm7463, %v6690
        %7716 = vst.msk [vmem:[%s210 + $0x3f0] sm:$0xf] %vm7463, %v6691
        %7717 = vst.msk [vmem:[%s210 + $0x3f4] sm:$0xf] %vm7463, %v6692
        %7718 = vst.msk [vmem:[%s210 + $0x3f8] sm:$0xf] %vm7463, %v6693
        %7719 = vst.msk [vmem:[%s210 + $0x3fc] sm:$0xf] %vm7463, %v6694
        %7720 = vst.msk [vmem:[%s210 + $0x400] sm:$0xf] %vm7463, %v6695
        %7721 = vst.msk [vmem:[%s210 + $0x404] sm:$0xf] %vm7463, %v6696
        %7722 = vst.msk [vmem:[%s210 + $0x408] sm:$0xf] %vm7463, %v6697
        %7723 = vst.msk [vmem:[%s210 + $0x40c] sm:$0xf] %vm7463, %v6698
        %7724 = vst.msk [vmem:[%s210 + $0x410] sm:$0xf] %vm7463, %v6699
        %7725 = vst.msk [vmem:[%s210 + $0x414] sm:$0xf] %vm7463, %v6700
        %7726 = vst.msk [vmem:[%s210 + $0x418] sm:$0xf] %vm7463, %v6701
        %7727 = vst.msk [vmem:[%s210 + $0x41c] sm:$0xf] %vm7463, %v6702
        %7728 = vst.msk [vmem:[%s210 + $0x420] sm:$0xf] %vm7463, %v6703
        %7729 = vst.msk [vmem:[%s210 + $0x424] sm:$0xf] %vm7463, %v6704
        %7730 = vst.msk [vmem:[%s210 + $0x428] sm:$0xf] %vm7463, %v6705
        %7731 = vst.msk [vmem:[%s210 + $0x42c] sm:$0xf] %vm7463, %v6706
        %7732 = vst.msk [vmem:[%s210 + $0x430] sm:$0xf] %vm7463, %v6707
        %7733 = vst.msk [vmem:[%s210 + $0x434] sm:$0xf] %vm7463, %v6708
        %7734 = vst.msk [vmem:[%s210 + $0x438] sm:$0xf] %vm7463, %v6709
        %7735 = vst.msk [vmem:[%s210 + $0x43c] sm:$0xf] %vm7463, %v6710
        %7736 = vst.msk [vmem:[%s210 + $0x440] sm:$0xf] %vm7463, %v6711
        %7737 = vst.msk [vmem:[%s210 + $0x444] sm:$0xf] %vm7463, %v6712
        %7738 = vst.msk [vmem:[%s210 + $0x448] sm:$0xf] %vm7463, %v6713
        %7739 = vst.msk [vmem:[%s210 + $0x44c] sm:$0xf] %vm7463, %v6714
        %7740 = vst.msk [vmem:[%s210 + $0x450] sm:$0xf] %vm7463, %v6715
        %7741 = vst.msk [vmem:[%s210 + $0x454] sm:$0xf] %vm7463, %v6716
        %7742 = vst.msk [vmem:[%s210 + $0x458] sm:$0xf] %vm7463, %v6717
        %7743 = vst.msk [vmem:[%s210 + $0x45c] sm:$0xf] %vm7463, %v6718
        %7744 = vst.msk [vmem:[%s210 + $0x460] sm:$0xf] %vm7463, %v6719
        %7745 = vst.msk [vmem:[%s210 + $0x464] sm:$0xf] %vm7463, %v6720
        %7746 = vst.msk [vmem:[%s210 + $0x468] sm:$0xf] %vm7463, %v6721
        %7747 = vst.msk [vmem:[%s210 + $0x46c] sm:$0xf] %vm7463, %v6722
        %7748 = vst.msk [vmem:[%s210 + $0x470] sm:$0xf] %vm7463, %v6723
        %7749 = vst.msk [vmem:[%s210 + $0x474] sm:$0xf] %vm7463, %v6724
        %7750 = vst.msk [vmem:[%s210 + $0x478] sm:$0xf] %vm7463, %v6725
        %7751 = vst.msk [vmem:[%s210 + $0x47c] sm:$0xf] %vm7463, %v6726
        %7752 = vst.msk [vmem:[%s210 + $0x480] sm:$0xf] %vm7463, %v6727
        %7753 = vst.msk [vmem:[%s210 + $0x484] sm:$0xf] %vm7463, %v6728
        %7754 = vst.msk [vmem:[%s210 + $0x488] sm:$0xf] %vm7463, %v6729
        %7755 = vst.msk [vmem:[%s210 + $0x48c] sm:$0xf] %vm7463, %v6730
        %7756 = vst.msk [vmem:[%s210 + $0x490] sm:$0xf] %vm7463, %v6731
        %7757 = vst.msk [vmem:[%s210 + $0x494] sm:$0xf] %vm7463, %v6732
        %7758 = vst.msk [vmem:[%s210 + $0x498] sm:$0xf] %vm7463, %v6733
        %7759 = vst.msk [vmem:[%s210 + $0x49c] sm:$0xf] %vm7463, %v6734
        %7760 = vst.msk [vmem:[%s210 + $0x4a0] sm:$0xf] %vm7463, %v6735
        %7761 = vst.msk [vmem:[%s210 + $0x4a4] sm:$0xf] %vm7463, %v6736
        %7762 = vst.msk [vmem:[%s210 + $0x4a8] sm:$0xf] %vm7463, %v6737
        %7763 = vst.msk [vmem:[%s210 + $0x4ac] sm:$0xf] %vm7463, %v6738
        %7764 = vst.msk [vmem:[%s210 + $0x4b0] sm:$0xf] %vm7463, %v6739
        %7765 = vst.msk [vmem:[%s210 + $0x4b4] sm:$0xf] %vm7463, %v6740
        %7766 = vst.msk [vmem:[%s210 + $0x4b8] sm:$0xf] %vm7463, %v6741
        %7767 = vst.msk [vmem:[%s210 + $0x4bc] sm:$0xf] %vm7463, %v6742
        %7768 = vst.msk [vmem:[%s210 + $0x4c0] sm:$0xf] %vm7463, %v6743
        %7769 = vst.msk [vmem:[%s210 + $0x4c4] sm:$0xf] %vm7463, %v6744
        %7770 = vst.msk [vmem:[%s210 + $0x4c8] sm:$0xf] %vm7463, %v6745
        %7771 = vst.msk [vmem:[%s210 + $0x4cc] sm:$0xf] %vm7463, %v6746
        %7772 = vst.msk [vmem:[%s210 + $0x4d0] sm:$0xf] %vm7463, %v6747
        %7773 = vst.msk [vmem:[%s210 + $0x4d4] sm:$0xf] %vm7463, %v6748
        %7774 = vst.msk [vmem:[%s210 + $0x4d8] sm:$0xf] %vm7463, %v6749
        %7775 = vst.msk [vmem:[%s210 + $0x4dc] sm:$0xf] %vm7463, %v6750
        %7776 = vst.msk [vmem:[%s210 + $0x4e0] sm:$0xf] %vm7463, %v6751
        %7777 = vst.msk [vmem:[%s210 + $0x4e4] sm:$0xf] %vm7463, %v6752
        %7778 = vst.msk [vmem:[%s210 + $0x4e8] sm:$0xf] %vm7463, %v6753
        %7779 = vst.msk [vmem:[%s210 + $0x4ec] sm:$0xf] %vm7463, %v6754
        %7780 = vst.msk [vmem:[%s210 + $0x4f0] sm:$0xf] %vm7463, %v6755
        %7781 = vst.msk [vmem:[%s210 + $0x4f4] sm:$0xf] %vm7463, %v6756
        %7782 = vst.msk [vmem:[%s210 + $0x4f8] sm:$0xf] %vm7463, %v6757
        %7783 = vst.msk [vmem:[%s210 + $0x4fc] sm:$0xf] %vm7463, %v6758
        %7784 = vst.msk [vmem:[%s210 + $0x500] sm:$0xf] %vm7463, %v6759
        %7785 = vst.msk [vmem:[%s210 + $0x504] sm:$0xf] %vm7463, %v6760
        %7786 = vst.msk [vmem:[%s210 + $0x508] sm:$0xf] %vm7463, %v6761
        %7787 = vst.msk [vmem:[%s210 + $0x50c] sm:$0xf] %vm7463, %v6762
        %7788 = vst.msk [vmem:[%s210 + $0x510] sm:$0xf] %vm7463, %v6763
        %7789 = vst.msk [vmem:[%s210 + $0x514] sm:$0xf] %vm7463, %v6764
        %7790 = vst.msk [vmem:[%s210 + $0x518] sm:$0xf] %vm7463, %v6765
        %7791 = vst.msk [vmem:[%s210 + $0x51c] sm:$0xf] %vm7463, %v6766
        %7792 = vst.msk [vmem:[%s210 + $0x520] sm:$0xf] %vm7463, %v6767
        %7793 = vst.msk [vmem:[%s210 + $0x524] sm:$0xf] %vm7463, %v6768
        %7794 = vst.msk [vmem:[%s210 + $0x528] sm:$0xf] %vm7463, %v6769
        %7795 = vst.msk [vmem:[%s210 + $0x52c] sm:$0xf] %vm7463, %v6770
        %7796 = vst.msk [vmem:[%s210 + $0x530] sm:$0xf] %vm7463, %v6771
        %7797 = vst.msk [vmem:[%s210 + $0x534] sm:$0xf] %vm7463, %v6772
        %7798 = vst.msk [vmem:[%s210 + $0x538] sm:$0xf] %vm7463, %v6773
        %7799 = vst.msk [vmem:[%s210 + $0x53c] sm:$0xf] %vm7463, %v6774
        %7800 = vst.msk [vmem:[%s210 + $0x540] sm:$0xf] %vm7463, %v6775
        %7801 = vst.msk [vmem:[%s210 + $0x544] sm:$0xf] %vm7463, %v6776
        %7802 = vst.msk [vmem:[%s210 + $0x548] sm:$0xf] %vm7463, %v6777
        %7803 = vst.msk [vmem:[%s210 + $0x54c] sm:$0xf] %vm7463, %v6778
        %7804 = vst.msk [vmem:[%s210 + $0x550] sm:$0xf] %vm7463, %v6779
        %7805 = vst.msk [vmem:[%s210 + $0x554] sm:$0xf] %vm7463, %v6780
        %7806 = vst.msk [vmem:[%s210 + $0x558] sm:$0xf] %vm7463, %v6781
        %7807 = vst.msk [vmem:[%s210 + $0x55c] sm:$0xf] %vm7463, %v6782
        %7808 = vst.msk [vmem:[%s210 + $0x560] sm:$0xf] %vm7463, %v6783
        %7809 = vst.msk [vmem:[%s210 + $0x564] sm:$0xf] %vm7463, %v6784
        %7810 = vst.msk [vmem:[%s210 + $0x568] sm:$0xf] %vm7463, %v6785
        %7811 = vst.msk [vmem:[%s210 + $0x56c] sm:$0xf] %vm7463, %v6786
        %7812 = vst.msk [vmem:[%s210 + $0x570] sm:$0xf] %vm7463, %v6787
        %7813 = vst.msk [vmem:[%s210 + $0x574] sm:$0xf] %vm7463, %v6788
        %7814 = vst.msk [vmem:[%s210 + $0x578] sm:$0xf] %vm7463, %v6789
        %7815 = vst.msk [vmem:[%s210 + $0x57c] sm:$0xf] %vm7463, %v6790
        %7816 = vst.msk [vmem:[%s210 + $0x580] sm:$0xf] %vm7463, %v6791
        %7817 = vst.msk [vmem:[%s210 + $0x584] sm:$0xf] %vm7463, %v6792
        %7818 = vst.msk [vmem:[%s210 + $0x588] sm:$0xf] %vm7463, %v6793
        %7819 = vst.msk [vmem:[%s210 + $0x58c] sm:$0xf] %vm7463, %v6794
        %7820 = vst.msk [vmem:[%s210 + $0x590] sm:$0xf] %vm7463, %v6795
        %7821 = vst.msk [vmem:[%s210 + $0x594] sm:$0xf] %vm7463, %v6796
        %7822 = vst.msk [vmem:[%s210 + $0x598] sm:$0xf] %vm7463, %v6797
        %7823 = vst.msk [vmem:[%s210 + $0x59c] sm:$0xf] %vm7463, %v6798
        %7824 = vst.msk [vmem:[%s210 + $0x5a0] sm:$0xf] %vm7463, %v6799
        %7825 = vst.msk [vmem:[%s210 + $0x5a4] sm:$0xf] %vm7463, %v6800
        %7826 = vst.msk [vmem:[%s210 + $0x5a8] sm:$0xf] %vm7463, %v6801
        %7827 = vst.msk [vmem:[%s210 + $0x5ac] sm:$0xf] %vm7463, %v6802
        %7828 = vst.msk [vmem:[%s210 + $0x5b0] sm:$0xf] %vm7463, %v6803
        %7829 = vst.msk [vmem:[%s210 + $0x5b4] sm:$0xf] %vm7463, %v6804
        %7830 = vst.msk [vmem:[%s210 + $0x5b8] sm:$0xf] %vm7463, %v6805
        %7831 = vst.msk [vmem:[%s210 + $0x5bc] sm:$0xf] %vm7463, %v6806
        %7832 = vst.msk [vmem:[%s210 + $0x5c0] sm:$0xf] %vm7463, %v6807
        %7833 = vst.msk [vmem:[%s210 + $0x5c4] sm:$0xf] %vm7463, %v6808
        %7834 = vst.msk [vmem:[%s210 + $0x5c8] sm:$0xf] %vm7463, %v6809
        %7835 = vst.msk [vmem:[%s210 + $0x5cc] sm:$0xf] %vm7463, %v6810
        %7836 = vst.msk [vmem:[%s210 + $0x5d0] sm:$0xf] %vm7463, %v6811
        %7837 = vst.msk [vmem:[%s210 + $0x5d4] sm:$0xf] %vm7463, %v6812
        %7838 = vst.msk [vmem:[%s210 + $0x5d8] sm:$0xf] %vm7463, %v6813
        %7839 = vst.msk [vmem:[%s210 + $0x5dc] sm:$0xf] %vm7463, %v6814
        %7840 = vst.msk [vmem:[%s210 + $0x5e0] sm:$0xf] %vm7463, %v6815
        %7841 = vst.msk [vmem:[%s210 + $0x5e4] sm:$0xf] %vm7463, %v6816
        %7842 = vst.msk [vmem:[%s210 + $0x5e8] sm:$0xf] %vm7463, %v6817
        %7843 = vst.msk [vmem:[%s210 + $0x5ec] sm:$0xf] %vm7463, %v6818
        %7844 = vst.msk [vmem:[%s210 + $0x5f0] sm:$0xf] %vm7463, %v6819
        %7845 = vst.msk [vmem:[%s210 + $0x5f4] sm:$0xf] %vm7463, %v6820
        %7846 = vst.msk [vmem:[%s210 + $0x5f8] sm:$0xf] %vm7463, %v6821
        %7847 = vst.msk [vmem:[%s210 + $0x5fc] sm:$0xf] %vm7463, %v6822
        %7848 = vst.msk [vmem:[%s210 + $0x600] sm:$0xf] %vm7463, %v6823
        %7849 = vst.msk [vmem:[%s210 + $0x604] sm:$0xf] %vm7463, %v6824
        %7850 = vst.msk [vmem:[%s210 + $0x608] sm:$0xf] %vm7463, %v6825
        %7851 = vst.msk [vmem:[%s210 + $0x60c] sm:$0xf] %vm7463, %v6826
        %7852 = vst.msk [vmem:[%s210 + $0x610] sm:$0xf] %vm7463, %v6827
        %7853 = vst.msk [vmem:[%s210 + $0x614] sm:$0xf] %vm7463, %v6828
        %7854 = vst.msk [vmem:[%s210 + $0x618] sm:$0xf] %vm7463, %v6829
        %7855 = vst.msk [vmem:[%s210 + $0x61c] sm:$0xf] %vm7463, %v6830
        %7856 = vst.msk [vmem:[%s210 + $0x620] sm:$0xf] %vm7463, %v6831
        %7857 = vst.msk [vmem:[%s210 + $0x624] sm:$0xf] %vm7463, %v6832
        %7858 = vst.msk [vmem:[%s210 + $0x628] sm:$0xf] %vm7463, %v6833
        %7859 = vst.msk [vmem:[%s210 + $0x62c] sm:$0xf] %vm7463, %v6834
        %7860 = vst.msk [vmem:[%s210 + $0x630] sm:$0xf] %vm7463, %v6835
        %7861 = vst.msk [vmem:[%s210 + $0x634] sm:$0xf] %vm7463, %v6836
        %7862 = vst.msk [vmem:[%s210 + $0x638] sm:$0xf] %vm7463, %v6837
        %7863 = vst.msk [vmem:[%s210 + $0x63c] sm:$0xf] %vm7463, %v6838
        %7864 = vst.msk [vmem:[%s210 + $0x640] sm:$0xf] %vm7463, %v6839
        %7865 = vst.msk [vmem:[%s210 + $0x644] sm:$0xf] %vm7463, %v6840
        %7866 = vst.msk [vmem:[%s210 + $0x648] sm:$0xf] %vm7463, %v6841
        %7867 = vst.msk [vmem:[%s210 + $0x64c] sm:$0xf] %vm7463, %v6842
        %7868 = vst.msk [vmem:[%s210 + $0x650] sm:$0xf] %vm7463, %v6843
        %7869 = vst.msk [vmem:[%s210 + $0x654] sm:$0xf] %vm7463, %v6844
        %7870 = vst.msk [vmem:[%s210 + $0x658] sm:$0xf] %vm7463, %v6845
        %7871 = vst.msk [vmem:[%s210 + $0x65c] sm:$0xf] %vm7463, %v6846
        %7872 = vst.msk [vmem:[%s210 + $0x660] sm:$0xf] %vm7463, %v6847
        %7873 = vst.msk [vmem:[%s210 + $0x664] sm:$0xf] %vm7463, %v6848
        %7874 = vst.msk [vmem:[%s210 + $0x668] sm:$0xf] %vm7463, %v6849
        %7875 = vst.msk [vmem:[%s210 + $0x66c] sm:$0xf] %vm7463, %v6850
        %7876 = vst.msk [vmem:[%s210 + $0x670] sm:$0xf] %vm7463, %v6851
        %7877 = vst.msk [vmem:[%s210 + $0x674] sm:$0xf] %vm7463, %v6852
        %7878 = vst.msk [vmem:[%s210 + $0x678] sm:$0xf] %vm7463, %v6853
        %7879 = vst.msk [vmem:[%s210 + $0x67c] sm:$0xf] %vm7463, %v6854
        %7880 = vst.msk [vmem:[%s210 + $0x680] sm:$0xf] %vm7463, %v6855
        %7881 = vst.msk [vmem:[%s210 + $0x684] sm:$0xf] %vm7463, %v6856
        %7882 = vst.msk [vmem:[%s210 + $0x688] sm:$0xf] %vm7463, %v6857
        %7883 = vst.msk [vmem:[%s210 + $0x68c] sm:$0xf] %vm7463, %v6858
        %7884 = vst.msk [vmem:[%s210 + $0x690] sm:$0xf] %vm7463, %v6859
        %7885 = vst.msk [vmem:[%s210 + $0x694] sm:$0xf] %vm7463, %v6860
        %7886 = vst.msk [vmem:[%s210 + $0x698] sm:$0xf] %vm7463, %v6861
        %7887 = vst.msk [vmem:[%s210 + $0x69c] sm:$0xf] %vm7463, %v6862
        %7888 = vst.msk [vmem:[%s210 + $0x6a0] sm:$0xf] %vm7463, %v6863
        %7889 = vst.msk [vmem:[%s210 + $0x6a4] sm:$0xf] %vm7463, %v6864
        %7890 = vst.msk [vmem:[%s210 + $0x6a8] sm:$0xf] %vm7463, %v6865
        %7891 = vst.msk [vmem:[%s210 + $0x6ac] sm:$0xf] %vm7463, %v6866
        %7892 = vst.msk [vmem:[%s210 + $0x6b0] sm:$0xf] %vm7463, %v6867
        %7893 = vst.msk [vmem:[%s210 + $0x6b4] sm:$0xf] %vm7463, %v6868
        %7894 = vst.msk [vmem:[%s210 + $0x6b8] sm:$0xf] %vm7463, %v6869
        %7895 = vst.msk [vmem:[%s210 + $0x6bc] sm:$0xf] %vm7463, %v6870
        %7896 = vst.msk [vmem:[%s210 + $0x6c0] sm:$0xf] %vm7463, %v6871
        %7897 = vst.msk [vmem:[%s210 + $0x6c4] sm:$0xf] %vm7463, %v6872
        %7898 = vst.msk [vmem:[%s210 + $0x6c8] sm:$0xf] %vm7463, %v6873
        %7899 = vst.msk [vmem:[%s210 + $0x6cc] sm:$0xf] %vm7463, %v6874
        %7900 = vst.msk [vmem:[%s210 + $0x6d0] sm:$0xf] %vm7463, %v6875
        %7901 = vst.msk [vmem:[%s210 + $0x6d4] sm:$0xf] %vm7463, %v6876
        %7902 = vst.msk [vmem:[%s210 + $0x6d8] sm:$0xf] %vm7463, %v6877
        %7903 = vst.msk [vmem:[%s210 + $0x6dc] sm:$0xf] %vm7463, %v6878
        %7904 = vst.msk [vmem:[%s210 + $0x6e0] sm:$0xf] %vm7463, %v6879
        %7905 = vst.msk [vmem:[%s210 + $0x6e4] sm:$0xf] %vm7463, %v6880
        %7906 = vst.msk [vmem:[%s210 + $0x6e8] sm:$0xf] %vm7463, %v6881
        %7907 = vst.msk [vmem:[%s210 + $0x6ec] sm:$0xf] %vm7463, %v6882
        %7908 = vst.msk [vmem:[%s210 + $0x6f0] sm:$0xf] %vm7463, %v6883
        %7909 = vst.msk [vmem:[%s210 + $0x6f4] sm:$0xf] %vm7463, %v6884
        %7910 = vst.msk [vmem:[%s210 + $0x6f8] sm:$0xf] %vm7463, %v6885
        %7911 = vst.msk [vmem:[%s210 + $0x6fc] sm:$0xf] %vm7463, %v6886
        %7912 = vst.msk [vmem:[%s210 + $0x700] sm:$0xf] %vm7463, %v6887
        %7913 = vst.msk [vmem:[%s210 + $0x704] sm:$0xf] %vm7463, %v6888
        %7914 = vst.msk [vmem:[%s210 + $0x708] sm:$0xf] %vm7463, %v6889
        %7915 = vst.msk [vmem:[%s210 + $0x70c] sm:$0xf] %vm7463, %v6890
        %7916 = vst.msk [vmem:[%s210 + $0x710] sm:$0xf] %vm7463, %v6891
        %7917 = vst.msk [vmem:[%s210 + $0x714] sm:$0xf] %vm7463, %v6892
        %7918 = vst.msk [vmem:[%s210 + $0x718] sm:$0xf] %vm7463, %v6893
        %7919 = vst.msk [vmem:[%s210 + $0x71c] sm:$0xf] %vm7463, %v6894
        %7920 = vst.msk [vmem:[%s210 + $0x720] sm:$0xf] %vm7463, %v6895
        %7921 = vst.msk [vmem:[%s210 + $0x724] sm:$0xf] %vm7463, %v6896
        %7922 = vst.msk [vmem:[%s210 + $0x728] sm:$0xf] %vm7463, %v6897
        %7923 = vst.msk [vmem:[%s210 + $0x72c] sm:$0xf] %vm7463, %v6898
        %7924 = vst.msk [vmem:[%s210 + $0x730] sm:$0xf] %vm7463, %v6899
        %7925 = vst.msk [vmem:[%s210 + $0x734] sm:$0xf] %vm7463, %v6900
        %7926 = vst.msk [vmem:[%s210 + $0x738] sm:$0xf] %vm7463, %v6901
        %7927 = vst.msk [vmem:[%s210 + $0x73c] sm:$0xf] %vm7463, %v6902
        %7928 = vst.msk [vmem:[%s210 + $0x740] sm:$0xf] %vm7463, %v6903
        %7929 = vst.msk [vmem:[%s210 + $0x744] sm:$0xf] %vm7463, %v6904
        %7930 = vst.msk [vmem:[%s210 + $0x748] sm:$0xf] %vm7463, %v6905
        %7931 = vst.msk [vmem:[%s210 + $0x74c] sm:$0xf] %vm7463, %v6906
        %7932 = vst.msk [vmem:[%s210 + $0x750] sm:$0xf] %vm7463, %v6907
        %7933 = vst.msk [vmem:[%s210 + $0x754] sm:$0xf] %vm7463, %v6908
        %7934 = vst.msk [vmem:[%s210 + $0x758] sm:$0xf] %vm7463, %v6909
        %7935 = vst.msk [vmem:[%s210 + $0x75c] sm:$0xf] %vm7463, %v6910
        %7936 = vst.msk [vmem:[%s210 + $0x760] sm:$0xf] %vm7463, %v6911
        %7937 = vst.msk [vmem:[%s210 + $0x764] sm:$0xf] %vm7463, %v6912
        %7938 = vst.msk [vmem:[%s210 + $0x768] sm:$0xf] %vm7463, %v6913
        %7939 = vst.msk [vmem:[%s210 + $0x76c] sm:$0xf] %vm7463, %v6914
        %7940 = vst.msk [vmem:[%s210 + $0x770] sm:$0xf] %vm7463, %v6915
        %7941 = vst.msk [vmem:[%s210 + $0x774] sm:$0xf] %vm7463, %v6916
        %7942 = vst.msk [vmem:[%s210 + $0x778] sm:$0xf] %vm7463, %v6917
        %7943 = vst.msk [vmem:[%s210 + $0x77c] sm:$0xf] %vm7463, %v6918
        %7944 = vst.msk [vmem:[%s210 + $0x780] sm:$0xf] %vm7463, %v6919
        %7945 = vst.msk [vmem:[%s210 + $0x784] sm:$0xf] %vm7463, %v6920
        %7946 = vst.msk [vmem:[%s210 + $0x788] sm:$0xf] %vm7463, %v6921
        %7947 = vst.msk [vmem:[%s210 + $0x78c] sm:$0xf] %vm7463, %v6922
        %7948 = vst.msk [vmem:[%s210 + $0x790] sm:$0xf] %vm7463, %v6923
        %7949 = vst.msk [vmem:[%s210 + $0x794] sm:$0xf] %vm7463, %v6924
        %7950 = vst.msk [vmem:[%s210 + $0x798] sm:$0xf] %vm7463, %v6925
        %7951 = vst.msk [vmem:[%s210 + $0x79c] sm:$0xf] %vm7463, %v6926
        %7952 = vst.msk [vmem:[%s210 + $0x7a0] sm:$0xf] %vm7463, %v6927
        %7953 = vst.msk [vmem:[%s210 + $0x7a4] sm:$0xf] %vm7463, %v6928
        %7954 = vst.msk [vmem:[%s210 + $0x7a8] sm:$0xf] %vm7463, %v6929
        %7955 = vst.msk [vmem:[%s210 + $0x7ac] sm:$0xf] %vm7463, %v6930
        %7956 = vst.msk [vmem:[%s210 + $0x7b0] sm:$0xf] %vm7463, %v6931
        %7957 = vst.msk [vmem:[%s210 + $0x7b4] sm:$0xf] %vm7463, %v6932
        %7958 = vst.msk [vmem:[%s210 + $0x7b8] sm:$0xf] %vm7463, %v6933
        %7959 = vst.msk [vmem:[%s210 + $0x7bc] sm:$0xf] %vm7463, %v6934
        %7960 = vst.msk [vmem:[%s210 + $0x7c0] sm:$0xf] %vm7463, %v6935
        %7961 = vst.msk [vmem:[%s210 + $0x7c4] sm:$0xf] %vm7463, %v6936
        %7962 = vst.msk [vmem:[%s210 + $0x7c8] sm:$0xf] %vm7463, %v6937
        %7963 = vst.msk [vmem:[%s210 + $0x7cc] sm:$0xf] %vm7463, %v6938
        %7964 = vst.msk [vmem:[%s210 + $0x7d0] sm:$0xf] %vm7463, %v6939
        %7965 = vst.msk [vmem:[%s210 + $0x7d4] sm:$0xf] %vm7463, %v6940
        %7966 = vst.msk [vmem:[%s210 + $0x7d8] sm:$0xf] %vm7463, %v6941
        %7967 = vst.msk [vmem:[%s210 + $0x7dc] sm:$0xf] %vm7463, %v6942
        %7968 = vst.msk [vmem:[%s210 + $0x7e0] sm:$0xf] %vm7463, %v6943
        %7969 = vst.msk [vmem:[%s210 + $0x7e4] sm:$0xf] %vm7463, %v6944
        %7970 = vst.msk [vmem:[%s210 + $0x7e8] sm:$0xf] %vm7463, %v6945
        %7971 = vst.msk [vmem:[%s210 + $0x7ec] sm:$0xf] %vm7463, %v6946
        %7972 = vst.msk [vmem:[%s210 + $0x7f0] sm:$0xf] %vm7463, %v6947
        %7973 = vst.msk [vmem:[%s210 + $0x7f4] sm:$0xf] %vm7463, %v6948
        %7974 = vst.msk [vmem:[%s210 + $0x7f8] sm:$0xf] %vm7463, %v6949
        %7975 = vst.msk [vmem:[%s210 + $0x7fc] sm:$0xf] %vm7463, %v6950
        %s7976 = sand.u32 %s114, 1
        %s7977 = sand.u32 %s114, 1
        %s7978 = smul.addr %s7977, 2048
        %s7979 = scalar_lea.vmem [#allocation2], %s7978
        // Predicated region
        $region33: #{conv2d_im2col.1} parent=31 // pred_check
          %p7980 = pneg %p124
        $region34: #{conv2d_im2col.1} parent=31 // pred_check_branch
          %7982 = sbr.rel (%p7980) target = $region36
        $region35: #{conv2d_im2col.1} parent=31 // pred_region
          %s7983 = smul.u32 512, %s18
          %s7984 = ssub.s32 5551, %s7983
          %p7985 = scmp.lt.s32.totalorder %s7984, 512
          %s7986 = scalar_select %p7985, %s7984, 512
          %s7987 = smul.u32 64, %s7986
          %p7988 = scmp.ne.s32.totalorder 0, %s7987
          %s7989 = sadd.s32 %s19, %s7983
          %s7990 = smul.addr %s7989, 4
          %s7991 = scalar_lea.vmem %s3, %s7990
          // Predicated region
          $region37: #{conv2d_im2col.1} parent=35 // pred_check
            %p7992 = pneg %p7988
          $region38: #{conv2d_im2col.1} parent=35 // pred_check_branch
            %7994 = sbr.rel (%p7992) target = $region40
          $region39: #{conv2d_im2col.1} parent=35 // pred_region
            // Predicated region
            $region41: #{conv2d_im2col.1} parent=39 // pred_check
              _
            $region42: #{conv2d_im2col.1} parent=39 // pred_check_branch
              %7996 = sbr.rel target = $region44
            $region43: #{conv2d_im2col.1} parent=39 // pred_region
              // Predicated region
              $region63: #{conv2d_im2col.1} parent=43 // pred_check
                _
              $region64: #{conv2d_im2col.1} parent=43 // pred_check_branch
                %8172 = sbr.rel (0) target = $region66
              $region65: #{conv2d_im2col.1} parent=43 // pred_region
                %s8174 = ssub.s32 16, 1
                %s8175 = sshrl.u32 %s7986, 6
                // While loop
                $region67: #{conv2d_im2col.1} parent=65 // loop_pre_header
                  _
                $region68: #{conv2d_im2col.1} parent=65 // loop_header
                  %s8177 = sphi 0, %s8179
                  %p8178 = scmp.ge.s32.totalorder %s8177, %s8175
                  %s8182 = sphi 0, %s8315
                  %s8183 = sphi %s7979, %s8318
                  %s8184 = sphi %s7991, %s8319
                $region69: #{conv2d_im2col.1} parent=65 // loop_header_branch
                  %8181 = sbr.rel (%p8178) target = $region73
                $region70: #{conv2d_im2col.1} parent=65 // loop_body
                  %v8185 = vld [vmem:[%s8183] sm:%s8174]
                  %8186 = vst [vmem:[%s8184] sm:%s8174] %v8185
                  %v8187 = vld [vmem:[%s8183 + $0x4] sm:%s8174]
                  %8188 = vst [vmem:[%s8184 + $0x4] sm:%s8174] %v8187
                  %v8189 = vld [vmem:[%s8183 + $0x8] sm:%s8174]
                  %8190 = vst [vmem:[%s8184 + $0x8] sm:%s8174] %v8189
                  %v8191 = vld [vmem:[%s8183 + $0xc] sm:%s8174]
                  %8192 = vst [vmem:[%s8184 + $0xc] sm:%s8174] %v8191
                  %v8193 = vld [vmem:[%s8183 + $0x10] sm:%s8174]
                  %8194 = vst [vmem:[%s8184 + $0x10] sm:%s8174] %v8193
                  %v8195 = vld [vmem:[%s8183 + $0x14] sm:%s8174]
                  %8196 = vst [vmem:[%s8184 + $0x14] sm:%s8174] %v8195
                  %v8197 = vld [vmem:[%s8183 + $0x18] sm:%s8174]
                  %8198 = vst [vmem:[%s8184 + $0x18] sm:%s8174] %v8197
                  %v8199 = vld [vmem:[%s8183 + $0x1c] sm:%s8174]
                  %8200 = vst [vmem:[%s8184 + $0x1c] sm:%s8174] %v8199
                  %v8201 = vld [vmem:[%s8183 + $0x20] sm:%s8174]
                  %8202 = vst [vmem:[%s8184 + $0x20] sm:%s8174] %v8201
                  %v8203 = vld [vmem:[%s8183 + $0x24] sm:%s8174]
                  %8204 = vst [vmem:[%s8184 + $0x24] sm:%s8174] %v8203
                  %v8205 = vld [vmem:[%s8183 + $0x28] sm:%s8174]
                  %8206 = vst [vmem:[%s8184 + $0x28] sm:%s8174] %v8205
                  %v8207 = vld [vmem:[%s8183 + $0x2c] sm:%s8174]
                  %8208 = vst [vmem:[%s8184 + $0x2c] sm:%s8174] %v8207
                  %v8209 = vld [vmem:[%s8183 + $0x30] sm:%s8174]
                  %8210 = vst [vmem:[%s8184 + $0x30] sm:%s8174] %v8209
                  %v8211 = vld [vmem:[%s8183 + $0x34] sm:%s8174]
                  %8212 = vst [vmem:[%s8184 + $0x34] sm:%s8174] %v8211
                  %v8213 = vld [vmem:[%s8183 + $0x38] sm:%s8174]
                  %8214 = vst [vmem:[%s8184 + $0x38] sm:%s8174] %v8213
                  %v8215 = vld [vmem:[%s8183 + $0x3c] sm:%s8174]
                  %8216 = vst [vmem:[%s8184 + $0x3c] sm:%s8174] %v8215
                  %v8217 = vld [vmem:[%s8183 + $0x40] sm:%s8174]
                  %8218 = vst [vmem:[%s8184 + $0x40] sm:%s8174] %v8217
                  %v8219 = vld [vmem:[%s8183 + $0x44] sm:%s8174]
                  %8220 = vst [vmem:[%s8184 + $0x44] sm:%s8174] %v8219
                  %v8221 = vld [vmem:[%s8183 + $0x48] sm:%s8174]
                  %8222 = vst [vmem:[%s8184 + $0x48] sm:%s8174] %v8221
                  %v8223 = vld [vmem:[%s8183 + $0x4c] sm:%s8174]
                  %8224 = vst [vmem:[%s8184 + $0x4c] sm:%s8174] %v8223
                  %v8225 = vld [vmem:[%s8183 + $0x50] sm:%s8174]
                  %8226 = vst [vmem:[%s8184 + $0x50] sm:%s8174] %v8225
                  %v8227 = vld [vmem:[%s8183 + $0x54] sm:%s8174]
                  %8228 = vst [vmem:[%s8184 + $0x54] sm:%s8174] %v8227
                  %v8229 = vld [vmem:[%s8183 + $0x58] sm:%s8174]
                  %8230 = vst [vmem:[%s8184 + $0x58] sm:%s8174] %v8229
                  %v8231 = vld [vmem:[%s8183 + $0x5c] sm:%s8174]
                  %8232 = vst [vmem:[%s8184 + $0x5c] sm:%s8174] %v8231
                  %v8233 = vld [vmem:[%s8183 + $0x60] sm:%s8174]
                  %8234 = vst [vmem:[%s8184 + $0x60] sm:%s8174] %v8233
                  %v8235 = vld [vmem:[%s8183 + $0x64] sm:%s8174]
                  %8236 = vst [vmem:[%s8184 + $0x64] sm:%s8174] %v8235
                  %v8237 = vld [vmem:[%s8183 + $0x68] sm:%s8174]
                  %8238 = vst [vmem:[%s8184 + $0x68] sm:%s8174] %v8237
                  %v8239 = vld [vmem:[%s8183 + $0x6c] sm:%s8174]
                  %8240 = vst [vmem:[%s8184 + $0x6c] sm:%s8174] %v8239
                  %v8241 = vld [vmem:[%s8183 + $0x70] sm:%s8174]
                  %8242 = vst [vmem:[%s8184 + $0x70] sm:%s8174] %v8241
                  %v8243 = vld [vmem:[%s8183 + $0x74] sm:%s8174]
                  %8244 = vst [vmem:[%s8184 + $0x74] sm:%s8174] %v8243
                  %v8245 = vld [vmem:[%s8183 + $0x78] sm:%s8174]
                  %8246 = vst [vmem:[%s8184 + $0x78] sm:%s8174] %v8245
                  %v8247 = vld [vmem:[%s8183 + $0x7c] sm:%s8174]
                  %8248 = vst [vmem:[%s8184 + $0x7c] sm:%s8174] %v8247
                  %v8249 = vld [vmem:[%s8183 + $0x80] sm:%s8174]
                  %8250 = vst [vmem:[%s8184 + $0x80] sm:%s8174] %v8249
                  %v8251 = vld [vmem:[%s8183 + $0x84] sm:%s8174]
                  %8252 = vst [vmem:[%s8184 + $0x84] sm:%s8174] %v8251
                  %v8253 = vld [vmem:[%s8183 + $0x88] sm:%s8174]
                  %8254 = vst [vmem:[%s8184 + $0x88] sm:%s8174] %v8253
                  %v8255 = vld [vmem:[%s8183 + $0x8c] sm:%s8174]
                  %8256 = vst [vmem:[%s8184 + $0x8c] sm:%s8174] %v8255
                  %v8257 = vld [vmem:[%s8183 + $0x90] sm:%s8174]
                  %8258 = vst [vmem:[%s8184 + $0x90] sm:%s8174] %v8257
                  %v8259 = vld [vmem:[%s8183 + $0x94] sm:%s8174]
                  %8260 = vst [vmem:[%s8184 + $0x94] sm:%s8174] %v8259
                  %v8261 = vld [vmem:[%s8183 + $0x98] sm:%s8174]
                  %8262 = vst [vmem:[%s8184 + $0x98] sm:%s8174] %v8261
                  %v8263 = vld [vmem:[%s8183 + $0x9c] sm:%s8174]
                  %8264 = vst [vmem:[%s8184 + $0x9c] sm:%s8174] %v8263
                  %v8265 = vld [vmem:[%s8183 + $0xa0] sm:%s8174]
                  %8266 = vst [vmem:[%s8184 + $0xa0] sm:%s8174] %v8265
                  %v8267 = vld [vmem:[%s8183 + $0xa4] sm:%s8174]
                  %8268 = vst [vmem:[%s8184 + $0xa4] sm:%s8174] %v8267
                  %v8269 = vld [vmem:[%s8183 + $0xa8] sm:%s8174]
                  %8270 = vst [vmem:[%s8184 + $0xa8] sm:%s8174] %v8269
                  %v8271 = vld [vmem:[%s8183 + $0xac] sm:%s8174]
                  %8272 = vst [vmem:[%s8184 + $0xac] sm:%s8174] %v8271
                  %v8273 = vld [vmem:[%s8183 + $0xb0] sm:%s8174]
                  %8274 = vst [vmem:[%s8184 + $0xb0] sm:%s8174] %v8273
                  %v8275 = vld [vmem:[%s8183 + $0xb4] sm:%s8174]
                  %8276 = vst [vmem:[%s8184 + $0xb4] sm:%s8174] %v8275
                  %v8277 = vld [vmem:[%s8183 + $0xb8] sm:%s8174]
                  %8278 = vst [vmem:[%s8184 + $0xb8] sm:%s8174] %v8277
                  %v8279 = vld [vmem:[%s8183 + $0xbc] sm:%s8174]
                  %8280 = vst [vmem:[%s8184 + $0xbc] sm:%s8174] %v8279
                  %v8281 = vld [vmem:[%s8183 + $0xc0] sm:%s8174]
                  %8282 = vst [vmem:[%s8184 + $0xc0] sm:%s8174] %v8281
                  %v8283 = vld [vmem:[%s8183 + $0xc4] sm:%s8174]
                  %8284 = vst [vmem:[%s8184 + $0xc4] sm:%s8174] %v8283
                  %v8285 = vld [vmem:[%s8183 + $0xc8] sm:%s8174]
                  %8286 = vst [vmem:[%s8184 + $0xc8] sm:%s8174] %v8285
                  %v8287 = vld [vmem:[%s8183 + $0xcc] sm:%s8174]
                  %8288 = vst [vmem:[%s8184 + $0xcc] sm:%s8174] %v8287
                  %v8289 = vld [vmem:[%s8183 + $0xd0] sm:%s8174]
                  %8290 = vst [vmem:[%s8184 + $0xd0] sm:%s8174] %v8289
                  %v8291 = vld [vmem:[%s8183 + $0xd4] sm:%s8174]
                  %8292 = vst [vmem:[%s8184 + $0xd4] sm:%s8174] %v8291
                  %v8293 = vld [vmem:[%s8183 + $0xd8] sm:%s8174]
                  %8294 = vst [vmem:[%s8184 + $0xd8] sm:%s8174] %v8293
                  %v8295 = vld [vmem:[%s8183 + $0xdc] sm:%s8174]
                  %8296 = vst [vmem:[%s8184 + $0xdc] sm:%s8174] %v8295
                  %v8297 = vld [vmem:[%s8183 + $0xe0] sm:%s8174]
                  %8298 = vst [vmem:[%s8184 + $0xe0] sm:%s8174] %v8297
                  %v8299 = vld [vmem:[%s8183 + $0xe4] sm:%s8174]
                  %8300 = vst [vmem:[%s8184 + $0xe4] sm:%s8174] %v8299
                  %v8301 = vld [vmem:[%s8183 + $0xe8] sm:%s8174]
                  %8302 = vst [vmem:[%s8184 + $0xe8] sm:%s8174] %v8301
                  %v8303 = vld [vmem:[%s8183 + $0xec] sm:%s8174]
                  %8304 = vst [vmem:[%s8184 + $0xec] sm:%s8174] %v8303
                  %v8305 = vld [vmem:[%s8183 + $0xf0] sm:%s8174]
                  %8306 = vst [vmem:[%s8184 + $0xf0] sm:%s8174] %v8305
                  %v8307 = vld [vmem:[%s8183 + $0xf4] sm:%s8174]
                  %8308 = vst [vmem:[%s8184 + $0xf4] sm:%s8174] %v8307
                  %v8309 = vld [vmem:[%s8183 + $0xf8] sm:%s8174]
                  %8310 = vst [vmem:[%s8184 + $0xf8] sm:%s8174] %v8309
                  %v8311 = vld [vmem:[%s8183 + $0xfc] sm:%s8174]
                  %8312 = vst [vmem:[%s8184 + $0xfc] sm:%s8174] %v8311
                  %s8313 = sadd.s32 1, %s8182
                  %p8314 = scmp.ge.s32.totalorder %s8313, %s8175
                  %s8315 = scalar_select %p8314, 0, %s8313
                  %s8316 = smul.u32 %s8315, 256
                  %s8317 = smul.u32 %s8315, 256
                  %s8318 = scalar_lea.vmem %s7979, %s8316 [#allocation2]
                  %s8319 = scalar_lea.vmem %s7991, %s8317
                $region71: #{conv2d_im2col.1} parent=65 // loop_footer
                  %s8179 = sadd.s32 %s8177, 1
                $region72: #{conv2d_im2col.1} parent=65 // loop_footer_branch
                  %8176 = sbr.rel target = $region68
                $region73: #{conv2d_im2col.1} parent=65 // loop_exit
                  _
                %s8320 = sshrl.u32 %s7986, 6
                %s8321 = sand.u32 %s7986, 63
                %s8322 = smul.u32 %s8320, 64
                %s8323 = smul.u32 4, %s8322
                %s8324 = scalar_lea.vmem %s7979, %s8323 [#allocation2]
                %s8325 = smul.u32 4, %s8322
                %s8326 = scalar_lea.vmem %s7991, %s8325
                // While loop
                $region74: #{conv2d_im2col.1} parent=65 // loop_pre_header
                  _
                $region75: #{conv2d_im2col.1} parent=65 // loop_header
                  %s8328 = sphi 0, %s8330
                  %p8329 = scmp.ge.s32.totalorder %s8328, %s8321
                  %s8333 = sphi 0, %s8340
                  %s8334 = sphi %s8324, %s8343
                  %s8335 = sphi %s8326, %s8344
                $region76: #{conv2d_im2col.1} parent=65 // loop_header_branch
                  %8332 = sbr.rel (%p8329) target = $region80
                $region77: #{conv2d_im2col.1} parent=65 // loop_body
                  %v8336 = vld [vmem:[%s8334] sm:%s8174]
                  %8337 = vst [vmem:[%s8335] sm:%s8174] %v8336
                  %s8338 = sadd.s32 1, %s8333
                  %p8339 = scmp.ge.s32.totalorder %s8338, %s8321
                  %s8340 = scalar_select %p8339, 0, %s8338
                  %s8341 = smul.u32 %s8340, 4
                  %s8342 = smul.u32 %s8340, 4
                  %s8343 = scalar_lea.vmem %s8324, %s8341 [#allocation2]
                  %s8344 = scalar_lea.vmem %s8326, %s8342
                $region78: #{conv2d_im2col.1} parent=65 // loop_footer
                  %s8330 = sadd.s32 %s8328, 1
                $region79: #{conv2d_im2col.1} parent=65 // loop_footer_branch
                  %8327 = sbr.rel target = $region75
                $region80: #{conv2d_im2col.1} parent=65 // loop_exit
                  _
              $region66: #{conv2d_im2col.1} parent=43 // pred_fallthru
                _
            $region44: #{conv2d_im2col.1} parent=39 // pred_fallthru
              _
            // Predicated region
            $region45: #{conv2d_im2col.1} parent=39 // pred_check
              _
            $region46: #{conv2d_im2col.1} parent=39 // pred_check_branch
              %7998 = sbr.rel (0) target = $region48
            $region47: #{conv2d_im2col.1} parent=39 // pred_region
              %s8000 = ssub.s32 16, 1
              %s8001 = sshrl.u32 %s7986, 6
              // While loop
              $region49: #{conv2d_im2col.1} parent=47 // loop_pre_header
                _
              $region50: #{conv2d_im2col.1} parent=47 // loop_header
                %s8003 = sphi 0, %s8005
                %p8004 = scmp.ge.s32.totalorder %s8003, %s8001
                %s8008 = sphi 0, %s8141
                %s8009 = sphi %s7979, %s8144
                %s8010 = sphi %s7991, %s8145
              $region51: #{conv2d_im2col.1} parent=47 // loop_header_branch
                %8007 = sbr.rel (%p8004) target = $region55
              $region52: #{conv2d_im2col.1} parent=47 // loop_body
                %v8011 = vld [vmem:[%s8009] sm:%s8000]
                %8012 = vst [vmem:[%s8010] sm:%s8000] %v8011
                %v8013 = vld [vmem:[%s8009 + $0x4] sm:%s8000]
                %8014 = vst [vmem:[%s8010 + $0x4] sm:%s8000] %v8013
                %v8015 = vld [vmem:[%s8009 + $0x8] sm:%s8000]
                %8016 = vst [vmem:[%s8010 + $0x8] sm:%s8000] %v8015
                %v8017 = vld [vmem:[%s8009 + $0xc] sm:%s8000]
                %8018 = vst [vmem:[%s8010 + $0xc] sm:%s8000] %v8017
                %v8019 = vld [vmem:[%s8009 + $0x10] sm:%s8000]
                %8020 = vst [vmem:[%s8010 + $0x10] sm:%s8000] %v8019
                %v8021 = vld [vmem:[%s8009 + $0x14] sm:%s8000]
                %8022 = vst [vmem:[%s8010 + $0x14] sm:%s8000] %v8021
                %v8023 = vld [vmem:[%s8009 + $0x18] sm:%s8000]
                %8024 = vst [vmem:[%s8010 + $0x18] sm:%s8000] %v8023
                %v8025 = vld [vmem:[%s8009 + $0x1c] sm:%s8000]
                %8026 = vst [vmem:[%s8010 + $0x1c] sm:%s8000] %v8025
                %v8027 = vld [vmem:[%s8009 + $0x20] sm:%s8000]
                %8028 = vst [vmem:[%s8010 + $0x20] sm:%s8000] %v8027
                %v8029 = vld [vmem:[%s8009 + $0x24] sm:%s8000]
                %8030 = vst [vmem:[%s8010 + $0x24] sm:%s8000] %v8029
                %v8031 = vld [vmem:[%s8009 + $0x28] sm:%s8000]
                %8032 = vst [vmem:[%s8010 + $0x28] sm:%s8000] %v8031
                %v8033 = vld [vmem:[%s8009 + $0x2c] sm:%s8000]
                %8034 = vst [vmem:[%s8010 + $0x2c] sm:%s8000] %v8033
                %v8035 = vld [vmem:[%s8009 + $0x30] sm:%s8000]
                %8036 = vst [vmem:[%s8010 + $0x30] sm:%s8000] %v8035
                %v8037 = vld [vmem:[%s8009 + $0x34] sm:%s8000]
                %8038 = vst [vmem:[%s8010 + $0x34] sm:%s8000] %v8037
                %v8039 = vld [vmem:[%s8009 + $0x38] sm:%s8000]
                %8040 = vst [vmem:[%s8010 + $0x38] sm:%s8000] %v8039
                %v8041 = vld [vmem:[%s8009 + $0x3c] sm:%s8000]
                %8042 = vst [vmem:[%s8010 + $0x3c] sm:%s8000] %v8041
                %v8043 = vld [vmem:[%s8009 + $0x40] sm:%s8000]
                %8044 = vst [vmem:[%s8010 + $0x40] sm:%s8000] %v8043
                %v8045 = vld [vmem:[%s8009 + $0x44] sm:%s8000]
                %8046 = vst [vmem:[%s8010 + $0x44] sm:%s8000] %v8045
                %v8047 = vld [vmem:[%s8009 + $0x48] sm:%s8000]
                %8048 = vst [vmem:[%s8010 + $0x48] sm:%s8000] %v8047
                %v8049 = vld [vmem:[%s8009 + $0x4c] sm:%s8000]
                %8050 = vst [vmem:[%s8010 + $0x4c] sm:%s8000] %v8049
                %v8051 = vld [vmem:[%s8009 + $0x50] sm:%s8000]
                %8052 = vst [vmem:[%s8010 + $0x50] sm:%s8000] %v8051
                %v8053 = vld [vmem:[%s8009 + $0x54] sm:%s8000]
                %8054 = vst [vmem:[%s8010 + $0x54] sm:%s8000] %v8053
                %v8055 = vld [vmem:[%s8009 + $0x58] sm:%s8000]
                %8056 = vst [vmem:[%s8010 + $0x58] sm:%s8000] %v8055
                %v8057 = vld [vmem:[%s8009 + $0x5c] sm:%s8000]
                %8058 = vst [vmem:[%s8010 + $0x5c] sm:%s8000] %v8057
                %v8059 = vld [vmem:[%s8009 + $0x60] sm:%s8000]
                %8060 = vst [vmem:[%s8010 + $0x60] sm:%s8000] %v8059
                %v8061 = vld [vmem:[%s8009 + $0x64] sm:%s8000]
                %8062 = vst [vmem:[%s8010 + $0x64] sm:%s8000] %v8061
                %v8063 = vld [vmem:[%s8009 + $0x68] sm:%s8000]
                %8064 = vst [vmem:[%s8010 + $0x68] sm:%s8000] %v8063
                %v8065 = vld [vmem:[%s8009 + $0x6c] sm:%s8000]
                %8066 = vst [vmem:[%s8010 + $0x6c] sm:%s8000] %v8065
                %v8067 = vld [vmem:[%s8009 + $0x70] sm:%s8000]
                %8068 = vst [vmem:[%s8010 + $0x70] sm:%s8000] %v8067
                %v8069 = vld [vmem:[%s8009 + $0x74] sm:%s8000]
                %8070 = vst [vmem:[%s8010 + $0x74] sm:%s8000] %v8069
                %v8071 = vld [vmem:[%s8009 + $0x78] sm:%s8000]
                %8072 = vst [vmem:[%s8010 + $0x78] sm:%s8000] %v8071
                %v8073 = vld [vmem:[%s8009 + $0x7c] sm:%s8000]
                %8074 = vst [vmem:[%s8010 + $0x7c] sm:%s8000] %v8073
                %v8075 = vld [vmem:[%s8009 + $0x80] sm:%s8000]
                %8076 = vst [vmem:[%s8010 + $0x80] sm:%s8000] %v8075
                %v8077 = vld [vmem:[%s8009 + $0x84] sm:%s8000]
                %8078 = vst [vmem:[%s8010 + $0x84] sm:%s8000] %v8077
                %v8079 = vld [vmem:[%s8009 + $0x88] sm:%s8000]
                %8080 = vst [vmem:[%s8010 + $0x88] sm:%s8000] %v8079
                %v8081 = vld [vmem:[%s8009 + $0x8c] sm:%s8000]
                %8082 = vst [vmem:[%s8010 + $0x8c] sm:%s8000] %v8081
                %v8083 = vld [vmem:[%s8009 + $0x90] sm:%s8000]
                %8084 = vst [vmem:[%s8010 + $0x90] sm:%s8000] %v8083
                %v8085 = vld [vmem:[%s8009 + $0x94] sm:%s8000]
                %8086 = vst [vmem:[%s8010 + $0x94] sm:%s8000] %v8085
                %v8087 = vld [vmem:[%s8009 + $0x98] sm:%s8000]
                %8088 = vst [vmem:[%s8010 + $0x98] sm:%s8000] %v8087
                %v8089 = vld [vmem:[%s8009 + $0x9c] sm:%s8000]
                %8090 = vst [vmem:[%s8010 + $0x9c] sm:%s8000] %v8089
                %v8091 = vld [vmem:[%s8009 + $0xa0] sm:%s8000]
                %8092 = vst [vmem:[%s8010 + $0xa0] sm:%s8000] %v8091
                %v8093 = vld [vmem:[%s8009 + $0xa4] sm:%s8000]
                %8094 = vst [vmem:[%s8010 + $0xa4] sm:%s8000] %v8093
                %v8095 = vld [vmem:[%s8009 + $0xa8] sm:%s8000]
                %8096 = vst [vmem:[%s8010 + $0xa8] sm:%s8000] %v8095
                %v8097 = vld [vmem:[%s8009 + $0xac] sm:%s8000]
                %8098 = vst [vmem:[%s8010 + $0xac] sm:%s8000] %v8097
                %v8099 = vld [vmem:[%s8009 + $0xb0] sm:%s8000]
                %8100 = vst [vmem:[%s8010 + $0xb0] sm:%s8000] %v8099
                %v8101 = vld [vmem:[%s8009 + $0xb4] sm:%s8000]
                %8102 = vst [vmem:[%s8010 + $0xb4] sm:%s8000] %v8101
                %v8103 = vld [vmem:[%s8009 + $0xb8] sm:%s8000]
                %8104 = vst [vmem:[%s8010 + $0xb8] sm:%s8000] %v8103
                %v8105 = vld [vmem:[%s8009 + $0xbc] sm:%s8000]
                %8106 = vst [vmem:[%s8010 + $0xbc] sm:%s8000] %v8105
                %v8107 = vld [vmem:[%s8009 + $0xc0] sm:%s8000]
                %8108 = vst [vmem:[%s8010 + $0xc0] sm:%s8000] %v8107
                %v8109 = vld [vmem:[%s8009 + $0xc4] sm:%s8000]
                %8110 = vst [vmem:[%s8010 + $0xc4] sm:%s8000] %v8109
                %v8111 = vld [vmem:[%s8009 + $0xc8] sm:%s8000]
                %8112 = vst [vmem:[%s8010 + $0xc8] sm:%s8000] %v8111
                %v8113 = vld [vmem:[%s8009 + $0xcc] sm:%s8000]
                %8114 = vst [vmem:[%s8010 + $0xcc] sm:%s8000] %v8113
                %v8115 = vld [vmem:[%s8009 + $0xd0] sm:%s8000]
                %8116 = vst [vmem:[%s8010 + $0xd0] sm:%s8000] %v8115
                %v8117 = vld [vmem:[%s8009 + $0xd4] sm:%s8000]
                %8118 = vst [vmem:[%s8010 + $0xd4] sm:%s8000] %v8117
                %v8119 = vld [vmem:[%s8009 + $0xd8] sm:%s8000]
                %8120 = vst [vmem:[%s8010 + $0xd8] sm:%s8000] %v8119
                %v8121 = vld [vmem:[%s8009 + $0xdc] sm:%s8000]
                %8122 = vst [vmem:[%s8010 + $0xdc] sm:%s8000] %v8121
                %v8123 = vld [vmem:[%s8009 + $0xe0] sm:%s8000]
                %8124 = vst [vmem:[%s8010 + $0xe0] sm:%s8000] %v8123
                %v8125 = vld [vmem:[%s8009 + $0xe4] sm:%s8000]
                %8126 = vst [vmem:[%s8010 + $0xe4] sm:%s8000] %v8125
                %v8127 = vld [vmem:[%s8009 + $0xe8] sm:%s8000]
                %8128 = vst [vmem:[%s8010 + $0xe8] sm:%s8000] %v8127
                %v8129 = vld [vmem:[%s8009 + $0xec] sm:%s8000]
                %8130 = vst [vmem:[%s8010 + $0xec] sm:%s8000] %v8129
                %v8131 = vld [vmem:[%s8009 + $0xf0] sm:%s8000]
                %8132 = vst [vmem:[%s8010 + $0xf0] sm:%s8000] %v8131
                %v8133 = vld [vmem:[%s8009 + $0xf4] sm:%s8000]
                %8134 = vst [vmem:[%s8010 + $0xf4] sm:%s8000] %v8133
                %v8135 = vld [vmem:[%s8009 + $0xf8] sm:%s8000]
                %8136 = vst [vmem:[%s8010 + $0xf8] sm:%s8000] %v8135
                %v8137 = vld [vmem:[%s8009 + $0xfc] sm:%s8000]
                %8138 = vst [vmem:[%s8010 + $0xfc] sm:%s8000] %v8137
                %s8139 = sadd.s32 1, %s8008
                %p8140 = scmp.ge.s32.totalorder %s8139, %s8001
                %s8141 = scalar_select %p8140, 0, %s8139
                %s8142 = smul.u32 %s8141, 256
                %s8143 = smul.u32 %s8141, 256
                %s8144 = scalar_lea.vmem %s7979, %s8142 [#allocation2]
                %s8145 = scalar_lea.vmem %s7991, %s8143
              $region53: #{conv2d_im2col.1} parent=47 // loop_footer
                %s8005 = sadd.s32 %s8003, 1
              $region54: #{conv2d_im2col.1} parent=47 // loop_footer_branch
                %8002 = sbr.rel target = $region50
              $region55: #{conv2d_im2col.1} parent=47 // loop_exit
                _
              %s8146 = sshrl.u32 %s7986, 6
              %s8147 = sand.u32 %s7986, 63
              %s8148 = smul.u32 %s8146, 64
              %s8149 = smul.u32 4, %s8148
              %s8150 = scalar_lea.vmem %s7979, %s8149 [#allocation2]
              %s8151 = smul.u32 4, %s8148
              %s8152 = scalar_lea.vmem %s7991, %s8151
              // While loop
              $region56: #{conv2d_im2col.1} parent=47 // loop_pre_header
                _
              $region57: #{conv2d_im2col.1} parent=47 // loop_header
                %s8154 = sphi 0, %s8156
                %p8155 = scmp.ge.s32.totalorder %s8154, %s8147
                %s8159 = sphi 0, %s8166
                %s8160 = sphi %s8150, %s8169
                %s8161 = sphi %s8152, %s8170
              $region58: #{conv2d_im2col.1} parent=47 // loop_header_branch
                %8158 = sbr.rel (%p8155) target = $region62
              $region59: #{conv2d_im2col.1} parent=47 // loop_body
                %v8162 = vld [vmem:[%s8160] sm:%s8000]
                %8163 = vst [vmem:[%s8161] sm:%s8000] %v8162
                %s8164 = sadd.s32 1, %s8159
                %p8165 = scmp.ge.s32.totalorder %s8164, %s8147
                %s8166 = scalar_select %p8165, 0, %s8164
                %s8167 = smul.u32 %s8166, 4
                %s8168 = smul.u32 %s8166, 4
                %s8169 = scalar_lea.vmem %s8150, %s8167 [#allocation2]
                %s8170 = scalar_lea.vmem %s8152, %s8168
              $region60: #{conv2d_im2col.1} parent=47 // loop_footer
                %s8156 = sadd.s32 %s8154, 1
              $region61: #{conv2d_im2col.1} parent=47 // loop_footer_branch
                %8153 = sbr.rel target = $region57
              $region62: #{conv2d_im2col.1} parent=47 // loop_exit
                _
            $region48: #{conv2d_im2col.1} parent=39 // pred_fallthru
              _
          $region40: #{conv2d_im2col.1} parent=35 // pred_fallthru
            _
          %8345 = vnop
        $region36: #{conv2d_im2col.1} parent=31 // pred_fallthru
          _
      $region32: #{conv2d_im2col.1} parent=5 // pred_fallthru
        _
      %p8346 = scmp.le.s32.totalorder 2, %s9
      // Predicated region
      $region81: #{conv2d_im2col.1} parent=5 // pred_check
        %p8347 = pneg %p8346
      $region82: #{conv2d_im2col.1} parent=5 // pred_check_branch
        %8349 = sbr.rel (%p8347) target = $region84
      $region83: #{conv2d_im2col.1} parent=5 // pred_region
        %s8350 = ssub.s32 %s9, 2
        // Predicated region
        $region85: #{conv2d_im2col.1} parent=83 // pred_check
          %p8351 = pneg %p130
        $region86: #{conv2d_im2col.1} parent=83 // pred_check_branch
          %8353 = sbr.rel (%p8351) target = $region88
        $region87: #{conv2d_im2col.1} parent=83 // pred_region
          %s8354 = sand.u32 %s115, 1
          %s8355 = sand.u32 %s115, 1
          %s8356 = smul.addr %s8355, 2048
          %s8357 = scalar_lea.vmem [#allocation2], %s8356
        $region88: #{conv2d_im2col.1} parent=83 // pred_fallthru
          _
      $region84: #{conv2d_im2col.1} parent=5 // pred_fallthru
        _
    $region6: #{conv2d_im2col.1} parent=1 // loop_footer
      %s13 = sadd.s32 1, %s9
    $region7: #{conv2d_im2col.1} parent=1 // loop_footer_branch
      %8 = sbr.rel target = $region3
    $region8: #{conv2d_im2col.1} parent=1 // loop_exit
      _

</llo_original>
